<compile_context>
chip_gen: v7x
topology: tpu7x:2x2x1
jax: 0.10.0
libtpu: 0.0.40
codegen_flags: <defaults>
</compile_context>

<pallas_src>
import jax
import jax.numpy as jnp
from jax.experimental import pallas as pl
from jax.experimental.pallas import tpu as pltpu


# ----------------------------- Kernel A -----------------------------
# Fused: skip 1x1 conv + SAM conv1x1/BN/ReLU/ChannelPool + bottleneck 1x1 conv.

def _fused_rows_kernel(xup_ref, skip_ref,
                       ssk_ref, bsk_ref, wsk_ref,
                       wsx_ref, wss_ref, bsam_ref,
                       sbx_ref, bbx_ref, sbs_ref, bbs_ref,
                       wbx_ref, wbs_ref,
                       bneck_ref, pooled_ref):
    xu = xup_ref[...]                                     # (tm, 128) upsampled x rows
    sk = skip_ref[...]                                    # (tm, 116) raw skip rows

    # skip = _BNReluConv(116 -> 128, k=1): BN -> ReLU -> 1x1 conv
    a_sk = jnp.maximum(sk * ssk_ref[...] + bsk_ref[...], 0.0)
    skip_f = jnp.dot(a_sk, wsk_ref[...], preferred_element_type=jnp.float32)

    # SAM conv1x1(256 -> 256): conv -> BN -> ReLU, BN scale folded into weights.
    # cat = [x_up, skip_f]; the 256-row weight is split into two 128-row halves.
    y = (jnp.dot(xu, wsx_ref[...], preferred_element_type=jnp.float32)
         + jnp.dot(skip_f, wss_ref[...], preferred_element_type=jnp.float32)
         + bsam_ref[...])
    y = jnp.maximum(y, 0.0)                               # (tm, 256)

    # ChannelPool: [max, mean] over the 256 channels.
    mx = jnp.max(y, axis=-1, keepdims=True)
    mn = jnp.mean(y, axis=-1, keepdims=True)
    pooled_ref[...] = jnp.concatenate([mx, mn], axis=-1)  # (tm, 2)

    # bottleneck = _BNReluConv(256 -> 128, k=1), split over the two cat halves.
    ax = jnp.maximum(xu * sbx_ref[...] + bbx_ref[...], 0.0)
    a2 = jnp.maximum(skip_f * sbs_ref[...] + bbs_ref[...], 0.0)
    bneck_ref[...] = (jnp.dot(ax, wbx_ref[...], preferred_element_type=jnp.float32)
                      + jnp.dot(a2, wbs_ref[...], preferred_element_type=jnp.float32))


def fused_rows_call(xup2d, skip2d, ssk, bsk, wsk, wsx, wss, bsam,
                    sbx, bbx, sbs, bbs, wbx, wbs):
    M, cx = xup2d.shape
    csk = skip2d.shape[1]
    tm = min(512, ((M + 7) // 8) * 8)     # big row tiles; partial tail handled by cdiv grid
    grid_m = pl.cdiv(M, tm)

    def row_spec(c):
        return pl.BlockSpec((tm, c), lambda i: (i, 0))

    def par_spec(shp):
        return pl.BlockSpec(shp, lambda i: (0,) * len(shp))

    return pl.pallas_call(
        _fused_rows_kernel,
        out_shape=(jax.ShapeDtypeStruct((M, 128), jnp.float32),
                   jax.ShapeDtypeStruct((M, 2), jnp.float32)),
        grid=(grid_m,),
        in_specs=[row_spec(cx), row_spec(csk),
                  par_spec((1, csk)), par_spec((1, csk)), par_spec((csk, 128)),
                  par_spec((128, 256)), par_spec((128, 256)), par_spec((1, 256)),
                  par_spec((1, 128)), par_spec((1, 128)),
                  par_spec((1, 128)), par_spec((1, 128)),
                  par_spec((128, 128)), par_spec((128, 128))],
        out_specs=(pl.BlockSpec((tm, 128), lambda i: (i, 0)),
                   pl.BlockSpec((tm, 2), lambda i: (i, 0))),
        compiler_params=pltpu.CompilerParams(dimension_semantics=("parallel",)),
    )(xup2d, skip2d, ssk, bsk, wsk, wsx, wss, bsam, sbx, bbx, sbs, bbs, wbx, wbs)


# ----------------------------- Kernel B -----------------------------
# Fused: 5x5 spatial gate + sigmoid + (x0 + scal*x0) + blend BN/ReLU + 3x3 conv.

def _make_gate_blend_kernel(H, W):
    HW = H * W

    def kernel(pooled_ref, bneck_ref, hh_ref, ww_ref, w5_ref,
               sbl_ref, bbl_ref, w3_ref, o_ref):
        p = pooled_ref[0]                                 # (HW, 2)  [max, mean]
        x0 = bneck_ref[0]                                 # (HW, 128)
        hh = hh_ref[...]                                  # (HW, 1) int32: row index h
        ww = ww_ref[...]                                  # (HW, 1) int32: col index w

        # SpatialGate 5x5 conv (2 -> 1 ch, pad=2, no bias) + sigmoid in flat
        # layout: tap (ky,kx) reads flat row r + (ky-2)*W + (kx-2), boundary-masked.
        acc_g = jnp.zeros((HW, 1), jnp.float32)
        for ky in range(5):
            for kx in range(5):
                oy, ox = ky - 2, kx - 2
                s = oy * W + ox
                shifted = p if s % HW == 0 else pltpu.roll(p, shift=(-s) % HW, axis=0)
                valid = ((hh + oy >= 0) & (hh + oy < H)
                         & (ww + ox >= 0) & (ww + ox < W))
                tap = (shifted[:, 0:1] * w5_ref[ky * 5 + kx]
                       + shifted[:, 1:2] * w5_ref[25 + ky * 5 + kx])
                acc_g = acc_g + jnp.where(valid, tap, 0.0)
        gate = jax.nn.sigmoid(acc_g)                      # (HW, 1)

        # x = x0 + scal * x0, then blend_conv BN -> ReLU (fused elementwise).
        a = x0 * (1.0 + gate)
        a = jnp.maximum(a * sbl_ref[...] + bbl_ref[...], 0.0)   # (HW, 128)

        # blend 3x3 conv (pad=1, no bias): 9 clean (HW,128)x(128,128) MXU matmuls;
        # each tap result is shifted in the flat row index and boundary-masked.
        acc = jnp.zeros((HW, 128), jnp.float32)
        for dy in range(3):
            for dx in range(3):
                oy, ox = dy - 1, dx - 1
                s = oy * W + ox
                t = jnp.dot(a, w3_ref[dy * 3 + dx],
                            preferred_element_type=jnp.float32)
                shifted = t if s % HW == 0 else pltpu.roll(t, shift=(-s) % HW, axis=0)
                valid = ((hh + oy >= 0) & (hh + oy < H)
                         & (ww + ox >= 0) & (ww + ox < W))
                acc = acc + jnp.where(valid, shifted, 0.0)
        o_ref[0] = acc

    return kernel


def gate_blend_call(pooled3, bneck3, hh, ww, w5_flat, sbl, bbl, w3, H, W):
    n, HW, _ = bneck3.shape
    kernel = _make_gate_blend_kernel(H, W)
    # TODO(synk): halo-tile the spatial dim for very large H*W on v7x (64 MiB VMEM);
    # per-batch full-spatial blocks are fine for v5e/v6e and for these test shapes.
    return pl.pallas_call(
        kernel,
        out_shape=jax.ShapeDtypeStruct((n, HW, 128), jnp.float32),
        grid=(n,),
        in_specs=[pl.BlockSpec((1, HW, 2), lambda i: (i, 0, 0)),
                  pl.BlockSpec((1, HW, 128), lambda i: (i, 0, 0)),
                  pl.BlockSpec((HW, 1), lambda i: (0, 0)),
                  pl.BlockSpec((HW, 1), lambda i: (0, 0)),
                  pl.BlockSpec(memory_space=pltpu.MemorySpace.SMEM),
                  pl.BlockSpec((1, 128), lambda i: (0, 0)),
                  pl.BlockSpec((1, 128), lambda i: (0, 0)),
                  pl.BlockSpec((9, 128, 128), lambda i: (0, 0, 0))],
        out_specs=pl.BlockSpec((1, HW, 128), lambda i: (i, 0, 0)),
        compiler_params=pltpu.CompilerParams(dimension_semantics=("parallel",)),
    )(pooled3, bneck3, hh, ww, w5_flat, sbl, bbl, w3)


# ----------------------------- plain-JAX glue -----------------------------

def _interp_matrix(in_size, out_size):
    # F.interpolate(mode='bilinear', align_corners=False) 1-D interpolation matrix.
    scale = in_size / out_size
    src = (jnp.arange(out_size, dtype=jnp.float32) + 0.5) * scale - 0.5
    src = jnp.maximum(src, 0.0)
    i0 = jnp.minimum(jnp.floor(src).astype(jnp.int32), in_size - 1)
    i1 = jnp.minimum(i0 + 1, in_size - 1)
    lam = src - i0.astype(jnp.float32)
    m = (jax.nn.one_hot(i0, in_size, dtype=jnp.float32) * (1.0 - lam)[:, None]
         + jax.nn.one_hot(i1, in_size, dtype=jnp.float32) * lam[:, None])
    return m                                              # (out_size, in_size)


def bilinear_upsample_nhwc(x, out_h, out_w):
    # Bilinear upsample as two small dense matmuls (MXU-friendly, no gathers).
    n, h, w, c = x.shape
    rh = _interp_matrix(h, out_h)
    rw = _interp_matrix(w, out_w)
    y = jnp.einsum('Oh,nhwc->nOwc', rh, x)
    y = jnp.einsum('Pw,nOwc->nOPc', rw, y)
    return y


# ----------------------------- parameters -----------------------------

def init_params(key):
    ks = jax.random.split(key, 9)
    eps = 1e-5

    def bn(k, c):
        k1, k2, k3, k4 = jax.random.split(k, 4)
        gamma = 1.0 + 0.1 * jax.random.normal(k1, (c,))
        beta = 0.1 * jax.random.normal(k2, (c,))
        mean = 0.1 * jax.random.normal(k3, (c,))
        var = 1.0 + 0.1 * jax.random.uniform(k4, (c,))
        scale = gamma / jnp.sqrt(var + eps)
        shift = beta - mean * scale
        return (scale.reshape(1, c).astype(jnp.float32),
                shift.reshape(1, c).astype(jnp.float32))

    def conv_w(k, cin, cout, kh=1, kw=1):
        std = 1.0 / jnp.sqrt(cin * kh * kw)
        return (std * jax.random.normal(k, (kh, kw, cin, cout))).astype(jnp.float32)

    p = {}
    p['skip_bn'] = bn(ks[0], 116)                        # self.conv: BN(116)
    p['skip_w'] = conv_w(ks[1], 116, 128)[0, 0]          # 1x1 conv 116->128
    p['bneck_bn'] = bn(ks[2], 256)                       # bottleneck: BN(256)
    p['bneck_w'] = conv_w(ks[3], 256, 128)[0, 0]         # 1x1 conv 256->128
    p['blend_bn'] = bn(ks[4], 128)                       # blend_conv: BN(128)
    p['blend_w'] = conv_w(ks[5], 128, 128, 3, 3)         # 3x3 conv 128->128
    p['sam_w'] = conv_w(ks[6], 256, 256)[0, 0]           # SAM conv1x1 256->256
    p['sam_bn'] = bn(ks[7], 256)                         # SAM BN(256)
    p['spatial_w'] = jnp.transpose(conv_w(ks[8], 2, 1, 5, 5)[:, :, :, 0],
                                   (2, 0, 1))            # (2, 5, 5)
    return p


# ----------------------------- forward -----------------------------

def upsample_8_forward(params, x_nchw, skip_nchw):
    x = jnp.transpose(x_nchw, (0, 2, 3, 1)).astype(jnp.float32)        # (N, h, w, 128)
    skip = jnp.transpose(skip_nchw, (0, 2, 3, 1)).astype(jnp.float32)  # (N, H, W, 116)
    n, H, W, c_skip = skip.shape
    HW = H * W
    M = n * HW

    # x = upsample(x, skip_size): bilinear, align_corners=False
    x_up = bilinear_upsample_nhwc(x, H, W)                             # (N, H, W, 128)
    xup2d = x_up.reshape(M, 128)
    skip2d = skip.reshape(M, c_skip)

    # parameter prep: split the 256-channel weights / BN params into the x / skip
    # halves of the (never materialized) concat, fold the SAM BN scale into W.
    ssk, bsk = params['skip_bn']
    wsk = params['skip_w']
    s_sam, b_sam = params['sam_bn']
    wsam = params['sam_w']
    wsx = wsam[:128] * s_sam
    wss = wsam[128:] * s_sam
    sbn, bbn = params['bneck_bn']
    sbx, sbs = sbn[:, :128], sbn[:, 128:]
    bbx, bbs = bbn[:, :128], bbn[:, 128:]
    wb = params['bneck_w']
    wbx, wbs = wb[:128], wb[128:]
    sbl, bbl = params['blend_bn']
    w3 = params['blend_w'].reshape(9, 128, 128)                        # [dy*3+dx] -> (Ci, Co)
    w5 = params['spatial_w'].reshape(-1)                               # (50,) = c*25 + ky*5 + kx

    # Kernel A: skip conv + SAM conv1x1/ChannelPool + bottleneck, fused per row tile.
    bneck, pooled = fused_rows_call(xup2d, skip2d, ssk, bsk, wsk,
                                    wsx, wss, b_sam, sbx, bbx, sbs, bbs, wbx, wbs)

    # Kernel B: 5x5 spatial gate + sigmoid + gating + blend BN/ReLU + 3x3 conv.
    r = jnp.arange(HW, dtype=jnp.int32)
    hh = (r // W).reshape(HW, 1)
    ww = (r % W).reshape(HW, 1)
    out3 = gate_blend_call(pooled.reshape(n, HW, 2), bneck.reshape(n, HW, 128),
                           hh, ww, w5, sbl, bbl, w3, H, W)

    out = out3.reshape(n, H, W, 128)
    return jnp.transpose(out, (0, 3, 1, 2))                            # NCHW


if __name__ == "__main__":
    key = jax.random.PRNGKey(0)
    kp, kx, ks = jax.random.split(key, 3)
    params = init_params(kp)

    # channel counts are fixed by the module (x: 128, skip: 116, out: 128)
    x = jax.random.normal(kx, (2, 128, 4, 4), dtype=jnp.float32)
    skip = jax.random.normal(ks, (2, 116, 8, 8), dtype=jnp.float32)

    out = jax.jit(upsample_8_forward)(params, x, skip)
    out = jax.block_until_ready(out)
    assert out.shape == (2, 128, 8, 8)
    assert bool(jnp.all(jnp.isfinite(out)))
    print("KERNEL_OK")
</pallas_src>

<mosaic_0001>
module attributes {stable_mosaic.version = 11 : i64} {
  func.func @_fused_rows_kernel(%arg0: i32, %arg1: memref<128x128xf32, #tpu.memory_space<vmem>>, %arg2: memref<128x116xf32, #tpu.memory_space<vmem>>, %arg3: memref<1x116xf32, #tpu.memory_space<vmem>>, %arg4: memref<1x116xf32, #tpu.memory_space<vmem>>, %arg5: memref<116x128xf32, #tpu.memory_space<vmem>>, %arg6: memref<128x256xf32, #tpu.memory_space<vmem>>, %arg7: memref<128x256xf32, #tpu.memory_space<vmem>>, %arg8: memref<1x256xf32, #tpu.memory_space<vmem>>, %arg9: memref<1x128xf32, #tpu.memory_space<vmem>>, %arg10: memref<1x128xf32, #tpu.memory_space<vmem>>, %arg11: memref<1x128xf32, #tpu.memory_space<vmem>>, %arg12: memref<1x128xf32, #tpu.memory_space<vmem>>, %arg13: memref<128x128xf32, #tpu.memory_space<vmem>>, %arg14: memref<128x128xf32, #tpu.memory_space<vmem>>, %arg15: memref<128x128xf32, #tpu.memory_space<vmem>>, %arg16: memref<128x2xf32, #tpu.memory_space<vmem>>) attributes {dimension_semantics = [#tpu.dimension_semantics<parallel>], iteration_bounds = array<i64: 1>, scalar_prefetch = 0 : i64, scratch_operands = 0 : i64, tpu.core_type = #tpu.core_type<tc>, window_params = [{transform_indices = @transform_0, window_bounds = array<i64: 128, 128>}, {transform_indices = @transform_1, window_bounds = array<i64: 128, 116>}, {pipeline_mode = #tpu.pipeline_mode<synchronous>, transform_indices = @transform_2, window_bounds = array<i64: 1, 116>}, {pipeline_mode = #tpu.pipeline_mode<synchronous>, transform_indices = @transform_3, window_bounds = array<i64: 1, 116>}, {pipeline_mode = #tpu.pipeline_mode<synchronous>, transform_indices = @transform_4, window_bounds = array<i64: 116, 128>}, {pipeline_mode = #tpu.pipeline_mode<synchronous>, transform_indices = @transform_5, window_bounds = array<i64: 128, 256>}, {pipeline_mode = #tpu.pipeline_mode<synchronous>, transform_indices = @transform_6, window_bounds = array<i64: 128, 256>}, {pipeline_mode = #tpu.pipeline_mode<synchronous>, transform_indices = @transform_7, window_bounds = array<i64: 1, 256>}, {pipeline_mode = #tpu.pipeline_mode<synchronous>, transform_indices = @transform_8, window_bounds = array<i64: 1, 128>}, {pipeline_mode = #tpu.pipeline_mode<synchronous>, transform_indices = @transform_9, window_bounds = array<i64: 1, 128>}, {pipeline_mode = #tpu.pipeline_mode<synchronous>, transform_indices = @transform_10, window_bounds = array<i64: 1, 128>}, {pipeline_mode = #tpu.pipeline_mode<synchronous>, transform_indices = @transform_11, window_bounds = array<i64: 1, 128>}, {pipeline_mode = #tpu.pipeline_mode<synchronous>, transform_indices = @transform_12, window_bounds = array<i64: 128, 128>}, {pipeline_mode = #tpu.pipeline_mode<synchronous>, transform_indices = @transform_13, window_bounds = array<i64: 128, 128>}, {transform_indices = @transform_14, window_bounds = array<i64: 128, 128>}, {transform_indices = @transform_15, window_bounds = array<i64: 128, 2>}]} {
    %c0 = arith.constant 0 : index
    %c0_0 = arith.constant 0 : index
    %0 = vector.load %arg1[%c0, %c0_0] : memref<128x128xf32, #tpu.memory_space<vmem>>, vector<128x128xf32>
    %c0_1 = arith.constant 0 : index
    %c0_2 = arith.constant 0 : index
    %1 = vector.load %arg2[%c0_1, %c0_2] : memref<128x116xf32, #tpu.memory_space<vmem>>, vector<128x116xf32>
    %c0_3 = arith.constant 0 : index
    %c0_4 = arith.constant 0 : index
    %2 = vector.load %arg3[%c0_3, %c0_4] : memref<1x116xf32, #tpu.memory_space<vmem>>, vector<1x116xf32>
    %3 = vector.broadcast %2 : vector<1x116xf32> to vector<128x116xf32>
    %4 = arith.mulf %1, %3 : vector<128x116xf32>
    %c0_5 = arith.constant 0 : index
    %c0_6 = arith.constant 0 : index
    %5 = vector.load %arg4[%c0_5, %c0_6] : memref<1x116xf32, #tpu.memory_space<vmem>>, vector<1x116xf32>
    %6 = vector.broadcast %5 : vector<1x116xf32> to vector<128x116xf32>
    %7 = arith.addf %4, %6 : vector<128x116xf32>
    %cst = arith.constant 0.000000e+00 : f32
    %8 = vector.broadcast %cst : f32 to vector<128x116xf32>
    %9 = arith.maximumf %7, %8 : vector<128x116xf32>
    %c0_7 = arith.constant 0 : index
    %c0_8 = arith.constant 0 : index
    %10 = vector.load %arg5[%c0_7, %c0_8] : memref<116x128xf32, #tpu.memory_space<vmem>>, vector<116x128xf32>
    %cst_9 = arith.constant dense<0.000000e+00> : vector<128x128xf32>
    %11 = tpu.matmul %9, %10, %cst_9 {dimension_numbers = #tpu.dot_dimension_numbers<[1], [0], [0], [1], [0, 0, 1, 1], [], []>} : vector<128x116xf32>, vector<116x128xf32>, vector<128x128xf32> -> vector<128x128xf32>
    %c0_10 = arith.constant 0 : index
    %c0_11 = arith.constant 0 : index
    %12 = vector.load %arg6[%c0_10, %c0_11] : memref<128x256xf32, #tpu.memory_space<vmem>>, vector<128x256xf32>
    %cst_12 = arith.constant dense<0.000000e+00> : vector<128x256xf32>
    %13 = tpu.matmul %0, %12, %cst_12 {dimension_numbers = #tpu.dot_dimension_numbers<[1], [0], [0], [1], [0, 0, 1, 1], [], []>} : vector<128x128xf32>, vector<128x256xf32>, vector<128x256xf32> -> vector<128x256xf32>
    %c0_13 = arith.constant 0 : index
    %c0_14 = arith.constant 0 : index
    %14 = vector.load %arg7[%c0_13, %c0_14] : memref<128x256xf32, #tpu.memory_space<vmem>>, vector<128x256xf32>
    %cst_15 = arith.constant dense<0.000000e+00> : vector<128x256xf32>
    %15 = tpu.matmul %11, %14, %cst_15 {dimension_numbers = #tpu.dot_dimension_numbers<[1], [0], [0], [1], [0, 0, 1, 1], [], []>} : vector<128x128xf32>, vector<128x256xf32>, vector<128x256xf32> -> vector<128x256xf32>
    %16 = arith.addf %13, %15 : vector<128x256xf32>
    %c0_16 = arith.constant 0 : index
    %c0_17 = arith.constant 0 : index
    %17 = vector.load %arg8[%c0_16, %c0_17] : memref<1x256xf32, #tpu.memory_space<vmem>>, vector<1x256xf32>
    %18 = vector.broadcast %17 : vector<1x256xf32> to vector<128x256xf32>
    %19 = arith.addf %16, %18 : vector<128x256xf32>
    %cst_18 = arith.constant 0.000000e+00 : f32
    %20 = vector.broadcast %cst_18 : f32 to vector<128x256xf32>
    %21 = arith.maximumf %19, %20 : vector<128x256xf32>
    %cst_19 = arith.constant dense<0xFF800000> : vector<128xf32>
    %22 = vector.multi_reduction <maximumf>, %21, %cst_19 [1] : vector<128x256xf32> to vector<128xf32>
    %23 = vector.shape_cast %22 : vector<128xf32> to vector<128x1xf32>
    %cst_20 = arith.constant dense<0.000000e+00> : vector<128xf32>
    %24 = vector.multi_reduction <add>, %21, %cst_20 [1] : vector<128x256xf32> to vector<128xf32>
    %25 = vector.shape_cast %24 : vector<128xf32> to vector<128x1xf32>
    %cst_21 = arith.constant 2.560000e+02 : f32
    %26 = vector.broadcast %cst_21 : f32 to vector<128x1xf32>
    %27 = arith.divf %25, %26 : vector<128x1xf32>
    %28 = tpu.concatenate %23, %27 in 1 : vector<128x1xf32>, vector<128x1xf32> -> vector<128x2xf32>
    %c0_22 = arith.constant 0 : index
    %c0_23 = arith.constant 0 : index
    %29 = vector.load %arg16[%c0_22, %c0_23] : memref<128x2xf32, #tpu.memory_space<vmem>>, vector<128x2xf32>
    tpu.vector_store %arg16[%c0_22, %c0_23], %28 {strides = array<i32>} : memref<128x2xf32, #tpu.memory_space<vmem>>, vector<128x2xf32>,
    %c0_24 = arith.constant 0 : index
    %c0_25 = arith.constant 0 : index
    %30 = vector.load %arg9[%c0_24, %c0_25] : memref<1x128xf32, #tpu.memory_space<vmem>>, vector<1x128xf32>
    %31 = vector.broadcast %30 : vector<1x128xf32> to vector<128x128xf32>
    %32 = arith.mulf %0, %31 : vector<128x128xf32>
    %c0_26 = arith.constant 0 : index
    %c0_27 = arith.constant 0 : index
    %33 = vector.load %arg10[%c0_26, %c0_27] : memref<1x128xf32, #tpu.memory_space<vmem>>, vector<1x128xf32>
    %34 = vector.broadcast %33 : vector<1x128xf32> to vector<128x128xf32>
    %35 = arith.addf %32, %34 : vector<128x128xf32>
    %cst_28 = arith.constant 0.000000e+00 : f32
    %36 = vector.broadcast %cst_28 : f32 to vector<128x128xf32>
    %37 = arith.maximumf %35, %36 : vector<128x128xf32>
    %c0_29 = arith.constant 0 : index
    %c0_30 = arith.constant 0 : index
    %38 = vector.load %arg11[%c0_29, %c0_30] : memref<1x128xf32, #tpu.memory_space<vmem>>, vector<1x128xf32>
    %39 = vector.broadcast %38 : vector<1x128xf32> to vector<128x128xf32>
    %40 = arith.mulf %11, %39 : vector<128x128xf32>
    %c0_31 = arith.constant 0 : index
    %c0_32 = arith.constant 0 : index
    %41 = vector.load %arg12[%c0_31, %c0_32] : memref<1x128xf32, #tpu.memory_space<vmem>>, vector<1x128xf32>
    %42 = vector.broadcast %41 : vector<1x128xf32> to vector<128x128xf32>
    %43 = arith.addf %40, %42 : vector<128x128xf32>
    %cst_33 = arith.constant 0.000000e+00 : f32
    %44 = vector.broadcast %cst_33 : f32 to vector<128x128xf32>
    %45 = arith.maximumf %43, %44 : vector<128x128xf32>
    %c0_34 = arith.constant 0 : index
    %c0_35 = arith.constant 0 : index
    %46 = vector.load %arg13[%c0_34, %c0_35] : memref<128x128xf32, #tpu.memory_space<vmem>>, vector<128x128xf32>
    %cst_36 = arith.constant dense<0.000000e+00> : vector<128x128xf32>
    %47 = tpu.matmul %37, %46, %cst_36 {dimension_numbers = #tpu.dot_dimension_numbers<[1], [0], [0], [1], [0, 0, 1, 1], [], []>} : vector<128x128xf32>, vector<128x128xf32>, vector<128x128xf32> -> vector<128x128xf32>
    %c0_37 = arith.constant 0 : index
    %c0_38 = arith.constant 0 : index
    %48 = vector.load %arg14[%c0_37, %c0_38] : memref<128x128xf32, #tpu.memory_space<vmem>>, vector<128x128xf32>
    %cst_39 = arith.constant dense<0.000000e+00> : vector<128x128xf32>
    %49 = tpu.matmul %45, %48, %cst_39 {dimension_numbers = #tpu.dot_dimension_numbers<[1], [0], [0], [1], [0, 0, 1, 1], [], []>} : vector<128x128xf32>, vector<128x128xf32>, vector<128x128xf32> -> vector<128x128xf32>
    %50 = arith.addf %47, %49 : vector<128x128xf32>
    %c0_40 = arith.constant 0 : index
    %c0_41 = arith.constant 0 : index
    %51 = vector.load %arg15[%c0_40, %c0_41] : memref<128x128xf32, #tpu.memory_space<vmem>>, vector<128x128xf32>
    tpu.vector_store %arg15[%c0_40, %c0_41], %50 {strides = array<i32>} : memref<128x128xf32, #tpu.memory_space<vmem>>, vector<128x128xf32>,
    return
  }
  func.func @transform_0(%arg0: i32) -> (i32, i32) {
    %c0_i32 = arith.constant 0 : i32
    %c0_i32_0 = arith.constant 0 : i32
    return %arg0, %c0_i32 : i32, i32
  }
  func.func @transform_1(%arg0: i32) -> (i32, i32) {
    %c0_i32 = arith.constant 0 : i32
    %c0_i32_0 = arith.constant 0 : i32
    return %arg0, %c0_i32 : i32, i32
  }
  func.func @transform_2(%arg0: i32) -> (i32, i32) {
    %c0_i32 = arith.constant 0 : i32
    %c0_i32_0 = arith.constant 0 : i32
    %c0_i32_1 = arith.constant 0 : i32
    return %c0_i32, %c0_i32_0 : i32, i32
  }
  func.func @transform_3(%arg0: i32) -> (i32, i32) {
    %c0_i32 = arith.constant 0 : i32
    %c0_i32_0 = arith.constant 0 : i32
    %c0_i32_1 = arith.constant 0 : i32
    return %c0_i32, %c0_i32_0 : i32, i32
  }
  func.func @transform_4(%arg0: i32) -> (i32, i32) {
    %c0_i32 = arith.constant 0 : i32
    %c0_i32_0 = arith.constant 0 : i32
    %c0_i32_1 = arith.constant 0 : i32
    return %c0_i32, %c0_i32_0 : i32, i32
  }
  func.func @transform_5(%arg0: i32) -> (i32, i32) {
    %c0_i32 = arith.constant 0 : i32
    %c0_i32_0 = arith.constant 0 : i32
    %c0_i32_1 = arith.constant 0 : i32
    return %c0_i32, %c0_i32_0 : i32, i32
  }
  func.func @transform_6(%arg0: i32) -> (i32, i32) {
    %c0_i32 = arith.constant 0 : i32
    %c0_i32_0 = arith.constant 0 : i32
    %c0_i32_1 = arith.constant 0 : i32
    return %c0_i32, %c0_i32_0 : i32, i32
  }
  func.func @transform_7(%arg0: i32) -> (i32, i32) {
    %c0_i32 = arith.constant 0 : i32
    %c0_i32_0 = arith.constant 0 : i32
    %c0_i32_1 = arith.constant 0 : i32
    return %c0_i32, %c0_i32_0 : i32, i32
  }
  func.func @transform_8(%arg0: i32) -> (i32, i32) {
    %c0_i32 = arith.constant 0 : i32
    %c0_i32_0 = arith.constant 0 : i32
    %c0_i32_1 = arith.constant 0 : i32
    return %c0_i32, %c0_i32_0 : i32, i32
  }
  func.func @transform_9(%arg0: i32) -> (i32, i32) {
    %c0_i32 = arith.constant 0 : i32
    %c0_i32_0 = arith.constant 0 : i32
    %c0_i32_1 = arith.constant 0 : i32
    return %c0_i32, %c0_i32_0 : i32, i32
  }
  func.func @transform_10(%arg0: i32) -> (i32, i32) {
    %c0_i32 = arith.constant 0 : i32
    %c0_i32_0 = arith.constant 0 : i32
    %c0_i32_1 = arith.constant 0 : i32
    return %c0_i32, %c0_i32_0 : i32, i32
  }
  func.func @transform_11(%arg0: i32) -> (i32, i32) {
    %c0_i32 = arith.constant 0 : i32
    %c0_i32_0 = arith.constant 0 : i32
    %c0_i32_1 = arith.constant 0 : i32
    return %c0_i32, %c0_i32_0 : i32, i32
  }
  func.func @transform_12(%arg0: i32) -> (i32, i32) {
    %c0_i32 = arith.constant 0 : i32
    %c0_i32_0 = arith.constant 0 : i32
    %c0_i32_1 = arith.constant 0 : i32
    return %c0_i32, %c0_i32_0 : i32, i32
  }
  func.func @transform_13(%arg0: i32) -> (i32, i32) {
    %c0_i32 = arith.constant 0 : i32
    %c0_i32_0 = arith.constant 0 : i32
    %c0_i32_1 = arith.constant 0 : i32
    return %c0_i32, %c0_i32_0 : i32, i32
  }
  func.func @transform_14(%arg0: i32) -> (i32, i32) {
    %c0_i32 = arith.constant 0 : i32
    %c0_i32_0 = arith.constant 0 : i32
    return %arg0, %c0_i32 : i32, i32
  }
  func.func @transform_15(%arg0: i32) -> (i32, i32) {
    %c0_i32 = arith.constant 0 : i32
    %c0_i32_0 = arith.constant 0 : i32
    return %arg0, %c0_i32 : i32, i32
  }
}

module attributes {stable_mosaic.version = 11 : i64} {
  func.func @kernel(%arg0: i32, %arg1: memref<1x64x2xf32, #tpu.memory_space<vmem>>, %arg2: memref<1x64x128xf32, #tpu.memory_space<vmem>>, %arg3: memref<64x1xi32, #tpu.memory_space<vmem>>, %arg4: memref<64x1xi32, #tpu.memory_space<vmem>>, %arg5: memref<50xf32, #tpu.memory_space<smem>>, %arg6: memref<1x128xf32, #tpu.memory_space<vmem>>, %arg7: memref<1x128xf32, #tpu.memory_space<vmem>>, %arg8: memref<9x128x128xf32, #tpu.memory_space<vmem>>, %arg9: memref<1x64x128xf32, #tpu.memory_space<vmem>>) attributes {dimension_semantics = [#tpu.dimension_semantics<parallel>], iteration_bounds = array<i64: 2>, scalar_prefetch = 0 : i64, scratch_operands = 0 : i64, tpu.core_type = #tpu.core_type<tc>, window_params = [{transform_indices = @transform_0, window_bounds = array<i64: 1, 64, 2>}, {transform_indices = @transform_1, window_bounds = array<i64: 1, 64, 128>}, {pipeline_mode = #tpu.pipeline_mode<synchronous>, transform_indices = @transform_2, window_bounds = array<i64: 64, 1>}, {pipeline_mode = #tpu.pipeline_mode<synchronous>, transform_indices = @transform_3, window_bounds = array<i64: 64, 1>}, {transform_indices = @transform_4, window_bounds = array<i64: 50>}, {pipeline_mode = #tpu.pipeline_mode<synchronous>, transform_indices = @transform_5, window_bounds = array<i64: 1, 128>}, {pipeline_mode = #tpu.pipeline_mode<synchronous>, transform_indices = @transform_6, window_bounds = array<i64: 1, 128>}, {pipeline_mode = #tpu.pipeline_mode<synchronous>, transform_indices = @transform_7, window_bounds = array<i64: 9, 128, 128>}, {transform_indices = @transform_8, window_bounds = array<i64: 1, 64, 128>}]} {
    %c0 = arith.constant 0 : index
    %c0_0 = arith.constant 0 : index
    %c0_1 = arith.constant 0 : index
    %0 = vector.load %arg1[%c0, %c0_0, %c0_1] : memref<1x64x2xf32, #tpu.memory_space<vmem>>, vector<1x64x2xf32>
    %1 = vector.shape_cast %0 : vector<1x64x2xf32> to vector<64x2xf32>
    %c0_2 = arith.constant 0 : index
    %c0_3 = arith.constant 0 : index
    %c0_4 = arith.constant 0 : index
    %2 = vector.load %arg2[%c0_2, %c0_3, %c0_4] : memref<1x64x128xf32, #tpu.memory_space<vmem>>, vector<1x64x128xf32>
    %3 = vector.shape_cast %2 : vector<1x64x128xf32> to vector<64x128xf32>
    %c0_5 = arith.constant 0 : index
    %c0_6 = arith.constant 0 : index
    %4 = vector.load %arg3[%c0_5, %c0_6] : memref<64x1xi32, #tpu.memory_space<vmem>>, vector<64x1xi32>
    %c0_7 = arith.constant 0 : index
    %c0_8 = arith.constant 0 : index
    %5 = vector.load %arg4[%c0_7, %c0_8] : memref<64x1xi32, #tpu.memory_space<vmem>>, vector<64x1xi32>
    %cst = arith.constant 0.000000e+00 : f32
    %6 = vector.broadcast %cst : f32 to vector<64x1xf32>
    %c18_i32 = arith.constant 18 : i32
    %7 = tpu.dynamic_rotate %1 by %c18_i32 dim 0 : vector<64x2xf32>, i32 -> vector<64x2xf32>
    %c-2_i32 = arith.constant -2 : i32
    %8 = vector.broadcast %c-2_i32 : i32 to vector<64x1xi32>
    %9 = arith.addi %4, %8 : vector<64x1xi32>
    %c0_i32 = arith.constant 0 : i32
    %10 = vector.broadcast %c0_i32 : i32 to vector<64x1xi32>
    %11 = arith.cmpi sge, %9, %10 : vector<64x1xi32>
    %c-2_i32_9 = arith.constant -2 : i32
    %12 = vector.broadcast %c-2_i32_9 : i32 to vector<64x1xi32>
    %13 = arith.addi %4, %12 : vector<64x1xi32>
    %c8_i32 = arith.constant 8 : i32
    %14 = vector.broadcast %c8_i32 : i32 to vector<64x1xi32>
    %15 = arith.cmpi slt, %13, %14 : vector<64x1xi32>
    %16 = arith.andi %11, %15 : vector<64x1xi1>
    %c-2_i32_10 = arith.constant -2 : i32
    %17 = vector.broadcast %c-2_i32_10 : i32 to vector<64x1xi32>
    %18 = arith.addi %5, %17 : vector<64x1xi32>
    %c0_i32_11 = arith.constant 0 : i32
    %19 = vector.broadcast %c0_i32_11 : i32 to vector<64x1xi32>
    %20 = arith.cmpi sge, %18, %19 : vector<64x1xi32>
    %21 = arith.andi %16, %20 : vector<64x1xi1>
    %c-2_i32_12 = arith.constant -2 : i32
    %22 = vector.broadcast %c-2_i32_12 : i32 to vector<64x1xi32>
    %23 = arith.addi %5, %22 : vector<64x1xi32>
    %c8_i32_13 = arith.constant 8 : i32
    %24 = vector.broadcast %c8_i32_13 : i32 to vector<64x1xi32>
    %25 = arith.cmpi slt, %23, %24 : vector<64x1xi32>
    %26 = arith.andi %21, %25 : vector<64x1xi1>
    %27 = vector.extract_strided_slice %7 {offsets = [0, 0], sizes = [64, 1], strides = [1, 1]} : vector<64x2xf32> to vector<64x1xf32>
    %c0_14 = arith.constant 0 : index
    %28 = memref.load %arg5[%c0_14] : memref<50xf32, #tpu.memory_space<smem>>
    %29 = vector.broadcast %28 : f32 to vector<64x1xf32>
    %30 = arith.mulf %27, %29 : vector<64x1xf32>
    %31 = vector.extract_strided_slice %7 {offsets = [0, 1], sizes = [64, 1], strides = [1, 1]} : vector<64x2xf32> to vector<64x1xf32>
    %c25 = arith.constant 25 : index
    %32 = memref.load %arg5[%c25] : memref<50xf32, #tpu.memory_space<smem>>
    %33 = vector.broadcast %32 : f32 to vector<64x1xf32>
    %34 = arith.mulf %31, %33 : vector<64x1xf32>
    %35 = arith.addf %30, %34 : vector<64x1xf32>
    %cst_15 = arith.constant 0.000000e+00 : f32
    %36 = vector.broadcast %cst_15 : f32 to vector<64x1xf32>
    %37 = arith.select %26, %35, %36 : vector<64x1xi1>, vector<64x1xf32>
    %38 = arith.addf %6, %37 : vector<64x1xf32>
    %c17_i32 = arith.constant 17 : i32
    %39 = tpu.dynamic_rotate %1 by %c17_i32 dim 0 : vector<64x2xf32>, i32 -> vector<64x2xf32>
    %c-2_i32_16 = arith.constant -2 : i32
    %40 = vector.broadcast %c-2_i32_16 : i32 to vector<64x1xi32>
    %41 = arith.addi %4, %40 : vector<64x1xi32>
    %c0_i32_17 = arith.constant 0 : i32
    %42 = vector.broadcast %c0_i32_17 : i32 to vector<64x1xi32>
    %43 = arith.cmpi sge, %41, %42 : vector<64x1xi32>
    %c-2_i32_18 = arith.constant -2 : i32
    %44 = vector.broadcast %c-2_i32_18 : i32 to vector<64x1xi32>
    %45 = arith.addi %4, %44 : vector<64x1xi32>
    %c8_i32_19 = arith.constant 8 : i32
    %46 = vector.broadcast %c8_i32_19 : i32 to vector<64x1xi32>
    %47 = arith.cmpi slt, %45, %46 : vector<64x1xi32>
    %48 = arith.andi %43, %47 : vector<64x1xi1>
    %c-1_i32 = arith.constant -1 : i32
    %49 = vector.broadcast %c-1_i32 : i32 to vector<64x1xi32>
    %50 = arith.addi %5, %49 : vector<64x1xi32>
    %c0_i32_20 = arith.constant 0 : i32
    %51 = vector.broadcast %c0_i32_20 : i32 to vector<64x1xi32>
    %52 = arith.cmpi sge, %50, %51 : vector<64x1xi32>
    %53 = arith.andi %48, %52 : vector<64x1xi1>
    %c-1_i32_21 = arith.constant -1 : i32
    %54 = vector.broadcast %c-1_i32_21 : i32 to vector<64x1xi32>
    %55 = arith.addi %5, %54 : vector<64x1xi32>
    %c8_i32_22 = arith.constant 8 : i32
    %56 = vector.broadcast %c8_i32_22 : i32 to vector<64x1xi32>
    %57 = arith.cmpi slt, %55, %56 : vector<64x1xi32>
    %58 = arith.andi %53, %57 : vector<64x1xi1>
    %59 = vector.extract_strided_slice %39 {offsets = [0, 0], sizes = [64, 1], strides = [1, 1]} : vector<64x2xf32> to vector<64x1xf32>
    %c1 = arith.constant 1 : index
    %60 = memref.load %arg5[%c1] : memref<50xf32, #tpu.memory_space<smem>>
    %61 = vector.broadcast %60 : f32 to vector<64x1xf32>
    %62 = arith.mulf %59, %61 : vector<64x1xf32>
    %63 = vector.extract_strided_slice %39 {offsets = [0, 1], sizes = [64, 1], strides = [1, 1]} : vector<64x2xf32> to vector<64x1xf32>
    %c26 = arith.constant 26 : index
    %64 = memref.load %arg5[%c26] : memref<50xf32, #tpu.memory_space<smem>>
    %65 = vector.broadcast %64 : f32 to vector<64x1xf32>
    %66 = arith.mulf %63, %65 : vector<64x1xf32>
    %67 = arith.addf %62, %66 : vector<64x1xf32>
    %cst_23 = arith.constant 0.000000e+00 : f32
    %68 = vector.broadcast %cst_23 : f32 to vector<64x1xf32>
    %69 = arith.select %58, %67, %68 : vector<64x1xi1>, vector<64x1xf32>
    %70 = arith.addf %38, %69 : vector<64x1xf32>
    %c16_i32 = arith.constant 16 : i32
    %71 = tpu.dynamic_rotate %1 by %c16_i32 dim 0 : vector<64x2xf32>, i32 -> vector<64x2xf32>
    %c-2_i32_24 = arith.constant -2 : i32
    %72 = vector.broadcast %c-2_i32_24 : i32 to vector<64x1xi32>
    %73 = arith.addi %4, %72 : vector<64x1xi32>
    %c0_i32_25 = arith.constant 0 : i32
    %74 = vector.broadcast %c0_i32_25 : i32 to vector<64x1xi32>
    %75 = arith.cmpi sge, %73, %74 : vector<64x1xi32>
    %c-2_i32_26 = arith.constant -2 : i32
    %76 = vector.broadcast %c-2_i32_26 : i32 to vector<64x1xi32>
    %77 = arith.addi %4, %76 : vector<64x1xi32>
    %c8_i32_27 = arith.constant 8 : i32
    %78 = vector.broadcast %c8_i32_27 : i32 to vector<64x1xi32>
    %79 = arith.cmpi slt, %77, %78 : vector<64x1xi32>
    %80 = arith.andi %75, %79 : vector<64x1xi1>
    %c0_i32_28 = arith.constant 0 : i32
    %81 = vector.broadcast %c0_i32_28 : i32 to vector<64x1xi32>
    %82 = arith.addi %5, %81 : vector<64x1xi32>
    %c0_i32_29 = arith.constant 0 : i32
    %83 = vector.broadcast %c0_i32_29 : i32 to vector<64x1xi32>
    %84 = arith.cmpi sge, %82, %83 : vector<64x1xi32>
    %85 = arith.andi %80, %84 : vector<64x1xi1>
    %c0_i32_30 = arith.constant 0 : i32
    %86 = vector.broadcast %c0_i32_30 : i32 to vector<64x1xi32>
    %87 = arith.addi %5, %86 : vector<64x1xi32>
    %c8_i32_31 = arith.constant 8 : i32
    %88 = vector.broadcast %c8_i32_31 : i32 to vector<64x1xi32>
    %89 = arith.cmpi slt, %87, %88 : vector<64x1xi32>
    %90 = arith.andi %85, %89 : vector<64x1xi1>
    %91 = vector.extract_strided_slice %71 {offsets = [0, 0], sizes = [64, 1], strides = [1, 1]} : vector<64x2xf32> to vector<64x1xf32>
    %c2 = arith.constant 2 : index
    %92 = memref.load %arg5[%c2] : memref<50xf32, #tpu.memory_space<smem>>
    %93 = vector.broadcast %92 : f32 to vector<64x1xf32>
    %94 = arith.mulf %91, %93 : vector<64x1xf32>
    %95 = vector.extract_strided_slice %71 {offsets = [0, 1], sizes = [64, 1], strides = [1, 1]} : vector<64x2xf32> to vector<64x1xf32>
    %c27 = arith.constant 27 : index
    %96 = memref.load %arg5[%c27] : memref<50xf32, #tpu.memory_space<smem>>
    %97 = vector.broadcast %96 : f32 to vector<64x1xf32>
    %98 = arith.mulf %95, %97 : vector<64x1xf32>
    %99 = arith.addf %94, %98 : vector<64x1xf32>
    %cst_32 = arith.constant 0.000000e+00 : f32
    %100 = vector.broadcast %cst_32 : f32 to vector<64x1xf32>
    %101 = arith.select %90, %99, %100 : vector<64x1xi1>, vector<64x1xf32>
    %102 = arith.addf %70, %101 : vector<64x1xf32>
    %c15_i32 = arith.constant 15 : i32
    %103 = tpu.dynamic_rotate %1 by %c15_i32 dim 0 : vector<64x2xf32>, i32 -> vector<64x2xf32>
    %c-2_i32_33 = arith.constant -2 : i32
    %104 = vector.broadcast %c-2_i32_33 : i32 to vector<64x1xi32>
    %105 = arith.addi %4, %104 : vector<64x1xi32>
    %c0_i32_34 = arith.constant 0 : i32
    %106 = vector.broadcast %c0_i32_34 : i32 to vector<64x1xi32>
    %107 = arith.cmpi sge, %105, %106 : vector<64x1xi32>
    %c-2_i32_35 = arith.constant -2 : i32
    %108 = vector.broadcast %c-2_i32_35 : i32 to vector<64x1xi32>
    %109 = arith.addi %4, %108 : vector<64x1xi32>
    %c8_i32_36 = arith.constant 8 : i32
    %110 = vector.broadcast %c8_i32_36 : i32 to vector<64x1xi32>
    %111 = arith.cmpi slt, %109, %110 : vector<64x1xi32>
    %112 = arith.andi %107, %111 : vector<64x1xi1>
    %c1_i32 = arith.constant 1 : i32
    %113 = vector.broadcast %c1_i32 : i32 to vector<64x1xi32>
    %114 = arith.addi %5, %113 : vector<64x1xi32>
    %c0_i32_37 = arith.constant 0 : i32
    %115 = vector.broadcast %c0_i32_37 : i32 to vector<64x1xi32>
    %116 = arith.cmpi sge, %114, %115 : vector<64x1xi32>
    %117 = arith.andi %112, %116 : vector<64x1xi1>
    %c1_i32_38 = arith.constant 1 : i32
    %118 = vector.broadcast %c1_i32_38 : i32 to vector<64x1xi32>
    %119 = arith.addi %5, %118 : vector<64x1xi32>
    %c8_i32_39 = arith.constant 8 : i32
    %120 = vector.broadcast %c8_i32_39 : i32 to vector<64x1xi32>
    %121 = arith.cmpi slt, %119, %120 : vector<64x1xi32>
    %122 = arith.andi %117, %121 : vector<64x1xi1>
    %123 = vector.extract_strided_slice %103 {offsets = [0, 0], sizes = [64, 1], strides = [1, 1]} : vector<64x2xf32> to vector<64x1xf32>
    %c3 = arith.constant 3 : index
    %124 = memref.load %arg5[%c3] : memref<50xf32, #tpu.memory_space<smem>>
    %125 = vector.broadcast %124 : f32 to vector<64x1xf32>
    %126 = arith.mulf %123, %125 : vector<64x1xf32>
    %127 = vector.extract_strided_slice %103 {offsets = [0, 1], sizes = [64, 1], strides = [1, 1]} : vector<64x2xf32> to vector<64x1xf32>
    %c28 = arith.constant 28 : index
    %128 = memref.load %arg5[%c28] : memref<50xf32, #tpu.memory_space<smem>>
    %129 = vector.broadcast %128 : f32 to vector<64x1xf32>
    %130 = arith.mulf %127, %129 : vector<64x1xf32>
    %131 = arith.addf %126, %130 : vector<64x1xf32>
    %cst_40 = arith.constant 0.000000e+00 : f32
    %132 = vector.broadcast %cst_40 : f32 to vector<64x1xf32>
    %133 = arith.select %122, %131, %132 : vector<64x1xi1>, vector<64x1xf32>
    %134 = arith.addf %102, %133 : vector<64x1xf32>
    %c14_i32 = arith.constant 14 : i32
    %135 = tpu.dynamic_rotate %1 by %c14_i32 dim 0 : vector<64x2xf32>, i32 -> vector<64x2xf32>
    %c-2_i32_41 = arith.constant -2 : i32
    %136 = vector.broadcast %c-2_i32_41 : i32 to vector<64x1xi32>
    %137 = arith.addi %4, %136 : vector<64x1xi32>
    %c0_i32_42 = arith.constant 0 : i32
    %138 = vector.broadcast %c0_i32_42 : i32 to vector<64x1xi32>
    %139 = arith.cmpi sge, %137, %138 : vector<64x1xi32>
    %c-2_i32_43 = arith.constant -2 : i32
    %140 = vector.broadcast %c-2_i32_43 : i32 to vector<64x1xi32>
    %141 = arith.addi %4, %140 : vector<64x1xi32>
    %c8_i32_44 = arith.constant 8 : i32
    %142 = vector.broadcast %c8_i32_44 : i32 to vector<64x1xi32>
    %143 = arith.cmpi slt, %141, %142 : vector<64x1xi32>
    %144 = arith.andi %139, %143 : vector<64x1xi1>
    %c2_i32 = arith.constant 2 : i32
    %145 = vector.broadcast %c2_i32 : i32 to vector<64x1xi32>
    %146 = arith.addi %5, %145 : vector<64x1xi32>
    %c0_i32_45 = arith.constant 0 : i32
    %147 = vector.broadcast %c0_i32_45 : i32 to vector<64x1xi32>
    %148 = arith.cmpi sge, %146, %147 : vector<64x1xi32>
    %149 = arith.andi %144, %148 : vector<64x1xi1>
    %c2_i32_46 = arith.constant 2 : i32
    %150 = vector.broadcast %c2_i32_46 : i32 to vector<64x1xi32>
    %151 = arith.addi %5, %150 : vector<64x1xi32>
    %c8_i32_47 = arith.constant 8 : i32
    %152 = vector.broadcast %c8_i32_47 : i32 to vector<64x1xi32>
    %153 = arith.cmpi slt, %151, %152 : vector<64x1xi32>
    %154 = arith.andi %149, %153 : vector<64x1xi1>
    %155 = vector.extract_strided_slice %135 {offsets = [0, 0], sizes = [64, 1], strides = [1, 1]} : vector<64x2xf32> to vector<64x1xf32>
    %c4 = arith.constant 4 : index
    %156 = memref.load %arg5[%c4] : memref<50xf32, #tpu.memory_space<smem>>
    %157 = vector.broadcast %156 : f32 to vector<64x1xf32>
    %158 = arith.mulf %155, %157 : vector<64x1xf32>
    %159 = vector.extract_strided_slice %135 {offsets = [0, 1], sizes = [64, 1], strides = [1, 1]} : vector<64x2xf32> to vector<64x1xf32>
    %c29 = arith.constant 29 : index
    %160 = memref.load %arg5[%c29] : memref<50xf32, #tpu.memory_space<smem>>
    %161 = vector.broadcast %160 : f32 to vector<64x1xf32>
    %162 = arith.mulf %159, %161 : vector<64x1xf32>
    %163 = arith.addf %158, %162 : vector<64x1xf32>
    %cst_48 = arith.constant 0.000000e+00 : f32
    %164 = vector.broadcast %cst_48 : f32 to vector<64x1xf32>
    %165 = arith.select %154, %163, %164 : vector<64x1xi1>, vector<64x1xf32>
    %166 = arith.addf %134, %165 : vector<64x1xf32>
    %c10_i32 = arith.constant 10 : i32
    %167 = tpu.dynamic_rotate %1 by %c10_i32 dim 0 : vector<64x2xf32>, i32 -> vector<64x2xf32>
    %c-1_i32_49 = arith.constant -1 : i32
    %168 = vector.broadcast %c-1_i32_49 : i32 to vector<64x1xi32>
    %169 = arith.addi %4, %168 : vector<64x1xi32>
    %c0_i32_50 = arith.constant 0 : i32
    %170 = vector.broadcast %c0_i32_50 : i32 to vector<64x1xi32>
    %171 = arith.cmpi sge, %169, %170 : vector<64x1xi32>
    %c-1_i32_51 = arith.constant -1 : i32
    %172 = vector.broadcast %c-1_i32_51 : i32 to vector<64x1xi32>
    %173 = arith.addi %4, %172 : vector<64x1xi32>
    %c8_i32_52 = arith.constant 8 : i32
    %174 = vector.broadcast %c8_i32_52 : i32 to vector<64x1xi32>
    %175 = arith.cmpi slt, %173, %174 : vector<64x1xi32>
    %176 = arith.andi %171, %175 : vector<64x1xi1>
    %c-2_i32_53 = arith.constant -2 : i32
    %177 = vector.broadcast %c-2_i32_53 : i32 to vector<64x1xi32>
    %178 = arith.addi %5, %177 : vector<64x1xi32>
    %c0_i32_54 = arith.constant 0 : i32
    %179 = vector.broadcast %c0_i32_54 : i32 to vector<64x1xi32>
    %180 = arith.cmpi sge, %178, %179 : vector<64x1xi32>
    %181 = arith.andi %176, %180 : vector<64x1xi1>
    %c-2_i32_55 = arith.constant -2 : i32
    %182 = vector.broadcast %c-2_i32_55 : i32 to vector<64x1xi32>
    %183 = arith.addi %5, %182 : vector<64x1xi32>
    %c8_i32_56 = arith.constant 8 : i32
    %184 = vector.broadcast %c8_i32_56 : i32 to vector<64x1xi32>
    %185 = arith.cmpi slt, %183, %184 : vector<64x1xi32>
    %186 = arith.andi %181, %185 : vector<64x1xi1>
    %187 = vector.extract_strided_slice %167 {offsets = [0, 0], sizes = [64, 1], strides = [1, 1]} : vector<64x2xf32> to vector<64x1xf32>
    %c5 = arith.constant 5 : index
    %188 = memref.load %arg5[%c5] : memref<50xf32, #tpu.memory_space<smem>>
    %189 = vector.broadcast %188 : f32 to vector<64x1xf32>
    %190 = arith.mulf %187, %189 : vector<64x1xf32>
    %191 = vector.extract_strided_slice %167 {offsets = [0, 1], sizes = [64, 1], strides = [1, 1]} : vector<64x2xf32> to vector<64x1xf32>
    %c30 = arith.constant 30 : index
    %192 = memref.load %arg5[%c30] : memref<50xf32, #tpu.memory_space<smem>>
    %193 = vector.broadcast %192 : f32 to vector<64x1xf32>
    %194 = arith.mulf %191, %193 : vector<64x1xf32>
    %195 = arith.addf %190, %194 : vector<64x1xf32>
    %cst_57 = arith.constant 0.000000e+00 : f32
    %196 = vector.broadcast %cst_57 : f32 to vector<64x1xf32>
    %197 = arith.select %186, %195, %196 : vector<64x1xi1>, vector<64x1xf32>
    %198 = arith.addf %166, %197 : vector<64x1xf32>
    %c9_i32 = arith.constant 9 : i32
    %199 = tpu.dynamic_rotate %1 by %c9_i32 dim 0 : vector<64x2xf32>, i32 -> vector<64x2xf32>
    %c-1_i32_58 = arith.constant -1 : i32
    %200 = vector.broadcast %c-1_i32_58 : i32 to vector<64x1xi32>
    %201 = arith.addi %4, %200 : vector<64x1xi32>
    %c0_i32_59 = arith.constant 0 : i32
    %202 = vector.broadcast %c0_i32_59 : i32 to vector<64x1xi32>
    %203 = arith.cmpi sge, %201, %202 : vector<64x1xi32>
    %c-1_i32_60 = arith.constant -1 : i32
    %204 = vector.broadcast %c-1_i32_60 : i32 to vector<64x1xi32>
    %205 = arith.addi %4, %204 : vector<64x1xi32>
    %c8_i32_61 = arith.constant 8 : i32
    %206 = vector.broadcast %c8_i32_61 : i32 to vector<64x1xi32>
    %207 = arith.cmpi slt, %205, %206 : vector<64x1xi32>
    %208 = arith.andi %203, %207 : vector<64x1xi1>
    %c-1_i32_62 = arith.constant -1 : i32
    %209 = vector.broadcast %c-1_i32_62 : i32 to vector<64x1xi32>
    %210 = arith.addi %5, %209 : vector<64x1xi32>
    %c0_i32_63 = arith.constant 0 : i32
    %211 = vector.broadcast %c0_i32_63 : i32 to vector<64x1xi32>
    %212 = arith.cmpi sge, %210, %211 : vector<64x1xi32>
    %213 = arith.andi %208, %212 : vector<64x1xi1>
    %c-1_i32_64 = arith.constant -1 : i32
    %214 = vector.broadcast %c-1_i32_64 : i32 to vector<64x1xi32>
    %215 = arith.addi %5, %214 : vector<64x1xi32>
    %c8_i32_65 = arith.constant 8 : i32
    %216 = vector.broadcast %c8_i32_65 : i32 to vector<64x1xi32>
    %217 = arith.cmpi slt, %215, %216 : vector<64x1xi32>
    %218 = arith.andi %213, %217 : vector<64x1xi1>
    %219 = vector.extract_strided_slice %199 {offsets = [0, 0], sizes = [64, 1], strides = [1, 1]} : vector<64x2xf32> to vector<64x1xf32>
    %c6 = arith.constant 6 : index
    %220 = memref.load %arg5[%c6] : memref<50xf32, #tpu.memory_space<smem>>
    %221 = vector.broadcast %220 : f32 to vector<64x1xf32>
    %222 = arith.mulf %219, %221 : vector<64x1xf32>
    %223 = vector.extract_strided_slice %199 {offsets = [0, 1], sizes = [64, 1], strides = [1, 1]} : vector<64x2xf32> to vector<64x1xf32>
    %c31 = arith.constant 31 : index
    %224 = memref.load %arg5[%c31] : memref<50xf32, #tpu.memory_space<smem>>
    %225 = vector.broadcast %224 : f32 to vector<64x1xf32>
    %226 = arith.mulf %223, %225 : vector<64x1xf32>
    %227 = arith.addf %222, %226 : vector<64x1xf32>
    %cst_66 = arith.constant 0.000000e+00 : f32
    %228 = vector.broadcast %cst_66 : f32 to vector<64x1xf32>
    %229 = arith.select %218, %227, %228 : vector<64x1xi1>, vector<64x1xf32>
    %230 = arith.addf %198, %229 : vector<64x1xf32>
    %c8_i32_67 = arith.constant 8 : i32
    %231 = tpu.dynamic_rotate %1 by %c8_i32_67 dim 0 : vector<64x2xf32>, i32 -> vector<64x2xf32>
    %c-1_i32_68 = arith.constant -1 : i32
    %232 = vector.broadcast %c-1_i32_68 : i32 to vector<64x1xi32>
    %233 = arith.addi %4, %232 : vector<64x1xi32>
    %c0_i32_69 = arith.constant 0 : i32
    %234 = vector.broadcast %c0_i32_69 : i32 to vector<64x1xi32>
    %235 = arith.cmpi sge, %233, %234 : vector<64x1xi32>
    %c-1_i32_70 = arith.constant -1 : i32
    %236 = vector.broadcast %c-1_i32_70 : i32 to vector<64x1xi32>
    %237 = arith.addi %4, %236 : vector<64x1xi32>
    %c8_i32_71 = arith.constant 8 : i32
    %238 = vector.broadcast %c8_i32_71 : i32 to vector<64x1xi32>
    %239 = arith.cmpi slt, %237, %238 : vector<64x1xi32>
    %240 = arith.andi %235, %239 : vector<64x1xi1>
    %c0_i32_72 = arith.constant 0 : i32
    %241 = vector.broadcast %c0_i32_72 : i32 to vector<64x1xi32>
    %242 = arith.addi %5, %241 : vector<64x1xi32>
    %c0_i32_73 = arith.constant 0 : i32
    %243 = vector.broadcast %c0_i32_73 : i32 to vector<64x1xi32>
    %244 = arith.cmpi sge, %242, %243 : vector<64x1xi32>
    %245 = arith.andi %240, %244 : vector<64x1xi1>
    %c0_i32_74 = arith.constant 0 : i32
    %246 = vector.broadcast %c0_i32_74 : i32 to vector<64x1xi32>
    %247 = arith.addi %5, %246 : vector<64x1xi32>
    %c8_i32_75 = arith.constant 8 : i32
    %248 = vector.broadcast %c8_i32_75 : i32 to vector<64x1xi32>
    %249 = arith.cmpi slt, %247, %248 : vector<64x1xi32>
    %250 = arith.andi %245, %249 : vector<64x1xi1>
    %251 = vector.extract_strided_slice %231 {offsets = [0, 0], sizes = [64, 1], strides = [1, 1]} : vector<64x2xf32> to vector<64x1xf32>
    %c7 = arith.constant 7 : index
    %252 = memref.load %arg5[%c7] : memref<50xf32, #tpu.memory_space<smem>>
    %253 = vector.broadcast %252 : f32 to vector<64x1xf32>
    %254 = arith.mulf %251, %253 : vector<64x1xf32>
    %255 = vector.extract_strided_slice %231 {offsets = [0, 1], sizes = [64, 1], strides = [1, 1]} : vector<64x2xf32> to vector<64x1xf32>
    %c32 = arith.constant 32 : index
    %256 = memref.load %arg5[%c32] : memref<50xf32, #tpu.memory_space<smem>>
    %257 = vector.broadcast %256 : f32 to vector<64x1xf32>
    %258 = arith.mulf %255, %257 : vector<64x1xf32>
    %259 = arith.addf %254, %258 : vector<64x1xf32>
    %cst_76 = arith.constant 0.000000e+00 : f32
    %260 = vector.broadcast %cst_76 : f32 to vector<64x1xf32>
    %261 = arith.select %250, %259, %260 : vector<64x1xi1>, vector<64x1xf32>
    %262 = arith.addf %230, %261 : vector<64x1xf32>
    %c7_i32 = arith.constant 7 : i32
    %263 = tpu.dynamic_rotate %1 by %c7_i32 dim 0 : vector<64x2xf32>, i32 -> vector<64x2xf32>
    %c-1_i32_77 = arith.constant -1 : i32
    %264 = vector.broadcast %c-1_i32_77 : i32 to vector<64x1xi32>
    %265 = arith.addi %4, %264 : vector<64x1xi32>
    %c0_i32_78 = arith.constant 0 : i32
    %266 = vector.broadcast %c0_i32_78 : i32 to vector<64x1xi32>
    %267 = arith.cmpi sge, %265, %266 : vector<64x1xi32>
    %c-1_i32_79 = arith.constant -1 : i32
    %268 = vector.broadcast %c-1_i32_79 : i32 to vector<64x1xi32>
    %269 = arith.addi %4, %268 : vector<64x1xi32>
    %c8_i32_80 = arith.constant 8 : i32
    %270 = vector.broadcast %c8_i32_80 : i32 to vector<64x1xi32>
    %271 = arith.cmpi slt, %269, %270 : vector<64x1xi32>
    %272 = arith.andi %267, %271 : vector<64x1xi1>
    %c1_i32_81 = arith.constant 1 : i32
    %273 = vector.broadcast %c1_i32_81 : i32 to vector<64x1xi32>
    %274 = arith.addi %5, %273 : vector<64x1xi32>
    %c0_i32_82 = arith.constant 0 : i32
    %275 = vector.broadcast %c0_i32_82 : i32 to vector<64x1xi32>
    %276 = arith.cmpi sge, %274, %275 : vector<64x1xi32>
    %277 = arith.andi %272, %276 : vector<64x1xi1>
    %c1_i32_83 = arith.constant 1 : i32
    %278 = vector.broadcast %c1_i32_83 : i32 to vector<64x1xi32>
    %279 = arith.addi %5, %278 : vector<64x1xi32>
    %c8_i32_84 = arith.constant 8 : i32
    %280 = vector.broadcast %c8_i32_84 : i32 to vector<64x1xi32>
    %281 = arith.cmpi slt, %279, %280 : vector<64x1xi32>
    %282 = arith.andi %277, %281 : vector<64x1xi1>
    %283 = vector.extract_strided_slice %263 {offsets = [0, 0], sizes = [64, 1], strides = [1, 1]} : vector<64x2xf32> to vector<64x1xf32>
    %c8 = arith.constant 8 : index
    %284 = memref.load %arg5[%c8] : memref<50xf32, #tpu.memory_space<smem>>
    %285 = vector.broadcast %284 : f32 to vector<64x1xf32>
    %286 = arith.mulf %283, %285 : vector<64x1xf32>
    %287 = vector.extract_strided_slice %263 {offsets = [0, 1], sizes = [64, 1], strides = [1, 1]} : vector<64x2xf32> to vector<64x1xf32>
    %c33 = arith.constant 33 : index
    %288 = memref.load %arg5[%c33] : memref<50xf32, #tpu.memory_space<smem>>
    %289 = vector.broadcast %288 : f32 to vector<64x1xf32>
    %290 = arith.mulf %287, %289 : vector<64x1xf32>
    %291 = arith.addf %286, %290 : vector<64x1xf32>
    %cst_85 = arith.constant 0.000000e+00 : f32
    %292 = vector.broadcast %cst_85 : f32 to vector<64x1xf32>
    %293 = arith.select %282, %291, %292 : vector<64x1xi1>, vector<64x1xf32>
    %294 = arith.addf %262, %293 : vector<64x1xf32>
    %c6_i32 = arith.constant 6 : i32
    %295 = tpu.dynamic_rotate %1 by %c6_i32 dim 0 : vector<64x2xf32>, i32 -> vector<64x2xf32>
    %c-1_i32_86 = arith.constant -1 : i32
    %296 = vector.broadcast %c-1_i32_86 : i32 to vector<64x1xi32>
    %297 = arith.addi %4, %296 : vector<64x1xi32>
    %c0_i32_87 = arith.constant 0 : i32
    %298 = vector.broadcast %c0_i32_87 : i32 to vector<64x1xi32>
    %299 = arith.cmpi sge, %297, %298 : vector<64x1xi32>
    %c-1_i32_88 = arith.constant -1 : i32
    %300 = vector.broadcast %c-1_i32_88 : i32 to vector<64x1xi32>
    %301 = arith.addi %4, %300 : vector<64x1xi32>
    %c8_i32_89 = arith.constant 8 : i32
    %302 = vector.broadcast %c8_i32_89 : i32 to vector<64x1xi32>
    %303 = arith.cmpi slt, %301, %302 : vector<64x1xi32>
    %304 = arith.andi %299, %303 : vector<64x1xi1>
    %c2_i32_90 = arith.constant 2 : i32
    %305 = vector.broadcast %c2_i32_90 : i32 to vector<64x1xi32>
    %306 = arith.addi %5, %305 : vector<64x1xi32>
    %c0_i32_91 = arith.constant 0 : i32
    %307 = vector.broadcast %c0_i32_91 : i32 to vector<64x1xi32>
    %308 = arith.cmpi sge, %306, %307 : vector<64x1xi32>
    %309 = arith.andi %304, %308 : vector<64x1xi1>
    %c2_i32_92 = arith.constant 2 : i32
    %310 = vector.broadcast %c2_i32_92 : i32 to vector<64x1xi32>
    %311 = arith.addi %5, %310 : vector<64x1xi32>
    %c8_i32_93 = arith.constant 8 : i32
    %312 = vector.broadcast %c8_i32_93 : i32 to vector<64x1xi32>
    %313 = arith.cmpi slt, %311, %312 : vector<64x1xi32>
    %314 = arith.andi %309, %313 : vector<64x1xi1>
    %315 = vector.extract_strided_slice %295 {offsets = [0, 0], sizes = [64, 1], strides = [1, 1]} : vector<64x2xf32> to vector<64x1xf32>
    %c9 = arith.constant 9 : index
    %316 = memref.load %arg5[%c9] : memref<50xf32, #tpu.memory_space<smem>>
    %317 = vector.broadcast %316 : f32 to vector<64x1xf32>
    %318 = arith.mulf %315, %317 : vector<64x1xf32>
    %319 = vector.extract_strided_slice %295 {offsets = [0, 1], sizes = [64, 1], strides = [1, 1]} : vector<64x2xf32> to vector<64x1xf32>
    %c34 = arith.constant 34 : index
    %320 = memref.load %arg5[%c34] : memref<50xf32, #tpu.memory_space<smem>>
    %321 = vector.broadcast %320 : f32 to vector<64x1xf32>
    %322 = arith.mulf %319, %321 : vector<64x1xf32>
    %323 = arith.addf %318, %322 : vector<64x1xf32>
    %cst_94 = arith.constant 0.000000e+00 : f32
    %324 = vector.broadcast %cst_94 : f32 to vector<64x1xf32>
    %325 = arith.select %314, %323, %324 : vector<64x1xi1>, vector<64x1xf32>
    %326 = arith.addf %294, %325 : vector<64x1xf32>
    %c2_i32_95 = arith.constant 2 : i32
    %327 = tpu.dynamic_rotate %1 by %c2_i32_95 dim 0 : vector<64x2xf32>, i32 -> vector<64x2xf32>
    %c0_i32_96 = arith.constant 0 : i32
    %328 = vector.broadcast %c0_i32_96 : i32 to vector<64x1xi32>
    %329 = arith.addi %4, %328 : vector<64x1xi32>
    %c0_i32_97 = arith.constant 0 : i32
    %330 = vector.broadcast %c0_i32_97 : i32 to vector<64x1xi32>
    %331 = arith.cmpi sge, %329, %330 : vector<64x1xi32>
    %c0_i32_98 = arith.constant 0 : i32
    %332 = vector.broadcast %c0_i32_98 : i32 to vector<64x1xi32>
    %333 = arith.addi %4, %332 : vector<64x1xi32>
    %c8_i32_99 = arith.constant 8 : i32
    %334 = vector.broadcast %c8_i32_99 : i32 to vector<64x1xi32>
    %335 = arith.cmpi slt, %333, %334 : vector<64x1xi32>
    %336 = arith.andi %331, %335 : vector<64x1xi1>
    %c-2_i32_100 = arith.constant -2 : i32
    %337 = vector.broadcast %c-2_i32_100 : i32 to vector<64x1xi32>
    %338 = arith.addi %5, %337 : vector<64x1xi32>
    %c0_i32_101 = arith.constant 0 : i32
    %339 = vector.broadcast %c0_i32_101 : i32 to vector<64x1xi32>
    %340 = arith.cmpi sge, %338, %339 : vector<64x1xi32>
    %341 = arith.andi %336, %340 : vector<64x1xi1>
    %c-2_i32_102 = arith.constant -2 : i32
    %342 = vector.broadcast %c-2_i32_102 : i32 to vector<64x1xi32>
    %343 = arith.addi %5, %342 : vector<64x1xi32>
    %c8_i32_103 = arith.constant 8 : i32
    %344 = vector.broadcast %c8_i32_103 : i32 to vector<64x1xi32>
    %345 = arith.cmpi slt, %343, %344 : vector<64x1xi32>
    %346 = arith.andi %341, %345 : vector<64x1xi1>
    %347 = vector.extract_strided_slice %327 {offsets = [0, 0], sizes = [64, 1], strides = [1, 1]} : vector<64x2xf32> to vector<64x1xf32>
    %c10 = arith.constant 10 : index
    %348 = memref.load %arg5[%c10] : memref<50xf32, #tpu.memory_space<smem>>
    %349 = vector.broadcast %348 : f32 to vector<64x1xf32>
    %350 = arith.mulf %347, %349 : vector<64x1xf32>
    %351 = vector.extract_strided_slice %327 {offsets = [0, 1], sizes = [64, 1], strides = [1, 1]} : vector<64x2xf32> to vector<64x1xf32>
    %c35 = arith.constant 35 : index
    %352 = memref.load %arg5[%c35] : memref<50xf32, #tpu.memory_space<smem>>
    %353 = vector.broadcast %352 : f32 to vector<64x1xf32>
    %354 = arith.mulf %351, %353 : vector<64x1xf32>
    %355 = arith.addf %350, %354 : vector<64x1xf32>
    %cst_104 = arith.constant 0.000000e+00 : f32
    %356 = vector.broadcast %cst_104 : f32 to vector<64x1xf32>
    %357 = arith.select %346, %355, %356 : vector<64x1xi1>, vector<64x1xf32>
    %358 = arith.addf %326, %357 : vector<64x1xf32>
    %c1_i32_105 = arith.constant 1 : i32
    %359 = tpu.dynamic_rotate %1 by %c1_i32_105 dim 0 : vector<64x2xf32>, i32 -> vector<64x2xf32>
    %c0_i32_106 = arith.constant 0 : i32
    %360 = vector.broadcast %c0_i32_106 : i32 to vector<64x1xi32>
    %361 = arith.addi %4, %360 : vector<64x1xi32>
    %c0_i32_107 = arith.constant 0 : i32
    %362 = vector.broadcast %c0_i32_107 : i32 to vector<64x1xi32>
    %363 = arith.cmpi sge, %361, %362 : vector<64x1xi32>
    %c0_i32_108 = arith.constant 0 : i32
    %364 = vector.broadcast %c0_i32_108 : i32 to vector<64x1xi32>
    %365 = arith.addi %4, %364 : vector<64x1xi32>
    %c8_i32_109 = arith.constant 8 : i32
    %366 = vector.broadcast %c8_i32_109 : i32 to vector<64x1xi32>
    %367 = arith.cmpi slt, %365, %366 : vector<64x1xi32>
    %368 = arith.andi %363, %367 : vector<64x1xi1>
    %c-1_i32_110 = arith.constant -1 : i32
    %369 = vector.broadcast %c-1_i32_110 : i32 to vector<64x1xi32>
    %370 = arith.addi %5, %369 : vector<64x1xi32>
    %c0_i32_111 = arith.constant 0 : i32
    %371 = vector.broadcast %c0_i32_111 : i32 to vector<64x1xi32>
    %372 = arith.cmpi sge, %370, %371 : vector<64x1xi32>
    %373 = arith.andi %368, %372 : vector<64x1xi1>
    %c-1_i32_112 = arith.constant -1 : i32
    %374 = vector.broadcast %c-1_i32_112 : i32 to vector<64x1xi32>
    %375 = arith.addi %5, %374 : vector<64x1xi32>
    %c8_i32_113 = arith.constant 8 : i32
    %376 = vector.broadcast %c8_i32_113 : i32 to vector<64x1xi32>
    %377 = arith.cmpi slt, %375, %376 : vector<64x1xi32>
    %378 = arith.andi %373, %377 : vector<64x1xi1>
    %379 = vector.extract_strided_slice %359 {offsets = [0, 0], sizes = [64, 1], strides = [1, 1]} : vector<64x2xf32> to vector<64x1xf32>
    %c11 = arith.constant 11 : index
    %380 = memref.load %arg5[%c11] : memref<50xf32, #tpu.memory_space<smem>>
    %381 = vector.broadcast %380 : f32 to vector<64x1xf32>
    %382 = arith.mulf %379, %381 : vector<64x1xf32>
    %383 = vector.extract_strided_slice %359 {offsets = [0, 1], sizes = [64, 1], strides = [1, 1]} : vector<64x2xf32> to vector<64x1xf32>
    %c36 = arith.constant 36 : index
    %384 = memref.load %arg5[%c36] : memref<50xf32, #tpu.memory_space<smem>>
    %385 = vector.broadcast %384 : f32 to vector<64x1xf32>
    %386 = arith.mulf %383, %385 : vector<64x1xf32>
    %387 = arith.addf %382, %386 : vector<64x1xf32>
    %cst_114 = arith.constant 0.000000e+00 : f32
    %388 = vector.broadcast %cst_114 : f32 to vector<64x1xf32>
    %389 = arith.select %378, %387, %388 : vector<64x1xi1>, vector<64x1xf32>
    %390 = arith.addf %358, %389 : vector<64x1xf32>
    %c0_i32_115 = arith.constant 0 : i32
    %391 = vector.broadcast %c0_i32_115 : i32 to vector<64x1xi32>
    %392 = arith.addi %4, %391 : vector<64x1xi32>
    %c0_i32_116 = arith.constant 0 : i32
    %393 = vector.broadcast %c0_i32_116 : i32 to vector<64x1xi32>
    %394 = arith.cmpi sge, %392, %393 : vector<64x1xi32>
    %c0_i32_117 = arith.constant 0 : i32
    %395 = vector.broadcast %c0_i32_117 : i32 to vector<64x1xi32>
    %396 = arith.addi %4, %395 : vector<64x1xi32>
    %c8_i32_118 = arith.constant 8 : i32
    %397 = vector.broadcast %c8_i32_118 : i32 to vector<64x1xi32>
    %398 = arith.cmpi slt, %396, %397 : vector<64x1xi32>
    %399 = arith.andi %394, %398 : vector<64x1xi1>
    %c0_i32_119 = arith.constant 0 : i32
    %400 = vector.broadcast %c0_i32_119 : i32 to vector<64x1xi32>
    %401 = arith.addi %5, %400 : vector<64x1xi32>
    %c0_i32_120 = arith.constant 0 : i32
    %402 = vector.broadcast %c0_i32_120 : i32 to vector<64x1xi32>
    %403 = arith.cmpi sge, %401, %402 : vector<64x1xi32>
    %404 = arith.andi %399, %403 : vector<64x1xi1>
    %c0_i32_121 = arith.constant 0 : i32
    %405 = vector.broadcast %c0_i32_121 : i32 to vector<64x1xi32>
    %406 = arith.addi %5, %405 : vector<64x1xi32>
    %c8_i32_122 = arith.constant 8 : i32
    %407 = vector.broadcast %c8_i32_122 : i32 to vector<64x1xi32>
    %408 = arith.cmpi slt, %406, %407 : vector<64x1xi32>
    %409 = arith.andi %404, %408 : vector<64x1xi1>
    %410 = vector.extract_strided_slice %1 {offsets = [0, 0], sizes = [64, 1], strides = [1, 1]} : vector<64x2xf32> to vector<64x1xf32>
    %c12 = arith.constant 12 : index
    %411 = memref.load %arg5[%c12] : memref<50xf32, #tpu.memory_space<smem>>
    %412 = vector.broadcast %411 : f32 to vector<64x1xf32>
    %413 = arith.mulf %410, %412 : vector<64x1xf32>
    %414 = vector.extract_strided_slice %1 {offsets = [0, 1], sizes = [64, 1], strides = [1, 1]} : vector<64x2xf32> to vector<64x1xf32>
    %c37 = arith.constant 37 : index
    %415 = memref.load %arg5[%c37] : memref<50xf32, #tpu.memory_space<smem>>
    %416 = vector.broadcast %415 : f32 to vector<64x1xf32>
    %417 = arith.mulf %414, %416 : vector<64x1xf32>
    %418 = arith.addf %413, %417 : vector<64x1xf32>
    %cst_123 = arith.constant 0.000000e+00 : f32
    %419 = vector.broadcast %cst_123 : f32 to vector<64x1xf32>
    %420 = arith.select %409, %418, %419 : vector<64x1xi1>, vector<64x1xf32>
    %421 = arith.addf %390, %420 : vector<64x1xf32>
    %c63_i32 = arith.constant 63 : i32
    %422 = tpu.dynamic_rotate %1 by %c63_i32 dim 0 : vector<64x2xf32>, i32 -> vector<64x2xf32>
    %c0_i32_124 = arith.constant 0 : i32
    %423 = vector.broadcast %c0_i32_124 : i32 to vector<64x1xi32>
    %424 = arith.addi %4, %423 : vector<64x1xi32>
    %c0_i32_125 = arith.constant 0 : i32
    %425 = vector.broadcast %c0_i32_125 : i32 to vector<64x1xi32>
    %426 = arith.cmpi sge, %424, %425 : vector<64x1xi32>
    %c0_i32_126 = arith.constant 0 : i32
    %427 = vector.broadcast %c0_i32_126 : i32 to vector<64x1xi32>
    %428 = arith.addi %4, %427 : vector<64x1xi32>
    %c8_i32_127 = arith.constant 8 : i32
    %429 = vector.broadcast %c8_i32_127 : i32 to vector<64x1xi32>
    %430 = arith.cmpi slt, %428, %429 : vector<64x1xi32>
    %431 = arith.andi %426, %430 : vector<64x1xi1>
    %c1_i32_128 = arith.constant 1 : i32
    %432 = vector.broadcast %c1_i32_128 : i32 to vector<64x1xi32>
    %433 = arith.addi %5, %432 : vector<64x1xi32>
    %c0_i32_129 = arith.constant 0 : i32
    %434 = vector.broadcast %c0_i32_129 : i32 to vector<64x1xi32>
    %435 = arith.cmpi sge, %433, %434 : vector<64x1xi32>
    %436 = arith.andi %431, %435 : vector<64x1xi1>
    %c1_i32_130 = arith.constant 1 : i32
    %437 = vector.broadcast %c1_i32_130 : i32 to vector<64x1xi32>
    %438 = arith.addi %5, %437 : vector<64x1xi32>
    %c8_i32_131 = arith.constant 8 : i32
    %439 = vector.broadcast %c8_i32_131 : i32 to vector<64x1xi32>
    %440 = arith.cmpi slt, %438, %439 : vector<64x1xi32>
    %441 = arith.andi %436, %440 : vector<64x1xi1>
    %442 = vector.extract_strided_slice %422 {offsets = [0, 0], sizes = [64, 1], strides = [1, 1]} : vector<64x2xf32> to vector<64x1xf32>
    %c13 = arith.constant 13 : index
    %443 = memref.load %arg5[%c13] : memref<50xf32, #tpu.memory_space<smem>>
    %444 = vector.broadcast %443 : f32 to vector<64x1xf32>
    %445 = arith.mulf %442, %444 : vector<64x1xf32>
    %446 = vector.extract_strided_slice %422 {offsets = [0, 1], sizes = [64, 1], strides = [1, 1]} : vector<64x2xf32> to vector<64x1xf32>
    %c38 = arith.constant 38 : index
    %447 = memref.load %arg5[%c38] : memref<50xf32, #tpu.memory_space<smem>>
    %448 = vector.broadcast %447 : f32 to vector<64x1xf32>
    %449 = arith.mulf %446, %448 : vector<64x1xf32>
    %450 = arith.addf %445, %449 : vector<64x1xf32>
    %cst_132 = arith.constant 0.000000e+00 : f32
    %451 = vector.broadcast %cst_132 : f32 to vector<64x1xf32>
    %452 = arith.select %441, %450, %451 : vector<64x1xi1>, vector<64x1xf32>
    %453 = arith.addf %421, %452 : vector<64x1xf32>
    %c62_i32 = arith.constant 62 : i32
    %454 = tpu.dynamic_rotate %1 by %c62_i32 dim 0 : vector<64x2xf32>, i32 -> vector<64x2xf32>
    %c0_i32_133 = arith.constant 0 : i32
    %455 = vector.broadcast %c0_i32_133 : i32 to vector<64x1xi32>
    %456 = arith.addi %4, %455 : vector<64x1xi32>
    %c0_i32_134 = arith.constant 0 : i32
    %457 = vector.broadcast %c0_i32_134 : i32 to vector<64x1xi32>
    %458 = arith.cmpi sge, %456, %457 : vector<64x1xi32>
    %c0_i32_135 = arith.constant 0 : i32
    %459 = vector.broadcast %c0_i32_135 : i32 to vector<64x1xi32>
    %460 = arith.addi %4, %459 : vector<64x1xi32>
    %c8_i32_136 = arith.constant 8 : i32
    %461 = vector.broadcast %c8_i32_136 : i32 to vector<64x1xi32>
    %462 = arith.cmpi slt, %460, %461 : vector<64x1xi32>
    %463 = arith.andi %458, %462 : vector<64x1xi1>
    %c2_i32_137 = arith.constant 2 : i32
    %464 = vector.broadcast %c2_i32_137 : i32 to vector<64x1xi32>
    %465 = arith.addi %5, %464 : vector<64x1xi32>
    %c0_i32_138 = arith.constant 0 : i32
    %466 = vector.broadcast %c0_i32_138 : i32 to vector<64x1xi32>
    %467 = arith.cmpi sge, %465, %466 : vector<64x1xi32>
    %468 = arith.andi %463, %467 : vector<64x1xi1>
    %c2_i32_139 = arith.constant 2 : i32
    %469 = vector.broadcast %c2_i32_139 : i32 to vector<64x1xi32>
    %470 = arith.addi %5, %469 : vector<64x1xi32>
    %c8_i32_140 = arith.constant 8 : i32
    %471 = vector.broadcast %c8_i32_140 : i32 to vector<64x1xi32>
    %472 = arith.cmpi slt, %470, %471 : vector<64x1xi32>
    %473 = arith.andi %468, %472 : vector<64x1xi1>
    %474 = vector.extract_strided_slice %454 {offsets = [0, 0], sizes = [64, 1], strides = [1, 1]} : vector<64x2xf32> to vector<64x1xf32>
    %c14 = arith.constant 14 : index
    %475 = memref.load %arg5[%c14] : memref<50xf32, #tpu.memory_space<smem>>
    %476 = vector.broadcast %475 : f32 to vector<64x1xf32>
    %477 = arith.mulf %474, %476 : vector<64x1xf32>
    %478 = vector.extract_strided_slice %454 {offsets = [0, 1], sizes = [64, 1], strides = [1, 1]} : vector<64x2xf32> to vector<64x1xf32>
    %c39 = arith.constant 39 : index
    %479 = memref.load %arg5[%c39] : memref<50xf32, #tpu.memory_space<smem>>
    %480 = vector.broadcast %479 : f32 to vector<64x1xf32>
    %481 = arith.mulf %478, %480 : vector<64x1xf32>
    %482 = arith.addf %477, %481 : vector<64x1xf32>
    %cst_141 = arith.constant 0.000000e+00 : f32
    %483 = vector.broadcast %cst_141 : f32 to vector<64x1xf32>
    %484 = arith.select %473, %482, %483 : vector<64x1xi1>, vector<64x1xf32>
    %485 = arith.addf %453, %484 : vector<64x1xf32>
    %c58_i32 = arith.constant 58 : i32
    %486 = tpu.dynamic_rotate %1 by %c58_i32 dim 0 : vector<64x2xf32>, i32 -> vector<64x2xf32>
    %c1_i32_142 = arith.constant 1 : i32
    %487 = vector.broadcast %c1_i32_142 : i32 to vector<64x1xi32>
    %488 = arith.addi %4, %487 : vector<64x1xi32>
    %c0_i32_143 = arith.constant 0 : i32
    %489 = vector.broadcast %c0_i32_143 : i32 to vector<64x1xi32>
    %490 = arith.cmpi sge, %488, %489 : vector<64x1xi32>
    %c1_i32_144 = arith.constant 1 : i32
    %491 = vector.broadcast %c1_i32_144 : i32 to vector<64x1xi32>
    %492 = arith.addi %4, %491 : vector<64x1xi32>
    %c8_i32_145 = arith.constant 8 : i32
    %493 = vector.broadcast %c8_i32_145 : i32 to vector<64x1xi32>
    %494 = arith.cmpi slt, %492, %493 : vector<64x1xi32>
    %495 = arith.andi %490, %494 : vector<64x1xi1>
    %c-2_i32_146 = arith.constant -2 : i32
    %496 = vector.broadcast %c-2_i32_146 : i32 to vector<64x1xi32>
    %497 = arith.addi %5, %496 : vector<64x1xi32>
    %c0_i32_147 = arith.constant 0 : i32
    %498 = vector.broadcast %c0_i32_147 : i32 to vector<64x1xi32>
    %499 = arith.cmpi sge, %497, %498 : vector<64x1xi32>
    %500 = arith.andi %495, %499 : vector<64x1xi1>
    %c-2_i32_148 = arith.constant -2 : i32
    %501 = vector.broadcast %c-2_i32_148 : i32 to vector<64x1xi32>
    %502 = arith.addi %5, %501 : vector<64x1xi32>
    %c8_i32_149 = arith.constant 8 : i32
    %503 = vector.broadcast %c8_i32_149 : i32 to vector<64x1xi32>
    %504 = arith.cmpi slt, %502, %503 : vector<64x1xi32>
    %505 = arith.andi %500, %504 : vector<64x1xi1>
    %506 = vector.extract_strided_slice %486 {offsets = [0, 0], sizes = [64, 1], strides = [1, 1]} : vector<64x2xf32> to vector<64x1xf32>
    %c15 = arith.constant 15 : index
    %507 = memref.load %arg5[%c15] : memref<50xf32, #tpu.memory_space<smem>>
    %508 = vector.broadcast %507 : f32 to vector<64x1xf32>
    %509 = arith.mulf %506, %508 : vector<64x1xf32>
    %510 = vector.extract_strided_slice %486 {offsets = [0, 1], sizes = [64, 1], strides = [1, 1]} : vector<64x2xf32> to vector<64x1xf32>
    %c40 = arith.constant 40 : index
    %511 = memref.load %arg5[%c40] : memref<50xf32, #tpu.memory_space<smem>>
    %512 = vector.broadcast %511 : f32 to vector<64x1xf32>
    %513 = arith.mulf %510, %512 : vector<64x1xf32>
    %514 = arith.addf %509, %513 : vector<64x1xf32>
    %cst_150 = arith.constant 0.000000e+00 : f32
    %515 = vector.broadcast %cst_150 : f32 to vector<64x1xf32>
    %516 = arith.select %505, %514, %515 : vector<64x1xi1>, vector<64x1xf32>
    %517 = arith.addf %485, %516 : vector<64x1xf32>
    %c57_i32 = arith.constant 57 : i32
    %518 = tpu.dynamic_rotate %1 by %c57_i32 dim 0 : vector<64x2xf32>, i32 -> vector<64x2xf32>
    %c1_i32_151 = arith.constant 1 : i32
    %519 = vector.broadcast %c1_i32_151 : i32 to vector<64x1xi32>
    %520 = arith.addi %4, %519 : vector<64x1xi32>
    %c0_i32_152 = arith.constant 0 : i32
    %521 = vector.broadcast %c0_i32_152 : i32 to vector<64x1xi32>
    %522 = arith.cmpi sge, %520, %521 : vector<64x1xi32>
    %c1_i32_153 = arith.constant 1 : i32
    %523 = vector.broadcast %c1_i32_153 : i32 to vector<64x1xi32>
    %524 = arith.addi %4, %523 : vector<64x1xi32>
    %c8_i32_154 = arith.constant 8 : i32
    %525 = vector.broadcast %c8_i32_154 : i32 to vector<64x1xi32>
    %526 = arith.cmpi slt, %524, %525 : vector<64x1xi32>
    %527 = arith.andi %522, %526 : vector<64x1xi1>
    %c-1_i32_155 = arith.constant -1 : i32
    %528 = vector.broadcast %c-1_i32_155 : i32 to vector<64x1xi32>
    %529 = arith.addi %5, %528 : vector<64x1xi32>
    %c0_i32_156 = arith.constant 0 : i32
    %530 = vector.broadcast %c0_i32_156 : i32 to vector<64x1xi32>
    %531 = arith.cmpi sge, %529, %530 : vector<64x1xi32>
    %532 = arith.andi %527, %531 : vector<64x1xi1>
    %c-1_i32_157 = arith.constant -1 : i32
    %533 = vector.broadcast %c-1_i32_157 : i32 to vector<64x1xi32>
    %534 = arith.addi %5, %533 : vector<64x1xi32>
    %c8_i32_158 = arith.constant 8 : i32
    %535 = vector.broadcast %c8_i32_158 : i32 to vector<64x1xi32>
    %536 = arith.cmpi slt, %534, %535 : vector<64x1xi32>
    %537 = arith.andi %532, %536 : vector<64x1xi1>
    %538 = vector.extract_strided_slice %518 {offsets = [0, 0], sizes = [64, 1], strides = [1, 1]} : vector<64x2xf32> to vector<64x1xf32>
    %c16 = arith.constant 16 : index
    %539 = memref.load %arg5[%c16] : memref<50xf32, #tpu.memory_space<smem>>
    %540 = vector.broadcast %539 : f32 to vector<64x1xf32>
    %541 = arith.mulf %538, %540 : vector<64x1xf32>
    %542 = vector.extract_strided_slice %518 {offsets = [0, 1], sizes = [64, 1], strides = [1, 1]} : vector<64x2xf32> to vector<64x1xf32>
    %c41 = arith.constant 41 : index
    %543 = memref.load %arg5[%c41] : memref<50xf32, #tpu.memory_space<smem>>
    %544 = vector.broadcast %543 : f32 to vector<64x1xf32>
    %545 = arith.mulf %542, %544 : vector<64x1xf32>
    %546 = arith.addf %541, %545 : vector<64x1xf32>
    %cst_159 = arith.constant 0.000000e+00 : f32
    %547 = vector.broadcast %cst_159 : f32 to vector<64x1xf32>
    %548 = arith.select %537, %546, %547 : vector<64x1xi1>, vector<64x1xf32>
    %549 = arith.addf %517, %548 : vector<64x1xf32>
    %c56_i32 = arith.constant 56 : i32
    %550 = tpu.dynamic_rotate %1 by %c56_i32 dim 0 : vector<64x2xf32>, i32 -> vector<64x2xf32>
    %c1_i32_160 = arith.constant 1 : i32
    %551 = vector.broadcast %c1_i32_160 : i32 to vector<64x1xi32>
    %552 = arith.addi %4, %551 : vector<64x1xi32>
    %c0_i32_161 = arith.constant 0 : i32
    %553 = vector.broadcast %c0_i32_161 : i32 to vector<64x1xi32>
    %554 = arith.cmpi sge, %552, %553 : vector<64x1xi32>
    %c1_i32_162 = arith.constant 1 : i32
    %555 = vector.broadcast %c1_i32_162 : i32 to vector<64x1xi32>
    %556 = arith.addi %4, %555 : vector<64x1xi32>
    %c8_i32_163 = arith.constant 8 : i32
    %557 = vector.broadcast %c8_i32_163 : i32 to vector<64x1xi32>
    %558 = arith.cmpi slt, %556, %557 : vector<64x1xi32>
    %559 = arith.andi %554, %558 : vector<64x1xi1>
    %c0_i32_164 = arith.constant 0 : i32
    %560 = vector.broadcast %c0_i32_164 : i32 to vector<64x1xi32>
    %561 = arith.addi %5, %560 : vector<64x1xi32>
    %c0_i32_165 = arith.constant 0 : i32
    %562 = vector.broadcast %c0_i32_165 : i32 to vector<64x1xi32>
    %563 = arith.cmpi sge, %561, %562 : vector<64x1xi32>
    %564 = arith.andi %559, %563 : vector<64x1xi1>
    %c0_i32_166 = arith.constant 0 : i32
    %565 = vector.broadcast %c0_i32_166 : i32 to vector<64x1xi32>
    %566 = arith.addi %5, %565 : vector<64x1xi32>
    %c8_i32_167 = arith.constant 8 : i32
    %567 = vector.broadcast %c8_i32_167 : i32 to vector<64x1xi32>
    %568 = arith.cmpi slt, %566, %567 : vector<64x1xi32>
    %569 = arith.andi %564, %568 : vector<64x1xi1>
    %570 = vector.extract_strided_slice %550 {offsets = [0, 0], sizes = [64, 1], strides = [1, 1]} : vector<64x2xf32> to vector<64x1xf32>
    %c17 = arith.constant 17 : index
    %571 = memref.load %arg5[%c17] : memref<50xf32, #tpu.memory_space<smem>>
    %572 = vector.broadcast %571 : f32 to vector<64x1xf32>
    %573 = arith.mulf %570, %572 : vector<64x1xf32>
    %574 = vector.extract_strided_slice %550 {offsets = [0, 1], sizes = [64, 1], strides = [1, 1]} : vector<64x2xf32> to vector<64x1xf32>
    %c42 = arith.constant 42 : index
    %575 = memref.load %arg5[%c42] : memref<50xf32, #tpu.memory_space<smem>>
    %576 = vector.broadcast %575 : f32 to vector<64x1xf32>
    %577 = arith.mulf %574, %576 : vector<64x1xf32>
    %578 = arith.addf %573, %577 : vector<64x1xf32>
    %cst_168 = arith.constant 0.000000e+00 : f32
    %579 = vector.broadcast %cst_168 : f32 to vector<64x1xf32>
    %580 = arith.select %569, %578, %579 : vector<64x1xi1>, vector<64x1xf32>
    %581 = arith.addf %549, %580 : vector<64x1xf32>
    %c55_i32 = arith.constant 55 : i32
    %582 = tpu.dynamic_rotate %1 by %c55_i32 dim 0 : vector<64x2xf32>, i32 -> vector<64x2xf32>
    %c1_i32_169 = arith.constant 1 : i32
    %583 = vector.broadcast %c1_i32_169 : i32 to vector<64x1xi32>
    %584 = arith.addi %4, %583 : vector<64x1xi32>
    %c0_i32_170 = arith.constant 0 : i32
    %585 = vector.broadcast %c0_i32_170 : i32 to vector<64x1xi32>
    %586 = arith.cmpi sge, %584, %585 : vector<64x1xi32>
    %c1_i32_171 = arith.constant 1 : i32
    %587 = vector.broadcast %c1_i32_171 : i32 to vector<64x1xi32>
    %588 = arith.addi %4, %587 : vector<64x1xi32>
    %c8_i32_172 = arith.constant 8 : i32
    %589 = vector.broadcast %c8_i32_172 : i32 to vector<64x1xi32>
    %590 = arith.cmpi slt, %588, %589 : vector<64x1xi32>
    %591 = arith.andi %586, %590 : vector<64x1xi1>
    %c1_i32_173 = arith.constant 1 : i32
    %592 = vector.broadcast %c1_i32_173 : i32 to vector<64x1xi32>
    %593 = arith.addi %5, %592 : vector<64x1xi32>
    %c0_i32_174 = arith.constant 0 : i32
    %594 = vector.broadcast %c0_i32_174 : i32 to vector<64x1xi32>
    %595 = arith.cmpi sge, %593, %594 : vector<64x1xi32>
    %596 = arith.andi %591, %595 : vector<64x1xi1>
    %c1_i32_175 = arith.constant 1 : i32
    %597 = vector.broadcast %c1_i32_175 : i32 to vector<64x1xi32>
    %598 = arith.addi %5, %597 : vector<64x1xi32>
    %c8_i32_176 = arith.constant 8 : i32
    %599 = vector.broadcast %c8_i32_176 : i32 to vector<64x1xi32>
    %600 = arith.cmpi slt, %598, %599 : vector<64x1xi32>
    %601 = arith.andi %596, %600 : vector<64x1xi1>
    %602 = vector.extract_strided_slice %582 {offsets = [0, 0], sizes = [64, 1], strides = [1, 1]} : vector<64x2xf32> to vector<64x1xf32>
    %c18 = arith.constant 18 : index
    %603 = memref.load %arg5[%c18] : memref<50xf32, #tpu.memory_space<smem>>
    %604 = vector.broadcast %603 : f32 to vector<64x1xf32>
    %605 = arith.mulf %602, %604 : vector<64x1xf32>
    %606 = vector.extract_strided_slice %582 {offsets = [0, 1], sizes = [64, 1], strides = [1, 1]} : vector<64x2xf32> to vector<64x1xf32>
    %c43 = arith.constant 43 : index
    %607 = memref.load %arg5[%c43] : memref<50xf32, #tpu.memory_space<smem>>
    %608 = vector.broadcast %607 : f32 to vector<64x1xf32>
    %609 = arith.mulf %606, %608 : vector<64x1xf32>
    %610 = arith.addf %605, %609 : vector<64x1xf32>
    %cst_177 = arith.constant 0.000000e+00 : f32
    %611 = vector.broadcast %cst_177 : f32 to vector<64x1xf32>
    %612 = arith.select %601, %610, %611 : vector<64x1xi1>, vector<64x1xf32>
    %613 = arith.addf %581, %612 : vector<64x1xf32>
    %c54_i32 = arith.constant 54 : i32
    %614 = tpu.dynamic_rotate %1 by %c54_i32 dim 0 : vector<64x2xf32>, i32 -> vector<64x2xf32>
    %c1_i32_178 = arith.constant 1 : i32
    %615 = vector.broadcast %c1_i32_178 : i32 to vector<64x1xi32>
    %616 = arith.addi %4, %615 : vector<64x1xi32>
    %c0_i32_179 = arith.constant 0 : i32
    %617 = vector.broadcast %c0_i32_179 : i32 to vector<64x1xi32>
    %618 = arith.cmpi sge, %616, %617 : vector<64x1xi32>
    %c1_i32_180 = arith.constant 1 : i32
    %619 = vector.broadcast %c1_i32_180 : i32 to vector<64x1xi32>
    %620 = arith.addi %4, %619 : vector<64x1xi32>
    %c8_i32_181 = arith.constant 8 : i32
    %621 = vector.broadcast %c8_i32_181 : i32 to vector<64x1xi32>
    %622 = arith.cmpi slt, %620, %621 : vector<64x1xi32>
    %623 = arith.andi %618, %622 : vector<64x1xi1>
    %c2_i32_182 = arith.constant 2 : i32
    %624 = vector.broadcast %c2_i32_182 : i32 to vector<64x1xi32>
    %625 = arith.addi %5, %624 : vector<64x1xi32>
    %c0_i32_183 = arith.constant 0 : i32
    %626 = vector.broadcast %c0_i32_183 : i32 to vector<64x1xi32>
    %627 = arith.cmpi sge, %625, %626 : vector<64x1xi32>
    %628 = arith.andi %623, %627 : vector<64x1xi1>
    %c2_i32_184 = arith.constant 2 : i32
    %629 = vector.broadcast %c2_i32_184 : i32 to vector<64x1xi32>
    %630 = arith.addi %5, %629 : vector<64x1xi32>
    %c8_i32_185 = arith.constant 8 : i32
    %631 = vector.broadcast %c8_i32_185 : i32 to vector<64x1xi32>
    %632 = arith.cmpi slt, %630, %631 : vector<64x1xi32>
    %633 = arith.andi %628, %632 : vector<64x1xi1>
    %634 = vector.extract_strided_slice %614 {offsets = [0, 0], sizes = [64, 1], strides = [1, 1]} : vector<64x2xf32> to vector<64x1xf32>
    %c19 = arith.constant 19 : index
    %635 = memref.load %arg5[%c19] : memref<50xf32, #tpu.memory_space<smem>>
    %636 = vector.broadcast %635 : f32 to vector<64x1xf32>
    %637 = arith.mulf %634, %636 : vector<64x1xf32>
    %638 = vector.extract_strided_slice %614 {offsets = [0, 1], sizes = [64, 1], strides = [1, 1]} : vector<64x2xf32> to vector<64x1xf32>
    %c44 = arith.constant 44 : index
    %639 = memref.load %arg5[%c44] : memref<50xf32, #tpu.memory_space<smem>>
    %640 = vector.broadcast %639 : f32 to vector<64x1xf32>
    %641 = arith.mulf %638, %640 : vector<64x1xf32>
    %642 = arith.addf %637, %641 : vector<64x1xf32>
    %cst_186 = arith.constant 0.000000e+00 : f32
    %643 = vector.broadcast %cst_186 : f32 to vector<64x1xf32>
    %644 = arith.select %633, %642, %643 : vector<64x1xi1>, vector<64x1xf32>
    %645 = arith.addf %613, %644 : vector<64x1xf32>
    %c50_i32 = arith.constant 50 : i32
    %646 = tpu.dynamic_rotate %1 by %c50_i32 dim 0 : vector<64x2xf32>, i32 -> vector<64x2xf32>
    %c2_i32_187 = arith.constant 2 : i32
    %647 = vector.broadcast %c2_i32_187 : i32 to vector<64x1xi32>
    %648 = arith.addi %4, %647 : vector<64x1xi32>
    %c0_i32_188 = arith.constant 0 : i32
    %649 = vector.broadcast %c0_i32_188 : i32 to vector<64x1xi32>
    %650 = arith.cmpi sge, %648, %649 : vector<64x1xi32>
    %c2_i32_189 = arith.constant 2 : i32
    %651 = vector.broadcast %c2_i32_189 : i32 to vector<64x1xi32>
    %652 = arith.addi %4, %651 : vector<64x1xi32>
    %c8_i32_190 = arith.constant 8 : i32
    %653 = vector.broadcast %c8_i32_190 : i32 to vector<64x1xi32>
    %654 = arith.cmpi slt, %652, %653 : vector<64x1xi32>
    %655 = arith.andi %650, %654 : vector<64x1xi1>
    %c-2_i32_191 = arith.constant -2 : i32
    %656 = vector.broadcast %c-2_i32_191 : i32 to vector<64x1xi32>
    %657 = arith.addi %5, %656 : vector<64x1xi32>
    %c0_i32_192 = arith.constant 0 : i32
    %658 = vector.broadcast %c0_i32_192 : i32 to vector<64x1xi32>
    %659 = arith.cmpi sge, %657, %658 : vector<64x1xi32>
    %660 = arith.andi %655, %659 : vector<64x1xi1>
    %c-2_i32_193 = arith.constant -2 : i32
    %661 = vector.broadcast %c-2_i32_193 : i32 to vector<64x1xi32>
    %662 = arith.addi %5, %661 : vector<64x1xi32>
    %c8_i32_194 = arith.constant 8 : i32
    %663 = vector.broadcast %c8_i32_194 : i32 to vector<64x1xi32>
    %664 = arith.cmpi slt, %662, %663 : vector<64x1xi32>
    %665 = arith.andi %660, %664 : vector<64x1xi1>
    %666 = vector.extract_strided_slice %646 {offsets = [0, 0], sizes = [64, 1], strides = [1, 1]} : vector<64x2xf32> to vector<64x1xf32>
    %c20 = arith.constant 20 : index
    %667 = memref.load %arg5[%c20] : memref<50xf32, #tpu.memory_space<smem>>
    %668 = vector.broadcast %667 : f32 to vector<64x1xf32>
    %669 = arith.mulf %666, %668 : vector<64x1xf32>
    %670 = vector.extract_strided_slice %646 {offsets = [0, 1], sizes = [64, 1], strides = [1, 1]} : vector<64x2xf32> to vector<64x1xf32>
    %c45 = arith.constant 45 : index
    %671 = memref.load %arg5[%c45] : memref<50xf32, #tpu.memory_space<smem>>
    %672 = vector.broadcast %671 : f32 to vector<64x1xf32>
    %673 = arith.mulf %670, %672 : vector<64x1xf32>
    %674 = arith.addf %669, %673 : vector<64x1xf32>
    %cst_195 = arith.constant 0.000000e+00 : f32
    %675 = vector.broadcast %cst_195 : f32 to vector<64x1xf32>
    %676 = arith.select %665, %674, %675 : vector<64x1xi1>, vector<64x1xf32>
    %677 = arith.addf %645, %676 : vector<64x1xf32>
    %c49_i32 = arith.constant 49 : i32
    %678 = tpu.dynamic_rotate %1 by %c49_i32 dim 0 : vector<64x2xf32>, i32 -> vector<64x2xf32>
    %c2_i32_196 = arith.constant 2 : i32
    %679 = vector.broadcast %c2_i32_196 : i32 to vector<64x1xi32>
    %680 = arith.addi %4, %679 : vector<64x1xi32>
    %c0_i32_197 = arith.constant 0 : i32
    %681 = vector.broadcast %c0_i32_197 : i32 to vector<64x1xi32>
    %682 = arith.cmpi sge, %680, %681 : vector<64x1xi32>
    %c2_i32_198 = arith.constant 2 : i32
    %683 = vector.broadcast %c2_i32_198 : i32 to vector<64x1xi32>
    %684 = arith.addi %4, %683 : vector<64x1xi32>
    %c8_i32_199 = arith.constant 8 : i32
    %685 = vector.broadcast %c8_i32_199 : i32 to vector<64x1xi32>
    %686 = arith.cmpi slt, %684, %685 : vector<64x1xi32>
    %687 = arith.andi %682, %686 : vector<64x1xi1>
    %c-1_i32_200 = arith.constant -1 : i32
    %688 = vector.broadcast %c-1_i32_200 : i32 to vector<64x1xi32>
    %689 = arith.addi %5, %688 : vector<64x1xi32>
    %c0_i32_201 = arith.constant 0 : i32
    %690 = vector.broadcast %c0_i32_201 : i32 to vector<64x1xi32>
    %691 = arith.cmpi sge, %689, %690 : vector<64x1xi32>
    %692 = arith.andi %687, %691 : vector<64x1xi1>
    %c-1_i32_202 = arith.constant -1 : i32
    %693 = vector.broadcast %c-1_i32_202 : i32 to vector<64x1xi32>
    %694 = arith.addi %5, %693 : vector<64x1xi32>
    %c8_i32_203 = arith.constant 8 : i32
    %695 = vector.broadcast %c8_i32_203 : i32 to vector<64x1xi32>
    %696 = arith.cmpi slt, %694, %695 : vector<64x1xi32>
    %697 = arith.andi %692, %696 : vector<64x1xi1>
    %698 = vector.extract_strided_slice %678 {offsets = [0, 0], sizes = [64, 1], strides = [1, 1]} : vector<64x2xf32> to vector<64x1xf32>
    %c21 = arith.constant 21 : index
    %699 = memref.load %arg5[%c21] : memref<50xf32, #tpu.memory_space<smem>>
    %700 = vector.broadcast %699 : f32 to vector<64x1xf32>
    %701 = arith.mulf %698, %700 : vector<64x1xf32>
    %702 = vector.extract_strided_slice %678 {offsets = [0, 1], sizes = [64, 1], strides = [1, 1]} : vector<64x2xf32> to vector<64x1xf32>
    %c46 = arith.constant 46 : index
    %703 = memref.load %arg5[%c46] : memref<50xf32, #tpu.memory_space<smem>>
    %704 = vector.broadcast %703 : f32 to vector<64x1xf32>
    %705 = arith.mulf %702, %704 : vector<64x1xf32>
    %706 = arith.addf %701, %705 : vector<64x1xf32>
    %cst_204 = arith.constant 0.000000e+00 : f32
    %707 = vector.broadcast %cst_204 : f32 to vector<64x1xf32>
    %708 = arith.select %697, %706, %707 : vector<64x1xi1>, vector<64x1xf32>
    %709 = arith.addf %677, %708 : vector<64x1xf32>
    %c48_i32 = arith.constant 48 : i32
    %710 = tpu.dynamic_rotate %1 by %c48_i32 dim 0 : vector<64x2xf32>, i32 -> vector<64x2xf32>
    %c2_i32_205 = arith.constant 2 : i32
    %711 = vector.broadcast %c2_i32_205 : i32 to vector<64x1xi32>
    %712 = arith.addi %4, %711 : vector<64x1xi32>
    %c0_i32_206 = arith.constant 0 : i32
    %713 = vector.broadcast %c0_i32_206 : i32 to vector<64x1xi32>
    %714 = arith.cmpi sge, %712, %713 : vector<64x1xi32>
    %c2_i32_207 = arith.constant 2 : i32
    %715 = vector.broadcast %c2_i32_207 : i32 to vector<64x1xi32>
    %716 = arith.addi %4, %715 : vector<64x1xi32>
    %c8_i32_208 = arith.constant 8 : i32
    %717 = vector.broadcast %c8_i32_208 : i32 to vector<64x1xi32>
    %718 = arith.cmpi slt, %716, %717 : vector<64x1xi32>
    %719 = arith.andi %714, %718 : vector<64x1xi1>
    %c0_i32_209 = arith.constant 0 : i32
    %720 = vector.broadcast %c0_i32_209 : i32 to vector<64x1xi32>
    %721 = arith.addi %5, %720 : vector<64x1xi32>
    %c0_i32_210 = arith.constant 0 : i32
    %722 = vector.broadcast %c0_i32_210 : i32 to vector<64x1xi32>
    %723 = arith.cmpi sge, %721, %722 : vector<64x1xi32>
    %724 = arith.andi %719, %723 : vector<64x1xi1>
    %c0_i32_211 = arith.constant 0 : i32
    %725 = vector.broadcast %c0_i32_211 : i32 to vector<64x1xi32>
    %726 = arith.addi %5, %725 : vector<64x1xi32>
    %c8_i32_212 = arith.constant 8 : i32
    %727 = vector.broadcast %c8_i32_212 : i32 to vector<64x1xi32>
    %728 = arith.cmpi slt, %726, %727 : vector<64x1xi32>
    %729 = arith.andi %724, %728 : vector<64x1xi1>
    %730 = vector.extract_strided_slice %710 {offsets = [0, 0], sizes = [64, 1], strides = [1, 1]} : vector<64x2xf32> to vector<64x1xf32>
    %c22 = arith.constant 22 : index
    %731 = memref.load %arg5[%c22] : memref<50xf32, #tpu.memory_space<smem>>
    %732 = vector.broadcast %731 : f32 to vector<64x1xf32>
    %733 = arith.mulf %730, %732 : vector<64x1xf32>
    %734 = vector.extract_strided_slice %710 {offsets = [0, 1], sizes = [64, 1], strides = [1, 1]} : vector<64x2xf32> to vector<64x1xf32>
    %c47 = arith.constant 47 : index
    %735 = memref.load %arg5[%c47] : memref<50xf32, #tpu.memory_space<smem>>
    %736 = vector.broadcast %735 : f32 to vector<64x1xf32>
    %737 = arith.mulf %734, %736 : vector<64x1xf32>
    %738 = arith.addf %733, %737 : vector<64x1xf32>
    %cst_213 = arith.constant 0.000000e+00 : f32
    %739 = vector.broadcast %cst_213 : f32 to vector<64x1xf32>
    %740 = arith.select %729, %738, %739 : vector<64x1xi1>, vector<64x1xf32>
    %741 = arith.addf %709, %740 : vector<64x1xf32>
    %c47_i32 = arith.constant 47 : i32
    %742 = tpu.dynamic_rotate %1 by %c47_i32 dim 0 : vector<64x2xf32>, i32 -> vector<64x2xf32>
    %c2_i32_214 = arith.constant 2 : i32
    %743 = vector.broadcast %c2_i32_214 : i32 to vector<64x1xi32>
    %744 = arith.addi %4, %743 : vector<64x1xi32>
    %c0_i32_215 = arith.constant 0 : i32
    %745 = vector.broadcast %c0_i32_215 : i32 to vector<64x1xi32>
    %746 = arith.cmpi sge, %744, %745 : vector<64x1xi32>
    %c2_i32_216 = arith.constant 2 : i32
    %747 = vector.broadcast %c2_i32_216 : i32 to vector<64x1xi32>
    %748 = arith.addi %4, %747 : vector<64x1xi32>
    %c8_i32_217 = arith.constant 8 : i32
    %749 = vector.broadcast %c8_i32_217 : i32 to vector<64x1xi32>
    %750 = arith.cmpi slt, %748, %749 : vector<64x1xi32>
    %751 = arith.andi %746, %750 : vector<64x1xi1>
    %c1_i32_218 = arith.constant 1 : i32
    %752 = vector.broadcast %c1_i32_218 : i32 to vector<64x1xi32>
    %753 = arith.addi %5, %752 : vector<64x1xi32>
    %c0_i32_219 = arith.constant 0 : i32
    %754 = vector.broadcast %c0_i32_219 : i32 to vector<64x1xi32>
    %755 = arith.cmpi sge, %753, %754 : vector<64x1xi32>
    %756 = arith.andi %751, %755 : vector<64x1xi1>
    %c1_i32_220 = arith.constant 1 : i32
    %757 = vector.broadcast %c1_i32_220 : i32 to vector<64x1xi32>
    %758 = arith.addi %5, %757 : vector<64x1xi32>
    %c8_i32_221 = arith.constant 8 : i32
    %759 = vector.broadcast %c8_i32_221 : i32 to vector<64x1xi32>
    %760 = arith.cmpi slt, %758, %759 : vector<64x1xi32>
    %761 = arith.andi %756, %760 : vector<64x1xi1>
    %762 = vector.extract_strided_slice %742 {offsets = [0, 0], sizes = [64, 1], strides = [1, 1]} : vector<64x2xf32> to vector<64x1xf32>
    %c23 = arith.constant 23 : index
    %763 = memref.load %arg5[%c23] : memref<50xf32, #tpu.memory_space<smem>>
    %764 = vector.broadcast %763 : f32 to vector<64x1xf32>
    %765 = arith.mulf %762, %764 : vector<64x1xf32>
    %766 = vector.extract_strided_slice %742 {offsets = [0, 1], sizes = [64, 1], strides = [1, 1]} : vector<64x2xf32> to vector<64x1xf32>
    %c48 = arith.constant 48 : index
    %767 = memref.load %arg5[%c48] : memref<50xf32, #tpu.memory_space<smem>>
    %768 = vector.broadcast %767 : f32 to vector<64x1xf32>
    %769 = arith.mulf %766, %768 : vector<64x1xf32>
    %770 = arith.addf %765, %769 : vector<64x1xf32>
    %cst_222 = arith.constant 0.000000e+00 : f32
    %771 = vector.broadcast %cst_222 : f32 to vector<64x1xf32>
    %772 = arith.select %761, %770, %771 : vector<64x1xi1>, vector<64x1xf32>
    %773 = arith.addf %741, %772 : vector<64x1xf32>
    %c46_i32 = arith.constant 46 : i32
    %774 = tpu.dynamic_rotate %1 by %c46_i32 dim 0 : vector<64x2xf32>, i32 -> vector<64x2xf32>
    %c2_i32_223 = arith.constant 2 : i32
    %775 = vector.broadcast %c2_i32_223 : i32 to vector<64x1xi32>
    %776 = arith.addi %4, %775 : vector<64x1xi32>
    %c0_i32_224 = arith.constant 0 : i32
    %777 = vector.broadcast %c0_i32_224 : i32 to vector<64x1xi32>
    %778 = arith.cmpi sge, %776, %777 : vector<64x1xi32>
    %c2_i32_225 = arith.constant 2 : i32
    %779 = vector.broadcast %c2_i32_225 : i32 to vector<64x1xi32>
    %780 = arith.addi %4, %779 : vector<64x1xi32>
    %c8_i32_226 = arith.constant 8 : i32
    %781 = vector.broadcast %c8_i32_226 : i32 to vector<64x1xi32>
    %782 = arith.cmpi slt, %780, %781 : vector<64x1xi32>
    %783 = arith.andi %778, %782 : vector<64x1xi1>
    %c2_i32_227 = arith.constant 2 : i32
    %784 = vector.broadcast %c2_i32_227 : i32 to vector<64x1xi32>
    %785 = arith.addi %5, %784 : vector<64x1xi32>
    %c0_i32_228 = arith.constant 0 : i32
    %786 = vector.broadcast %c0_i32_228 : i32 to vector<64x1xi32>
    %787 = arith.cmpi sge, %785, %786 : vector<64x1xi32>
    %788 = arith.andi %783, %787 : vector<64x1xi1>
    %c2_i32_229 = arith.constant 2 : i32
    %789 = vector.broadcast %c2_i32_229 : i32 to vector<64x1xi32>
    %790 = arith.addi %5, %789 : vector<64x1xi32>
    %c8_i32_230 = arith.constant 8 : i32
    %791 = vector.broadcast %c8_i32_230 : i32 to vector<64x1xi32>
    %792 = arith.cmpi slt, %790, %791 : vector<64x1xi32>
    %793 = arith.andi %788, %792 : vector<64x1xi1>
    %794 = vector.extract_strided_slice %774 {offsets = [0, 0], sizes = [64, 1], strides = [1, 1]} : vector<64x2xf32> to vector<64x1xf32>
    %c24 = arith.constant 24 : index
    %795 = memref.load %arg5[%c24] : memref<50xf32, #tpu.memory_space<smem>>
    %796 = vector.broadcast %795 : f32 to vector<64x1xf32>
    %797 = arith.mulf %794, %796 : vector<64x1xf32>
    %798 = vector.extract_strided_slice %774 {offsets = [0, 1], sizes = [64, 1], strides = [1, 1]} : vector<64x2xf32> to vector<64x1xf32>
    %c49 = arith.constant 49 : index
    %799 = memref.load %arg5[%c49] : memref<50xf32, #tpu.memory_space<smem>>
    %800 = vector.broadcast %799 : f32 to vector<64x1xf32>
    %801 = arith.mulf %798, %800 : vector<64x1xf32>
    %802 = arith.addf %797, %801 : vector<64x1xf32>
    %cst_231 = arith.constant 0.000000e+00 : f32
    %803 = vector.broadcast %cst_231 : f32 to vector<64x1xf32>
    %804 = arith.select %793, %802, %803 : vector<64x1xi1>, vector<64x1xf32>
    %805 = arith.addf %773, %804 : vector<64x1xf32>
    %806 = arith.negf %805 : vector<64x1xf32>
    %807 = math.exp %806 : vector<64x1xf32>
    %cst_232 = arith.constant 1.000000e+00 : f32
    %808 = vector.broadcast %cst_232 : f32 to vector<64x1xf32>
    %809 = arith.addf %808, %807 : vector<64x1xf32>
    %810 = arith.divf %808, %809 : vector<64x1xf32>
    %cst_233 = arith.constant 1.000000e+00 : f32
    %811 = vector.broadcast %cst_233 : f32 to vector<64x1xf32>
    %812 = arith.addf %811, %810 : vector<64x1xf32>
    %813 = vector.broadcast %812 : vector<64x1xf32> to vector<64x128xf32>
    %814 = arith.mulf %3, %813 : vector<64x128xf32>
    %c0_234 = arith.constant 0 : index
    %c0_235 = arith.constant 0 : index
    %815 = vector.load %arg6[%c0_234, %c0_235] : memref<1x128xf32, #tpu.memory_space<vmem>>, vector<1x128xf32>
    %816 = vector.broadcast %815 : vector<1x128xf32> to vector<64x128xf32>
    %817 = arith.mulf %814, %816 : vector<64x128xf32>
    %c0_236 = arith.constant 0 : index
    %c0_237 = arith.constant 0 : index
    %818 = vector.load %arg7[%c0_236, %c0_237] : memref<1x128xf32, #tpu.memory_space<vmem>>, vector<1x128xf32>
    %819 = vector.broadcast %818 : vector<1x128xf32> to vector<64x128xf32>
    %820 = arith.addf %817, %819 : vector<64x128xf32>
    %cst_238 = arith.constant 0.000000e+00 : f32
    %821 = vector.broadcast %cst_238 : f32 to vector<64x128xf32>
    %822 = arith.maximumf %820, %821 : vector<64x128xf32>
    %cst_239 = arith.constant 0.000000e+00 : f32
    %823 = vector.broadcast %cst_239 : f32 to vector<64x128xf32>
    %c0_240 = arith.constant 0 : index
    %c0_241 = arith.constant 0 : index
    %c0_242 = arith.constant 0 : index
    %824 = vector.load %arg8[%c0_240, %c0_241, %c0_242] : memref<9x128x128xf32, #tpu.memory_space<vmem>>, vector<1x128x128xf32>
    %825 = vector.shape_cast %824 : vector<1x128x128xf32> to vector<128x128xf32>
    %cst_243 = arith.constant dense<0.000000e+00> : vector<64x128xf32>
    %826 = tpu.matmul %822, %825, %cst_243 {dimension_numbers = #tpu.dot_dimension_numbers<[1], [0], [0], [1], [0, 0, 1, 1], [], []>} : vector<64x128xf32>, vector<128x128xf32>, vector<64x128xf32> -> vector<64x128xf32>
    %c9_i32_244 = arith.constant 9 : i32
    %827 = tpu.dynamic_rotate %826 by %c9_i32_244 dim 0 : vector<64x128xf32>, i32 -> vector<64x128xf32>
    %c-1_i32_245 = arith.constant -1 : i32
    %828 = vector.broadcast %c-1_i32_245 : i32 to vector<64x1xi32>
    %829 = arith.addi %4, %828 : vector<64x1xi32>
    %c0_i32_246 = arith.constant 0 : i32
    %830 = vector.broadcast %c0_i32_246 : i32 to vector<64x1xi32>
    %831 = arith.cmpi sge, %829, %830 : vector<64x1xi32>
    %c-1_i32_247 = arith.constant -1 : i32
    %832 = vector.broadcast %c-1_i32_247 : i32 to vector<64x1xi32>
    %833 = arith.addi %4, %832 : vector<64x1xi32>
    %c8_i32_248 = arith.constant 8 : i32
    %834 = vector.broadcast %c8_i32_248 : i32 to vector<64x1xi32>
    %835 = arith.cmpi slt, %833, %834 : vector<64x1xi32>
    %836 = arith.andi %831, %835 : vector<64x1xi1>
    %c-1_i32_249 = arith.constant -1 : i32
    %837 = vector.broadcast %c-1_i32_249 : i32 to vector<64x1xi32>
    %838 = arith.addi %5, %837 : vector<64x1xi32>
    %c0_i32_250 = arith.constant 0 : i32
    %839 = vector.broadcast %c0_i32_250 : i32 to vector<64x1xi32>
    %840 = arith.cmpi sge, %838, %839 : vector<64x1xi32>
    %841 = arith.andi %836, %840 : vector<64x1xi1>
    %c-1_i32_251 = arith.constant -1 : i32
    %842 = vector.broadcast %c-1_i32_251 : i32 to vector<64x1xi32>
    %843 = arith.addi %5, %842 : vector<64x1xi32>
    %c8_i32_252 = arith.constant 8 : i32
    %844 = vector.broadcast %c8_i32_252 : i32 to vector<64x1xi32>
    %845 = arith.cmpi slt, %843, %844 : vector<64x1xi32>
    %846 = arith.andi %841, %845 : vector<64x1xi1>
    %cst_253 = arith.constant 0.000000e+00 : f32
    %847 = vector.shape_cast %846 : vector<64x1xi1> to vector<64x1xi1>
    %848 = vector.broadcast %847 : vector<64x1xi1> to vector<64x128xi1>
    %849 = vector.broadcast %cst_253 : f32 to vector<64x128xf32>
    %850 = arith.select %848, %827, %849 : vector<64x128xi1>, vector<64x128xf32>
    %851 = arith.addf %823, %850 : vector<64x128xf32>
    %c1_254 = arith.constant 1 : index
    %c0_255 = arith.constant 0 : index
    %c0_256 = arith.constant 0 : index
    %852 = vector.load %arg8[%c1_254, %c0_255, %c0_256] : memref<9x128x128xf32, #tpu.memory_space<vmem>>, vector<1x128x128xf32>
    %853 = vector.shape_cast %852 : vector<1x128x128xf32> to vector<128x128xf32>
    %cst_257 = arith.constant dense<0.000000e+00> : vector<64x128xf32>
    %854 = tpu.matmul %822, %853, %cst_257 {dimension_numbers = #tpu.dot_dimension_numbers<[1], [0], [0], [1], [0, 0, 1, 1], [], []>} : vector<64x128xf32>, vector<128x128xf32>, vector<64x128xf32> -> vector<64x128xf32>
    %c8_i32_258 = arith.constant 8 : i32
    %855 = tpu.dynamic_rotate %854 by %c8_i32_258 dim 0 : vector<64x128xf32>, i32 -> vector<64x128xf32>
    %c-1_i32_259 = arith.constant -1 : i32
    %856 = vector.broadcast %c-1_i32_259 : i32 to vector<64x1xi32>
    %857 = arith.addi %4, %856 : vector<64x1xi32>
    %c0_i32_260 = arith.constant 0 : i32
    %858 = vector.broadcast %c0_i32_260 : i32 to vector<64x1xi32>
    %859 = arith.cmpi sge, %857, %858 : vector<64x1xi32>
    %c-1_i32_261 = arith.constant -1 : i32
    %860 = vector.broadcast %c-1_i32_261 : i32 to vector<64x1xi32>
    %861 = arith.addi %4, %860 : vector<64x1xi32>
    %c8_i32_262 = arith.constant 8 : i32
    %862 = vector.broadcast %c8_i32_262 : i32 to vector<64x1xi32>
    %863 = arith.cmpi slt, %861, %862 : vector<64x1xi32>
    %864 = arith.andi %859, %863 : vector<64x1xi1>
    %c0_i32_263 = arith.constant 0 : i32
    %865 = vector.broadcast %c0_i32_263 : i32 to vector<64x1xi32>
    %866 = arith.addi %5, %865 : vector<64x1xi32>
    %c0_i32_264 = arith.constant 0 : i32
    %867 = vector.broadcast %c0_i32_264 : i32 to vector<64x1xi32>
    %868 = arith.cmpi sge, %866, %867 : vector<64x1xi32>
    %869 = arith.andi %864, %868 : vector<64x1xi1>
    %c0_i32_265 = arith.constant 0 : i32
    %870 = vector.broadcast %c0_i32_265 : i32 to vector<64x1xi32>
    %871 = arith.addi %5, %870 : vector<64x1xi32>
    %c8_i32_266 = arith.constant 8 : i32
    %872 = vector.broadcast %c8_i32_266 : i32 to vector<64x1xi32>
    %873 = arith.cmpi slt, %871, %872 : vector<64x1xi32>
    %874 = arith.andi %869, %873 : vector<64x1xi1>
    %cst_267 = arith.constant 0.000000e+00 : f32
    %875 = vector.shape_cast %874 : vector<64x1xi1> to vector<64x1xi1>
    %876 = vector.broadcast %875 : vector<64x1xi1> to vector<64x128xi1>
    %877 = vector.broadcast %cst_267 : f32 to vector<64x128xf32>
    %878 = arith.select %876, %855, %877 : vector<64x128xi1>, vector<64x128xf32>
    %879 = arith.addf %851, %878 : vector<64x128xf32>
    %c2_268 = arith.constant 2 : index
    %c0_269 = arith.constant 0 : index
    %c0_270 = arith.constant 0 : index
    %880 = vector.load %arg8[%c2_268, %c0_269, %c0_270] : memref<9x128x128xf32, #tpu.memory_space<vmem>>, vector<1x128x128xf32>
    %881 = vector.shape_cast %880 : vector<1x128x128xf32> to vector<128x128xf32>
    %cst_271 = arith.constant dense<0.000000e+00> : vector<64x128xf32>
    %882 = tpu.matmul %822, %881, %cst_271 {dimension_numbers = #tpu.dot_dimension_numbers<[1], [0], [0], [1], [0, 0, 1, 1], [], []>} : vector<64x128xf32>, vector<128x128xf32>, vector<64x128xf32> -> vector<64x128xf32>
    %c7_i32_272 = arith.constant 7 : i32
    %883 = tpu.dynamic_rotate %882 by %c7_i32_272 dim 0 : vector<64x128xf32>, i32 -> vector<64x128xf32>
    %c-1_i32_273 = arith.constant -1 : i32
    %884 = vector.broadcast %c-1_i32_273 : i32 to vector<64x1xi32>
    %885 = arith.addi %4, %884 : vector<64x1xi32>
    %c0_i32_274 = arith.constant 0 : i32
    %886 = vector.broadcast %c0_i32_274 : i32 to vector<64x1xi32>
    %887 = arith.cmpi sge, %885, %886 : vector<64x1xi32>
    %c-1_i32_275 = arith.constant -1 : i32
    %888 = vector.broadcast %c-1_i32_275 : i32 to vector<64x1xi32>
    %889 = arith.addi %4, %888 : vector<64x1xi32>
    %c8_i32_276 = arith.constant 8 : i32
    %890 = vector.broadcast %c8_i32_276 : i32 to vector<64x1xi32>
    %891 = arith.cmpi slt, %889, %890 : vector<64x1xi32>
    %892 = arith.andi %887, %891 : vector<64x1xi1>
    %c1_i32_277 = arith.constant 1 : i32
    %893 = vector.broadcast %c1_i32_277 : i32 to vector<64x1xi32>
    %894 = arith.addi %5, %893 : vector<64x1xi32>
    %c0_i32_278 = arith.constant 0 : i32
    %895 = vector.broadcast %c0_i32_278 : i32 to vector<64x1xi32>
    %896 = arith.cmpi sge, %894, %895 : vector<64x1xi32>
    %897 = arith.andi %892, %896 : vector<64x1xi1>
    %c1_i32_279 = arith.constant 1 : i32
    %898 = vector.broadcast %c1_i32_279 : i32 to vector<64x1xi32>
    %899 = arith.addi %5, %898 : vector<64x1xi32>
    %c8_i32_280 = arith.constant 8 : i32
    %900 = vector.broadcast %c8_i32_280 : i32 to vector<64x1xi32>
    %901 = arith.cmpi slt, %899, %900 : vector<64x1xi32>
    %902 = arith.andi %897, %901 : vector<64x1xi1>
    %cst_281 = arith.constant 0.000000e+00 : f32
    %903 = vector.shape_cast %902 : vector<64x1xi1> to vector<64x1xi1>
    %904 = vector.broadcast %903 : vector<64x1xi1> to vector<64x128xi1>
    %905 = vector.broadcast %cst_281 : f32 to vector<64x128xf32>
    %906 = arith.select %904, %883, %905 : vector<64x128xi1>, vector<64x128xf32>
    %907 = arith.addf %879, %906 : vector<64x128xf32>
    %c3_282 = arith.constant 3 : index
    %c0_283 = arith.constant 0 : index
    %c0_284 = arith.constant 0 : index
    %908 = vector.load %arg8[%c3_282, %c0_283, %c0_284] : memref<9x128x128xf32, #tpu.memory_space<vmem>>, vector<1x128x128xf32>
    %909 = vector.shape_cast %908 : vector<1x128x128xf32> to vector<128x128xf32>
    %cst_285 = arith.constant dense<0.000000e+00> : vector<64x128xf32>
    %910 = tpu.matmul %822, %909, %cst_285 {dimension_numbers = #tpu.dot_dimension_numbers<[1], [0], [0], [1], [0, 0, 1, 1], [], []>} : vector<64x128xf32>, vector<128x128xf32>, vector<64x128xf32> -> vector<64x128xf32>
    %c1_i32_286 = arith.constant 1 : i32
    %911 = tpu.dynamic_rotate %910 by %c1_i32_286 dim 0 : vector<64x128xf32>, i32 -> vector<64x128xf32>
    %c0_i32_287 = arith.constant 0 : i32
    %912 = vector.broadcast %c0_i32_287 : i32 to vector<64x1xi32>
    %913 = arith.addi %4, %912 : vector<64x1xi32>
    %c0_i32_288 = arith.constant 0 : i32
    %914 = vector.broadcast %c0_i32_288 : i32 to vector<64x1xi32>
    %915 = arith.cmpi sge, %913, %914 : vector<64x1xi32>
    %c0_i32_289 = arith.constant 0 : i32
    %916 = vector.broadcast %c0_i32_289 : i32 to vector<64x1xi32>
    %917 = arith.addi %4, %916 : vector<64x1xi32>
    %c8_i32_290 = arith.constant 8 : i32
    %918 = vector.broadcast %c8_i32_290 : i32 to vector<64x1xi32>
    %919 = arith.cmpi slt, %917, %918 : vector<64x1xi32>
    %920 = arith.andi %915, %919 : vector<64x1xi1>
    %c-1_i32_291 = arith.constant -1 : i32
    %921 = vector.broadcast %c-1_i32_291 : i32 to vector<64x1xi32>
    %922 = arith.addi %5, %921 : vector<64x1xi32>
    %c0_i32_292 = arith.constant 0 : i32
    %923 = vector.broadcast %c0_i32_292 : i32 to vector<64x1xi32>
    %924 = arith.cmpi sge, %922, %923 : vector<64x1xi32>
    %925 = arith.andi %920, %924 : vector<64x1xi1>
    %c-1_i32_293 = arith.constant -1 : i32
    %926 = vector.broadcast %c-1_i32_293 : i32 to vector<64x1xi32>
    %927 = arith.addi %5, %926 : vector<64x1xi32>
    %c8_i32_294 = arith.constant 8 : i32
    %928 = vector.broadcast %c8_i32_294 : i32 to vector<64x1xi32>
    %929 = arith.cmpi slt, %927, %928 : vector<64x1xi32>
    %930 = arith.andi %925, %929 : vector<64x1xi1>
    %cst_295 = arith.constant 0.000000e+00 : f32
    %931 = vector.shape_cast %930 : vector<64x1xi1> to vector<64x1xi1>
    %932 = vector.broadcast %931 : vector<64x1xi1> to vector<64x128xi1>
    %933 = vector.broadcast %cst_295 : f32 to vector<64x128xf32>
    %934 = arith.select %932, %911, %933 : vector<64x128xi1>, vector<64x128xf32>
    %935 = arith.addf %907, %934 : vector<64x128xf32>
    %c4_296 = arith.constant 4 : index
    %c0_297 = arith.constant 0 : index
    %c0_298 = arith.constant 0 : index
    %936 = vector.load %arg8[%c4_296, %c0_297, %c0_298] : memref<9x128x128xf32, #tpu.memory_space<vmem>>, vector<1x128x128xf32>
    %937 = vector.shape_cast %936 : vector<1x128x128xf32> to vector<128x128xf32>
    %cst_299 = arith.constant dense<0.000000e+00> : vector<64x128xf32>
    %938 = tpu.matmul %822, %937, %cst_299 {dimension_numbers = #tpu.dot_dimension_numbers<[1], [0], [0], [1], [0, 0, 1, 1], [], []>} : vector<64x128xf32>, vector<128x128xf32>, vector<64x128xf32> -> vector<64x128xf32>
    %c0_i32_300 = arith.constant 0 : i32
    %939 = vector.broadcast %c0_i32_300 : i32 to vector<64x1xi32>
    %940 = arith.addi %4, %939 : vector<64x1xi32>
    %c0_i32_301 = arith.constant 0 : i32
    %941 = vector.broadcast %c0_i32_301 : i32 to vector<64x1xi32>
    %942 = arith.cmpi sge, %940, %941 : vector<64x1xi32>
    %c0_i32_302 = arith.constant 0 : i32
    %943 = vector.broadcast %c0_i32_302 : i32 to vector<64x1xi32>
    %944 = arith.addi %4, %943 : vector<64x1xi32>
    %c8_i32_303 = arith.constant 8 : i32
    %945 = vector.broadcast %c8_i32_303 : i32 to vector<64x1xi32>
    %946 = arith.cmpi slt, %944, %945 : vector<64x1xi32>
    %947 = arith.andi %942, %946 : vector<64x1xi1>
    %c0_i32_304 = arith.constant 0 : i32
    %948 = vector.broadcast %c0_i32_304 : i32 to vector<64x1xi32>
    %949 = arith.addi %5, %948 : vector<64x1xi32>
    %c0_i32_305 = arith.constant 0 : i32
    %950 = vector.broadcast %c0_i32_305 : i32 to vector<64x1xi32>
    %951 = arith.cmpi sge, %949, %950 : vector<64x1xi32>
    %952 = arith.andi %947, %951 : vector<64x1xi1>
    %c0_i32_306 = arith.constant 0 : i32
    %953 = vector.broadcast %c0_i32_306 : i32 to vector<64x1xi32>
    %954 = arith.addi %5, %953 : vector<64x1xi32>
    %c8_i32_307 = arith.constant 8 : i32
    %955 = vector.broadcast %c8_i32_307 : i32 to vector<64x1xi32>
    %956 = arith.cmpi slt, %954, %955 : vector<64x1xi32>
    %957 = arith.andi %952, %956 : vector<64x1xi1>
    %cst_308 = arith.constant 0.000000e+00 : f32
    %958 = vector.shape_cast %957 : vector<64x1xi1> to vector<64x1xi1>
    %959 = vector.broadcast %958 : vector<64x1xi1> to vector<64x128xi1>
    %960 = vector.broadcast %cst_308 : f32 to vector<64x128xf32>
    %961 = arith.select %959, %938, %960 : vector<64x128xi1>, vector<64x128xf32>
    %962 = arith.addf %935, %961 : vector<64x128xf32>
    %c5_309 = arith.constant 5 : index
    %c0_310 = arith.constant 0 : index
    %c0_311 = arith.constant 0 : index
    %963 = vector.load %arg8[%c5_309, %c0_310, %c0_311] : memref<9x128x128xf32, #tpu.memory_space<vmem>>, vector<1x128x128xf32>
    %964 = vector.shape_cast %963 : vector<1x128x128xf32> to vector<128x128xf32>
    %cst_312 = arith.constant dense<0.000000e+00> : vector<64x128xf32>
    %965 = tpu.matmul %822, %964, %cst_312 {dimension_numbers = #tpu.dot_dimension_numbers<[1], [0], [0], [1], [0, 0, 1, 1], [], []>} : vector<64x128xf32>, vector<128x128xf32>, vector<64x128xf32> -> vector<64x128xf32>
    %c63_i32_313 = arith.constant 63 : i32
    %966 = tpu.dynamic_rotate %965 by %c63_i32_313 dim 0 : vector<64x128xf32>, i32 -> vector<64x128xf32>
    %c0_i32_314 = arith.constant 0 : i32
    %967 = vector.broadcast %c0_i32_314 : i32 to vector<64x1xi32>
    %968 = arith.addi %4, %967 : vector<64x1xi32>
    %c0_i32_315 = arith.constant 0 : i32
    %969 = vector.broadcast %c0_i32_315 : i32 to vector<64x1xi32>
    %970 = arith.cmpi sge, %968, %969 : vector<64x1xi32>
    %c0_i32_316 = arith.constant 0 : i32
    %971 = vector.broadcast %c0_i32_316 : i32 to vector<64x1xi32>
    %972 = arith.addi %4, %971 : vector<64x1xi32>
    %c8_i32_317 = arith.constant 8 : i32
    %973 = vector.broadcast %c8_i32_317 : i32 to vector<64x1xi32>
    %974 = arith.cmpi slt, %972, %973 : vector<64x1xi32>
    %975 = arith.andi %970, %974 : vector<64x1xi1>
    %c1_i32_318 = arith.constant 1 : i32
    %976 = vector.broadcast %c1_i32_318 : i32 to vector<64x1xi32>
    %977 = arith.addi %5, %976 : vector<64x1xi32>
    %c0_i32_319 = arith.constant 0 : i32
    %978 = vector.broadcast %c0_i32_319 : i32 to vector<64x1xi32>
    %979 = arith.cmpi sge, %977, %978 : vector<64x1xi32>
    %980 = arith.andi %975, %979 : vector<64x1xi1>
    %c1_i32_320 = arith.constant 1 : i32
    %981 = vector.broadcast %c1_i32_320 : i32 to vector<64x1xi32>
    %982 = arith.addi %5, %981 : vector<64x1xi32>
    %c8_i32_321 = arith.constant 8 : i32
    %983 = vector.broadcast %c8_i32_321 : i32 to vector<64x1xi32>
    %984 = arith.cmpi slt, %982, %983 : vector<64x1xi32>
    %985 = arith.andi %980, %984 : vector<64x1xi1>
    %cst_322 = arith.constant 0.000000e+00 : f32
    %986 = vector.shape_cast %985 : vector<64x1xi1> to vector<64x1xi1>
    %987 = vector.broadcast %986 : vector<64x1xi1> to vector<64x128xi1>
    %988 = vector.broadcast %cst_322 : f32 to vector<64x128xf32>
    %989 = arith.select %987, %966, %988 : vector<64x128xi1>, vector<64x128xf32>
    %990 = arith.addf %962, %989 : vector<64x128xf32>
    %c6_323 = arith.constant 6 : index
    %c0_324 = arith.constant 0 : index
    %c0_325 = arith.constant 0 : index
    %991 = vector.load %arg8[%c6_323, %c0_324, %c0_325] : memref<9x128x128xf32, #tpu.memory_space<vmem>>, vector<1x128x128xf32>
    %992 = vector.shape_cast %991 : vector<1x128x128xf32> to vector<128x128xf32>
    %cst_326 = arith.constant dense<0.000000e+00> : vector<64x128xf32>
    %993 = tpu.matmul %822, %992, %cst_326 {dimension_numbers = #tpu.dot_dimension_numbers<[1], [0], [0], [1], [0, 0, 1, 1], [], []>} : vector<64x128xf32>, vector<128x128xf32>, vector<64x128xf32> -> vector<64x128xf32>
    %c57_i32_327 = arith.constant 57 : i32
    %994 = tpu.dynamic_rotate %993 by %c57_i32_327 dim 0 : vector<64x128xf32>, i32 -> vector<64x128xf32>
    %c1_i32_328 = arith.constant 1 : i32
    %995 = vector.broadcast %c1_i32_328 : i32 to vector<64x1xi32>
    %996 = arith.addi %4, %995 : vector<64x1xi32>
    %c0_i32_329 = arith.constant 0 : i32
    %997 = vector.broadcast %c0_i32_329 : i32 to vector<64x1xi32>
    %998 = arith.cmpi sge, %996, %997 : vector<64x1xi32>
    %c1_i32_330 = arith.constant 1 : i32
    %999 = vector.broadcast %c1_i32_330 : i32 to vector<64x1xi32>
    %1000 = arith.addi %4, %999 : vector<64x1xi32>
    %c8_i32_331 = arith.constant 8 : i32
    %1001 = vector.broadcast %c8_i32_331 : i32 to vector<64x1xi32>
    %1002 = arith.cmpi slt, %1000, %1001 : vector<64x1xi32>
    %1003 = arith.andi %998, %1002 : vector<64x1xi1>
    %c-1_i32_332 = arith.constant -1 : i32
    %1004 = vector.broadcast %c-1_i32_332 : i32 to vector<64x1xi32>
    %1005 = arith.addi %5, %1004 : vector<64x1xi32>
    %c0_i32_333 = arith.constant 0 : i32
    %1006 = vector.broadcast %c0_i32_333 : i32 to vector<64x1xi32>
    %1007 = arith.cmpi sge, %1005, %1006 : vector<64x1xi32>
    %1008 = arith.andi %1003, %1007 : vector<64x1xi1>
    %c-1_i32_334 = arith.constant -1 : i32
    %1009 = vector.broadcast %c-1_i32_334 : i32 to vector<64x1xi32>
    %1010 = arith.addi %5, %1009 : vector<64x1xi32>
    %c8_i32_335 = arith.constant 8 : i32
    %1011 = vector.broadcast %c8_i32_335 : i32 to vector<64x1xi32>
    %1012 = arith.cmpi slt, %1010, %1011 : vector<64x1xi32>
    %1013 = arith.andi %1008, %1012 : vector<64x1xi1>
    %cst_336 = arith.constant 0.000000e+00 : f32
    %1014 = vector.shape_cast %1013 : vector<64x1xi1> to vector<64x1xi1>
    %1015 = vector.broadcast %1014 : vector<64x1xi1> to vector<64x128xi1>
    %1016 = vector.broadcast %cst_336 : f32 to vector<64x128xf32>
    %1017 = arith.select %1015, %994, %1016 : vector<64x128xi1>, vector<64x128xf32>
    %1018 = arith.addf %990, %1017 : vector<64x128xf32>
    %c7_337 = arith.constant 7 : index
    %c0_338 = arith.constant 0 : index
    %c0_339 = arith.constant 0 : index
    %1019 = vector.load %arg8[%c7_337, %c0_338, %c0_339] : memref<9x128x128xf32, #tpu.memory_space<vmem>>, vector<1x128x128xf32>
    %1020 = vector.shape_cast %1019 : vector<1x128x128xf32> to vector<128x128xf32>
    %cst_340 = arith.constant dense<0.000000e+00> : vector<64x128xf32>
    %1021 = tpu.matmul %822, %1020, %cst_340 {dimension_numbers = #tpu.dot_dimension_numbers<[1], [0], [0], [1], [0, 0, 1, 1], [], []>} : vector<64x128xf32>, vector<128x128xf32>, vector<64x128xf32> -> vector<64x128xf32>
    %c56_i32_341 = arith.constant 56 : i32
    %1022 = tpu.dynamic_rotate %1021 by %c56_i32_341 dim 0 : vector<64x128xf32>, i32 -> vector<64x128xf32>
    %c1_i32_342 = arith.constant 1 : i32
    %1023 = vector.broadcast %c1_i32_342 : i32 to vector<64x1xi32>
    %1024 = arith.addi %4, %1023 : vector<64x1xi32>
    %c0_i32_343 = arith.constant 0 : i32
    %1025 = vector.broadcast %c0_i32_343 : i32 to vector<64x1xi32>
    %1026 = arith.cmpi sge, %1024, %1025 : vector<64x1xi32>
    %c1_i32_344 = arith.constant 1 : i32
    %1027 = vector.broadcast %c1_i32_344 : i32 to vector<64x1xi32>
    %1028 = arith.addi %4, %1027 : vector<64x1xi32>
    %c8_i32_345 = arith.constant 8 : i32
    %1029 = vector.broadcast %c8_i32_345 : i32 to vector<64x1xi32>
    %1030 = arith.cmpi slt, %1028, %1029 : vector<64x1xi32>
    %1031 = arith.andi %1026, %1030 : vector<64x1xi1>
    %c0_i32_346 = arith.constant 0 : i32
    %1032 = vector.broadcast %c0_i32_346 : i32 to vector<64x1xi32>
    %1033 = arith.addi %5, %1032 : vector<64x1xi32>
    %c0_i32_347 = arith.constant 0 : i32
    %1034 = vector.broadcast %c0_i32_347 : i32 to vector<64x1xi32>
    %1035 = arith.cmpi sge, %1033, %1034 : vector<64x1xi32>
    %1036 = arith.andi %1031, %1035 : vector<64x1xi1>
    %c0_i32_348 = arith.constant 0 : i32
    %1037 = vector.broadcast %c0_i32_348 : i32 to vector<64x1xi32>
    %1038 = arith.addi %5, %1037 : vector<64x1xi32>
    %c8_i32_349 = arith.constant 8 : i32
    %1039 = vector.broadcast %c8_i32_349 : i32 to vector<64x1xi32>
    %1040 = arith.cmpi slt, %1038, %1039 : vector<64x1xi32>
    %1041 = arith.andi %1036, %1040 : vector<64x1xi1>
    %cst_350 = arith.constant 0.000000e+00 : f32
    %1042 = vector.shape_cast %1041 : vector<64x1xi1> to vector<64x1xi1>
    %1043 = vector.broadcast %1042 : vector<64x1xi1> to vector<64x128xi1>
    %1044 = vector.broadcast %cst_350 : f32 to vector<64x128xf32>
    %1045 = arith.select %1043, %1022, %1044 : vector<64x128xi1>, vector<64x128xf32>
    %1046 = arith.addf %1018, %1045 : vector<64x128xf32>
    %c8_351 = arith.constant 8 : index
    %c0_352 = arith.constant 0 : index
    %c0_353 = arith.constant 0 : index
    %1047 = vector.load %arg8[%c8_351, %c0_352, %c0_353] : memref<9x128x128xf32, #tpu.memory_space<vmem>>, vector<1x128x128xf32>
    %1048 = vector.shape_cast %1047 : vector<1x128x128xf32> to vector<128x128xf32>
    %cst_354 = arith.constant dense<0.000000e+00> : vector<64x128xf32>
    %1049 = tpu.matmul %822, %1048, %cst_354 {dimension_numbers = #tpu.dot_dimension_numbers<[1], [0], [0], [1], [0, 0, 1, 1], [], []>} : vector<64x128xf32>, vector<128x128xf32>, vector<64x128xf32> -> vector<64x128xf32>
    %c55_i32_355 = arith.constant 55 : i32
    %1050 = tpu.dynamic_rotate %1049 by %c55_i32_355 dim 0 : vector<64x128xf32>, i32 -> vector<64x128xf32>
    %c1_i32_356 = arith.constant 1 : i32
    %1051 = vector.broadcast %c1_i32_356 : i32 to vector<64x1xi32>
    %1052 = arith.addi %4, %1051 : vector<64x1xi32>
    %c0_i32_357 = arith.constant 0 : i32
    %1053 = vector.broadcast %c0_i32_357 : i32 to vector<64x1xi32>
    %1054 = arith.cmpi sge, %1052, %1053 : vector<64x1xi32>
    %c1_i32_358 = arith.constant 1 : i32
    %1055 = vector.broadcast %c1_i32_358 : i32 to vector<64x1xi32>
    %1056 = arith.addi %4, %1055 : vector<64x1xi32>
    %c8_i32_359 = arith.constant 8 : i32
    %1057 = vector.broadcast %c8_i32_359 : i32 to vector<64x1xi32>
    %1058 = arith.cmpi slt, %1056, %1057 : vector<64x1xi32>
    %1059 = arith.andi %1054, %1058 : vector<64x1xi1>
    %c1_i32_360 = arith.constant 1 : i32
    %1060 = vector.broadcast %c1_i32_360 : i32 to vector<64x1xi32>
    %1061 = arith.addi %5, %1060 : vector<64x1xi32>
    %c0_i32_361 = arith.constant 0 : i32
    %1062 = vector.broadcast %c0_i32_361 : i32 to vector<64x1xi32>
    %1063 = arith.cmpi sge, %1061, %1062 : vector<64x1xi32>
    %1064 = arith.andi %1059, %1063 : vector<64x1xi1>
    %c1_i32_362 = arith.constant 1 : i32
    %1065 = vector.broadcast %c1_i32_362 : i32 to vector<64x1xi32>
    %1066 = arith.addi %5, %1065 : vector<64x1xi32>
    %c8_i32_363 = arith.constant 8 : i32
    %1067 = vector.broadcast %c8_i32_363 : i32 to vector<64x1xi32>
    %1068 = arith.cmpi slt, %1066, %1067 : vector<64x1xi32>
    %1069 = arith.andi %1064, %1068 : vector<64x1xi1>
    %cst_364 = arith.constant 0.000000e+00 : f32
    %1070 = vector.shape_cast %1069 : vector<64x1xi1> to vector<64x1xi1>
    %1071 = vector.broadcast %1070 : vector<64x1xi1> to vector<64x128xi1>
    %1072 = vector.broadcast %cst_364 : f32 to vector<64x128xf32>
    %1073 = arith.select %1071, %1050, %1072 : vector<64x128xi1>, vector<64x128xf32>
    %1074 = arith.addf %1046, %1073 : vector<64x128xf32>
    %c0_365 = arith.constant 0 : index
    %c0_366 = arith.constant 0 : index
    %c0_367 = arith.constant 0 : index
    %1075 = vector.load %arg9[%c0_365, %c0_366, %c0_367] : memref<1x64x128xf32, #tpu.memory_space<vmem>>, vector<1x64x128xf32>
    %1076 = vector.shape_cast %1075 : vector<1x64x128xf32> to vector<64x128xf32>
    %1077 = vector.shape_cast %1074 : vector<64x128xf32> to vector<1x64x128xf32>
    tpu.vector_store %arg9[%c0_365, %c0_366, %c0_367], %1077 {strides = array<i32>} : memref<1x64x128xf32, #tpu.memory_space<vmem>>, vector<1x64x128xf32>,
    return
  }
  func.func @transform_0(%arg0: i32) -> (i32, i32, i32) {
    %c0_i32 = arith.constant 0 : i32
    %c0_i32_0 = arith.constant 0 : i32
    %c0_i32_1 = arith.constant 0 : i32
    return %arg0, %c0_i32, %c0_i32_0 : i32, i32, i32
  }
  func.func @transform_1(%arg0: i32) -> (i32, i32, i32) {
    %c0_i32 = arith.constant 0 : i32
    %c0_i32_0 = arith.constant 0 : i32
    %c0_i32_1 = arith.constant 0 : i32
    return %arg0, %c0_i32, %c0_i32_0 : i32, i32, i32
  }
  func.func @transform_2(%arg0: i32) -> (i32, i32) {
    %c0_i32 = arith.constant 0 : i32
    %c0_i32_0 = arith.constant 0 : i32
    %c0_i32_1 = arith.constant 0 : i32
    return %c0_i32, %c0_i32_0 : i32, i32
  }
  func.func @transform_3(%arg0: i32) -> (i32, i32) {
    %c0_i32 = arith.constant 0 : i32
    %c0_i32_0 = arith.constant 0 : i32
    %c0_i32_1 = arith.constant 0 : i32
    return %c0_i32, %c0_i32_0 : i32, i32
  }
  func.func @transform_4(%arg0: i32) -> i32 {
    %c0_i32 = arith.constant 0 : i32
    %c0_i32_0 = arith.constant 0 : i32
    return %c0_i32 : i32
  }
  func.func @transform_5(%arg0: i32) -> (i32, i32) {
    %c0_i32 = arith.constant 0 : i32
    %c0_i32_0 = arith.constant 0 : i32
    %c0_i32_1 = arith.constant 0 : i32
    return %c0_i32, %c0_i32_0 : i32, i32
  }
  func.func @transform_6(%arg0: i32) -> (i32, i32) {
    %c0_i32 = arith.constant 0 : i32
    %c0_i32_0 = arith.constant 0 : i32
    %c0_i32_1 = arith.constant 0 : i32
    return %c0_i32, %c0_i32_0 : i32, i32
  }
  func.func @transform_7(%arg0: i32) -> (i32, i32, i32) {
    %c0_i32 = arith.constant 0 : i32
    %c0_i32_0 = arith.constant 0 : i32
    %c0_i32_1 = arith.constant 0 : i32
    %c0_i32_2 = arith.constant 0 : i32
    return %c0_i32, %c0_i32_0, %c0_i32_1 : i32, i32, i32
  }
  func.func @transform_8(%arg0: i32) -> (i32, i32, i32) {
    %c0_i32 = arith.constant 0 : i32
    %c0_i32_0 = arith.constant 0 : i32
    %c0_i32_1 = arith.constant 0 : i32
    return %arg0, %c0_i32, %c0_i32_0 : i32, i32, i32
  }
}

</mosaic_0001>

<llo_original>
// kernel: upsample_8_forward.2
$region0: #{upsample_8_forward.2}
  #allocation0 [shape = 'u32[]', space=smem, size = 0x4, offset = 0x4, fixed_abs, tag = 'smem constant byte address 0x4 - core index']
  #allocation1 [shape = 'u32[144,128]{1,0:T(1,128)}', space=vmem, size = 0x12000, scoped, tag = 'internal scratch']
  %s0 = inlined_call_operand.vmem [shape: f32[128,128], index: 0, kind: input, shape index: {}]
  %s1 = inlined_call_operand.vmem [shape: f32[128,116], index: 1, kind: input, shape index: {}]
  %s2 = inlined_call_operand.vmem [shape: f32[1,116], index: 2, kind: input, shape index: {}]
  %s3 = inlined_call_operand.vmem [shape: f32[1,116], index: 3, kind: input, shape index: {}]
  %s4 = inlined_call_operand.vmem [shape: f32[116,128], index: 4, kind: input, shape index: {}]
  %s5 = inlined_call_operand.vmem [shape: f32[128,256], index: 5, kind: input, shape index: {}]
  %s6 = inlined_call_operand.vmem [shape: f32[128,256], index: 6, kind: input, shape index: {}]
  %s7 = inlined_call_operand.vmem [shape: f32[1,256], index: 7, kind: input, shape index: {}]
  %s8 = inlined_call_operand.vmem [shape: f32[1,128], index: 8, kind: input, shape index: {}]
  %s9 = inlined_call_operand.vmem [shape: f32[1,128], index: 9, kind: input, shape index: {}]
  %s10 = inlined_call_operand.vmem [shape: f32[1,128], index: 10, kind: input, shape index: {}]
  %s11 = inlined_call_operand.vmem [shape: f32[1,128], index: 11, kind: input, shape index: {}]
  %s12 = inlined_call_operand.vmem [shape: f32[128,128], index: 12, kind: input, shape index: {}]
  %s13 = inlined_call_operand.vmem [shape: f32[128,128], index: 13, kind: input, shape index: {}]
  %s14 = inlined_call_operand.vmem [shape: f32[128,128], index: 14, kind: output, shape index: {0}]
  %s15 = inlined_call_operand.vmem [shape: f32[128,2], index: 15, kind: output, shape index: {1}]
  %16 = xla_tuple %s14, %s15
  %s17 = sld [smem:[#allocation0]]
  $region74: #{upsample_8_forward.2} parent=0
    _
  %s19 = ssub.s32 1, %s17
  %s20 = scalar_select 0, %s19, %s17
  // Predicated region
  $region2: #{upsample_8_forward.2} parent=0 // pred_check
    _
  $region3: #{upsample_8_forward.2} parent=0 // pred_check_branch
    %22 = sbr.rel (0) target = $region5
  $region4: #{upsample_8_forward.2} parent=0 // pred_region
    _
  $region5: #{upsample_8_forward.2} parent=0 // pred_fallthru
    _
  // Predicated region
  $region6: #{upsample_8_forward.2} parent=0 // pred_check
    _
  $region7: #{upsample_8_forward.2} parent=0 // pred_check_branch
    %24 = sbr.rel (0) target = $region9
  $region8: #{upsample_8_forward.2} parent=0 // pred_region
    _
  $region9: #{upsample_8_forward.2} parent=0 // pred_fallthru
    _
  // Predicated region
  $region10: #{upsample_8_forward.2} parent=0 // pred_check
    _
  $region11: #{upsample_8_forward.2} parent=0 // pred_check_branch
    %26 = sbr.rel (0) target = $region13
  $region12: #{upsample_8_forward.2} parent=0 // pred_region
    _
  $region13: #{upsample_8_forward.2} parent=0 // pred_fallthru
    _
  // Predicated region
  $region14: #{upsample_8_forward.2} parent=0 // pred_check
    _
  $region15: #{upsample_8_forward.2} parent=0 // pred_check_branch
    %28 = sbr.rel (0) target = $region17
  $region16: #{upsample_8_forward.2} parent=0 // pred_region
    _
  $region17: #{upsample_8_forward.2} parent=0 // pred_fallthru
    _
  // Predicated region
  $region18: #{upsample_8_forward.2} parent=0 // pred_check
    _
  $region19: #{upsample_8_forward.2} parent=0 // pred_check_branch
    %30 = sbr.rel (0) target = $region21
  $region20: #{upsample_8_forward.2} parent=0 // pred_region
    _
  $region21: #{upsample_8_forward.2} parent=0 // pred_fallthru
    _
  // Predicated region
  $region22: #{upsample_8_forward.2} parent=0 // pred_check
    _
  $region23: #{upsample_8_forward.2} parent=0 // pred_check_branch
    %32 = sbr.rel (0) target = $region25
  $region24: #{upsample_8_forward.2} parent=0 // pred_region
    _
  $region25: #{upsample_8_forward.2} parent=0 // pred_fallthru
    _
  // Predicated region
  $region26: #{upsample_8_forward.2} parent=0 // pred_check
    _
  $region27: #{upsample_8_forward.2} parent=0 // pred_check_branch
    %34 = sbr.rel (0) target = $region29
  $region28: #{upsample_8_forward.2} parent=0 // pred_region
    _
  $region29: #{upsample_8_forward.2} parent=0 // pred_fallthru
    _
  // Predicated region
  $region30: #{upsample_8_forward.2} parent=0 // pred_check
    _
  $region31: #{upsample_8_forward.2} parent=0 // pred_check_branch
    %36 = sbr.rel (0) target = $region33
  $region32: #{upsample_8_forward.2} parent=0 // pred_region
    _
  $region33: #{upsample_8_forward.2} parent=0 // pred_fallthru
    _
  // Predicated region
  $region34: #{upsample_8_forward.2} parent=0 // pred_check
    _
  $region35: #{upsample_8_forward.2} parent=0 // pred_check_branch
    %38 = sbr.rel (0) target = $region37
  $region36: #{upsample_8_forward.2} parent=0 // pred_region
    _
  $region37: #{upsample_8_forward.2} parent=0 // pred_fallthru
    _
  // Predicated region
  $region38: #{upsample_8_forward.2} parent=0 // pred_check
    _
  $region39: #{upsample_8_forward.2} parent=0 // pred_check_branch
    %40 = sbr.rel (0) target = $region41
  $region40: #{upsample_8_forward.2} parent=0 // pred_region
    _
  $region41: #{upsample_8_forward.2} parent=0 // pred_fallthru
    _
  // Predicated region
  $region42: #{upsample_8_forward.2} parent=0 // pred_check
    _
  $region43: #{upsample_8_forward.2} parent=0 // pred_check_branch
    %42 = sbr.rel (0) target = $region45
  $region44: #{upsample_8_forward.2} parent=0 // pred_region
    _
  $region45: #{upsample_8_forward.2} parent=0 // pred_fallthru
    _
  // Predicated region
  $region46: #{upsample_8_forward.2} parent=0 // pred_check
    _
  $region47: #{upsample_8_forward.2} parent=0 // pred_check_branch
    %44 = sbr.rel (0) target = $region49
  $region48: #{upsample_8_forward.2} parent=0 // pred_region
    _
  $region49: #{upsample_8_forward.2} parent=0 // pred_fallthru
    _
  // Predicated region
  $region50: #{upsample_8_forward.2} parent=0 // pred_check
    _
  $region51: #{upsample_8_forward.2} parent=0 // pred_check_branch
    %46 = sbr.rel (0) target = $region53
  $region52: #{upsample_8_forward.2} parent=0 // pred_region
    _
  $region53: #{upsample_8_forward.2} parent=0 // pred_fallthru
    _
  // Predicated region
  $region54: #{upsample_8_forward.2} parent=0 // pred_check
    _
  $region55: #{upsample_8_forward.2} parent=0 // pred_check_branch
    %48 = sbr.rel (0) target = $region57
  $region56: #{upsample_8_forward.2} parent=0 // pred_region
    _
  $region57: #{upsample_8_forward.2} parent=0 // pred_fallthru
    _
  %v49 = vld [vmem:[%s0] sm:$0xff]
  %v50 = vld [vmem:[%s0 + $0x8] sm:$0xff]
  %v51 = vld [vmem:[%s0 + $0x10] sm:$0xff]
  %v52 = vld [vmem:[%s0 + $0x18] sm:$0xff]
  %v53 = vld [vmem:[%s0 + $0x20] sm:$0xff]
  %v54 = vld [vmem:[%s0 + $0x28] sm:$0xff]
  %v55 = vld [vmem:[%s0 + $0x30] sm:$0xff]
  %v56 = vld [vmem:[%s0 + $0x38] sm:$0xff]
  %v57 = vld [vmem:[%s0 + $0x40] sm:$0xff]
  %v58 = vld [vmem:[%s0 + $0x48] sm:$0xff]
  %v59 = vld [vmem:[%s0 + $0x50] sm:$0xff]
  %v60 = vld [vmem:[%s0 + $0x58] sm:$0xff]
  %v61 = vld [vmem:[%s0 + $0x60] sm:$0xff]
  %v62 = vld [vmem:[%s0 + $0x68] sm:$0xff]
  %v63 = vld [vmem:[%s0 + $0x70] sm:$0xff]
  %v64 = vld [vmem:[%s0 + $0x78] sm:$0xff]
  %v65 = vld [vmem:[%s1] sm:$0xff]
  %v66 = vld [vmem:[%s1 + $0x8] sm:$0xff]
  %v67 = vld [vmem:[%s1 + $0x10] sm:$0xff]
  %v68 = vld [vmem:[%s1 + $0x18] sm:$0xff]
  %v69 = vld [vmem:[%s1 + $0x20] sm:$0xff]
  %v70 = vld [vmem:[%s1 + $0x28] sm:$0xff]
  %v71 = vld [vmem:[%s1 + $0x30] sm:$0xff]
  %v72 = vld [vmem:[%s1 + $0x38] sm:$0xff]
  %v73 = vld [vmem:[%s1 + $0x40] sm:$0xff]
  %v74 = vld [vmem:[%s1 + $0x48] sm:$0xff]
  %v75 = vld [vmem:[%s1 + $0x50] sm:$0xff]
  %v76 = vld [vmem:[%s1 + $0x58] sm:$0xff]
  %v77 = vld [vmem:[%s1 + $0x60] sm:$0xff]
  %v78 = vld [vmem:[%s1 + $0x68] sm:$0xff]
  %v79 = vld [vmem:[%s1 + $0x70] sm:$0xff]
  %v80 = vld [vmem:[%s1 + $0x78] sm:$0xff]
  %v81 = vld [vmem:[%s2] sm:$0x1]
  %v83 = vlaneseq
  %v84 = vshrl.u32 %v83, 7
  %v85 = vsub.s32 0, %v84
  %v86 = vrot.slane %v81, %v85
  %v88 = vmul.f32 %v65, %v86
  %v89 = vmul.f32 %v66, %v86
  %v90 = vmul.f32 %v67, %v86
  %v91 = vmul.f32 %v68, %v86
  %v92 = vmul.f32 %v69, %v86
  %v93 = vmul.f32 %v70, %v86
  %v94 = vmul.f32 %v71, %v86
  %v95 = vmul.f32 %v72, %v86
  %v96 = vmul.f32 %v73, %v86
  %v97 = vmul.f32 %v74, %v86
  %v98 = vmul.f32 %v75, %v86
  %v99 = vmul.f32 %v76, %v86
  %v100 = vmul.f32 %v77, %v86
  %v101 = vmul.f32 %v78, %v86
  %v102 = vmul.f32 %v79, %v86
  %v103 = vmul.f32 %v80, %v86
  %v104 = vld [vmem:[%s3] sm:$0x1]
  %v106 = vlaneseq
  %v107 = vshrl.u32 %v106, 7
  %v108 = vsub.s32 0, %v107
  %v109 = vrot.slane %v104, %v108
  %v111 = vadd.f32 %v88, %v109
  %v112 = vadd.f32 %v89, %v109
  %v113 = vadd.f32 %v90, %v109
  %v114 = vadd.f32 %v91, %v109
  %v115 = vadd.f32 %v92, %v109
  %v116 = vadd.f32 %v93, %v109
  %v117 = vadd.f32 %v94, %v109
  %v118 = vadd.f32 %v95, %v109
  %v119 = vadd.f32 %v96, %v109
  %v120 = vadd.f32 %v97, %v109
  %v121 = vadd.f32 %v98, %v109
  %v122 = vadd.f32 %v99, %v109
  %v123 = vadd.f32 %v100, %v109
  %v124 = vadd.f32 %v101, %v109
  %v125 = vadd.f32 %v102, %v109
  %v126 = vadd.f32 %v103, %v109
  %v127 = vmax.f32 %v111, 0.0
  %v128 = vmax.f32 %v112, 0.0
  %v129 = vmax.f32 %v113, 0.0
  %v130 = vmax.f32 %v114, 0.0
  %v131 = vmax.f32 %v115, 0.0
  %v132 = vmax.f32 %v116, 0.0
  %v133 = vmax.f32 %v117, 0.0
  %v134 = vmax.f32 %v118, 0.0
  %v135 = vmax.f32 %v119, 0.0
  %v136 = vmax.f32 %v120, 0.0
  %v137 = vmax.f32 %v121, 0.0
  %v138 = vmax.f32 %v122, 0.0
  %v139 = vmax.f32 %v123, 0.0
  %v140 = vmax.f32 %v124, 0.0
  %v141 = vmax.f32 %v125, 0.0
  %v142 = vmax.f32 %v126, 0.0
  %v143 = vld [vmem:[%s4] sm:$0xff]
  %v144 = vld [vmem:[%s4 + $0x8] sm:$0xff]
  %v145 = vld [vmem:[%s4 + $0x10] sm:$0xff]
  %v146 = vld [vmem:[%s4 + $0x18] sm:$0xff]
  %v147 = vld [vmem:[%s4 + $0x20] sm:$0xff]
  %v148 = vld [vmem:[%s4 + $0x28] sm:$0xff]
  %v149 = vld [vmem:[%s4 + $0x30] sm:$0xff]
  %v150 = vld [vmem:[%s4 + $0x38] sm:$0xff]
  %v151 = vld [vmem:[%s4 + $0x40] sm:$0xff]
  %v152 = vld [vmem:[%s4 + $0x48] sm:$0xff]
  %v153 = vld [vmem:[%s4 + $0x50] sm:$0xff]
  %v154 = vld [vmem:[%s4 + $0x58] sm:$0xff]
  %v155 = vld [vmem:[%s4 + $0x60] sm:$0xff]
  %v156 = vld [vmem:[%s4 + $0x68] sm:$0xff]
  %v157 = vld [vmem:[%s4 + $0x70] sm:$0xf]
  %vm158 = vcmask 949248
  %v160 = vsel %vm158, %v127, 0
  %v163 = vsel %vm158, %v128, 0
  %v166 = vsel %vm158, %v129, 0
  %v169 = vsel %vm158, %v130, 0
  %v172 = vsel %vm158, %v131, 0
  %v175 = vsel %vm158, %v132, 0
  %v178 = vsel %vm158, %v133, 0
  %v181 = vsel %vm158, %v134, 0
  %v184 = vsel %vm158, %v135, 0
  %v187 = vsel %vm158, %v136, 0
  %v190 = vsel %vm158, %v137, 0
  %v193 = vsel %vm158, %v138, 0
  %v196 = vsel %vm158, %v139, 0
  %v199 = vsel %vm158, %v140, 0
  %v202 = vsel %vm158, %v141, 0
  %v205 = vsel %vm158, %v142, 0
  %vm207 = vcmask 1043456
  %v209 = vsel %vm207, %v157, 0
  %211 = vmatprep.subr.mxu0 0.0
  %212 = vmatpush1.msra.mxu0 %v143
  %213 = vmatprep.subr.mxu0 0.0
  %214 = vmatpush1.msra.mxu0 %v144
  %215 = vmatprep.subr.mxu0 0.0
  %216 = vmatpush1.msra.mxu0 %v145
  %217 = vmatprep.subr.mxu0 0.0
  %218 = vmatpush1.msra.mxu0 %v146
  %219 = vmatprep.subr.mxu0 0.0
  %220 = vmatpush1.msra.mxu0 %v147
  %221 = vmatprep.subr.mxu0 0.0
  %222 = vmatpush1.msra.mxu0 %v148
  %223 = vmatprep.subr.mxu0 0.0
  %224 = vmatpush1.msra.mxu0 %v149
  %225 = vmatprep.subr.mxu0 0.0
  %226 = vmatpush1.msra.mxu0 %v150
  %227 = vmatprep.subr.mxu0 0.0
  %228 = vmatpush1.msra.mxu0 %v151
  %229 = vmatprep.subr.mxu0 0.0
  %230 = vmatpush1.msra.mxu0 %v152
  %231 = vmatprep.subr.mxu0 0.0
  %232 = vmatpush1.msra.mxu0 %v153
  %233 = vmatprep.subr.mxu0 0.0
  %234 = vmatpush1.msra.mxu0 %v154
  %235 = vmatprep.subr.mxu0 0.0
  %236 = vmatpush1.msra.mxu0 %v155
  %237 = vmatprep.subr.mxu0 0.0
  %238 = vmatpush1.msra.mxu0 %v156
  %239 = vmatprep.subr.mxu0 0.0
  %240 = vmatpush1.msra.mxu0 %v209
  %241 = vmatprep.subr.mxu0 0.0
  %242 = vmatpush1.msra.mxu0 0.0
  %243 = vmatprep.subr.mxu0 0.0
  %244 = vmatpush1.msra.mxu0 0.0
  %245 = vmatprep.subr.mxu0 0.0
  %246 = vmatpush1.msra.mxu0 0.0
  %247 = vmatprep.subr.mxu0 0.0
  %248 = vmatpush1.msra.mxu0 0.0
  %249 = vmatprep.subr.mxu0 0.0
  %250 = vmatpush1.msra.mxu0 0.0
  %251 = vmatprep.subr.mxu0 0.0
  %252 = vmatpush1.msra.mxu0 0.0
  %253 = vmatprep.subr.mxu0 0.0
  %254 = vmatpush1.msra.mxu0 0.0
  %255 = vmatprep.subr.mxu0 0.0
  %256 = vmatpush1.msra.mxu0 0.0
  %257 = vmatprep.subr.mxu0 0.0
  %258 = vmatpush1.msra.mxu0 0.0
  %259 = vmatprep.subr.mxu0 0.0
  %260 = vmatpush1.msra.mxu0 0.0
  %261 = vmatprep.subr.mxu0 0.0
  %262 = vmatpush1.msra.mxu0 0.0
  %263 = vmatprep.subr.mxu0 0.0
  %264 = vmatpush1.msra.mxu0 0.0
  %265 = vmatprep.subr.mxu0 0.0
  %266 = vmatpush1.msra.mxu0 0.0
  %267 = vmatprep.subr.mxu0 0.0
  %268 = vmatpush1.msra.mxu0 0.0
  %269 = vmatprep.subr.mxu0 0.0
  %270 = vmatpush1.msra.mxu0 0.0
  %271 = vmatprep.subr.mxu0 0.0
  %272 = vmatpush1.msra.mxu0 0.0
  %273 = vmatprep.subr.mxu0 0.0
  %274 = vmatpush1.msra.mxu0 0.0
  %275 = vmatprep.mubr.f32.mxu0 0.0
  %276 = vmatmul.mubr.f32.gmra.mrb[0].mxu0 %v160
  %v277 = vpop.f32.mrb[0].mxu0
  %v278 = vadd.f32 0.0, %v277
  %v279 = vpop.f32.mrb[0].mxu0
  %280 = vmatprep.mubr.f32.mxu0 0.0
  %281 = vmatmul.mubr.f32.gmra.mrb[0].mxu0 %v163
  %v282 = vpop.f32.mrb[0].mxu0
  %v283 = vadd.f32 0.0, %v282
  %v284 = vpop.f32.mrb[0].mxu0
  %285 = vmatprep.mubr.f32.mxu0 0.0
  %286 = vmatmul.mubr.f32.gmra.mrb[0].mxu0 %v166
  %v287 = vpop.f32.mrb[0].mxu0
  %v288 = vadd.f32 0.0, %v287
  %v289 = vpop.f32.mrb[0].mxu0
  %290 = vmatprep.mubr.f32.mxu0 0.0
  %291 = vmatmul.mubr.f32.gmra.mrb[0].mxu0 %v169
  %v292 = vpop.f32.mrb[0].mxu0
  %v293 = vadd.f32 0.0, %v292
  %v294 = vpop.f32.mrb[0].mxu0
  %295 = vmatprep.mubr.f32.mxu0 0.0
  %296 = vmatmul.mubr.f32.gmra.mrb[0].mxu0 %v172
  %v297 = vpop.f32.mrb[0].mxu0
  %v298 = vadd.f32 0.0, %v297
  %v299 = vpop.f32.mrb[0].mxu0
  %300 = vmatprep.mubr.f32.mxu0 0.0
  %301 = vmatmul.mubr.f32.gmra.mrb[0].mxu0 %v175
  %v302 = vpop.f32.mrb[0].mxu0
  %v303 = vadd.f32 0.0, %v302
  %v304 = vpop.f32.mrb[0].mxu0
  %305 = vmatprep.mubr.f32.mxu0 0.0
  %306 = vmatmul.mubr.f32.gmra.mrb[0].mxu0 %v178
  %v307 = vpop.f32.mrb[0].mxu0
  %v308 = vadd.f32 0.0, %v307
  %v309 = vpop.f32.mrb[0].mxu0
  %310 = vmatprep.mubr.f32.mxu0 0.0
  %311 = vmatmul.mubr.f32.gmra.mrb[0].mxu0 %v181
  %v312 = vpop.f32.mrb[0].mxu0
  %v313 = vadd.f32 0.0, %v312
  %v314 = vpop.f32.mrb[0].mxu0
  %315 = vmatprep.mubr.f32.mxu0 0.0
  %316 = vmatmul.mubr.f32.gmra.mrb[0].mxu0 %v184
  %v317 = vpop.f32.mrb[0].mxu0
  %v318 = vadd.f32 0.0, %v317
  %v319 = vpop.f32.mrb[0].mxu0
  %320 = vmatprep.mubr.f32.mxu0 0.0
  %321 = vmatmul.mubr.f32.gmra.mrb[0].mxu0 %v187
  %v322 = vpop.f32.mrb[0].mxu0
  %v323 = vadd.f32 0.0, %v322
  %v324 = vpop.f32.mrb[0].mxu0
  %325 = vmatprep.mubr.f32.mxu0 0.0
  %326 = vmatmul.mubr.f32.gmra.mrb[0].mxu0 %v190
  %v327 = vpop.f32.mrb[0].mxu0
  %v328 = vadd.f32 0.0, %v327
  %v329 = vpop.f32.mrb[0].mxu0
  %330 = vmatprep.mubr.f32.mxu0 0.0
  %331 = vmatmul.mubr.f32.gmra.mrb[0].mxu0 %v193
  %v332 = vpop.f32.mrb[0].mxu0
  %v333 = vadd.f32 0.0, %v332
  %v334 = vpop.f32.mrb[0].mxu0
  %335 = vmatprep.mubr.f32.mxu0 0.0
  %336 = vmatmul.mubr.f32.gmra.mrb[0].mxu0 %v196
  %v337 = vpop.f32.mrb[0].mxu0
  %v338 = vadd.f32 0.0, %v337
  %v339 = vpop.f32.mrb[0].mxu0
  %340 = vmatprep.mubr.f32.mxu0 0.0
  %341 = vmatmul.mubr.f32.gmra.mrb[0].mxu0 %v199
  %v342 = vpop.f32.mrb[0].mxu0
  %v343 = vadd.f32 0.0, %v342
  %v344 = vpop.f32.mrb[0].mxu0
  %345 = vmatprep.mubr.f32.mxu0 0.0
  %346 = vmatmul.mubr.f32.gmra.mrb[0].mxu0 %v202
  %v347 = vpop.f32.mrb[0].mxu0
  %v348 = vadd.f32 0.0, %v347
  %v349 = vpop.f32.mrb[0].mxu0
  %350 = vmatprep.mubr.f32.mxu0 0.0
  %351 = vmatmul.mubr.f32.gmra.mrb[0].mxu0 %v205
  %v352 = vpop.f32.mrb[0].mxu0
  %v353 = vadd.f32 0.0, %v352
  %v354 = vpop.f32.mrb[0].mxu0
  %355 = vdwg.mxu0
  %v356 = vld [vmem:[%s5] sm:$0xff]
  %v357 = vld [vmem:[%s5 + $0x8] sm:$0xff]
  %v358 = vld [vmem:[%s5 + $0x10] sm:$0xff]
  %v359 = vld [vmem:[%s5 + $0x18] sm:$0xff]
  %v360 = vld [vmem:[%s5 + $0x20] sm:$0xff]
  %v361 = vld [vmem:[%s5 + $0x28] sm:$0xff]
  %v362 = vld [vmem:[%s5 + $0x30] sm:$0xff]
  %v363 = vld [vmem:[%s5 + $0x38] sm:$0xff]
  %v364 = vld [vmem:[%s5 + $0x40] sm:$0xff]
  %v365 = vld [vmem:[%s5 + $0x48] sm:$0xff]
  %v366 = vld [vmem:[%s5 + $0x50] sm:$0xff]
  %v367 = vld [vmem:[%s5 + $0x58] sm:$0xff]
  %v368 = vld [vmem:[%s5 + $0x60] sm:$0xff]
  %v369 = vld [vmem:[%s5 + $0x68] sm:$0xff]
  %v370 = vld [vmem:[%s5 + $0x70] sm:$0xff]
  %v371 = vld [vmem:[%s5 + $0x78] sm:$0xff]
  %v372 = vld [vmem:[%s5 + $0x80] sm:$0xff]
  %v373 = vld [vmem:[%s5 + $0x88] sm:$0xff]
  %v374 = vld [vmem:[%s5 + $0x90] sm:$0xff]
  %v375 = vld [vmem:[%s5 + $0x98] sm:$0xff]
  %v376 = vld [vmem:[%s5 + $0xa0] sm:$0xff]
  %v377 = vld [vmem:[%s5 + $0xa8] sm:$0xff]
  %v378 = vld [vmem:[%s5 + $0xb0] sm:$0xff]
  %v379 = vld [vmem:[%s5 + $0xb8] sm:$0xff]
  %v380 = vld [vmem:[%s5 + $0xc0] sm:$0xff]
  %v381 = vld [vmem:[%s5 + $0xc8] sm:$0xff]
  %v382 = vld [vmem:[%s5 + $0xd0] sm:$0xff]
  %v383 = vld [vmem:[%s5 + $0xd8] sm:$0xff]
  %v384 = vld [vmem:[%s5 + $0xe0] sm:$0xff]
  %v385 = vld [vmem:[%s5 + $0xe8] sm:$0xff]
  %v386 = vld [vmem:[%s5 + $0xf0] sm:$0xff]
  %v387 = vld [vmem:[%s5 + $0xf8] sm:$0xff]
  %v388 = vld [vmem:[%s6] sm:$0xff]
  %v389 = vld [vmem:[%s6 + $0x8] sm:$0xff]
  %v390 = vld [vmem:[%s6 + $0x10] sm:$0xff]
  %v391 = vld [vmem:[%s6 + $0x18] sm:$0xff]
  %v392 = vld [vmem:[%s6 + $0x20] sm:$0xff]
  %v393 = vld [vmem:[%s6 + $0x28] sm:$0xff]
  %v394 = vld [vmem:[%s6 + $0x30] sm:$0xff]
  %v395 = vld [vmem:[%s6 + $0x38] sm:$0xff]
  %v396 = vld [vmem:[%s6 + $0x40] sm:$0xff]
  %v397 = vld [vmem:[%s6 + $0x48] sm:$0xff]
  %v398 = vld [vmem:[%s6 + $0x50] sm:$0xff]
  %v399 = vld [vmem:[%s6 + $0x58] sm:$0xff]
  %v400 = vld [vmem:[%s6 + $0x60] sm:$0xff]
  %v401 = vld [vmem:[%s6 + $0x68] sm:$0xff]
  %v402 = vld [vmem:[%s6 + $0x70] sm:$0xff]
  %v403 = vld [vmem:[%s6 + $0x78] sm:$0xff]
  %v404 = vld [vmem:[%s6 + $0x80] sm:$0xff]
  %v405 = vld [vmem:[%s6 + $0x88] sm:$0xff]
  %v406 = vld [vmem:[%s6 + $0x90] sm:$0xff]
  %v407 = vld [vmem:[%s6 + $0x98] sm:$0xff]
  %v408 = vld [vmem:[%s6 + $0xa0] sm:$0xff]
  %v409 = vld [vmem:[%s6 + $0xa8] sm:$0xff]
  %v410 = vld [vmem:[%s6 + $0xb0] sm:$0xff]
  %v411 = vld [vmem:[%s6 + $0xb8] sm:$0xff]
  %v412 = vld [vmem:[%s6 + $0xc0] sm:$0xff]
  %v413 = vld [vmem:[%s6 + $0xc8] sm:$0xff]
  %v414 = vld [vmem:[%s6 + $0xd0] sm:$0xff]
  %v415 = vld [vmem:[%s6 + $0xd8] sm:$0xff]
  %v416 = vld [vmem:[%s6 + $0xe0] sm:$0xff]
  %v417 = vld [vmem:[%s6 + $0xe8] sm:$0xff]
  %v418 = vld [vmem:[%s6 + $0xf0] sm:$0xff]
  %v419 = vld [vmem:[%s6 + $0xf8] sm:$0xff]
  %420 = vmatprep.subr.mxu0 %v389
  %421 = vmatpush1.msra.mxu0 %v388
  %422 = vmatprep.subr.mxu0 %v391
  %423 = vmatpush1.msra.mxu0 %v390
  %424 = vmatprep.subr.mxu0 %v393
  %425 = vmatpush1.msra.mxu0 %v392
  %426 = vmatprep.subr.mxu0 %v395
  %427 = vmatpush1.msra.mxu0 %v394
  %428 = vmatprep.subr.mxu0 %v397
  %429 = vmatpush1.msra.mxu0 %v396
  %430 = vmatprep.subr.mxu0 %v399
  %431 = vmatpush1.msra.mxu0 %v398
  %432 = vmatprep.subr.mxu0 %v401
  %433 = vmatpush1.msra.mxu0 %v400
  %434 = vmatprep.subr.mxu0 %v403
  %435 = vmatpush1.msra.mxu0 %v402
  %436 = vmatprep.subr.mxu0 %v405
  %437 = vmatpush1.msra.mxu0 %v404
  %438 = vmatprep.subr.mxu0 %v407
  %439 = vmatpush1.msra.mxu0 %v406
  %440 = vmatprep.subr.mxu0 %v409
  %441 = vmatpush1.msra.mxu0 %v408
  %442 = vmatprep.subr.mxu0 %v411
  %443 = vmatpush1.msra.mxu0 %v410
  %444 = vmatprep.subr.mxu0 %v413
  %445 = vmatpush1.msra.mxu0 %v412
  %446 = vmatprep.subr.mxu0 %v415
  %447 = vmatpush1.msra.mxu0 %v414
  %448 = vmatprep.subr.mxu0 %v417
  %449 = vmatpush1.msra.mxu0 %v416
  %450 = vmatprep.subr.mxu0 %v419
  %451 = vmatpush1.msra.mxu0 %v418
  %452 = vmatprep.subr.mxu0 0.0
  %453 = vmatpush1.msra.mxu0 0.0
  %454 = vmatprep.subr.mxu0 0.0
  %455 = vmatpush1.msra.mxu0 0.0
  %456 = vmatprep.subr.mxu0 0.0
  %457 = vmatpush1.msra.mxu0 0.0
  %458 = vmatprep.subr.mxu0 0.0
  %459 = vmatpush1.msra.mxu0 0.0
  %460 = vmatprep.subr.mxu0 0.0
  %461 = vmatpush1.msra.mxu0 0.0
  %462 = vmatprep.subr.mxu0 0.0
  %463 = vmatpush1.msra.mxu0 0.0
  %464 = vmatprep.subr.mxu0 0.0
  %465 = vmatpush1.msra.mxu0 0.0
  %466 = vmatprep.subr.mxu0 0.0
  %467 = vmatpush1.msra.mxu0 0.0
  %468 = vmatprep.subr.mxu0 0.0
  %469 = vmatpush1.msra.mxu0 0.0
  %470 = vmatprep.subr.mxu0 0.0
  %471 = vmatpush1.msra.mxu0 0.0
  %472 = vmatprep.subr.mxu0 0.0
  %473 = vmatpush1.msra.mxu0 0.0
  %474 = vmatprep.subr.mxu0 0.0
  %475 = vmatpush1.msra.mxu0 0.0
  %476 = vmatprep.subr.mxu0 0.0
  %477 = vmatpush1.msra.mxu0 0.0
  %478 = vmatprep.subr.mxu0 0.0
  %479 = vmatpush1.msra.mxu0 0.0
  %480 = vmatprep.subr.mxu0 0.0
  %481 = vmatpush1.msra.mxu0 0.0
  %482 = vmatprep.subr.mxu0 0.0
  %483 = vmatpush1.msra.mxu0 0.0
  %484 = vmatprep.mubr.f32.mxu0 0.0
  %485 = vmatmul.mubr.f32.gmra.mrb[0].mxu0 %v278
  %v486 = vpop.f32.mrb[0].mxu0
  %v487 = vadd.f32 0.0, %v486
  %v488 = vpop.f32.mrb[0].mxu0
  %v489 = vadd.f32 0.0, %v488
  %490 = vmatprep.mubr.f32.mxu0 0.0
  %491 = vmatmul.mubr.f32.gmra.mrb[0].mxu0 %v283
  %v492 = vpop.f32.mrb[0].mxu0
  %v493 = vadd.f32 0.0, %v492
  %v494 = vpop.f32.mrb[0].mxu0
  %v495 = vadd.f32 0.0, %v494
  %496 = vmatprep.mubr.f32.mxu0 0.0
  %497 = vmatmul.mubr.f32.gmra.mrb[0].mxu0 %v288
  %v498 = vpop.f32.mrb[0].mxu0
  %v499 = vadd.f32 0.0, %v498
  %v500 = vpop.f32.mrb[0].mxu0
  %v501 = vadd.f32 0.0, %v500
  %502 = vmatprep.mubr.f32.mxu0 0.0
  %503 = vmatmul.mubr.f32.gmra.mrb[0].mxu0 %v293
  %v504 = vpop.f32.mrb[0].mxu0
  %v505 = vadd.f32 0.0, %v504
  %v506 = vpop.f32.mrb[0].mxu0
  %v507 = vadd.f32 0.0, %v506
  %508 = vmatprep.mubr.f32.mxu0 0.0
  %509 = vmatmul.mubr.f32.gmra.mrb[0].mxu0 %v298
  %v510 = vpop.f32.mrb[0].mxu0
  %v511 = vadd.f32 0.0, %v510
  %v512 = vpop.f32.mrb[0].mxu0
  %v513 = vadd.f32 0.0, %v512
  %514 = vmatprep.mubr.f32.mxu0 0.0
  %515 = vmatmul.mubr.f32.gmra.mrb[0].mxu0 %v303
  %v516 = vpop.f32.mrb[0].mxu0
  %v517 = vadd.f32 0.0, %v516
  %v518 = vpop.f32.mrb[0].mxu0
  %v519 = vadd.f32 0.0, %v518
  %520 = vmatprep.mubr.f32.mxu0 0.0
  %521 = vmatmul.mubr.f32.gmra.mrb[0].mxu0 %v308
  %v522 = vpop.f32.mrb[0].mxu0
  %v523 = vadd.f32 0.0, %v522
  %v524 = vpop.f32.mrb[0].mxu0
  %v525 = vadd.f32 0.0, %v524
  %526 = vmatprep.mubr.f32.mxu0 0.0
  %527 = vmatmul.mubr.f32.gmra.mrb[0].mxu0 %v313
  %v528 = vpop.f32.mrb[0].mxu0
  %v529 = vadd.f32 0.0, %v528
  %v530 = vpop.f32.mrb[0].mxu0
  %v531 = vadd.f32 0.0, %v530
  %532 = vmatprep.mubr.f32.mxu0 0.0
  %533 = vmatmul.mubr.f32.gmra.mrb[0].mxu0 %v318
  %v534 = vpop.f32.mrb[0].mxu0
  %v535 = vadd.f32 0.0, %v534
  %v536 = vpop.f32.mrb[0].mxu0
  %v537 = vadd.f32 0.0, %v536
  %538 = vmatprep.mubr.f32.mxu0 0.0
  %539 = vmatmul.mubr.f32.gmra.mrb[0].mxu0 %v323
  %v540 = vpop.f32.mrb[0].mxu0
  %v541 = vadd.f32 0.0, %v540
  %v542 = vpop.f32.mrb[0].mxu0
  %v543 = vadd.f32 0.0, %v542
  %544 = vmatprep.mubr.f32.mxu0 0.0
  %545 = vmatmul.mubr.f32.gmra.mrb[0].mxu0 %v328
  %v546 = vpop.f32.mrb[0].mxu0
  %v547 = vadd.f32 0.0, %v546
  %v548 = vpop.f32.mrb[0].mxu0
  %v549 = vadd.f32 0.0, %v548
  %550 = vmatprep.mubr.f32.mxu0 0.0
  %551 = vmatmul.mubr.f32.gmra.mrb[0].mxu0 %v333
  %v552 = vpop.f32.mrb[0].mxu0
  %v553 = vadd.f32 0.0, %v552
  %v554 = vpop.f32.mrb[0].mxu0
  %v555 = vadd.f32 0.0, %v554
  %556 = vmatprep.mubr.f32.mxu0 0.0
  %557 = vmatmul.mubr.f32.gmra.mrb[0].mxu0 %v338
  %v558 = vpop.f32.mrb[0].mxu0
  %v559 = vadd.f32 0.0, %v558
  %v560 = vpop.f32.mrb[0].mxu0
  %v561 = vadd.f32 0.0, %v560
  %562 = vmatprep.mubr.f32.mxu0 0.0
  %563 = vmatmul.mubr.f32.gmra.mrb[0].mxu0 %v343
  %v564 = vpop.f32.mrb[0].mxu0
  %v565 = vadd.f32 0.0, %v564
  %v566 = vpop.f32.mrb[0].mxu0
  %v567 = vadd.f32 0.0, %v566
  %568 = vmatprep.mubr.f32.mxu0 0.0
  %569 = vmatmul.mubr.f32.gmra.mrb[0].mxu0 %v348
  %v570 = vpop.f32.mrb[0].mxu0
  %v571 = vadd.f32 0.0, %v570
  %v572 = vpop.f32.mrb[0].mxu0
  %v573 = vadd.f32 0.0, %v572
  %574 = vmatprep.mubr.f32.mxu0 0.0
  %575 = vmatmul.mubr.f32.gmra.mrb[0].mxu0 %v353
  %v576 = vpop.f32.mrb[0].mxu0
  %v577 = vadd.f32 0.0, %v576
  %v578 = vpop.f32.mrb[0].mxu0
  %v579 = vadd.f32 0.0, %v578
  %580 = vdwg.mxu0
  %581 = vmatprep.subr.mxu0 %v357
  %582 = vmatpush1.msra.mxu0 %v356
  %583 = vmatprep.subr.mxu0 %v359
  %584 = vmatpush1.msra.mxu0 %v358
  %585 = vmatprep.subr.mxu0 %v361
  %586 = vmatpush1.msra.mxu0 %v360
  %587 = vmatprep.subr.mxu0 %v363
  %588 = vmatpush1.msra.mxu0 %v362
  %589 = vmatprep.subr.mxu0 %v365
  %590 = vmatpush1.msra.mxu0 %v364
  %591 = vmatprep.subr.mxu0 %v367
  %592 = vmatpush1.msra.mxu0 %v366
  %593 = vmatprep.subr.mxu0 %v369
  %594 = vmatpush1.msra.mxu0 %v368
  %595 = vmatprep.subr.mxu0 %v371
  %596 = vmatpush1.msra.mxu0 %v370
  %597 = vmatprep.subr.mxu0 %v373
  %598 = vmatpush1.msra.mxu0 %v372
  %599 = vmatprep.subr.mxu0 %v375
  %600 = vmatpush1.msra.mxu0 %v374
  %601 = vmatprep.subr.mxu0 %v377
  %602 = vmatpush1.msra.mxu0 %v376
  %603 = vmatprep.subr.mxu0 %v379
  %604 = vmatpush1.msra.mxu0 %v378
  %605 = vmatprep.subr.mxu0 %v381
  %606 = vmatpush1.msra.mxu0 %v380
  %607 = vmatprep.subr.mxu0 %v383
  %608 = vmatpush1.msra.mxu0 %v382
  %609 = vmatprep.subr.mxu0 %v385
  %610 = vmatpush1.msra.mxu0 %v384
  %611 = vmatprep.subr.mxu0 %v387
  %612 = vmatpush1.msra.mxu0 %v386
  %613 = vmatprep.subr.mxu0 0.0
  %614 = vmatpush1.msra.mxu0 0.0
  %615 = vmatprep.subr.mxu0 0.0
  %616 = vmatpush1.msra.mxu0 0.0
  %617 = vmatprep.subr.mxu0 0.0
  %618 = vmatpush1.msra.mxu0 0.0
  %619 = vmatprep.subr.mxu0 0.0
  %620 = vmatpush1.msra.mxu0 0.0
  %621 = vmatprep.subr.mxu0 0.0
  %622 = vmatpush1.msra.mxu0 0.0
  %623 = vmatprep.subr.mxu0 0.0
  %624 = vmatpush1.msra.mxu0 0.0
  %625 = vmatprep.subr.mxu0 0.0
  %626 = vmatpush1.msra.mxu0 0.0
  %627 = vmatprep.subr.mxu0 0.0
  %628 = vmatpush1.msra.mxu0 0.0
  %629 = vmatprep.subr.mxu0 0.0
  %630 = vmatpush1.msra.mxu0 0.0
  %631 = vmatprep.subr.mxu0 0.0
  %632 = vmatpush1.msra.mxu0 0.0
  %633 = vmatprep.subr.mxu0 0.0
  %634 = vmatpush1.msra.mxu0 0.0
  %635 = vmatprep.subr.mxu0 0.0
  %636 = vmatpush1.msra.mxu0 0.0
  %637 = vmatprep.subr.mxu0 0.0
  %638 = vmatpush1.msra.mxu0 0.0
  %639 = vmatprep.subr.mxu0 0.0
  %640 = vmatpush1.msra.mxu0 0.0
  %641 = vmatprep.subr.mxu0 0.0
  %642 = vmatpush1.msra.mxu0 0.0
  %643 = vmatprep.subr.mxu0 0.0
  %644 = vmatpush1.msra.mxu0 0.0
  %645 = vmatprep.mubr.f32.mxu0 0.0
  %646 = vmatmul.mubr.f32.gmra.mrb[0].mxu0 %v49
  %v647 = vpop.f32.mrb[0].mxu0
  %v648 = vadd.f32 %v487, %v647
  %v649 = vpop.f32.mrb[0].mxu0
  %v650 = vadd.f32 %v489, %v649
  %651 = vmatprep.mubr.f32.mxu0 0.0
  %652 = vmatmul.mubr.f32.gmra.mrb[0].mxu0 %v50
  %v653 = vpop.f32.mrb[0].mxu0
  %v654 = vadd.f32 %v493, %v653
  %v655 = vpop.f32.mrb[0].mxu0
  %v656 = vadd.f32 %v495, %v655
  %657 = vmatprep.mubr.f32.mxu0 0.0
  %658 = vmatmul.mubr.f32.gmra.mrb[0].mxu0 %v51
  %v659 = vpop.f32.mrb[0].mxu0
  %v660 = vadd.f32 %v499, %v659
  %v661 = vpop.f32.mrb[0].mxu0
  %v662 = vadd.f32 %v501, %v661
  %663 = vmatprep.mubr.f32.mxu0 0.0
  %664 = vmatmul.mubr.f32.gmra.mrb[0].mxu0 %v52
  %v665 = vpop.f32.mrb[0].mxu0
  %v666 = vadd.f32 %v505, %v665
  %v667 = vpop.f32.mrb[0].mxu0
  %v668 = vadd.f32 %v507, %v667
  %669 = vmatprep.mubr.f32.mxu0 0.0
  %670 = vmatmul.mubr.f32.gmra.mrb[0].mxu0 %v53
  %v671 = vpop.f32.mrb[0].mxu0
  %v672 = vadd.f32 %v511, %v671
  %v673 = vpop.f32.mrb[0].mxu0
  %v674 = vadd.f32 %v513, %v673
  %675 = vmatprep.mubr.f32.mxu0 0.0
  %676 = vmatmul.mubr.f32.gmra.mrb[0].mxu0 %v54
  %v677 = vpop.f32.mrb[0].mxu0
  %v678 = vadd.f32 %v517, %v677
  %v679 = vpop.f32.mrb[0].mxu0
  %v680 = vadd.f32 %v519, %v679
  %681 = vmatprep.mubr.f32.mxu0 0.0
  %682 = vmatmul.mubr.f32.gmra.mrb[0].mxu0 %v55
  %v683 = vpop.f32.mrb[0].mxu0
  %v684 = vadd.f32 %v523, %v683
  %v685 = vpop.f32.mrb[0].mxu0
  %v686 = vadd.f32 %v525, %v685
  %687 = vmatprep.mubr.f32.mxu0 0.0
  %688 = vmatmul.mubr.f32.gmra.mrb[0].mxu0 %v56
  %v689 = vpop.f32.mrb[0].mxu0
  %v690 = vadd.f32 %v529, %v689
  %v691 = vpop.f32.mrb[0].mxu0
  %v692 = vadd.f32 %v531, %v691
  %693 = vmatprep.mubr.f32.mxu0 0.0
  %694 = vmatmul.mubr.f32.gmra.mrb[0].mxu0 %v57
  %v695 = vpop.f32.mrb[0].mxu0
  %v696 = vadd.f32 %v535, %v695
  %v697 = vpop.f32.mrb[0].mxu0
  %v698 = vadd.f32 %v537, %v697
  %699 = vmatprep.mubr.f32.mxu0 0.0
  %700 = vmatmul.mubr.f32.gmra.mrb[0].mxu0 %v58
  %v701 = vpop.f32.mrb[0].mxu0
  %v702 = vadd.f32 %v541, %v701
  %v703 = vpop.f32.mrb[0].mxu0
  %v704 = vadd.f32 %v543, %v703
  %705 = vmatprep.mubr.f32.mxu0 0.0
  %706 = vmatmul.mubr.f32.gmra.mrb[0].mxu0 %v59
  %v707 = vpop.f32.mrb[0].mxu0
  %v708 = vadd.f32 %v547, %v707
  %v709 = vpop.f32.mrb[0].mxu0
  %v710 = vadd.f32 %v549, %v709
  %711 = vmatprep.mubr.f32.mxu0 0.0
  %712 = vmatmul.mubr.f32.gmra.mrb[0].mxu0 %v60
  %v713 = vpop.f32.mrb[0].mxu0
  %v714 = vadd.f32 %v553, %v713
  %v715 = vpop.f32.mrb[0].mxu0
  %v716 = vadd.f32 %v555, %v715
  %717 = vmatprep.mubr.f32.mxu0 0.0
  %718 = vmatmul.mubr.f32.gmra.mrb[0].mxu0 %v61
  %v719 = vpop.f32.mrb[0].mxu0
  %v720 = vadd.f32 %v559, %v719
  %v721 = vpop.f32.mrb[0].mxu0
  %v722 = vadd.f32 %v561, %v721
  %723 = vmatprep.mubr.f32.mxu0 0.0
  %724 = vmatmul.mubr.f32.gmra.mrb[0].mxu0 %v62
  %v725 = vpop.f32.mrb[0].mxu0
  %v726 = vadd.f32 %v565, %v725
  %v727 = vpop.f32.mrb[0].mxu0
  %v728 = vadd.f32 %v567, %v727
  %729 = vmatprep.mubr.f32.mxu0 0.0
  %730 = vmatmul.mubr.f32.gmra.mrb[0].mxu0 %v63
  %v731 = vpop.f32.mrb[0].mxu0
  %v732 = vadd.f32 %v571, %v731
  %v733 = vpop.f32.mrb[0].mxu0
  %v734 = vadd.f32 %v573, %v733
  %735 = vmatprep.mubr.f32.mxu0 0.0
  %736 = vmatmul.mubr.f32.gmra.mrb[0].mxu0 %v64
  %v737 = vpop.f32.mrb[0].mxu0
  %v738 = vadd.f32 %v577, %v737
  %v739 = vpop.f32.mrb[0].mxu0
  %v740 = vadd.f32 %v579, %v739
  %741 = vdwg.mxu0
  %v742 = vld [vmem:[%s7] sm:$0x3]
  %v744 = vlaneseq
  %v745 = vshrl.u32 %v744, 7
  %v746 = vsub.s32 0, %v745
  %v747 = vrot.slane %v742, %v746
  %v748 = vlaneseq
  %v749 = vshrl.u32 %v748, 7
  %v750 = vsub.s32 1, %v749
  %v751 = vrot.slane %v742, %v750
  %v754 = vadd.f32 %v648, %v747
  %v755 = vadd.f32 %v650, %v751
  %v756 = vadd.f32 %v654, %v747
  %v757 = vadd.f32 %v656, %v751
  %v758 = vadd.f32 %v660, %v747
  %v759 = vadd.f32 %v662, %v751
  %v760 = vadd.f32 %v666, %v747
  %v761 = vadd.f32 %v668, %v751
  %v762 = vadd.f32 %v672, %v747
  %v763 = vadd.f32 %v674, %v751
  %v764 = vadd.f32 %v678, %v747
  %v765 = vadd.f32 %v680, %v751
  %v766 = vadd.f32 %v684, %v747
  %v767 = vadd.f32 %v686, %v751
  %v768 = vadd.f32 %v690, %v747
  %v769 = vadd.f32 %v692, %v751
  %v770 = vadd.f32 %v696, %v747
  %v771 = vadd.f32 %v698, %v751
  %v772 = vadd.f32 %v702, %v747
  %v773 = vadd.f32 %v704, %v751
  %v774 = vadd.f32 %v708, %v747
  %v775 = vadd.f32 %v710, %v751
  %v776 = vadd.f32 %v714, %v747
  %v777 = vadd.f32 %v716, %v751
  %v778 = vadd.f32 %v720, %v747
  %v779 = vadd.f32 %v722, %v751
  %v780 = vadd.f32 %v726, %v747
  %v781 = vadd.f32 %v728, %v751
  %v782 = vadd.f32 %v732, %v747
  %v783 = vadd.f32 %v734, %v751
  %v784 = vadd.f32 %v738, %v747
  %v785 = vadd.f32 %v740, %v751
  %v786 = vmax.f32 %v754, 0.0
  %v787 = vmax.f32 %v755, 0.0
  %v788 = vmax.f32 %v756, 0.0
  %v789 = vmax.f32 %v757, 0.0
  %v790 = vmax.f32 %v758, 0.0
  %v791 = vmax.f32 %v759, 0.0
  %v792 = vmax.f32 %v760, 0.0
  %v793 = vmax.f32 %v761, 0.0
  %v794 = vmax.f32 %v762, 0.0
  %v795 = vmax.f32 %v763, 0.0
  %v796 = vmax.f32 %v764, 0.0
  %v797 = vmax.f32 %v765, 0.0
  %v798 = vmax.f32 %v766, 0.0
  %v799 = vmax.f32 %v767, 0.0
  %v800 = vmax.f32 %v768, 0.0
  %v801 = vmax.f32 %v769, 0.0
  %v802 = vmax.f32 %v770, 0.0
  %v803 = vmax.f32 %v771, 0.0
  %v804 = vmax.f32 %v772, 0.0
  %v805 = vmax.f32 %v773, 0.0
  %v806 = vmax.f32 %v774, 0.0
  %v807 = vmax.f32 %v775, 0.0
  %v808 = vmax.f32 %v776, 0.0
  %v809 = vmax.f32 %v777, 0.0
  %v810 = vmax.f32 %v778, 0.0
  %v811 = vmax.f32 %v779, 0.0
  %v812 = vmax.f32 %v780, 0.0
  %v813 = vmax.f32 %v781, 0.0
  %v814 = vmax.f32 %v782, 0.0
  %v815 = vmax.f32 %v783, 0.0
  %v816 = vmax.f32 %v784, 0.0
  %v817 = vmax.f32 %v785, 0.0
  %v818 = vmax.f32 %v786, %v787
  %819 = vmax.xlane.f32.xlu0 %v818
  %v820 = vpop.xlane.xlu0 %819
  %v821 = vmax.f32 %v788, %v789
  %822 = vmax.xlane.f32.xlu0 %v821
  %v823 = vpop.xlane.xlu0 %822
  %v824 = vmax.f32 %v790, %v791
  %825 = vmax.xlane.f32.xlu0 %v824
  %v826 = vpop.xlane.xlu0 %825
  %v827 = vmax.f32 %v792, %v793
  %828 = vmax.xlane.f32.xlu0 %v827
  %v829 = vpop.xlane.xlu0 %828
  %v830 = vmax.f32 %v794, %v795
  %831 = vmax.xlane.f32.xlu0 %v830
  %v832 = vpop.xlane.xlu0 %831
  %v833 = vmax.f32 %v796, %v797
  %834 = vmax.xlane.f32.xlu0 %v833
  %v835 = vpop.xlane.xlu0 %834
  %v836 = vmax.f32 %v798, %v799
  %837 = vmax.xlane.f32.xlu0 %v836
  %v838 = vpop.xlane.xlu0 %837
  %v839 = vmax.f32 %v800, %v801
  %840 = vmax.xlane.f32.xlu0 %v839
  %v841 = vpop.xlane.xlu0 %840
  %v842 = vmax.f32 %v802, %v803
  %843 = vmax.xlane.f32.xlu0 %v842
  %v844 = vpop.xlane.xlu0 %843
  %v845 = vmax.f32 %v804, %v805
  %846 = vmax.xlane.f32.xlu0 %v845
  %v847 = vpop.xlane.xlu0 %846
  %v848 = vmax.f32 %v806, %v807
  %849 = vmax.xlane.f32.xlu0 %v848
  %v850 = vpop.xlane.xlu0 %849
  %v851 = vmax.f32 %v808, %v809
  %852 = vmax.xlane.f32.xlu0 %v851
  %v853 = vpop.xlane.xlu0 %852
  %v854 = vmax.f32 %v810, %v811
  %855 = vmax.xlane.f32.xlu0 %v854
  %v856 = vpop.xlane.xlu0 %855
  %v857 = vmax.f32 %v812, %v813
  %858 = vmax.xlane.f32.xlu0 %v857
  %v859 = vpop.xlane.xlu0 %858
  %v860 = vmax.f32 %v814, %v815
  %861 = vmax.xlane.f32.xlu0 %v860
  %v862 = vpop.xlane.xlu0 %861
  %v863 = vmax.f32 %v816, %v817
  %864 = vmax.xlane.f32.xlu0 %v863
  %v865 = vpop.xlane.xlu0 %864
  %v866 = vadd.f32 %v786, %v787
  %867 = vadd.xlane.f32.xlu0 %v866
  %v868 = vpop.xlane.xlu0 %867
  %v869 = vadd.f32 %v788, %v789
  %870 = vadd.xlane.f32.xlu0 %v869
  %v871 = vpop.xlane.xlu0 %870
  %v872 = vadd.f32 %v790, %v791
  %873 = vadd.xlane.f32.xlu0 %v872
  %v874 = vpop.xlane.xlu0 %873
  %v875 = vadd.f32 %v792, %v793
  %876 = vadd.xlane.f32.xlu0 %v875
  %v877 = vpop.xlane.xlu0 %876
  %v878 = vadd.f32 %v794, %v795
  %879 = vadd.xlane.f32.xlu0 %v878
  %v880 = vpop.xlane.xlu0 %879
  %v881 = vadd.f32 %v796, %v797
  %882 = vadd.xlane.f32.xlu0 %v881
  %v883 = vpop.xlane.xlu0 %882
  %v884 = vadd.f32 %v798, %v799
  %885 = vadd.xlane.f32.xlu0 %v884
  %v886 = vpop.xlane.xlu0 %885
  %v887 = vadd.f32 %v800, %v801
  %888 = vadd.xlane.f32.xlu0 %v887
  %v889 = vpop.xlane.xlu0 %888
  %v890 = vadd.f32 %v802, %v803
  %891 = vadd.xlane.f32.xlu0 %v890
  %v892 = vpop.xlane.xlu0 %891
  %v893 = vadd.f32 %v804, %v805
  %894 = vadd.xlane.f32.xlu0 %v893
  %v895 = vpop.xlane.xlu0 %894
  %v896 = vadd.f32 %v806, %v807
  %897 = vadd.xlane.f32.xlu0 %v896
  %v898 = vpop.xlane.xlu0 %897
  %v899 = vadd.f32 %v808, %v809
  %900 = vadd.xlane.f32.xlu0 %v899
  %v901 = vpop.xlane.xlu0 %900
  %v902 = vadd.f32 %v810, %v811
  %903 = vadd.xlane.f32.xlu0 %v902
  %v904 = vpop.xlane.xlu0 %903
  %v905 = vadd.f32 %v812, %v813
  %906 = vadd.xlane.f32.xlu0 %v905
  %v907 = vpop.xlane.xlu0 %906
  %v908 = vadd.f32 %v814, %v815
  %909 = vadd.xlane.f32.xlu0 %v908
  %v910 = vpop.xlane.xlu0 %909
  %v911 = vadd.f32 %v816, %v817
  %912 = vadd.xlane.f32.xlu0 %v911
  %v913 = vpop.xlane.xlu0 %912
  %v914 = vrcp.pop 256.0
  %v915 = vmul.f32 %v868, %v914
  %v916 = vmul.f32 %v871, %v914
  %v917 = vmul.f32 %v874, %v914
  %v918 = vmul.f32 %v877, %v914
  %v919 = vmul.f32 %v880, %v914
  %v920 = vmul.f32 %v883, %v914
  %v921 = vmul.f32 %v886, %v914
  %v922 = vmul.f32 %v889, %v914
  %v923 = vmul.f32 %v892, %v914
  %v924 = vmul.f32 %v895, %v914
  %v925 = vmul.f32 %v898, %v914
  %v926 = vmul.f32 %v901, %v914
  %v927 = vmul.f32 %v904, %v914
  %v928 = vmul.f32 %v907, %v914
  %v929 = vmul.f32 %v910, %v914
  %v930 = vmul.f32 %v913, %v914
  %vm931 = vcmask 7168
  %v932 = vsel %vm931, %v820, %v915
  %v933 = vsel %vm931, %v823, %v916
  %v934 = vsel %vm931, %v826, %v917
  %v935 = vsel %vm931, %v829, %v918
  %v936 = vsel %vm931, %v832, %v919
  %v937 = vsel %vm931, %v835, %v920
  %v938 = vsel %vm931, %v838, %v921
  %v939 = vsel %vm931, %v841, %v922
  %v940 = vsel %vm931, %v844, %v923
  %v941 = vsel %vm931, %v847, %v924
  %v942 = vsel %vm931, %v850, %v925
  %v943 = vsel %vm931, %v853, %v926
  %v944 = vsel %vm931, %v856, %v927
  %v945 = vsel %vm931, %v859, %v928
  %v946 = vsel %vm931, %v862, %v929
  %v947 = vsel %vm931, %v865, %v930
  %vm948 = vcmask 15360
  %949 = vst.msk [vmem:[%s15] sm:$0xff] %vm948, %v932
  %950 = vst.msk [vmem:[%s15 + $0x8] sm:$0xff] %vm948, %v933
  %951 = vst.msk [vmem:[%s15 + $0x10] sm:$0xff] %vm948, %v934
  %952 = vst.msk [vmem:[%s15 + $0x18] sm:$0xff] %vm948, %v935
  %953 = vst.msk [vmem:[%s15 + $0x20] sm:$0xff] %vm948, %v936
  %954 = vst.msk [vmem:[%s15 + $0x28] sm:$0xff] %vm948, %v937
  %955 = vst.msk [vmem:[%s15 + $0x30] sm:$0xff] %vm948, %v938
  %956 = vst.msk [vmem:[%s15 + $0x38] sm:$0xff] %vm948, %v939
  %957 = vst.msk [vmem:[%s15 + $0x40] sm:$0xff] %vm948, %v940
  %958 = vst.msk [vmem:[%s15 + $0x48] sm:$0xff] %vm948, %v941
  %959 = vst.msk [vmem:[%s15 + $0x50] sm:$0xff] %vm948, %v942
  %960 = vst.msk [vmem:[%s15 + $0x58] sm:$0xff] %vm948, %v943
  %961 = vst.msk [vmem:[%s15 + $0x60] sm:$0xff] %vm948, %v944
  %962 = vst.msk [vmem:[%s15 + $0x68] sm:$0xff] %vm948, %v945
  %963 = vst.msk [vmem:[%s15 + $0x70] sm:$0xff] %vm948, %v946
  %964 = vst.msk [vmem:[%s15 + $0x78] sm:$0xff] %vm948, %v947
  %v965 = vld [vmem:[%s8] sm:$0x1]
  %v967 = vlaneseq
  %v968 = vshrl.u32 %v967, 7
  %v969 = vsub.s32 0, %v968
  %v970 = vrot.slane %v965, %v969
  %v972 = vmul.f32 %v49, %v970
  %v973 = vmul.f32 %v50, %v970
  %v974 = vmul.f32 %v51, %v970
  %v975 = vmul.f32 %v52, %v970
  %v976 = vmul.f32 %v53, %v970
  %v977 = vmul.f32 %v54, %v970
  %v978 = vmul.f32 %v55, %v970
  %v979 = vmul.f32 %v56, %v970
  %v980 = vmul.f32 %v57, %v970
  %v981 = vmul.f32 %v58, %v970
  %v982 = vmul.f32 %v59, %v970
  %v983 = vmul.f32 %v60, %v970
  %v984 = vmul.f32 %v61, %v970
  %v985 = vmul.f32 %v62, %v970
  %v986 = vmul.f32 %v63, %v970
  %v987 = vmul.f32 %v64, %v970
  %v988 = vld [vmem:[%s9] sm:$0x1]
  %v990 = vlaneseq
  %v991 = vshrl.u32 %v990, 7
  %v992 = vsub.s32 0, %v991
  %v993 = vrot.slane %v988, %v992
  %v995 = vadd.f32 %v972, %v993
  %v996 = vadd.f32 %v973, %v993
  %v997 = vadd.f32 %v974, %v993
  %v998 = vadd.f32 %v975, %v993
  %v999 = vadd.f32 %v976, %v993
  %v1000 = vadd.f32 %v977, %v993
  %v1001 = vadd.f32 %v978, %v993
  %v1002 = vadd.f32 %v979, %v993
  %v1003 = vadd.f32 %v980, %v993
  %v1004 = vadd.f32 %v981, %v993
  %v1005 = vadd.f32 %v982, %v993
  %v1006 = vadd.f32 %v983, %v993
  %v1007 = vadd.f32 %v984, %v993
  %v1008 = vadd.f32 %v985, %v993
  %v1009 = vadd.f32 %v986, %v993
  %v1010 = vadd.f32 %v987, %v993
  %v1011 = vmax.f32 %v995, 0.0
  %v1012 = vmax.f32 %v996, 0.0
  %v1013 = vmax.f32 %v997, 0.0
  %v1014 = vmax.f32 %v998, 0.0
  %v1015 = vmax.f32 %v999, 0.0
  %v1016 = vmax.f32 %v1000, 0.0
  %v1017 = vmax.f32 %v1001, 0.0
  %v1018 = vmax.f32 %v1002, 0.0
  %v1019 = vmax.f32 %v1003, 0.0
  %v1020 = vmax.f32 %v1004, 0.0
  %v1021 = vmax.f32 %v1005, 0.0
  %v1022 = vmax.f32 %v1006, 0.0
  %v1023 = vmax.f32 %v1007, 0.0
  %v1024 = vmax.f32 %v1008, 0.0
  %v1025 = vmax.f32 %v1009, 0.0
  %v1026 = vmax.f32 %v1010, 0.0
  %v1027 = vld [vmem:[%s10] sm:$0x1]
  %v1029 = vlaneseq
  %v1030 = vshrl.u32 %v1029, 7
  %v1031 = vsub.s32 0, %v1030
  %v1032 = vrot.slane %v1027, %v1031
  %v1034 = vmul.f32 %v278, %v1032
  %v1035 = vmul.f32 %v283, %v1032
  %v1036 = vmul.f32 %v288, %v1032
  %v1037 = vmul.f32 %v293, %v1032
  %v1038 = vmul.f32 %v298, %v1032
  %v1039 = vmul.f32 %v303, %v1032
  %v1040 = vmul.f32 %v308, %v1032
  %v1041 = vmul.f32 %v313, %v1032
  %v1042 = vmul.f32 %v318, %v1032
  %v1043 = vmul.f32 %v323, %v1032
  %v1044 = vmul.f32 %v328, %v1032
  %v1045 = vmul.f32 %v333, %v1032
  %v1046 = vmul.f32 %v338, %v1032
  %v1047 = vmul.f32 %v343, %v1032
  %v1048 = vmul.f32 %v348, %v1032
  %v1049 = vmul.f32 %v353, %v1032
  %v1050 = vld [vmem:[%s11] sm:$0x1]
  %v1052 = vlaneseq
  %v1053 = vshrl.u32 %v1052, 7
  %v1054 = vsub.s32 0, %v1053
  %v1055 = vrot.slane %v1050, %v1054
  %v1057 = vadd.f32 %v1034, %v1055
  %v1058 = vadd.f32 %v1035, %v1055
  %v1059 = vadd.f32 %v1036, %v1055
  %v1060 = vadd.f32 %v1037, %v1055
  %v1061 = vadd.f32 %v1038, %v1055
  %v1062 = vadd.f32 %v1039, %v1055
  %v1063 = vadd.f32 %v1040, %v1055
  %v1064 = vadd.f32 %v1041, %v1055
  %v1065 = vadd.f32 %v1042, %v1055
  %v1066 = vadd.f32 %v1043, %v1055
  %v1067 = vadd.f32 %v1044, %v1055
  %v1068 = vadd.f32 %v1045, %v1055
  %v1069 = vadd.f32 %v1046, %v1055
  %v1070 = vadd.f32 %v1047, %v1055
  %v1071 = vadd.f32 %v1048, %v1055
  %v1072 = vadd.f32 %v1049, %v1055
  %v1073 = vmax.f32 %v1057, 0.0
  %v1074 = vmax.f32 %v1058, 0.0
  %v1075 = vmax.f32 %v1059, 0.0
  %v1076 = vmax.f32 %v1060, 0.0
  %v1077 = vmax.f32 %v1061, 0.0
  %v1078 = vmax.f32 %v1062, 0.0
  %v1079 = vmax.f32 %v1063, 0.0
  %v1080 = vmax.f32 %v1064, 0.0
  %v1081 = vmax.f32 %v1065, 0.0
  %v1082 = vmax.f32 %v1066, 0.0
  %v1083 = vmax.f32 %v1067, 0.0
  %v1084 = vmax.f32 %v1068, 0.0
  %v1085 = vmax.f32 %v1069, 0.0
  %v1086 = vmax.f32 %v1070, 0.0
  %v1087 = vmax.f32 %v1071, 0.0
  %v1088 = vmax.f32 %v1072, 0.0
  %v1089 = vld [vmem:[%s12] sm:$0xff]
  %v1090 = vld [vmem:[%s12 + $0x8] sm:$0xff]
  %v1091 = vld [vmem:[%s12 + $0x10] sm:$0xff]
  %v1092 = vld [vmem:[%s12 + $0x18] sm:$0xff]
  %v1093 = vld [vmem:[%s12 + $0x20] sm:$0xff]
  %v1094 = vld [vmem:[%s12 + $0x28] sm:$0xff]
  %v1095 = vld [vmem:[%s12 + $0x30] sm:$0xff]
  %v1096 = vld [vmem:[%s12 + $0x38] sm:$0xff]
  %v1097 = vld [vmem:[%s12 + $0x40] sm:$0xff]
  %v1098 = vld [vmem:[%s12 + $0x48] sm:$0xff]
  %v1099 = vld [vmem:[%s12 + $0x50] sm:$0xff]
  %v1100 = vld [vmem:[%s12 + $0x58] sm:$0xff]
  %v1101 = vld [vmem:[%s12 + $0x60] sm:$0xff]
  %v1102 = vld [vmem:[%s12 + $0x68] sm:$0xff]
  %v1103 = vld [vmem:[%s12 + $0x70] sm:$0xff]
  %v1104 = vld [vmem:[%s12 + $0x78] sm:$0xff]
  %v1105 = vld [vmem:[%s13] sm:$0xff]
  %v1106 = vld [vmem:[%s13 + $0x8] sm:$0xff]
  %v1107 = vld [vmem:[%s13 + $0x10] sm:$0xff]
  %v1108 = vld [vmem:[%s13 + $0x18] sm:$0xff]
  %v1109 = vld [vmem:[%s13 + $0x20] sm:$0xff]
  %v1110 = vld [vmem:[%s13 + $0x28] sm:$0xff]
  %v1111 = vld [vmem:[%s13 + $0x30] sm:$0xff]
  %v1112 = vld [vmem:[%s13 + $0x38] sm:$0xff]
  %v1113 = vld [vmem:[%s13 + $0x40] sm:$0xff]
  %v1114 = vld [vmem:[%s13 + $0x48] sm:$0xff]
  %v1115 = vld [vmem:[%s13 + $0x50] sm:$0xff]
  %v1116 = vld [vmem:[%s13 + $0x58] sm:$0xff]
  %v1117 = vld [vmem:[%s13 + $0x60] sm:$0xff]
  %v1118 = vld [vmem:[%s13 + $0x68] sm:$0xff]
  %v1119 = vld [vmem:[%s13 + $0x70] sm:$0xff]
  %v1120 = vld [vmem:[%s13 + $0x78] sm:$0xff]
  %1121 = vmatprep.subr.mxu0 0.0
  %1122 = vmatpush1.msra.mxu0 %v1105
  %1123 = vmatprep.subr.mxu0 0.0
  %1124 = vmatpush1.msra.mxu0 %v1106
  %1125 = vmatprep.subr.mxu0 0.0
  %1126 = vmatpush1.msra.mxu0 %v1107
  %1127 = vmatprep.subr.mxu0 0.0
  %1128 = vmatpush1.msra.mxu0 %v1108
  %1129 = vmatprep.subr.mxu0 0.0
  %1130 = vmatpush1.msra.mxu0 %v1109
  %1131 = vmatprep.subr.mxu0 0.0
  %1132 = vmatpush1.msra.mxu0 %v1110
  %1133 = vmatprep.subr.mxu0 0.0
  %1134 = vmatpush1.msra.mxu0 %v1111
  %1135 = vmatprep.subr.mxu0 0.0
  %1136 = vmatpush1.msra.mxu0 %v1112
  %1137 = vmatprep.subr.mxu0 0.0
  %1138 = vmatpush1.msra.mxu0 %v1113
  %1139 = vmatprep.subr.mxu0 0.0
  %1140 = vmatpush1.msra.mxu0 %v1114
  %1141 = vmatprep.subr.mxu0 0.0
  %1142 = vmatpush1.msra.mxu0 %v1115
  %1143 = vmatprep.subr.mxu0 0.0
  %1144 = vmatpush1.msra.mxu0 %v1116
  %1145 = vmatprep.subr.mxu0 0.0
  %1146 = vmatpush1.msra.mxu0 %v1117
  %1147 = vmatprep.subr.mxu0 0.0
  %1148 = vmatpush1.msra.mxu0 %v1118
  %1149 = vmatprep.subr.mxu0 0.0
  %1150 = vmatpush1.msra.mxu0 %v1119
  %1151 = vmatprep.subr.mxu0 0.0
  %1152 = vmatpush1.msra.mxu0 %v1120
  %1153 = vmatprep.subr.mxu0 0.0
  %1154 = vmatpush1.msra.mxu0 0.0
  %1155 = vmatprep.subr.mxu0 0.0
  %1156 = vmatpush1.msra.mxu0 0.0
  %1157 = vmatprep.subr.mxu0 0.0
  %1158 = vmatpush1.msra.mxu0 0.0
  %1159 = vmatprep.subr.mxu0 0.0
  %1160 = vmatpush1.msra.mxu0 0.0
  %1161 = vmatprep.subr.mxu0 0.0
  %1162 = vmatpush1.msra.mxu0 0.0
  %1163 = vmatprep.subr.mxu0 0.0
  %1164 = vmatpush1.msra.mxu0 0.0
  %1165 = vmatprep.subr.mxu0 0.0
  %1166 = vmatpush1.msra.mxu0 0.0
  %1167 = vmatprep.subr.mxu0 0.0
  %1168 = vmatpush1.msra.mxu0 0.0
  %1169 = vmatprep.subr.mxu0 0.0
  %1170 = vmatpush1.msra.mxu0 0.0
  %1171 = vmatprep.subr.mxu0 0.0
  %1172 = vmatpush1.msra.mxu0 0.0
  %1173 = vmatprep.subr.mxu0 0.0
  %1174 = vmatpush1.msra.mxu0 0.0
  %1175 = vmatprep.subr.mxu0 0.0
  %1176 = vmatpush1.msra.mxu0 0.0
  %1177 = vmatprep.subr.mxu0 0.0
  %1178 = vmatpush1.msra.mxu0 0.0
  %1179 = vmatprep.subr.mxu0 0.0
  %1180 = vmatpush1.msra.mxu0 0.0
  %1181 = vmatprep.subr.mxu0 0.0
  %1182 = vmatpush1.msra.mxu0 0.0
  %1183 = vmatprep.subr.mxu0 0.0
  %1184 = vmatpush1.msra.mxu0 0.0
  %1185 = vmatprep.mubr.f32.mxu0 0.0
  %1186 = vmatmul.mubr.f32.gmra.mrb[0].mxu0 %v1073
  %v1187 = vpop.f32.mrb[0].mxu0
  %v1188 = vadd.f32 0.0, %v1187
  %v1189 = vpop.f32.mrb[0].mxu0
  %1190 = vmatprep.mubr.f32.mxu0 0.0
  %1191 = vmatmul.mubr.f32.gmra.mrb[0].mxu0 %v1074
  %v1192 = vpop.f32.mrb[0].mxu0
  %v1193 = vadd.f32 0.0, %v1192
  %v1194 = vpop.f32.mrb[0].mxu0
  %1195 = vmatprep.mubr.f32.mxu0 0.0
  %1196 = vmatmul.mubr.f32.gmra.mrb[0].mxu0 %v1075
  %v1197 = vpop.f32.mrb[0].mxu0
  %v1198 = vadd.f32 0.0, %v1197
  %v1199 = vpop.f32.mrb[0].mxu0
  %1200 = vmatprep.mubr.f32.mxu0 0.0
  %1201 = vmatmul.mubr.f32.gmra.mrb[0].mxu0 %v1076
  %v1202 = vpop.f32.mrb[0].mxu0
  %v1203 = vadd.f32 0.0, %v1202
  %v1204 = vpop.f32.mrb[0].mxu0
  %1205 = vmatprep.mubr.f32.mxu0 0.0
  %1206 = vmatmul.mubr.f32.gmra.mrb[0].mxu0 %v1077
  %v1207 = vpop.f32.mrb[0].mxu0
  %v1208 = vadd.f32 0.0, %v1207
  %v1209 = vpop.f32.mrb[0].mxu0
  %1210 = vmatprep.mubr.f32.mxu0 0.0
  %1211 = vmatmul.mubr.f32.gmra.mrb[0].mxu0 %v1078
  %v1212 = vpop.f32.mrb[0].mxu0
  %v1213 = vadd.f32 0.0, %v1212
  %v1214 = vpop.f32.mrb[0].mxu0
  %1215 = vmatprep.mubr.f32.mxu0 0.0
  %1216 = vmatmul.mubr.f32.gmra.mrb[0].mxu0 %v1079
  %v1217 = vpop.f32.mrb[0].mxu0
  %v1218 = vadd.f32 0.0, %v1217
  %v1219 = vpop.f32.mrb[0].mxu0
  %1220 = vmatprep.mubr.f32.mxu0 0.0
  %1221 = vmatmul.mubr.f32.gmra.mrb[0].mxu0 %v1080
  %v1222 = vpop.f32.mrb[0].mxu0
  %v1223 = vadd.f32 0.0, %v1222
  %v1224 = vpop.f32.mrb[0].mxu0
  %1225 = vmatprep.mubr.f32.mxu0 0.0
  %1226 = vmatmul.mubr.f32.gmra.mrb[0].mxu0 %v1081
  %v1227 = vpop.f32.mrb[0].mxu0
  %v1228 = vadd.f32 0.0, %v1227
  %v1229 = vpop.f32.mrb[0].mxu0
  %1230 = vmatprep.mubr.f32.mxu0 0.0
  %1231 = vmatmul.mubr.f32.gmra.mrb[0].mxu0 %v1082
  %v1232 = vpop.f32.mrb[0].mxu0
  %v1233 = vadd.f32 0.0, %v1232
  %v1234 = vpop.f32.mrb[0].mxu0
  %1235 = vmatprep.mubr.f32.mxu0 0.0
  %1236 = vmatmul.mubr.f32.gmra.mrb[0].mxu0 %v1083
  %v1237 = vpop.f32.mrb[0].mxu0
  %v1238 = vadd.f32 0.0, %v1237
  %v1239 = vpop.f32.mrb[0].mxu0
  %1240 = vmatprep.mubr.f32.mxu0 0.0
  %1241 = vmatmul.mubr.f32.gmra.mrb[0].mxu0 %v1084
  %v1242 = vpop.f32.mrb[0].mxu0
  %v1243 = vadd.f32 0.0, %v1242
  %v1244 = vpop.f32.mrb[0].mxu0
  %1245 = vmatprep.mubr.f32.mxu0 0.0
  %1246 = vmatmul.mubr.f32.gmra.mrb[0].mxu0 %v1085
  %v1247 = vpop.f32.mrb[0].mxu0
  %v1248 = vadd.f32 0.0, %v1247
  %v1249 = vpop.f32.mrb[0].mxu0
  %1250 = vmatprep.mubr.f32.mxu0 0.0
  %1251 = vmatmul.mubr.f32.gmra.mrb[0].mxu0 %v1086
  %v1252 = vpop.f32.mrb[0].mxu0
  %v1253 = vadd.f32 0.0, %v1252
  %v1254 = vpop.f32.mrb[0].mxu0
  %1255 = vmatprep.mubr.f32.mxu0 0.0
  %1256 = vmatmul.mubr.f32.gmra.mrb[0].mxu0 %v1087
  %v1257 = vpop.f32.mrb[0].mxu0
  %v1258 = vadd.f32 0.0, %v1257
  %v1259 = vpop.f32.mrb[0].mxu0
  %1260 = vmatprep.mubr.f32.mxu0 0.0
  %1261 = vmatmul.mubr.f32.gmra.mrb[0].mxu0 %v1088
  %v1262 = vpop.f32.mrb[0].mxu0
  %v1263 = vadd.f32 0.0, %v1262
  %v1264 = vpop.f32.mrb[0].mxu0
  %1265 = vdwg.mxu0
  %1266 = vmatprep.subr.mxu0 0.0
  %1267 = vmatpush1.msra.mxu0 %v1089
  %1268 = vmatprep.subr.mxu0 0.0
  %1269 = vmatpush1.msra.mxu0 %v1090
  %1270 = vmatprep.subr.mxu0 0.0
  %1271 = vmatpush1.msra.mxu0 %v1091
  %1272 = vmatprep.subr.mxu0 0.0
  %1273 = vmatpush1.msra.mxu0 %v1092
  %1274 = vmatprep.subr.mxu0 0.0
  %1275 = vmatpush1.msra.mxu0 %v1093
  %1276 = vmatprep.subr.mxu0 0.0
  %1277 = vmatpush1.msra.mxu0 %v1094
  %1278 = vmatprep.subr.mxu0 0.0
  %1279 = vmatpush1.msra.mxu0 %v1095
  %1280 = vmatprep.subr.mxu0 0.0
  %1281 = vmatpush1.msra.mxu0 %v1096
  %1282 = vmatprep.subr.mxu0 0.0
  %1283 = vmatpush1.msra.mxu0 %v1097
  %1284 = vmatprep.subr.mxu0 0.0
  %1285 = vmatpush1.msra.mxu0 %v1098
  %1286 = vmatprep.subr.mxu0 0.0
  %1287 = vmatpush1.msra.mxu0 %v1099
  %1288 = vmatprep.subr.mxu0 0.0
  %1289 = vmatpush1.msra.mxu0 %v1100
  %1290 = vmatprep.subr.mxu0 0.0
  %1291 = vmatpush1.msra.mxu0 %v1101
  %1292 = vmatprep.subr.mxu0 0.0
  %1293 = vmatpush1.msra.mxu0 %v1102
  %1294 = vmatprep.subr.mxu0 0.0
  %1295 = vmatpush1.msra.mxu0 %v1103
  %1296 = vmatprep.subr.mxu0 0.0
  %1297 = vmatpush1.msra.mxu0 %v1104
  %1298 = vmatprep.subr.mxu0 0.0
  %1299 = vmatpush1.msra.mxu0 0.0
  %1300 = vmatprep.subr.mxu0 0.0
  %1301 = vmatpush1.msra.mxu0 0.0
  %1302 = vmatprep.subr.mxu0 0.0
  %1303 = vmatpush1.msra.mxu0 0.0
  %1304 = vmatprep.subr.mxu0 0.0
  %1305 = vmatpush1.msra.mxu0 0.0
  %1306 = vmatprep.subr.mxu0 0.0
  %1307 = vmatpush1.msra.mxu0 0.0
  %1308 = vmatprep.subr.mxu0 0.0
  %1309 = vmatpush1.msra.mxu0 0.0
  %1310 = vmatprep.subr.mxu0 0.0
  %1311 = vmatpush1.msra.mxu0 0.0
  %1312 = vmatprep.subr.mxu0 0.0
  %1313 = vmatpush1.msra.mxu0 0.0
  %1314 = vmatprep.subr.mxu0 0.0
  %1315 = vmatpush1.msra.mxu0 0.0
  %1316 = vmatprep.subr.mxu0 0.0
  %1317 = vmatpush1.msra.mxu0 0.0
  %1318 = vmatprep.subr.mxu0 0.0
  %1319 = vmatpush1.msra.mxu0 0.0
  %1320 = vmatprep.subr.mxu0 0.0
  %1321 = vmatpush1.msra.mxu0 0.0
  %1322 = vmatprep.subr.mxu0 0.0
  %1323 = vmatpush1.msra.mxu0 0.0
  %1324 = vmatprep.subr.mxu0 0.0
  %1325 = vmatpush1.msra.mxu0 0.0
  %1326 = vmatprep.subr.mxu0 0.0
  %1327 = vmatpush1.msra.mxu0 0.0
  %1328 = vmatprep.subr.mxu0 0.0
  %1329 = vmatpush1.msra.mxu0 0.0
  %1330 = vmatprep.mubr.f32.mxu0 0.0
  %1331 = vmatmul.mubr.f32.gmra.mrb[0].mxu0 %v1011
  %v1332 = vpop.f32.mrb[0].mxu0
  %v1333 = vadd.f32 %v1188, %v1332
  %v1334 = vpop.f32.mrb[0].mxu0
  %1335 = vmatprep.mubr.f32.mxu0 0.0
  %1336 = vmatmul.mubr.f32.gmra.mrb[0].mxu0 %v1012
  %v1337 = vpop.f32.mrb[0].mxu0
  %v1338 = vadd.f32 %v1193, %v1337
  %v1339 = vpop.f32.mrb[0].mxu0
  %1340 = vmatprep.mubr.f32.mxu0 0.0
  %1341 = vmatmul.mubr.f32.gmra.mrb[0].mxu0 %v1013
  %v1342 = vpop.f32.mrb[0].mxu0
  %v1343 = vadd.f32 %v1198, %v1342
  %v1344 = vpop.f32.mrb[0].mxu0
  %1345 = vmatprep.mubr.f32.mxu0 0.0
  %1346 = vmatmul.mubr.f32.gmra.mrb[0].mxu0 %v1014
  %v1347 = vpop.f32.mrb[0].mxu0
  %v1348 = vadd.f32 %v1203, %v1347
  %v1349 = vpop.f32.mrb[0].mxu0
  %1350 = vmatprep.mubr.f32.mxu0 0.0
  %1351 = vmatmul.mubr.f32.gmra.mrb[0].mxu0 %v1015
  %v1352 = vpop.f32.mrb[0].mxu0
  %v1353 = vadd.f32 %v1208, %v1352
  %v1354 = vpop.f32.mrb[0].mxu0
  %1355 = vmatprep.mubr.f32.mxu0 0.0
  %1356 = vmatmul.mubr.f32.gmra.mrb[0].mxu0 %v1016
  %v1357 = vpop.f32.mrb[0].mxu0
  %v1358 = vadd.f32 %v1213, %v1357
  %v1359 = vpop.f32.mrb[0].mxu0
  %1360 = vmatprep.mubr.f32.mxu0 0.0
  %1361 = vmatmul.mubr.f32.gmra.mrb[0].mxu0 %v1017
  %v1362 = vpop.f32.mrb[0].mxu0
  %v1363 = vadd.f32 %v1218, %v1362
  %v1364 = vpop.f32.mrb[0].mxu0
  %1365 = vmatprep.mubr.f32.mxu0 0.0
  %1366 = vmatmul.mubr.f32.gmra.mrb[0].mxu0 %v1018
  %v1367 = vpop.f32.mrb[0].mxu0
  %v1368 = vadd.f32 %v1223, %v1367
  %v1369 = vpop.f32.mrb[0].mxu0
  %1370 = vmatprep.mubr.f32.mxu0 0.0
  %1371 = vmatmul.mubr.f32.gmra.mrb[0].mxu0 %v1019
  %v1372 = vpop.f32.mrb[0].mxu0
  %v1373 = vadd.f32 %v1228, %v1372
  %v1374 = vpop.f32.mrb[0].mxu0
  %1375 = vmatprep.mubr.f32.mxu0 0.0
  %1376 = vmatmul.mubr.f32.gmra.mrb[0].mxu0 %v1020
  %v1377 = vpop.f32.mrb[0].mxu0
  %v1378 = vadd.f32 %v1233, %v1377
  %v1379 = vpop.f32.mrb[0].mxu0
  %1380 = vmatprep.mubr.f32.mxu0 0.0
  %1381 = vmatmul.mubr.f32.gmra.mrb[0].mxu0 %v1021
  %v1382 = vpop.f32.mrb[0].mxu0
  %v1383 = vadd.f32 %v1238, %v1382
  %v1384 = vpop.f32.mrb[0].mxu0
  %1385 = vmatprep.mubr.f32.mxu0 0.0
  %1386 = vmatmul.mubr.f32.gmra.mrb[0].mxu0 %v1022
  %v1387 = vpop.f32.mrb[0].mxu0
  %v1388 = vadd.f32 %v1243, %v1387
  %v1389 = vpop.f32.mrb[0].mxu0
  %1390 = vmatprep.mubr.f32.mxu0 0.0
  %1391 = vmatmul.mubr.f32.gmra.mrb[0].mxu0 %v1023
  %v1392 = vpop.f32.mrb[0].mxu0
  %v1393 = vadd.f32 %v1248, %v1392
  %v1394 = vpop.f32.mrb[0].mxu0
  %1395 = vmatprep.mubr.f32.mxu0 0.0
  %1396 = vmatmul.mubr.f32.gmra.mrb[0].mxu0 %v1024
  %v1397 = vpop.f32.mrb[0].mxu0
  %v1398 = vadd.f32 %v1253, %v1397
  %v1399 = vpop.f32.mrb[0].mxu0
  %1400 = vmatprep.mubr.f32.mxu0 0.0
  %1401 = vmatmul.mubr.f32.gmra.mrb[0].mxu0 %v1025
  %v1402 = vpop.f32.mrb[0].mxu0
  %v1403 = vadd.f32 %v1258, %v1402
  %v1404 = vpop.f32.mrb[0].mxu0
  %1405 = vmatprep.mubr.f32.mxu0 0.0
  %1406 = vmatmul.mubr.f32.gmra.mrb[0].mxu0 %v1026
  %v1407 = vpop.f32.mrb[0].mxu0
  %v1408 = vadd.f32 %v1263, %v1407
  %v1409 = vpop.f32.mrb[0].mxu0
  %1410 = vdwg.mxu0
  %1411 = vst [vmem:[%s14] sm:$0xff] %v1333
  %1412 = vst [vmem:[%s14 + $0x8] sm:$0xff] %v1338
  %1413 = vst [vmem:[%s14 + $0x10] sm:$0xff] %v1343
  %1414 = vst [vmem:[%s14 + $0x18] sm:$0xff] %v1348
  %1415 = vst [vmem:[%s14 + $0x20] sm:$0xff] %v1353
  %1416 = vst [vmem:[%s14 + $0x28] sm:$0xff] %v1358
  %1417 = vst [vmem:[%s14 + $0x30] sm:$0xff] %v1363
  %1418 = vst [vmem:[%s14 + $0x38] sm:$0xff] %v1368
  %1419 = vst [vmem:[%s14 + $0x40] sm:$0xff] %v1373
  %1420 = vst [vmem:[%s14 + $0x48] sm:$0xff] %v1378
  %1421 = vst [vmem:[%s14 + $0x50] sm:$0xff] %v1383
  %1422 = vst [vmem:[%s14 + $0x58] sm:$0xff] %v1388
  %1423 = vst [vmem:[%s14 + $0x60] sm:$0xff] %v1393
  %1424 = vst [vmem:[%s14 + $0x68] sm:$0xff] %v1398
  %1425 = vst [vmem:[%s14 + $0x70] sm:$0xff] %v1403
  %1426 = vst [vmem:[%s14 + $0x78] sm:$0xff] %v1408
  // Predicated region
  $region58: #{upsample_8_forward.2} parent=0 // pred_check
    _
  $region59: #{upsample_8_forward.2} parent=0 // pred_check_branch
    %1428 = sbr.rel (0) target = $region61
  $region60: #{upsample_8_forward.2} parent=0 // pred_region
    _
  $region61: #{upsample_8_forward.2} parent=0 // pred_fallthru
    _
  // Predicated region
  $region62: #{upsample_8_forward.2} parent=0 // pred_check
    _
  $region63: #{upsample_8_forward.2} parent=0 // pred_check_branch
    %1430 = sbr.rel (0) target = $region65
  $region64: #{upsample_8_forward.2} parent=0 // pred_region
    _
  $region65: #{upsample_8_forward.2} parent=0 // pred_fallthru
    _
  // Predicated region
  $region66: #{upsample_8_forward.2} parent=0 // pred_check
    _
  $region67: #{upsample_8_forward.2} parent=0 // pred_check_branch
    %1432 = sbr.rel (0) target = $region69
  $region68: #{upsample_8_forward.2} parent=0 // pred_region
    _
  $region69: #{upsample_8_forward.2} parent=0 // pred_fallthru
    _
  // Predicated region
  $region70: #{upsample_8_forward.2} parent=0 // pred_check
    _
  $region71: #{upsample_8_forward.2} parent=0 // pred_check_branch
    %1434 = sbr.rel (0) target = $region73
  $region72: #{upsample_8_forward.2} parent=0 // pred_region
    _
  $region73: #{upsample_8_forward.2} parent=0 // pred_fallthru
    _

// kernel: upsample_8_forward.3
$region0: #{upsample_8_forward.3}
  #allocation0 [shape = 'u32[]', space=smem, size = 0x4, offset = 0x4, fixed_abs, tag = 'smem constant byte address 0x4 - core index']
  #allocation1 [shape = 'u32[144,128]{1,0:T(1,128)}', space=vmem, size = 0x12000, scoped, tag = 'internal scratch']
  %s0 = inlined_call_operand.vmem [shape: f32[2,64,2], index: 0, kind: input, shape index: {}]
  %s1 = inlined_call_operand.vmem [shape: f32[2,64,128], index: 1, kind: input, shape index: {}]
  %s2 = inlined_call_operand.vmem [shape: s32[64,1], index: 2, kind: input, shape index: {}]
  %s3 = inlined_call_operand.vmem [shape: s32[64,1], index: 3, kind: input, shape index: {}]
  %s4 = inlined_call_operand.vmem [shape: f32[50], index: 4, kind: input, shape index: {}]
  %s5 = inlined_call_operand.vmem [shape: f32[1,128], index: 5, kind: input, shape index: {}]
  %s6 = inlined_call_operand.vmem [shape: f32[1,128], index: 6, kind: input, shape index: {}]
  %s7 = inlined_call_operand.vmem [shape: f32[9,128,128], index: 7, kind: input, shape index: {}]
  %s8 = inlined_call_operand.hbm [shape: f32[2,64,128], index: 8, kind: output, shape index: {}]
  %s9 = sld [smem:[#allocation0]]
  $region69: #{upsample_8_forward.3} parent=0
    _
  %s11 = ssub.s32 1, %s9
  %s12 = scalar_select 0, %s11, %s9
  $region1: #{upsample_8_forward.3} parent=0
    #allocation2 [shape = 'u8[512]{0}', space=smem, size = 0x200, scoped, tag = 'input window, operand 4, single buffered']
    #allocation3 [shape = 's32[2]{0}', space=sflag, size = 0x8, scoped, tag = 'scoped memory for upsample_8_forward.3']
    #allocation4 [shape = 's32[2]{0}', space=sflag, size = 0x8, scoped, tag = 'scoped memory for upsample_8_forward.3']
    #allocation5 [shape = 'u8[65536]{0}', space=vmem, size = 0x10000, scoped, tag = 'output window, operand 0']
    %13 = vsyncpa [#allocation4], 0
    %14 = vsyncpa [#allocation3], 0
    %s15 = scalar_lea.sflag [#allocation3], 1
    %16 = vsyncpa %s15, 0
    loop: start=0, step=1, limit=4
    $region2: #{upsample_8_forward.3} parent=1 // loop_pre_header
      _
    $region3: #{upsample_8_forward.3} parent=1 // loop_header
      %s18 = sphi 0, %s22
      %p19 = scmp.ge.s32.totalorder %s18, 4
      %s28 = sphi 0, %s30
      %s31 = sphi 0, %s28
      %s32 = sphi 0, %s31
      %s48 = sphi 0, %s32
      %s54 = sphi 0, %s56
      %s57 = sphi 0, %s54
      %s58 = sphi 0, %s57
      %s74 = sphi 0, %s58
      %s78 = sphi 0, %s78
      %s80 = sphi 0, %s78
      %s81 = sphi 0, %s80
      %s95 = sphi 0, %s81
      %s99 = sphi 0, %s99
      %s101 = sphi 0, %s99
      %s102 = sphi 0, %s101
      %s116 = sphi 0, %s102
      %s120 = sphi 0, %s120
      %s122 = sphi 0, %s120
      %s123 = sphi 0, %s122
      %s137 = sphi 0, %s123
      %s141 = sphi 0, %s141
      %s143 = sphi 0, %s141
      %s144 = sphi 0, %s143
      %s158 = sphi 0, %s144
      %s162 = sphi 0, %s162
      %s164 = sphi 0, %s162
      %s165 = sphi 0, %s164
      %s179 = sphi 0, %s165
      %s183 = sphi 0, %s183
      %s185 = sphi 0, %s183
      %s186 = sphi 0, %s185
      %s200 = sphi 0, %s186
      %s206 = sphi 0, %s208
      %s209 = sphi 0, %s206
      %s210 = sphi 0, %s209
      %s226 = sphi 0, %s210
    $region4: #{upsample_8_forward.3} parent=1 // loop_header_branch
      %21 = sbr.rel (%p19) target = $region8
    $region5: #{upsample_8_forward.3} parent=1 // loop_body
      %s23 = ssub.s32 %s18, 1
      %s24 = ssub.s32 %s18, 2
      %s25 = sadd.s32 %s18, 1
      %s26 = ssub.s32 %s18, %s25
      %p27 = scmp.eq.s32.totalorder %s26, 0
      %s29 = sadd.s32 %s28, 1
      %s30 = scalar_select %p27, %s28, %s29
      %p33 = pneg %p27
      %p34 = scmp.eq.s32.totalorder %s18, 1
      %p35 = por %p33, %p34
      %p36 = scmp.ne.s32.totalorder %s28, %s31
      %p37 = scmp.eq.s32.totalorder %s18, 0
      %p38 = por %p36, %p37
      %p39 = scmp.ne.s32.totalorder %s28, %s31
      %p40 = scmp.eq.s32.totalorder %s23, 1
      %p41 = por %p39, %p40
      %p42 = scmp.ne.s32.totalorder %s31, %s32
      %p43 = scmp.eq.s32.totalorder %s23, 0
      %p44 = por %p42, %p43
      %p45 = scmp.ne.s32.totalorder %s31, %s32
      %p46 = scmp.eq.s32.totalorder %s24, 1
      %p47 = por %p45, %p46
      %p49 = scmp.ne.s32.totalorder %s32, %s48
      %p50 = scmp.eq.s32.totalorder %s24, 0
      %p51 = por %p49, %p50
      %s52 = ssub.s32 %s18, %s25
      %p53 = scmp.eq.s32.totalorder %s52, 0
      %s55 = sadd.s32 %s54, 1
      %s56 = scalar_select %p53, %s54, %s55
      %p59 = pneg %p53
      %p60 = scmp.eq.s32.totalorder %s18, 1
      %p61 = por %p59, %p60
      %p62 = scmp.ne.s32.totalorder %s54, %s57
      %p63 = scmp.eq.s32.totalorder %s18, 0
      %p64 = por %p62, %p63
      %p65 = scmp.ne.s32.totalorder %s54, %s57
      %p66 = scmp.eq.s32.totalorder %s23, 1
      %p67 = por %p65, %p66
      %p68 = scmp.ne.s32.totalorder %s57, %s58
      %p69 = scmp.eq.s32.totalorder %s23, 0
      %p70 = por %p68, %p69
      %p71 = scmp.ne.s32.totalorder %s57, %s58
      %p72 = scmp.eq.s32.totalorder %s24, 1
      %p73 = por %p71, %p72
      %p75 = scmp.ne.s32.totalorder %s58, %s74
      %p76 = scmp.eq.s32.totalorder %s24, 0
      %p77 = por %p75, %p76
      %s79 = sadd.s32 %s78, 1
      %p82 = scmp.eq.s32.totalorder %s18, 1
      %p83 = scmp.ne.s32.totalorder %s78, %s80
      %p84 = scmp.eq.s32.totalorder %s18, 0
      %p85 = por %p83, %p84
      %p86 = scmp.ne.s32.totalorder %s78, %s80
      %p87 = scmp.eq.s32.totalorder %s23, 1
      %p88 = por %p86, %p87
      %p89 = scmp.ne.s32.totalorder %s80, %s81
      %p90 = scmp.eq.s32.totalorder %s23, 0
      %p91 = por %p89, %p90
      %p92 = scmp.ne.s32.totalorder %s80, %s81
      %p93 = scmp.eq.s32.totalorder %s24, 1
      %p94 = por %p92, %p93
      %p96 = scmp.ne.s32.totalorder %s81, %s95
      %p97 = scmp.eq.s32.totalorder %s24, 0
      %p98 = por %p96, %p97
      %s100 = sadd.s32 %s99, 1
      %p103 = scmp.eq.s32.totalorder %s18, 1
      %p104 = scmp.ne.s32.totalorder %s99, %s101
      %p105 = scmp.eq.s32.totalorder %s18, 0
      %p106 = por %p104, %p105
      %p107 = scmp.ne.s32.totalorder %s99, %s101
      %p108 = scmp.eq.s32.totalorder %s23, 1
      %p109 = por %p107, %p108
      %p110 = scmp.ne.s32.totalorder %s101, %s102
      %p111 = scmp.eq.s32.totalorder %s23, 0
      %p112 = por %p110, %p111
      %p113 = scmp.ne.s32.totalorder %s101, %s102
      %p114 = scmp.eq.s32.totalorder %s24, 1
      %p115 = por %p113, %p114
      %p117 = scmp.ne.s32.totalorder %s102, %s116
      %p118 = scmp.eq.s32.totalorder %s24, 0
      %p119 = por %p117, %p118
      %s121 = sadd.s32 %s120, 1
      %p124 = scmp.eq.s32.totalorder %s18, 1
      %p125 = scmp.ne.s32.totalorder %s120, %s122
      %p126 = scmp.eq.s32.totalorder %s18, 0
      %p127 = por %p125, %p126
      %p128 = scmp.ne.s32.totalorder %s120, %s122
      %p129 = scmp.eq.s32.totalorder %s23, 1
      %p130 = por %p128, %p129
      %p131 = scmp.ne.s32.totalorder %s122, %s123
      %p132 = scmp.eq.s32.totalorder %s23, 0
      %p133 = por %p131, %p132
      %p134 = scmp.ne.s32.totalorder %s122, %s123
      %p135 = scmp.eq.s32.totalorder %s24, 1
      %p136 = por %p134, %p135
      %p138 = scmp.ne.s32.totalorder %s123, %s137
      %p139 = scmp.eq.s32.totalorder %s24, 0
      %p140 = por %p138, %p139
      %s142 = sadd.s32 %s141, 1
      %p145 = scmp.eq.s32.totalorder %s18, 1
      %p146 = scmp.ne.s32.totalorder %s141, %s143
      %p147 = scmp.eq.s32.totalorder %s18, 0
      %p148 = por %p146, %p147
      %p149 = scmp.ne.s32.totalorder %s141, %s143
      %p150 = scmp.eq.s32.totalorder %s23, 1
      %p151 = por %p149, %p150
      %p152 = scmp.ne.s32.totalorder %s143, %s144
      %p153 = scmp.eq.s32.totalorder %s23, 0
      %p154 = por %p152, %p153
      %p155 = scmp.ne.s32.totalorder %s143, %s144
      %p156 = scmp.eq.s32.totalorder %s24, 1
      %p157 = por %p155, %p156
      %p159 = scmp.ne.s32.totalorder %s144, %s158
      %p160 = scmp.eq.s32.totalorder %s24, 0
      %p161 = por %p159, %p160
      %s163 = sadd.s32 %s162, 1
      %p166 = scmp.eq.s32.totalorder %s18, 1
      %p167 = scmp.ne.s32.totalorder %s162, %s164
      %p168 = scmp.eq.s32.totalorder %s18, 0
      %p169 = por %p167, %p168
      %p170 = scmp.ne.s32.totalorder %s162, %s164
      %p171 = scmp.eq.s32.totalorder %s23, 1
      %p172 = por %p170, %p171
      %p173 = scmp.ne.s32.totalorder %s164, %s165
      %p174 = scmp.eq.s32.totalorder %s23, 0
      %p175 = por %p173, %p174
      %p176 = scmp.ne.s32.totalorder %s164, %s165
      %p177 = scmp.eq.s32.totalorder %s24, 1
      %p178 = por %p176, %p177
      %p180 = scmp.ne.s32.totalorder %s165, %s179
      %p181 = scmp.eq.s32.totalorder %s24, 0
      %p182 = por %p180, %p181
      %s184 = sadd.s32 %s183, 1
      %p187 = scmp.eq.s32.totalorder %s18, 1
      %p188 = scmp.ne.s32.totalorder %s183, %s185
      %p189 = scmp.eq.s32.totalorder %s18, 0
      %p190 = por %p188, %p189
      %p191 = scmp.ne.s32.totalorder %s183, %s185
      %p192 = scmp.eq.s32.totalorder %s23, 1
      %p193 = por %p191, %p192
      %p194 = scmp.ne.s32.totalorder %s185, %s186
      %p195 = scmp.eq.s32.totalorder %s23, 0
      %p196 = por %p194, %p195
      %p197 = scmp.ne.s32.totalorder %s185, %s186
      %p198 = scmp.eq.s32.totalorder %s24, 1
      %p199 = por %p197, %p198
      %p201 = scmp.ne.s32.totalorder %s186, %s200
      %p202 = scmp.eq.s32.totalorder %s24, 0
      %p203 = por %p201, %p202
      %s204 = ssub.s32 %s18, %s25
      %p205 = scmp.eq.s32.totalorder %s204, 0
      %s207 = sadd.s32 %s206, 1
      %s208 = scalar_select %p205, %s206, %s207
      %p211 = pneg %p205
      %p212 = scmp.eq.s32.totalorder %s18, 1
      %p213 = por %p211, %p212
      %p214 = scmp.ne.s32.totalorder %s206, %s209
      %p215 = scmp.eq.s32.totalorder %s18, 0
      %p216 = por %p214, %p215
      %p217 = scmp.ne.s32.totalorder %s206, %s209
      %p218 = scmp.eq.s32.totalorder %s23, 1
      %p219 = por %p217, %p218
      %p220 = scmp.ne.s32.totalorder %s209, %s210
      %p221 = scmp.eq.s32.totalorder %s23, 0
      %p222 = por %p220, %p221
      %p223 = scmp.ne.s32.totalorder %s209, %s210
      %p224 = scmp.eq.s32.totalorder %s24, 1
      %p225 = por %p223, %p224
      %p227 = scmp.ne.s32.totalorder %s210, %s226
      %p228 = scmp.eq.s32.totalorder %s24, 0
      %p229 = por %p227, %p228
      %p230 = scmp.le.s32.totalorder 1, %s18
      %p231 = scmp.lt.s32.totalorder %s18, 3
      %p232 = pnand %p230, %p231
      %p233 = pneg %p232
      // Predicated region
      $region9: #{upsample_8_forward.3} parent=5 // pred_check
        _
      $region10: #{upsample_8_forward.3} parent=5 // pred_check_branch
        %235 = sbr.rel (%p232) target = $region12
      $region11: #{upsample_8_forward.3} parent=5 // pred_region
        %s236 = ssub.s32 %s18, 1
        // Predicated region
        $region13: #{upsample_8_forward.3} parent=11 // pred_check
          %p237 = pneg %p91
        $region14: #{upsample_8_forward.3} parent=11 // pred_check_branch
          %239 = sbr.rel (%p237) target = $region16
        $region15: #{upsample_8_forward.3} parent=11 // pred_region
          _
        $region16: #{upsample_8_forward.3} parent=11 // pred_fallthru
          _
        // Predicated region
        $region17: #{upsample_8_forward.3} parent=11 // pred_check
          %p240 = pneg %p112
        $region18: #{upsample_8_forward.3} parent=11 // pred_check_branch
          %242 = sbr.rel (%p240) target = $region20
        $region19: #{upsample_8_forward.3} parent=11 // pred_region
          _
        $region20: #{upsample_8_forward.3} parent=11 // pred_fallthru
          _
        // Predicated region
        $region21: #{upsample_8_forward.3} parent=11 // pred_check
          %p243 = pneg %p133
        $region22: #{upsample_8_forward.3} parent=11 // pred_check_branch
          %245 = sbr.rel (%p243) target = $region24
        $region23: #{upsample_8_forward.3} parent=11 // pred_region
          %s247 = ssub.s32 16, 16
          %248 = vsyncadd [#allocation4], %s247
          %s250 = sshll.u32 %s4, 4
          %s251 = int_to_ptr.vmem [resolvable:$true] %s250
          %253 = dma.vmem_to_smem %s251, 16, [#allocation2], [#allocation4]
        $region24: #{upsample_8_forward.3} parent=11 // pred_fallthru
          _
        // Predicated region
        $region25: #{upsample_8_forward.3} parent=11 // pred_check
          %p254 = pneg %p154
        $region26: #{upsample_8_forward.3} parent=11 // pred_check_branch
          %256 = sbr.rel (%p254) target = $region28
        $region27: #{upsample_8_forward.3} parent=11 // pred_region
          _
        $region28: #{upsample_8_forward.3} parent=11 // pred_fallthru
          _
        // Predicated region
        $region29: #{upsample_8_forward.3} parent=11 // pred_check
          %p257 = pneg %p175
        $region30: #{upsample_8_forward.3} parent=11 // pred_check_branch
          %259 = sbr.rel (%p257) target = $region32
        $region31: #{upsample_8_forward.3} parent=11 // pred_region
          _
        $region32: #{upsample_8_forward.3} parent=11 // pred_fallthru
          _
        // Predicated region
        $region33: #{upsample_8_forward.3} parent=11 // pred_check
          %p260 = pneg %p196
        $region34: #{upsample_8_forward.3} parent=11 // pred_check_branch
          %262 = sbr.rel (%p260) target = $region36
        $region35: #{upsample_8_forward.3} parent=11 // pred_region
          _
        $region36: #{upsample_8_forward.3} parent=11 // pred_fallthru
          _
      $region12: #{upsample_8_forward.3} parent=5 // pred_fallthru
        _
      %p263 = scmp.lt.s32.totalorder %s18, 2
      // Predicated region
      $region37: #{upsample_8_forward.3} parent=5 // pred_check
        %p264 = pneg %p263
      $region38: #{upsample_8_forward.3} parent=5 // pred_check_branch
        %266 = sbr.rel (%p264) target = $region40
      $region39: #{upsample_8_forward.3} parent=5 // pred_region
        // Predicated region
        $region41: #{upsample_8_forward.3} parent=39 // pred_check
          %p267 = pneg %p38
        $region42: #{upsample_8_forward.3} parent=39 // pred_check_branch
          %269 = sbr.rel (%p267) target = $region44
        $region43: #{upsample_8_forward.3} parent=39 // pred_region
          %p270 = scmp.lt.s32.totalorder %s18, 1
          %s271 = scalar_select %p270, %s18, 1
          %s272 = smul.addr %s271, 8
          %s273 = smul.addr %s272, 8
          %s274 = scalar_lea.vmem %s0, %s273
        $region44: #{upsample_8_forward.3} parent=39 // pred_fallthru
          _
        // Predicated region
        $region45: #{upsample_8_forward.3} parent=39 // pred_check
          %p275 = pneg %p64
        $region46: #{upsample_8_forward.3} parent=39 // pred_check_branch
          %277 = sbr.rel (%p275) target = $region48
        $region47: #{upsample_8_forward.3} parent=39 // pred_region
          %p278 = scmp.lt.s32.totalorder %s18, 1
          %s279 = scalar_select %p278, %s18, 1
          %s280 = smul.addr %s279, 8
          %s281 = smul.addr %s280, 8
          %s282 = scalar_lea.vmem %s1, %s281
        $region48: #{upsample_8_forward.3} parent=39 // pred_fallthru
          _
      $region40: #{upsample_8_forward.3} parent=5 // pred_fallthru
        _
      %p283 = scmp.le.s32.totalorder 1, %s18
      %p284 = scmp.lt.s32.totalorder %s18, 3
      %p285 = pnand %p283, %p284
      %p286 = pneg %p285
      // Predicated region
      $region49: #{upsample_8_forward.3} parent=5 // pred_check
        _
      $region50: #{upsample_8_forward.3} parent=5 // pred_check_branch
        %288 = sbr.rel (%p285) target = $region52
      $region51: #{upsample_8_forward.3} parent=5 // pred_region
        %s289 = ssub.s32 %s18, 1
        // Predicated region
        $region53: #{upsample_8_forward.3} parent=51 // pred_check
          %p290 = pneg %p133
        $region54: #{upsample_8_forward.3} parent=51 // pred_check_branch
          %292 = sbr.rel (%p290) target = $region56
        $region55: #{upsample_8_forward.3} parent=51 // pred_region
          %293 = dma.done [#allocation4], 16
        $region56: #{upsample_8_forward.3} parent=51 // pred_fallthru
          _
        %294 = sfence
        %p295 = scmp.lt.s32.totalorder %s23, 1
        %s296 = scalar_select %p295, %s23, 1
        %s297 = smul.addr %s296, 8
        %s298 = smul.addr %s297, 8
        %s299 = scalar_lea.vmem %s0, %s298
        %p300 = pneg %p44
        %p301 = pneg %p41
        %p302 = scmp.lt.s32.totalorder %s23, 1
        %s303 = scalar_select %p302, %s23, 1
        %s304 = smul.addr %s303, 8
        %s305 = smul.addr %s304, 8
        %s306 = scalar_lea.vmem %s1, %s305
        %p307 = pneg %p70
        %p308 = pneg %p67
        %p309 = pneg %p91
        %p310 = pneg %p88
        %p311 = pneg %p112
        %p312 = pneg %p109
        %p313 = pneg %p133
        %p314 = pneg %p130
        %p315 = pneg %p154
        %p316 = pneg %p151
        %p317 = pneg %p175
        %p318 = pneg %p172
        %p319 = pneg %p196
        %p320 = pneg %p193
        %p321 = pneg %p222
        %p322 = pneg %p219
        %s323 = sand.u32 %s209, 1
        %s324 = scalar_lea.sflag [#allocation3], %s323
        %s325 = sand.u32 %s209, 1
        %s326 = smul.addr %s325, 64
        %s327 = scalar_lea.vmem [#allocation5], %s326
        %p328 = scmp.lt.s32.totalorder %s23, 1
        %s329 = scalar_select %p328, %s23, 1
        %s330 = smul.addr %s329, 8
        %s331 = smul.addr %s330, 8
        %s332 = scalar_lea.vmem %s0, %s331
        %p333 = scmp.lt.s32.totalorder %s23, 1
        %s334 = scalar_select %p333, %s23, 1
        %s335 = smul.addr %s334, 8
        %s336 = smul.addr %s335, 8
        %s337 = scalar_lea.vmem %s1, %s336
        %v338 = vld [vmem:[%s332] sm:$0xff]
        %v339 = vld [vmem:[%s332 + $0x8] sm:$0xff]
        %v340 = vld [vmem:[%s332 + $0x10] sm:$0xff]
        %v341 = vld [vmem:[%s332 + $0x18] sm:$0xff]
        %v342 = vld [vmem:[%s332 + $0x20] sm:$0xff]
        %v343 = vld [vmem:[%s332 + $0x28] sm:$0xff]
        %v344 = vld [vmem:[%s332 + $0x30] sm:$0xff]
        %v345 = vld [vmem:[%s332 + $0x38] sm:$0xff]
        %v346 = vld [vmem:[%s337] sm:$0xff]
        %v347 = vld [vmem:[%s337 + $0x8] sm:$0xff]
        %v348 = vld [vmem:[%s337 + $0x10] sm:$0xff]
        %v349 = vld [vmem:[%s337 + $0x18] sm:$0xff]
        %v350 = vld [vmem:[%s337 + $0x20] sm:$0xff]
        %v351 = vld [vmem:[%s337 + $0x28] sm:$0xff]
        %v352 = vld [vmem:[%s337 + $0x30] sm:$0xff]
        %v353 = vld [vmem:[%s337 + $0x38] sm:$0xff]
        %v354 = vld [vmem:[%s2] sm:$0xff]
        %v355 = vld [vmem:[%s2 + $0x8] sm:$0xff]
        %v356 = vld [vmem:[%s2 + $0x10] sm:$0xff]
        %v357 = vld [vmem:[%s2 + $0x18] sm:$0xff]
        %v358 = vld [vmem:[%s2 + $0x20] sm:$0xff]
        %v359 = vld [vmem:[%s2 + $0x28] sm:$0xff]
        %v360 = vld [vmem:[%s2 + $0x30] sm:$0xff]
        %v361 = vld [vmem:[%s2 + $0x38] sm:$0xff]
        %v362 = vld [vmem:[%s3] sm:$0xff]
        %v363 = vld [vmem:[%s3 + $0x8] sm:$0xff]
        %v364 = vld [vmem:[%s3 + $0x10] sm:$0xff]
        %v365 = vld [vmem:[%s3 + $0x18] sm:$0xff]
        %v366 = vld [vmem:[%s3 + $0x20] sm:$0xff]
        %v367 = vld [vmem:[%s3 + $0x28] sm:$0xff]
        %v368 = vld [vmem:[%s3 + $0x30] sm:$0xff]
        %v369 = vld [vmem:[%s3 + $0x38] sm:$0xff]
        %v370 = vrot.slane %v338, 6
        %v371 = vrot.slane %v339, 6
        %v372 = vrot.slane %v340, 6
        %v373 = vrot.slane %v341, 6
        %v374 = vrot.slane %v342, 6
        %v375 = vrot.slane %v343, 6
        %v376 = vrot.slane %v344, 6
        %v377 = vrot.slane %v345, 6
        %v378 = vlaneseq
        %v379 = vshrl.u32 %v378, 7
        %vm380 = vcmp.lt.s32.totalorder %v379, 2
        %v381 = vsel %vm380, %v376, %v377
        %v382 = vsel %vm380, %v375, %v376
        %v383 = vsel %vm380, %v374, %v375
        %v384 = vsel %vm380, %v373, %v374
        %v385 = vsel %vm380, %v372, %v373
        %v386 = vsel %vm380, %v371, %v372
        %v387 = vsel %vm380, %v370, %v371
        %v388 = vsel %vm380, %v377, %v370
        %v389 = vadd.s32 %v354, 4294967294
        %v390 = vadd.s32 %v355, 4294967294
        %v391 = vadd.s32 %v356, 4294967294
        %v392 = vadd.s32 %v357, 4294967294
        %v393 = vadd.s32 %v358, 4294967294
        %v394 = vadd.s32 %v359, 4294967294
        %v395 = vadd.s32 %v360, 4294967294
        %v396 = vadd.s32 %v361, 4294967294
        %vm397 = vcmp.ge.s32.totalorder %v389, 0
        %vm398 = vcmp.ge.s32.totalorder %v390, 0
        %vm399 = vcmp.ge.s32.totalorder %v391, 0
        %vm400 = vcmp.ge.s32.totalorder %v392, 0
        %vm401 = vcmp.ge.s32.totalorder %v393, 0
        %vm402 = vcmp.ge.s32.totalorder %v394, 0
        %vm403 = vcmp.ge.s32.totalorder %v395, 0
        %vm404 = vcmp.ge.s32.totalorder %v396, 0
        %vm405 = vcmp.lt.s32.totalorder %v389, 8
        %vm406 = vcmp.lt.s32.totalorder %v390, 8
        %vm407 = vcmp.lt.s32.totalorder %v391, 8
        %vm408 = vcmp.lt.s32.totalorder %v392, 8
        %vm409 = vcmp.lt.s32.totalorder %v393, 8
        %vm410 = vcmp.lt.s32.totalorder %v394, 8
        %vm411 = vcmp.lt.s32.totalorder %v395, 8
        %vm412 = vcmp.lt.s32.totalorder %v396, 8
        %vm413 = vmand %vm397, %vm405
        %vm414 = vmand %vm398, %vm406
        %vm415 = vmand %vm399, %vm407
        %vm416 = vmand %vm400, %vm408
        %vm417 = vmand %vm401, %vm409
        %vm418 = vmand %vm402, %vm410
        %vm419 = vmand %vm403, %vm411
        %vm420 = vmand %vm404, %vm412
        %v421 = vadd.s32 %v362, 4294967294
        %v422 = vadd.s32 %v363, 4294967294
        %v423 = vadd.s32 %v364, 4294967294
        %v424 = vadd.s32 %v365, 4294967294
        %v425 = vadd.s32 %v366, 4294967294
        %v426 = vadd.s32 %v367, 4294967294
        %v427 = vadd.s32 %v368, 4294967294
        %v428 = vadd.s32 %v369, 4294967294
        %vm429 = vcmp.ge.s32.totalorder %v421, 0
        %vm430 = vcmp.ge.s32.totalorder %v422, 0
        %vm431 = vcmp.ge.s32.totalorder %v423, 0
        %vm432 = vcmp.ge.s32.totalorder %v424, 0
        %vm433 = vcmp.ge.s32.totalorder %v425, 0
        %vm434 = vcmp.ge.s32.totalorder %v426, 0
        %vm435 = vcmp.ge.s32.totalorder %v427, 0
        %vm436 = vcmp.ge.s32.totalorder %v428, 0
        %vm437 = vmand %vm413, %vm429
        %vm438 = vmand %vm414, %vm430
        %vm439 = vmand %vm415, %vm431
        %vm440 = vmand %vm416, %vm432
        %vm441 = vmand %vm417, %vm433
        %vm442 = vmand %vm418, %vm434
        %vm443 = vmand %vm419, %vm435
        %vm444 = vmand %vm420, %vm436
        %vm445 = vcmp.lt.s32.totalorder %v421, 8
        %vm446 = vcmp.lt.s32.totalorder %v422, 8
        %vm447 = vcmp.lt.s32.totalorder %v423, 8
        %vm448 = vcmp.lt.s32.totalorder %v424, 8
        %vm449 = vcmp.lt.s32.totalorder %v425, 8
        %vm450 = vcmp.lt.s32.totalorder %v426, 8
        %vm451 = vcmp.lt.s32.totalorder %v427, 8
        %vm452 = vcmp.lt.s32.totalorder %v428, 8
        %vm453 = vmand %vm437, %vm445
        %vm454 = vmand %vm438, %vm446
        %vm455 = vmand %vm439, %vm447
        %vm456 = vmand %vm440, %vm448
        %vm457 = vmand %vm441, %vm449
        %vm458 = vmand %vm442, %vm450
        %vm459 = vmand %vm443, %vm451
        %vm460 = vmand %vm444, %vm452
        %s461 = sld [smem:[#allocation2]]
        %v462 = vstv %s461
        %v463 = vmul.f32 %v382, %v462
        %v464 = vmul.f32 %v381, %v462
        %v465 = vmul.f32 %v388, %v462
        %v466 = vmul.f32 %v387, %v462
        %v467 = vmul.f32 %v386, %v462
        %v468 = vmul.f32 %v385, %v462
        %v469 = vmul.f32 %v384, %v462
        %v470 = vmul.f32 %v383, %v462
        %s471 = sld [smem:[#allocation2 + $0x19]]
        %v472 = vstv %s471
        %v473 = vmul.f32 %v382, %v472
        %v474 = vmul.f32 %v381, %v472
        %v475 = vmul.f32 %v388, %v472
        %v476 = vmul.f32 %v387, %v472
        %v477 = vmul.f32 %v386, %v472
        %v478 = vmul.f32 %v385, %v472
        %v479 = vmul.f32 %v384, %v472
        %v480 = vmul.f32 %v383, %v472
        %489 = vrot.lane.b32.xlu0 %v473, 127
        %v490 = vpop.permute.xlu0 %489
        %491 = vrot.lane.b32.xlu0 %v474, 127
        %v492 = vpop.permute.xlu0 %491
        %493 = vrot.lane.b32.xlu0 %v475, 127
        %v494 = vpop.permute.xlu0 %493
        %495 = vrot.lane.b32.xlu0 %v476, 127
        %v496 = vpop.permute.xlu0 %495
        %497 = vrot.lane.b32.xlu0 %v477, 127
        %v498 = vpop.permute.xlu0 %497
        %499 = vrot.lane.b32.xlu0 %v478, 127
        %v500 = vpop.permute.xlu0 %499
        %501 = vrot.lane.b32.xlu0 %v479, 127
        %v502 = vpop.permute.xlu0 %501
        %503 = vrot.lane.b32.xlu0 %v480, 127
        %v504 = vpop.permute.xlu0 %503
        %v513 = vadd.f32 %v463, %v490
        %v514 = vadd.f32 %v464, %v492
        %v515 = vadd.f32 %v465, %v494
        %v516 = vadd.f32 %v466, %v496
        %v517 = vadd.f32 %v467, %v498
        %v518 = vadd.f32 %v468, %v500
        %v519 = vadd.f32 %v469, %v502
        %v520 = vadd.f32 %v470, %v504
        %v521 = vsel %vm453, %v513, 0.0
        %v522 = vsel %vm454, %v514, 0.0
        %v523 = vsel %vm455, %v515, 0.0
        %v524 = vsel %vm456, %v516, 0.0
        %v525 = vsel %vm457, %v517, 0.0
        %v526 = vsel %vm458, %v518, 0.0
        %v527 = vsel %vm459, %v519, 0.0
        %v528 = vsel %vm460, %v520, 0.0
        %v529 = vadd.f32 %v521, 0.0
        %v530 = vadd.f32 %v522, 0.0
        %v531 = vadd.f32 %v523, 0.0
        %v532 = vadd.f32 %v524, 0.0
        %v533 = vadd.f32 %v525, 0.0
        %v534 = vadd.f32 %v526, 0.0
        %v535 = vadd.f32 %v527, 0.0
        %v536 = vadd.f32 %v528, 0.0
        %v537 = vrot.slane %v338, 7
        %v538 = vrot.slane %v339, 7
        %v539 = vrot.slane %v340, 7
        %v540 = vrot.slane %v341, 7
        %v541 = vrot.slane %v342, 7
        %v542 = vrot.slane %v343, 7
        %v543 = vrot.slane %v344, 7
        %v544 = vrot.slane %v345, 7
        %vm545 = vcmp.lt.s32.totalorder %v379, 1
        %v546 = vsel %vm545, %v543, %v544
        %v547 = vsel %vm545, %v542, %v543
        %v548 = vsel %vm545, %v541, %v542
        %v549 = vsel %vm545, %v540, %v541
        %v550 = vsel %vm545, %v539, %v540
        %v551 = vsel %vm545, %v538, %v539
        %v552 = vsel %vm545, %v537, %v538
        %v553 = vsel %vm545, %v544, %v537
        %v554 = vadd.s32 %v362, 4294967295
        %v555 = vadd.s32 %v363, 4294967295
        %v556 = vadd.s32 %v364, 4294967295
        %v557 = vadd.s32 %v365, 4294967295
        %v558 = vadd.s32 %v366, 4294967295
        %v559 = vadd.s32 %v367, 4294967295
        %v560 = vadd.s32 %v368, 4294967295
        %v561 = vadd.s32 %v369, 4294967295
        %vm562 = vcmp.ge.s32.totalorder %v554, 0
        %vm563 = vcmp.ge.s32.totalorder %v555, 0
        %vm564 = vcmp.ge.s32.totalorder %v556, 0
        %vm565 = vcmp.ge.s32.totalorder %v557, 0
        %vm566 = vcmp.ge.s32.totalorder %v558, 0
        %vm567 = vcmp.ge.s32.totalorder %v559, 0
        %vm568 = vcmp.ge.s32.totalorder %v560, 0
        %vm569 = vcmp.ge.s32.totalorder %v561, 0
        %vm570 = vmand %vm413, %vm562
        %vm571 = vmand %vm414, %vm563
        %vm572 = vmand %vm415, %vm564
        %vm573 = vmand %vm416, %vm565
        %vm574 = vmand %vm417, %vm566
        %vm575 = vmand %vm418, %vm567
        %vm576 = vmand %vm419, %vm568
        %vm577 = vmand %vm420, %vm569
        %vm578 = vcmp.lt.s32.totalorder %v554, 8
        %vm579 = vcmp.lt.s32.totalorder %v555, 8
        %vm580 = vcmp.lt.s32.totalorder %v556, 8
        %vm581 = vcmp.lt.s32.totalorder %v557, 8
        %vm582 = vcmp.lt.s32.totalorder %v558, 8
        %vm583 = vcmp.lt.s32.totalorder %v559, 8
        %vm584 = vcmp.lt.s32.totalorder %v560, 8
        %vm585 = vcmp.lt.s32.totalorder %v561, 8
        %vm586 = vmand %vm570, %vm578
        %vm587 = vmand %vm571, %vm579
        %vm588 = vmand %vm572, %vm580
        %vm589 = vmand %vm573, %vm581
        %vm590 = vmand %vm574, %vm582
        %vm591 = vmand %vm575, %vm583
        %vm592 = vmand %vm576, %vm584
        %vm593 = vmand %vm577, %vm585
        %s594 = sld [smem:[#allocation2 + $0x1]]
        %v595 = vstv %s594
        %v596 = vmul.f32 %v547, %v595
        %v597 = vmul.f32 %v546, %v595
        %v598 = vmul.f32 %v553, %v595
        %v599 = vmul.f32 %v552, %v595
        %v600 = vmul.f32 %v551, %v595
        %v601 = vmul.f32 %v550, %v595
        %v602 = vmul.f32 %v549, %v595
        %v603 = vmul.f32 %v548, %v595
        %s604 = sld [smem:[#allocation2 + $0x1a]]
        %v605 = vstv %s604
        %v606 = vmul.f32 %v547, %v605
        %v607 = vmul.f32 %v546, %v605
        %v608 = vmul.f32 %v553, %v605
        %v609 = vmul.f32 %v552, %v605
        %v610 = vmul.f32 %v551, %v605
        %v611 = vmul.f32 %v550, %v605
        %v612 = vmul.f32 %v549, %v605
        %v613 = vmul.f32 %v548, %v605
        %622 = vrot.lane.b32.xlu0 %v606, 127
        %v623 = vpop.permute.xlu0 %622
        %624 = vrot.lane.b32.xlu0 %v607, 127
        %v625 = vpop.permute.xlu0 %624
        %626 = vrot.lane.b32.xlu0 %v608, 127
        %v627 = vpop.permute.xlu0 %626
        %628 = vrot.lane.b32.xlu0 %v609, 127
        %v629 = vpop.permute.xlu0 %628
        %630 = vrot.lane.b32.xlu0 %v610, 127
        %v631 = vpop.permute.xlu0 %630
        %632 = vrot.lane.b32.xlu0 %v611, 127
        %v633 = vpop.permute.xlu0 %632
        %634 = vrot.lane.b32.xlu0 %v612, 127
        %v635 = vpop.permute.xlu0 %634
        %636 = vrot.lane.b32.xlu0 %v613, 127
        %v637 = vpop.permute.xlu0 %636
        %v646 = vadd.f32 %v596, %v623
        %v647 = vadd.f32 %v597, %v625
        %v648 = vadd.f32 %v598, %v627
        %v649 = vadd.f32 %v599, %v629
        %v650 = vadd.f32 %v600, %v631
        %v651 = vadd.f32 %v601, %v633
        %v652 = vadd.f32 %v602, %v635
        %v653 = vadd.f32 %v603, %v637
        %v654 = vsel %vm586, %v646, 0.0
        %v655 = vsel %vm587, %v647, 0.0
        %v656 = vsel %vm588, %v648, 0.0
        %v657 = vsel %vm589, %v649, 0.0
        %v658 = vsel %vm590, %v650, 0.0
        %v659 = vsel %vm591, %v651, 0.0
        %v660 = vsel %vm592, %v652, 0.0
        %v661 = vsel %vm593, %v653, 0.0
        %v662 = vadd.f32 %v529, %v654
        %v663 = vadd.f32 %v530, %v655
        %v664 = vadd.f32 %v531, %v656
        %v665 = vadd.f32 %v532, %v657
        %v666 = vadd.f32 %v533, %v658
        %v667 = vadd.f32 %v534, %v659
        %v668 = vadd.f32 %v535, %v660
        %v669 = vadd.f32 %v536, %v661
        %vm670 = vcmp.ge.s32.totalorder %v362, 0
        %vm671 = vcmp.ge.s32.totalorder %v363, 0
        %vm672 = vcmp.ge.s32.totalorder %v364, 0
        %vm673 = vcmp.ge.s32.totalorder %v365, 0
        %vm674 = vcmp.ge.s32.totalorder %v366, 0
        %vm675 = vcmp.ge.s32.totalorder %v367, 0
        %vm676 = vcmp.ge.s32.totalorder %v368, 0
        %vm677 = vcmp.ge.s32.totalorder %v369, 0
        %vm678 = vmand %vm413, %vm670
        %vm679 = vmand %vm414, %vm671
        %vm680 = vmand %vm415, %vm672
        %vm681 = vmand %vm416, %vm673
        %vm682 = vmand %vm417, %vm674
        %vm683 = vmand %vm418, %vm675
        %vm684 = vmand %vm419, %vm676
        %vm685 = vmand %vm420, %vm677
        %vm686 = vcmp.lt.s32.totalorder %v362, 8
        %vm687 = vcmp.lt.s32.totalorder %v363, 8
        %vm688 = vcmp.lt.s32.totalorder %v364, 8
        %vm689 = vcmp.lt.s32.totalorder %v365, 8
        %vm690 = vcmp.lt.s32.totalorder %v366, 8
        %vm691 = vcmp.lt.s32.totalorder %v367, 8
        %vm692 = vcmp.lt.s32.totalorder %v368, 8
        %vm693 = vcmp.lt.s32.totalorder %v369, 8
        %vm694 = vmand %vm678, %vm686
        %vm695 = vmand %vm679, %vm687
        %vm696 = vmand %vm680, %vm688
        %vm697 = vmand %vm681, %vm689
        %vm698 = vmand %vm682, %vm690
        %vm699 = vmand %vm683, %vm691
        %vm700 = vmand %vm684, %vm692
        %vm701 = vmand %vm685, %vm693
        %s702 = sld [smem:[#allocation2 + $0x2]]
        %v703 = vstv %s702
        %v704 = vmul.f32 %v344, %v703
        %v705 = vmul.f32 %v345, %v703
        %v706 = vmul.f32 %v338, %v703
        %v707 = vmul.f32 %v339, %v703
        %v708 = vmul.f32 %v340, %v703
        %v709 = vmul.f32 %v341, %v703
        %v710 = vmul.f32 %v342, %v703
        %v711 = vmul.f32 %v343, %v703
        %s712 = sld [smem:[#allocation2 + $0x1b]]
        %v713 = vstv %s712
        %v714 = vmul.f32 %v344, %v713
        %v715 = vmul.f32 %v345, %v713
        %v716 = vmul.f32 %v338, %v713
        %v717 = vmul.f32 %v339, %v713
        %v718 = vmul.f32 %v340, %v713
        %v719 = vmul.f32 %v341, %v713
        %v720 = vmul.f32 %v342, %v713
        %v721 = vmul.f32 %v343, %v713
        %730 = vrot.lane.b32.xlu0 %v714, 127
        %v731 = vpop.permute.xlu0 %730
        %732 = vrot.lane.b32.xlu0 %v715, 127
        %v733 = vpop.permute.xlu0 %732
        %734 = vrot.lane.b32.xlu0 %v716, 127
        %v735 = vpop.permute.xlu0 %734
        %736 = vrot.lane.b32.xlu0 %v717, 127
        %v737 = vpop.permute.xlu0 %736
        %738 = vrot.lane.b32.xlu0 %v718, 127
        %v739 = vpop.permute.xlu0 %738
        %740 = vrot.lane.b32.xlu0 %v719, 127
        %v741 = vpop.permute.xlu0 %740
        %742 = vrot.lane.b32.xlu0 %v720, 127
        %v743 = vpop.permute.xlu0 %742
        %744 = vrot.lane.b32.xlu0 %v721, 127
        %v745 = vpop.permute.xlu0 %744
        %v754 = vadd.f32 %v704, %v731
        %v755 = vadd.f32 %v705, %v733
        %v756 = vadd.f32 %v706, %v735
        %v757 = vadd.f32 %v707, %v737
        %v758 = vadd.f32 %v708, %v739
        %v759 = vadd.f32 %v709, %v741
        %v760 = vadd.f32 %v710, %v743
        %v761 = vadd.f32 %v711, %v745
        %v762 = vsel %vm694, %v754, 0.0
        %v763 = vsel %vm695, %v755, 0.0
        %v764 = vsel %vm696, %v756, 0.0
        %v765 = vsel %vm697, %v757, 0.0
        %v766 = vsel %vm698, %v758, 0.0
        %v767 = vsel %vm699, %v759, 0.0
        %v768 = vsel %vm700, %v760, 0.0
        %v769 = vsel %vm701, %v761, 0.0
        %v770 = vadd.f32 %v662, %v762
        %v771 = vadd.f32 %v663, %v763
        %v772 = vadd.f32 %v664, %v764
        %v773 = vadd.f32 %v665, %v765
        %v774 = vadd.f32 %v666, %v766
        %v775 = vadd.f32 %v667, %v767
        %v776 = vadd.f32 %v668, %v768
        %v777 = vadd.f32 %v669, %v769
        %v778 = vrot.slane %v338, 1
        %v779 = vrot.slane %v339, 1
        %v780 = vrot.slane %v340, 1
        %v781 = vrot.slane %v341, 1
        %v782 = vrot.slane %v342, 1
        %v783 = vrot.slane %v343, 1
        %v784 = vrot.slane %v344, 1
        %v785 = vrot.slane %v345, 1
        %vm786 = vcmp.lt.s32.totalorder %v379, 7
        %v787 = vsel %vm786, %v784, %v785
        %v788 = vsel %vm786, %v783, %v784
        %v789 = vsel %vm786, %v782, %v783
        %v790 = vsel %vm786, %v781, %v782
        %v791 = vsel %vm786, %v780, %v781
        %v792 = vsel %vm786, %v779, %v780
        %v793 = vsel %vm786, %v778, %v779
        %v794 = vsel %vm786, %v785, %v778
        %v795 = vadd.s32 %v362, 1
        %v796 = vadd.s32 %v363, 1
        %v797 = vadd.s32 %v364, 1
        %v798 = vadd.s32 %v365, 1
        %v799 = vadd.s32 %v366, 1
        %v800 = vadd.s32 %v367, 1
        %v801 = vadd.s32 %v368, 1
        %v802 = vadd.s32 %v369, 1
        %vm803 = vcmp.ge.s32.totalorder %v795, 0
        %vm804 = vcmp.ge.s32.totalorder %v796, 0
        %vm805 = vcmp.ge.s32.totalorder %v797, 0
        %vm806 = vcmp.ge.s32.totalorder %v798, 0
        %vm807 = vcmp.ge.s32.totalorder %v799, 0
        %vm808 = vcmp.ge.s32.totalorder %v800, 0
        %vm809 = vcmp.ge.s32.totalorder %v801, 0
        %vm810 = vcmp.ge.s32.totalorder %v802, 0
        %vm811 = vmand %vm413, %vm803
        %vm812 = vmand %vm414, %vm804
        %vm813 = vmand %vm415, %vm805
        %vm814 = vmand %vm416, %vm806
        %vm815 = vmand %vm417, %vm807
        %vm816 = vmand %vm418, %vm808
        %vm817 = vmand %vm419, %vm809
        %vm818 = vmand %vm420, %vm810
        %vm819 = vcmp.lt.s32.totalorder %v795, 8
        %vm820 = vcmp.lt.s32.totalorder %v796, 8
        %vm821 = vcmp.lt.s32.totalorder %v797, 8
        %vm822 = vcmp.lt.s32.totalorder %v798, 8
        %vm823 = vcmp.lt.s32.totalorder %v799, 8
        %vm824 = vcmp.lt.s32.totalorder %v800, 8
        %vm825 = vcmp.lt.s32.totalorder %v801, 8
        %vm826 = vcmp.lt.s32.totalorder %v802, 8
        %vm827 = vmand %vm811, %vm819
        %vm828 = vmand %vm812, %vm820
        %vm829 = vmand %vm813, %vm821
        %vm830 = vmand %vm814, %vm822
        %vm831 = vmand %vm815, %vm823
        %vm832 = vmand %vm816, %vm824
        %vm833 = vmand %vm817, %vm825
        %vm834 = vmand %vm818, %vm826
        %s835 = sld [smem:[#allocation2 + $0x3]]
        %v836 = vstv %s835
        %v837 = vmul.f32 %v787, %v836
        %v838 = vmul.f32 %v794, %v836
        %v839 = vmul.f32 %v793, %v836
        %v840 = vmul.f32 %v792, %v836
        %v841 = vmul.f32 %v791, %v836
        %v842 = vmul.f32 %v790, %v836
        %v843 = vmul.f32 %v789, %v836
        %v844 = vmul.f32 %v788, %v836
        %s845 = sld [smem:[#allocation2 + $0x1c]]
        %v846 = vstv %s845
        %v847 = vmul.f32 %v787, %v846
        %v848 = vmul.f32 %v794, %v846
        %v849 = vmul.f32 %v793, %v846
        %v850 = vmul.f32 %v792, %v846
        %v851 = vmul.f32 %v791, %v846
        %v852 = vmul.f32 %v790, %v846
        %v853 = vmul.f32 %v789, %v846
        %v854 = vmul.f32 %v788, %v846
        %863 = vrot.lane.b32.xlu0 %v847, 127
        %v864 = vpop.permute.xlu0 %863
        %865 = vrot.lane.b32.xlu0 %v848, 127
        %v866 = vpop.permute.xlu0 %865
        %867 = vrot.lane.b32.xlu0 %v849, 127
        %v868 = vpop.permute.xlu0 %867
        %869 = vrot.lane.b32.xlu0 %v850, 127
        %v870 = vpop.permute.xlu0 %869
        %871 = vrot.lane.b32.xlu0 %v851, 127
        %v872 = vpop.permute.xlu0 %871
        %873 = vrot.lane.b32.xlu0 %v852, 127
        %v874 = vpop.permute.xlu0 %873
        %875 = vrot.lane.b32.xlu0 %v853, 127
        %v876 = vpop.permute.xlu0 %875
        %877 = vrot.lane.b32.xlu0 %v854, 127
        %v878 = vpop.permute.xlu0 %877
        %v887 = vadd.f32 %v837, %v864
        %v888 = vadd.f32 %v838, %v866
        %v889 = vadd.f32 %v839, %v868
        %v890 = vadd.f32 %v840, %v870
        %v891 = vadd.f32 %v841, %v872
        %v892 = vadd.f32 %v842, %v874
        %v893 = vadd.f32 %v843, %v876
        %v894 = vadd.f32 %v844, %v878
        %v895 = vsel %vm827, %v887, 0.0
        %v896 = vsel %vm828, %v888, 0.0
        %v897 = vsel %vm829, %v889, 0.0
        %v898 = vsel %vm830, %v890, 0.0
        %v899 = vsel %vm831, %v891, 0.0
        %v900 = vsel %vm832, %v892, 0.0
        %v901 = vsel %vm833, %v893, 0.0
        %v902 = vsel %vm834, %v894, 0.0
        %v903 = vadd.f32 %v770, %v895
        %v904 = vadd.f32 %v771, %v896
        %v905 = vadd.f32 %v772, %v897
        %v906 = vadd.f32 %v773, %v898
        %v907 = vadd.f32 %v774, %v899
        %v908 = vadd.f32 %v775, %v900
        %v909 = vadd.f32 %v776, %v901
        %v910 = vadd.f32 %v777, %v902
        %v911 = vrot.slane %v338, 2
        %v912 = vrot.slane %v339, 2
        %v913 = vrot.slane %v340, 2
        %v914 = vrot.slane %v341, 2
        %v915 = vrot.slane %v342, 2
        %v916 = vrot.slane %v343, 2
        %v917 = vrot.slane %v344, 2
        %v918 = vrot.slane %v345, 2
        %vm919 = vcmp.lt.s32.totalorder %v379, 6
        %v920 = vsel %vm919, %v917, %v918
        %v921 = vsel %vm919, %v916, %v917
        %v922 = vsel %vm919, %v915, %v916
        %v923 = vsel %vm919, %v914, %v915
        %v924 = vsel %vm919, %v913, %v914
        %v925 = vsel %vm919, %v912, %v913
        %v926 = vsel %vm919, %v911, %v912
        %v927 = vsel %vm919, %v918, %v911
        %v928 = vadd.s32 %v362, 2
        %v929 = vadd.s32 %v363, 2
        %v930 = vadd.s32 %v364, 2
        %v931 = vadd.s32 %v365, 2
        %v932 = vadd.s32 %v366, 2
        %v933 = vadd.s32 %v367, 2
        %v934 = vadd.s32 %v368, 2
        %v935 = vadd.s32 %v369, 2
        %vm936 = vcmp.ge.s32.totalorder %v928, 0
        %vm937 = vcmp.ge.s32.totalorder %v929, 0
        %vm938 = vcmp.ge.s32.totalorder %v930, 0
        %vm939 = vcmp.ge.s32.totalorder %v931, 0
        %vm940 = vcmp.ge.s32.totalorder %v932, 0
        %vm941 = vcmp.ge.s32.totalorder %v933, 0
        %vm942 = vcmp.ge.s32.totalorder %v934, 0
        %vm943 = vcmp.ge.s32.totalorder %v935, 0
        %vm944 = vmand %vm413, %vm936
        %vm945 = vmand %vm414, %vm937
        %vm946 = vmand %vm415, %vm938
        %vm947 = vmand %vm416, %vm939
        %vm948 = vmand %vm417, %vm940
        %vm949 = vmand %vm418, %vm941
        %vm950 = vmand %vm419, %vm942
        %vm951 = vmand %vm420, %vm943
        %vm952 = vcmp.lt.s32.totalorder %v928, 8
        %vm953 = vcmp.lt.s32.totalorder %v929, 8
        %vm954 = vcmp.lt.s32.totalorder %v930, 8
        %vm955 = vcmp.lt.s32.totalorder %v931, 8
        %vm956 = vcmp.lt.s32.totalorder %v932, 8
        %vm957 = vcmp.lt.s32.totalorder %v933, 8
        %vm958 = vcmp.lt.s32.totalorder %v934, 8
        %vm959 = vcmp.lt.s32.totalorder %v935, 8
        %vm960 = vmand %vm944, %vm952
        %vm961 = vmand %vm945, %vm953
        %vm962 = vmand %vm946, %vm954
        %vm963 = vmand %vm947, %vm955
        %vm964 = vmand %vm948, %vm956
        %vm965 = vmand %vm949, %vm957
        %vm966 = vmand %vm950, %vm958
        %vm967 = vmand %vm951, %vm959
        %s968 = sld [smem:[#allocation2 + $0x4]]
        %v969 = vstv %s968
        %v970 = vmul.f32 %v920, %v969
        %v971 = vmul.f32 %v927, %v969
        %v972 = vmul.f32 %v926, %v969
        %v973 = vmul.f32 %v925, %v969
        %v974 = vmul.f32 %v924, %v969
        %v975 = vmul.f32 %v923, %v969
        %v976 = vmul.f32 %v922, %v969
        %v977 = vmul.f32 %v921, %v969
        %s978 = sld [smem:[#allocation2 + $0x1d]]
        %v979 = vstv %s978
        %v980 = vmul.f32 %v920, %v979
        %v981 = vmul.f32 %v927, %v979
        %v982 = vmul.f32 %v926, %v979
        %v983 = vmul.f32 %v925, %v979
        %v984 = vmul.f32 %v924, %v979
        %v985 = vmul.f32 %v923, %v979
        %v986 = vmul.f32 %v922, %v979
        %v987 = vmul.f32 %v921, %v979
        %996 = vrot.lane.b32.xlu0 %v980, 127
        %v997 = vpop.permute.xlu0 %996
        %998 = vrot.lane.b32.xlu0 %v981, 127
        %v999 = vpop.permute.xlu0 %998
        %1000 = vrot.lane.b32.xlu0 %v982, 127
        %v1001 = vpop.permute.xlu0 %1000
        %1002 = vrot.lane.b32.xlu0 %v983, 127
        %v1003 = vpop.permute.xlu0 %1002
        %1004 = vrot.lane.b32.xlu0 %v984, 127
        %v1005 = vpop.permute.xlu0 %1004
        %1006 = vrot.lane.b32.xlu0 %v985, 127
        %v1007 = vpop.permute.xlu0 %1006
        %1008 = vrot.lane.b32.xlu0 %v986, 127
        %v1009 = vpop.permute.xlu0 %1008
        %1010 = vrot.lane.b32.xlu0 %v987, 127
        %v1011 = vpop.permute.xlu0 %1010
        %v1020 = vadd.f32 %v970, %v997
        %v1021 = vadd.f32 %v971, %v999
        %v1022 = vadd.f32 %v972, %v1001
        %v1023 = vadd.f32 %v973, %v1003
        %v1024 = vadd.f32 %v974, %v1005
        %v1025 = vadd.f32 %v975, %v1007
        %v1026 = vadd.f32 %v976, %v1009
        %v1027 = vadd.f32 %v977, %v1011
        %v1028 = vsel %vm960, %v1020, 0.0
        %v1029 = vsel %vm961, %v1021, 0.0
        %v1030 = vsel %vm962, %v1022, 0.0
        %v1031 = vsel %vm963, %v1023, 0.0
        %v1032 = vsel %vm964, %v1024, 0.0
        %v1033 = vsel %vm965, %v1025, 0.0
        %v1034 = vsel %vm966, %v1026, 0.0
        %v1035 = vsel %vm967, %v1027, 0.0
        %v1036 = vadd.f32 %v903, %v1028
        %v1037 = vadd.f32 %v904, %v1029
        %v1038 = vadd.f32 %v905, %v1030
        %v1039 = vadd.f32 %v906, %v1031
        %v1040 = vadd.f32 %v907, %v1032
        %v1041 = vadd.f32 %v908, %v1033
        %v1042 = vadd.f32 %v909, %v1034
        %v1043 = vadd.f32 %v910, %v1035
        %v1044 = vadd.s32 %v354, 4294967295
        %v1045 = vadd.s32 %v355, 4294967295
        %v1046 = vadd.s32 %v356, 4294967295
        %v1047 = vadd.s32 %v357, 4294967295
        %v1048 = vadd.s32 %v358, 4294967295
        %v1049 = vadd.s32 %v359, 4294967295
        %v1050 = vadd.s32 %v360, 4294967295
        %v1051 = vadd.s32 %v361, 4294967295
        %vm1052 = vcmp.ge.s32.totalorder %v1044, 0
        %vm1053 = vcmp.ge.s32.totalorder %v1045, 0
        %vm1054 = vcmp.ge.s32.totalorder %v1046, 0
        %vm1055 = vcmp.ge.s32.totalorder %v1047, 0
        %vm1056 = vcmp.ge.s32.totalorder %v1048, 0
        %vm1057 = vcmp.ge.s32.totalorder %v1049, 0
        %vm1058 = vcmp.ge.s32.totalorder %v1050, 0
        %vm1059 = vcmp.ge.s32.totalorder %v1051, 0
        %vm1060 = vcmp.lt.s32.totalorder %v1044, 8
        %vm1061 = vcmp.lt.s32.totalorder %v1045, 8
        %vm1062 = vcmp.lt.s32.totalorder %v1046, 8
        %vm1063 = vcmp.lt.s32.totalorder %v1047, 8
        %vm1064 = vcmp.lt.s32.totalorder %v1048, 8
        %vm1065 = vcmp.lt.s32.totalorder %v1049, 8
        %vm1066 = vcmp.lt.s32.totalorder %v1050, 8
        %vm1067 = vcmp.lt.s32.totalorder %v1051, 8
        %vm1068 = vmand %vm1052, %vm1060
        %vm1069 = vmand %vm1053, %vm1061
        %vm1070 = vmand %vm1054, %vm1062
        %vm1071 = vmand %vm1055, %vm1063
        %vm1072 = vmand %vm1056, %vm1064
        %vm1073 = vmand %vm1057, %vm1065
        %vm1074 = vmand %vm1058, %vm1066
        %vm1075 = vmand %vm1059, %vm1067
        %vm1076 = vmand %vm1068, %vm429
        %vm1077 = vmand %vm1069, %vm430
        %vm1078 = vmand %vm1070, %vm431
        %vm1079 = vmand %vm1071, %vm432
        %vm1080 = vmand %vm1072, %vm433
        %vm1081 = vmand %vm1073, %vm434
        %vm1082 = vmand %vm1074, %vm435
        %vm1083 = vmand %vm1075, %vm436
        %vm1084 = vmand %vm1076, %vm445
        %vm1085 = vmand %vm1077, %vm446
        %vm1086 = vmand %vm1078, %vm447
        %vm1087 = vmand %vm1079, %vm448
        %vm1088 = vmand %vm1080, %vm449
        %vm1089 = vmand %vm1081, %vm450
        %vm1090 = vmand %vm1082, %vm451
        %vm1091 = vmand %vm1083, %vm452
        %s1092 = sld [smem:[#allocation2 + $0x5]]
        %v1093 = vstv %s1092
        %v1094 = vmul.f32 %v381, %v1093
        %v1095 = vmul.f32 %v388, %v1093
        %v1096 = vmul.f32 %v387, %v1093
        %v1097 = vmul.f32 %v386, %v1093
        %v1098 = vmul.f32 %v385, %v1093
        %v1099 = vmul.f32 %v384, %v1093
        %v1100 = vmul.f32 %v383, %v1093
        %v1101 = vmul.f32 %v382, %v1093
        %s1102 = sld [smem:[#allocation2 + $0x1e]]
        %v1103 = vstv %s1102
        %v1104 = vmul.f32 %v381, %v1103
        %v1105 = vmul.f32 %v388, %v1103
        %v1106 = vmul.f32 %v387, %v1103
        %v1107 = vmul.f32 %v386, %v1103
        %v1108 = vmul.f32 %v385, %v1103
        %v1109 = vmul.f32 %v384, %v1103
        %v1110 = vmul.f32 %v383, %v1103
        %v1111 = vmul.f32 %v382, %v1103
        %1120 = vrot.lane.b32.xlu0 %v1104, 127
        %v1121 = vpop.permute.xlu0 %1120
        %1122 = vrot.lane.b32.xlu0 %v1105, 127
        %v1123 = vpop.permute.xlu0 %1122
        %1124 = vrot.lane.b32.xlu0 %v1106, 127
        %v1125 = vpop.permute.xlu0 %1124
        %1126 = vrot.lane.b32.xlu0 %v1107, 127
        %v1127 = vpop.permute.xlu0 %1126
        %1128 = vrot.lane.b32.xlu0 %v1108, 127
        %v1129 = vpop.permute.xlu0 %1128
        %1130 = vrot.lane.b32.xlu0 %v1109, 127
        %v1131 = vpop.permute.xlu0 %1130
        %1132 = vrot.lane.b32.xlu0 %v1110, 127
        %v1133 = vpop.permute.xlu0 %1132
        %1134 = vrot.lane.b32.xlu0 %v1111, 127
        %v1135 = vpop.permute.xlu0 %1134
        %v1144 = vadd.f32 %v1094, %v1121
        %v1145 = vadd.f32 %v1095, %v1123
        %v1146 = vadd.f32 %v1096, %v1125
        %v1147 = vadd.f32 %v1097, %v1127
        %v1148 = vadd.f32 %v1098, %v1129
        %v1149 = vadd.f32 %v1099, %v1131
        %v1150 = vadd.f32 %v1100, %v1133
        %v1151 = vadd.f32 %v1101, %v1135
        %v1152 = vsel %vm1084, %v1144, 0.0
        %v1153 = vsel %vm1085, %v1145, 0.0
        %v1154 = vsel %vm1086, %v1146, 0.0
        %v1155 = vsel %vm1087, %v1147, 0.0
        %v1156 = vsel %vm1088, %v1148, 0.0
        %v1157 = vsel %vm1089, %v1149, 0.0
        %v1158 = vsel %vm1090, %v1150, 0.0
        %v1159 = vsel %vm1091, %v1151, 0.0
        %v1160 = vadd.f32 %v1036, %v1152
        %v1161 = vadd.f32 %v1037, %v1153
        %v1162 = vadd.f32 %v1038, %v1154
        %v1163 = vadd.f32 %v1039, %v1155
        %v1164 = vadd.f32 %v1040, %v1156
        %v1165 = vadd.f32 %v1041, %v1157
        %v1166 = vadd.f32 %v1042, %v1158
        %v1167 = vadd.f32 %v1043, %v1159
        %vm1168 = vmand %vm1068, %vm562
        %vm1169 = vmand %vm1069, %vm563
        %vm1170 = vmand %vm1070, %vm564
        %vm1171 = vmand %vm1071, %vm565
        %vm1172 = vmand %vm1072, %vm566
        %vm1173 = vmand %vm1073, %vm567
        %vm1174 = vmand %vm1074, %vm568
        %vm1175 = vmand %vm1075, %vm569
        %vm1176 = vmand %vm1168, %vm578
        %vm1177 = vmand %vm1169, %vm579
        %vm1178 = vmand %vm1170, %vm580
        %vm1179 = vmand %vm1171, %vm581
        %vm1180 = vmand %vm1172, %vm582
        %vm1181 = vmand %vm1173, %vm583
        %vm1182 = vmand %vm1174, %vm584
        %vm1183 = vmand %vm1175, %vm585
        %s1184 = sld [smem:[#allocation2 + $0x6]]
        %v1185 = vstv %s1184
        %v1186 = vmul.f32 %v546, %v1185
        %v1187 = vmul.f32 %v553, %v1185
        %v1188 = vmul.f32 %v552, %v1185
        %v1189 = vmul.f32 %v551, %v1185
        %v1190 = vmul.f32 %v550, %v1185
        %v1191 = vmul.f32 %v549, %v1185
        %v1192 = vmul.f32 %v548, %v1185
        %v1193 = vmul.f32 %v547, %v1185
        %s1194 = sld [smem:[#allocation2 + $0x1f]]
        %v1195 = vstv %s1194
        %v1196 = vmul.f32 %v546, %v1195
        %v1197 = vmul.f32 %v553, %v1195
        %v1198 = vmul.f32 %v552, %v1195
        %v1199 = vmul.f32 %v551, %v1195
        %v1200 = vmul.f32 %v550, %v1195
        %v1201 = vmul.f32 %v549, %v1195
        %v1202 = vmul.f32 %v548, %v1195
        %v1203 = vmul.f32 %v547, %v1195
        %1212 = vrot.lane.b32.xlu0 %v1196, 127
        %v1213 = vpop.permute.xlu0 %1212
        %1214 = vrot.lane.b32.xlu0 %v1197, 127
        %v1215 = vpop.permute.xlu0 %1214
        %1216 = vrot.lane.b32.xlu0 %v1198, 127
        %v1217 = vpop.permute.xlu0 %1216
        %1218 = vrot.lane.b32.xlu0 %v1199, 127
        %v1219 = vpop.permute.xlu0 %1218
        %1220 = vrot.lane.b32.xlu0 %v1200, 127
        %v1221 = vpop.permute.xlu0 %1220
        %1222 = vrot.lane.b32.xlu0 %v1201, 127
        %v1223 = vpop.permute.xlu0 %1222
        %1224 = vrot.lane.b32.xlu0 %v1202, 127
        %v1225 = vpop.permute.xlu0 %1224
        %1226 = vrot.lane.b32.xlu0 %v1203, 127
        %v1227 = vpop.permute.xlu0 %1226
        %v1236 = vadd.f32 %v1186, %v1213
        %v1237 = vadd.f32 %v1187, %v1215
        %v1238 = vadd.f32 %v1188, %v1217
        %v1239 = vadd.f32 %v1189, %v1219
        %v1240 = vadd.f32 %v1190, %v1221
        %v1241 = vadd.f32 %v1191, %v1223
        %v1242 = vadd.f32 %v1192, %v1225
        %v1243 = vadd.f32 %v1193, %v1227
        %v1244 = vsel %vm1176, %v1236, 0.0
        %v1245 = vsel %vm1177, %v1237, 0.0
        %v1246 = vsel %vm1178, %v1238, 0.0
        %v1247 = vsel %vm1179, %v1239, 0.0
        %v1248 = vsel %vm1180, %v1240, 0.0
        %v1249 = vsel %vm1181, %v1241, 0.0
        %v1250 = vsel %vm1182, %v1242, 0.0
        %v1251 = vsel %vm1183, %v1243, 0.0
        %v1252 = vadd.f32 %v1160, %v1244
        %v1253 = vadd.f32 %v1161, %v1245
        %v1254 = vadd.f32 %v1162, %v1246
        %v1255 = vadd.f32 %v1163, %v1247
        %v1256 = vadd.f32 %v1164, %v1248
        %v1257 = vadd.f32 %v1165, %v1249
        %v1258 = vadd.f32 %v1166, %v1250
        %v1259 = vadd.f32 %v1167, %v1251
        %vm1260 = vmand %vm1068, %vm670
        %vm1261 = vmand %vm1069, %vm671
        %vm1262 = vmand %vm1070, %vm672
        %vm1263 = vmand %vm1071, %vm673
        %vm1264 = vmand %vm1072, %vm674
        %vm1265 = vmand %vm1073, %vm675
        %vm1266 = vmand %vm1074, %vm676
        %vm1267 = vmand %vm1075, %vm677
        %vm1268 = vmand %vm1260, %vm686
        %vm1269 = vmand %vm1261, %vm687
        %vm1270 = vmand %vm1262, %vm688
        %vm1271 = vmand %vm1263, %vm689
        %vm1272 = vmand %vm1264, %vm690
        %vm1273 = vmand %vm1265, %vm691
        %vm1274 = vmand %vm1266, %vm692
        %vm1275 = vmand %vm1267, %vm693
        %s1276 = sld [smem:[#allocation2 + $0x7]]
        %v1277 = vstv %s1276
        %v1278 = vmul.f32 %v345, %v1277
        %v1279 = vmul.f32 %v338, %v1277
        %v1280 = vmul.f32 %v339, %v1277
        %v1281 = vmul.f32 %v340, %v1277
        %v1282 = vmul.f32 %v341, %v1277
        %v1283 = vmul.f32 %v342, %v1277
        %v1284 = vmul.f32 %v343, %v1277
        %v1285 = vmul.f32 %v344, %v1277
        %s1286 = sld [smem:[#allocation2 + $0x20]]
        %v1287 = vstv %s1286
        %v1288 = vmul.f32 %v345, %v1287
        %v1289 = vmul.f32 %v338, %v1287
        %v1290 = vmul.f32 %v339, %v1287
        %v1291 = vmul.f32 %v340, %v1287
        %v1292 = vmul.f32 %v341, %v1287
        %v1293 = vmul.f32 %v342, %v1287
        %v1294 = vmul.f32 %v343, %v1287
        %v1295 = vmul.f32 %v344, %v1287
        %1304 = vrot.lane.b32.xlu0 %v1288, 127
        %v1305 = vpop.permute.xlu0 %1304
        %1306 = vrot.lane.b32.xlu0 %v1289, 127
        %v1307 = vpop.permute.xlu0 %1306
        %1308 = vrot.lane.b32.xlu0 %v1290, 127
        %v1309 = vpop.permute.xlu0 %1308
        %1310 = vrot.lane.b32.xlu0 %v1291, 127
        %v1311 = vpop.permute.xlu0 %1310
        %1312 = vrot.lane.b32.xlu0 %v1292, 127
        %v1313 = vpop.permute.xlu0 %1312
        %1314 = vrot.lane.b32.xlu0 %v1293, 127
        %v1315 = vpop.permute.xlu0 %1314
        %1316 = vrot.lane.b32.xlu0 %v1294, 127
        %v1317 = vpop.permute.xlu0 %1316
        %1318 = vrot.lane.b32.xlu0 %v1295, 127
        %v1319 = vpop.permute.xlu0 %1318
        %v1328 = vadd.f32 %v1278, %v1305
        %v1329 = vadd.f32 %v1279, %v1307
        %v1330 = vadd.f32 %v1280, %v1309
        %v1331 = vadd.f32 %v1281, %v1311
        %v1332 = vadd.f32 %v1282, %v1313
        %v1333 = vadd.f32 %v1283, %v1315
        %v1334 = vadd.f32 %v1284, %v1317
        %v1335 = vadd.f32 %v1285, %v1319
        %v1336 = vsel %vm1268, %v1328, 0.0
        %v1337 = vsel %vm1269, %v1329, 0.0
        %v1338 = vsel %vm1270, %v1330, 0.0
        %v1339 = vsel %vm1271, %v1331, 0.0
        %v1340 = vsel %vm1272, %v1332, 0.0
        %v1341 = vsel %vm1273, %v1333, 0.0
        %v1342 = vsel %vm1274, %v1334, 0.0
        %v1343 = vsel %vm1275, %v1335, 0.0
        %v1344 = vadd.f32 %v1252, %v1336
        %v1345 = vadd.f32 %v1253, %v1337
        %v1346 = vadd.f32 %v1254, %v1338
        %v1347 = vadd.f32 %v1255, %v1339
        %v1348 = vadd.f32 %v1256, %v1340
        %v1349 = vadd.f32 %v1257, %v1341
        %v1350 = vadd.f32 %v1258, %v1342
        %v1351 = vadd.f32 %v1259, %v1343
        %vm1352 = vmand %vm1068, %vm803
        %vm1353 = vmand %vm1069, %vm804
        %vm1354 = vmand %vm1070, %vm805
        %vm1355 = vmand %vm1071, %vm806
        %vm1356 = vmand %vm1072, %vm807
        %vm1357 = vmand %vm1073, %vm808
        %vm1358 = vmand %vm1074, %vm809
        %vm1359 = vmand %vm1075, %vm810
        %vm1360 = vmand %vm1352, %vm819
        %vm1361 = vmand %vm1353, %vm820
        %vm1362 = vmand %vm1354, %vm821
        %vm1363 = vmand %vm1355, %vm822
        %vm1364 = vmand %vm1356, %vm823
        %vm1365 = vmand %vm1357, %vm824
        %vm1366 = vmand %vm1358, %vm825
        %vm1367 = vmand %vm1359, %vm826
        %s1368 = sld [smem:[#allocation2 + $0x8]]
        %v1369 = vstv %s1368
        %v1370 = vmul.f32 %v794, %v1369
        %v1371 = vmul.f32 %v793, %v1369
        %v1372 = vmul.f32 %v792, %v1369
        %v1373 = vmul.f32 %v791, %v1369
        %v1374 = vmul.f32 %v790, %v1369
        %v1375 = vmul.f32 %v789, %v1369
        %v1376 = vmul.f32 %v788, %v1369
        %v1377 = vmul.f32 %v787, %v1369
        %s1378 = sld [smem:[#allocation2 + $0x21]]
        %v1379 = vstv %s1378
        %v1380 = vmul.f32 %v794, %v1379
        %v1381 = vmul.f32 %v793, %v1379
        %v1382 = vmul.f32 %v792, %v1379
        %v1383 = vmul.f32 %v791, %v1379
        %v1384 = vmul.f32 %v790, %v1379
        %v1385 = vmul.f32 %v789, %v1379
        %v1386 = vmul.f32 %v788, %v1379
        %v1387 = vmul.f32 %v787, %v1379
        %1396 = vrot.lane.b32.xlu0 %v1380, 127
        %v1397 = vpop.permute.xlu0 %1396
        %1398 = vrot.lane.b32.xlu0 %v1381, 127
        %v1399 = vpop.permute.xlu0 %1398
        %1400 = vrot.lane.b32.xlu0 %v1382, 127
        %v1401 = vpop.permute.xlu0 %1400
        %1402 = vrot.lane.b32.xlu0 %v1383, 127
        %v1403 = vpop.permute.xlu0 %1402
        %1404 = vrot.lane.b32.xlu0 %v1384, 127
        %v1405 = vpop.permute.xlu0 %1404
        %1406 = vrot.lane.b32.xlu0 %v1385, 127
        %v1407 = vpop.permute.xlu0 %1406
        %1408 = vrot.lane.b32.xlu0 %v1386, 127
        %v1409 = vpop.permute.xlu0 %1408
        %1410 = vrot.lane.b32.xlu0 %v1387, 127
        %v1411 = vpop.permute.xlu0 %1410
        %v1420 = vadd.f32 %v1370, %v1397
        %v1421 = vadd.f32 %v1371, %v1399
        %v1422 = vadd.f32 %v1372, %v1401
        %v1423 = vadd.f32 %v1373, %v1403
        %v1424 = vadd.f32 %v1374, %v1405
        %v1425 = vadd.f32 %v1375, %v1407
        %v1426 = vadd.f32 %v1376, %v1409
        %v1427 = vadd.f32 %v1377, %v1411
        %v1428 = vsel %vm1360, %v1420, 0.0
        %v1429 = vsel %vm1361, %v1421, 0.0
        %v1430 = vsel %vm1362, %v1422, 0.0
        %v1431 = vsel %vm1363, %v1423, 0.0
        %v1432 = vsel %vm1364, %v1424, 0.0
        %v1433 = vsel %vm1365, %v1425, 0.0
        %v1434 = vsel %vm1366, %v1426, 0.0
        %v1435 = vsel %vm1367, %v1427, 0.0
        %v1436 = vadd.f32 %v1344, %v1428
        %v1437 = vadd.f32 %v1345, %v1429
        %v1438 = vadd.f32 %v1346, %v1430
        %v1439 = vadd.f32 %v1347, %v1431
        %v1440 = vadd.f32 %v1348, %v1432
        %v1441 = vadd.f32 %v1349, %v1433
        %v1442 = vadd.f32 %v1350, %v1434
        %v1443 = vadd.f32 %v1351, %v1435
        %vm1444 = vmand %vm1068, %vm936
        %vm1445 = vmand %vm1069, %vm937
        %vm1446 = vmand %vm1070, %vm938
        %vm1447 = vmand %vm1071, %vm939
        %vm1448 = vmand %vm1072, %vm940
        %vm1449 = vmand %vm1073, %vm941
        %vm1450 = vmand %vm1074, %vm942
        %vm1451 = vmand %vm1075, %vm943
        %vm1452 = vmand %vm1444, %vm952
        %vm1453 = vmand %vm1445, %vm953
        %vm1454 = vmand %vm1446, %vm954
        %vm1455 = vmand %vm1447, %vm955
        %vm1456 = vmand %vm1448, %vm956
        %vm1457 = vmand %vm1449, %vm957
        %vm1458 = vmand %vm1450, %vm958
        %vm1459 = vmand %vm1451, %vm959
        %s1460 = sld [smem:[#allocation2 + $0x9]]
        %v1461 = vstv %s1460
        %v1462 = vmul.f32 %v927, %v1461
        %v1463 = vmul.f32 %v926, %v1461
        %v1464 = vmul.f32 %v925, %v1461
        %v1465 = vmul.f32 %v924, %v1461
        %v1466 = vmul.f32 %v923, %v1461
        %v1467 = vmul.f32 %v922, %v1461
        %v1468 = vmul.f32 %v921, %v1461
        %v1469 = vmul.f32 %v920, %v1461
        %s1470 = sld [smem:[#allocation2 + $0x22]]
        %v1471 = vstv %s1470
        %v1472 = vmul.f32 %v927, %v1471
        %v1473 = vmul.f32 %v926, %v1471
        %v1474 = vmul.f32 %v925, %v1471
        %v1475 = vmul.f32 %v924, %v1471
        %v1476 = vmul.f32 %v923, %v1471
        %v1477 = vmul.f32 %v922, %v1471
        %v1478 = vmul.f32 %v921, %v1471
        %v1479 = vmul.f32 %v920, %v1471
        %1488 = vrot.lane.b32.xlu0 %v1472, 127
        %v1489 = vpop.permute.xlu0 %1488
        %1490 = vrot.lane.b32.xlu0 %v1473, 127
        %v1491 = vpop.permute.xlu0 %1490
        %1492 = vrot.lane.b32.xlu0 %v1474, 127
        %v1493 = vpop.permute.xlu0 %1492
        %1494 = vrot.lane.b32.xlu0 %v1475, 127
        %v1495 = vpop.permute.xlu0 %1494
        %1496 = vrot.lane.b32.xlu0 %v1476, 127
        %v1497 = vpop.permute.xlu0 %1496
        %1498 = vrot.lane.b32.xlu0 %v1477, 127
        %v1499 = vpop.permute.xlu0 %1498
        %1500 = vrot.lane.b32.xlu0 %v1478, 127
        %v1501 = vpop.permute.xlu0 %1500
        %1502 = vrot.lane.b32.xlu0 %v1479, 127
        %v1503 = vpop.permute.xlu0 %1502
        %v1512 = vadd.f32 %v1462, %v1489
        %v1513 = vadd.f32 %v1463, %v1491
        %v1514 = vadd.f32 %v1464, %v1493
        %v1515 = vadd.f32 %v1465, %v1495
        %v1516 = vadd.f32 %v1466, %v1497
        %v1517 = vadd.f32 %v1467, %v1499
        %v1518 = vadd.f32 %v1468, %v1501
        %v1519 = vadd.f32 %v1469, %v1503
        %v1520 = vsel %vm1452, %v1512, 0.0
        %v1521 = vsel %vm1453, %v1513, 0.0
        %v1522 = vsel %vm1454, %v1514, 0.0
        %v1523 = vsel %vm1455, %v1515, 0.0
        %v1524 = vsel %vm1456, %v1516, 0.0
        %v1525 = vsel %vm1457, %v1517, 0.0
        %v1526 = vsel %vm1458, %v1518, 0.0
        %v1527 = vsel %vm1459, %v1519, 0.0
        %v1528 = vadd.f32 %v1436, %v1520
        %v1529 = vadd.f32 %v1437, %v1521
        %v1530 = vadd.f32 %v1438, %v1522
        %v1531 = vadd.f32 %v1439, %v1523
        %v1532 = vadd.f32 %v1440, %v1524
        %v1533 = vadd.f32 %v1441, %v1525
        %v1534 = vadd.f32 %v1442, %v1526
        %v1535 = vadd.f32 %v1443, %v1527
        %vm1536 = vcmp.ge.s32.totalorder %v354, 0
        %vm1537 = vcmp.ge.s32.totalorder %v355, 0
        %vm1538 = vcmp.ge.s32.totalorder %v356, 0
        %vm1539 = vcmp.ge.s32.totalorder %v357, 0
        %vm1540 = vcmp.ge.s32.totalorder %v358, 0
        %vm1541 = vcmp.ge.s32.totalorder %v359, 0
        %vm1542 = vcmp.ge.s32.totalorder %v360, 0
        %vm1543 = vcmp.ge.s32.totalorder %v361, 0
        %vm1544 = vcmp.lt.s32.totalorder %v354, 8
        %vm1545 = vcmp.lt.s32.totalorder %v355, 8
        %vm1546 = vcmp.lt.s32.totalorder %v356, 8
        %vm1547 = vcmp.lt.s32.totalorder %v357, 8
        %vm1548 = vcmp.lt.s32.totalorder %v358, 8
        %vm1549 = vcmp.lt.s32.totalorder %v359, 8
        %vm1550 = vcmp.lt.s32.totalorder %v360, 8
        %vm1551 = vcmp.lt.s32.totalorder %v361, 8
        %vm1552 = vmand %vm1536, %vm1544
        %vm1553 = vmand %vm1537, %vm1545
        %vm1554 = vmand %vm1538, %vm1546
        %vm1555 = vmand %vm1539, %vm1547
        %vm1556 = vmand %vm1540, %vm1548
        %vm1557 = vmand %vm1541, %vm1549
        %vm1558 = vmand %vm1542, %vm1550
        %vm1559 = vmand %vm1543, %vm1551
        %vm1560 = vmand %vm1552, %vm429
        %vm1561 = vmand %vm1553, %vm430
        %vm1562 = vmand %vm1554, %vm431
        %vm1563 = vmand %vm1555, %vm432
        %vm1564 = vmand %vm1556, %vm433
        %vm1565 = vmand %vm1557, %vm434
        %vm1566 = vmand %vm1558, %vm435
        %vm1567 = vmand %vm1559, %vm436
        %vm1568 = vmand %vm1560, %vm445
        %vm1569 = vmand %vm1561, %vm446
        %vm1570 = vmand %vm1562, %vm447
        %vm1571 = vmand %vm1563, %vm448
        %vm1572 = vmand %vm1564, %vm449
        %vm1573 = vmand %vm1565, %vm450
        %vm1574 = vmand %vm1566, %vm451
        %vm1575 = vmand %vm1567, %vm452
        %s1576 = sld [smem:[#allocation2 + $0xa]]
        %v1577 = vstv %s1576
        %v1578 = vmul.f32 %v388, %v1577
        %v1579 = vmul.f32 %v387, %v1577
        %v1580 = vmul.f32 %v386, %v1577
        %v1581 = vmul.f32 %v385, %v1577
        %v1582 = vmul.f32 %v384, %v1577
        %v1583 = vmul.f32 %v383, %v1577
        %v1584 = vmul.f32 %v382, %v1577
        %v1585 = vmul.f32 %v381, %v1577
        %s1586 = sld [smem:[#allocation2 + $0x23]]
        %v1587 = vstv %s1586
        %v1588 = vmul.f32 %v388, %v1587
        %v1589 = vmul.f32 %v387, %v1587
        %v1590 = vmul.f32 %v386, %v1587
        %v1591 = vmul.f32 %v385, %v1587
        %v1592 = vmul.f32 %v384, %v1587
        %v1593 = vmul.f32 %v383, %v1587
        %v1594 = vmul.f32 %v382, %v1587
        %v1595 = vmul.f32 %v381, %v1587
        %1604 = vrot.lane.b32.xlu0 %v1588, 127
        %v1605 = vpop.permute.xlu0 %1604
        %1606 = vrot.lane.b32.xlu0 %v1589, 127
        %v1607 = vpop.permute.xlu0 %1606
        %1608 = vrot.lane.b32.xlu0 %v1590, 127
        %v1609 = vpop.permute.xlu0 %1608
        %1610 = vrot.lane.b32.xlu0 %v1591, 127
        %v1611 = vpop.permute.xlu0 %1610
        %1612 = vrot.lane.b32.xlu0 %v1592, 127
        %v1613 = vpop.permute.xlu0 %1612
        %1614 = vrot.lane.b32.xlu0 %v1593, 127
        %v1615 = vpop.permute.xlu0 %1614
        %1616 = vrot.lane.b32.xlu0 %v1594, 127
        %v1617 = vpop.permute.xlu0 %1616
        %1618 = vrot.lane.b32.xlu0 %v1595, 127
        %v1619 = vpop.permute.xlu0 %1618
        %v1628 = vadd.f32 %v1578, %v1605
        %v1629 = vadd.f32 %v1579, %v1607
        %v1630 = vadd.f32 %v1580, %v1609
        %v1631 = vadd.f32 %v1581, %v1611
        %v1632 = vadd.f32 %v1582, %v1613
        %v1633 = vadd.f32 %v1583, %v1615
        %v1634 = vadd.f32 %v1584, %v1617
        %v1635 = vadd.f32 %v1585, %v1619
        %v1636 = vsel %vm1568, %v1628, 0.0
        %v1637 = vsel %vm1569, %v1629, 0.0
        %v1638 = vsel %vm1570, %v1630, 0.0
        %v1639 = vsel %vm1571, %v1631, 0.0
        %v1640 = vsel %vm1572, %v1632, 0.0
        %v1641 = vsel %vm1573, %v1633, 0.0
        %v1642 = vsel %vm1574, %v1634, 0.0
        %v1643 = vsel %vm1575, %v1635, 0.0
        %v1644 = vadd.f32 %v1528, %v1636
        %v1645 = vadd.f32 %v1529, %v1637
        %v1646 = vadd.f32 %v1530, %v1638
        %v1647 = vadd.f32 %v1531, %v1639
        %v1648 = vadd.f32 %v1532, %v1640
        %v1649 = vadd.f32 %v1533, %v1641
        %v1650 = vadd.f32 %v1534, %v1642
        %v1651 = vadd.f32 %v1535, %v1643
        %vm1652 = vmand %vm1552, %vm562
        %vm1653 = vmand %vm1553, %vm563
        %vm1654 = vmand %vm1554, %vm564
        %vm1655 = vmand %vm1555, %vm565
        %vm1656 = vmand %vm1556, %vm566
        %vm1657 = vmand %vm1557, %vm567
        %vm1658 = vmand %vm1558, %vm568
        %vm1659 = vmand %vm1559, %vm569
        %vm1660 = vmand %vm1652, %vm578
        %vm1661 = vmand %vm1653, %vm579
        %vm1662 = vmand %vm1654, %vm580
        %vm1663 = vmand %vm1655, %vm581
        %vm1664 = vmand %vm1656, %vm582
        %vm1665 = vmand %vm1657, %vm583
        %vm1666 = vmand %vm1658, %vm584
        %vm1667 = vmand %vm1659, %vm585
        %s1668 = sld [smem:[#allocation2 + $0xb]]
        %v1669 = vstv %s1668
        %v1670 = vmul.f32 %v553, %v1669
        %v1671 = vmul.f32 %v552, %v1669
        %v1672 = vmul.f32 %v551, %v1669
        %v1673 = vmul.f32 %v550, %v1669
        %v1674 = vmul.f32 %v549, %v1669
        %v1675 = vmul.f32 %v548, %v1669
        %v1676 = vmul.f32 %v547, %v1669
        %v1677 = vmul.f32 %v546, %v1669
        %s1678 = sld [smem:[#allocation2 + $0x24]]
        %v1679 = vstv %s1678
        %v1680 = vmul.f32 %v553, %v1679
        %v1681 = vmul.f32 %v552, %v1679
        %v1682 = vmul.f32 %v551, %v1679
        %v1683 = vmul.f32 %v550, %v1679
        %v1684 = vmul.f32 %v549, %v1679
        %v1685 = vmul.f32 %v548, %v1679
        %v1686 = vmul.f32 %v547, %v1679
        %v1687 = vmul.f32 %v546, %v1679
        %1696 = vrot.lane.b32.xlu0 %v1680, 127
        %v1697 = vpop.permute.xlu0 %1696
        %1698 = vrot.lane.b32.xlu0 %v1681, 127
        %v1699 = vpop.permute.xlu0 %1698
        %1700 = vrot.lane.b32.xlu0 %v1682, 127
        %v1701 = vpop.permute.xlu0 %1700
        %1702 = vrot.lane.b32.xlu0 %v1683, 127
        %v1703 = vpop.permute.xlu0 %1702
        %1704 = vrot.lane.b32.xlu0 %v1684, 127
        %v1705 = vpop.permute.xlu0 %1704
        %1706 = vrot.lane.b32.xlu0 %v1685, 127
        %v1707 = vpop.permute.xlu0 %1706
        %1708 = vrot.lane.b32.xlu0 %v1686, 127
        %v1709 = vpop.permute.xlu0 %1708
        %1710 = vrot.lane.b32.xlu0 %v1687, 127
        %v1711 = vpop.permute.xlu0 %1710
        %v1720 = vadd.f32 %v1670, %v1697
        %v1721 = vadd.f32 %v1671, %v1699
        %v1722 = vadd.f32 %v1672, %v1701
        %v1723 = vadd.f32 %v1673, %v1703
        %v1724 = vadd.f32 %v1674, %v1705
        %v1725 = vadd.f32 %v1675, %v1707
        %v1726 = vadd.f32 %v1676, %v1709
        %v1727 = vadd.f32 %v1677, %v1711
        %v1728 = vsel %vm1660, %v1720, 0.0
        %v1729 = vsel %vm1661, %v1721, 0.0
        %v1730 = vsel %vm1662, %v1722, 0.0
        %v1731 = vsel %vm1663, %v1723, 0.0
        %v1732 = vsel %vm1664, %v1724, 0.0
        %v1733 = vsel %vm1665, %v1725, 0.0
        %v1734 = vsel %vm1666, %v1726, 0.0
        %v1735 = vsel %vm1667, %v1727, 0.0
        %v1736 = vadd.f32 %v1644, %v1728
        %v1737 = vadd.f32 %v1645, %v1729
        %v1738 = vadd.f32 %v1646, %v1730
        %v1739 = vadd.f32 %v1647, %v1731
        %v1740 = vadd.f32 %v1648, %v1732
        %v1741 = vadd.f32 %v1649, %v1733
        %v1742 = vadd.f32 %v1650, %v1734
        %v1743 = vadd.f32 %v1651, %v1735
        %vm1744 = vmand %vm1552, %vm670
        %vm1745 = vmand %vm1553, %vm671
        %vm1746 = vmand %vm1554, %vm672
        %vm1747 = vmand %vm1555, %vm673
        %vm1748 = vmand %vm1556, %vm674
        %vm1749 = vmand %vm1557, %vm675
        %vm1750 = vmand %vm1558, %vm676
        %vm1751 = vmand %vm1559, %vm677
        %vm1752 = vmand %vm1744, %vm686
        %vm1753 = vmand %vm1745, %vm687
        %vm1754 = vmand %vm1746, %vm688
        %vm1755 = vmand %vm1747, %vm689
        %vm1756 = vmand %vm1748, %vm690
        %vm1757 = vmand %vm1749, %vm691
        %vm1758 = vmand %vm1750, %vm692
        %vm1759 = vmand %vm1751, %vm693
        %s1760 = sld [smem:[#allocation2 + $0xc]]
        %v1761 = vstv %s1760
        %v1762 = vmul.f32 %v338, %v1761
        %v1763 = vmul.f32 %v339, %v1761
        %v1764 = vmul.f32 %v340, %v1761
        %v1765 = vmul.f32 %v341, %v1761
        %v1766 = vmul.f32 %v342, %v1761
        %v1767 = vmul.f32 %v343, %v1761
        %v1768 = vmul.f32 %v344, %v1761
        %v1769 = vmul.f32 %v345, %v1761
        %s1770 = sld [smem:[#allocation2 + $0x25]]
        %v1771 = vstv %s1770
        %v1772 = vmul.f32 %v338, %v1771
        %v1773 = vmul.f32 %v339, %v1771
        %v1774 = vmul.f32 %v340, %v1771
        %v1775 = vmul.f32 %v341, %v1771
        %v1776 = vmul.f32 %v342, %v1771
        %v1777 = vmul.f32 %v343, %v1771
        %v1778 = vmul.f32 %v344, %v1771
        %v1779 = vmul.f32 %v345, %v1771
        %1788 = vrot.lane.b32.xlu0 %v1772, 127
        %v1789 = vpop.permute.xlu0 %1788
        %1790 = vrot.lane.b32.xlu0 %v1773, 127
        %v1791 = vpop.permute.xlu0 %1790
        %1792 = vrot.lane.b32.xlu0 %v1774, 127
        %v1793 = vpop.permute.xlu0 %1792
        %1794 = vrot.lane.b32.xlu0 %v1775, 127
        %v1795 = vpop.permute.xlu0 %1794
        %1796 = vrot.lane.b32.xlu0 %v1776, 127
        %v1797 = vpop.permute.xlu0 %1796
        %1798 = vrot.lane.b32.xlu0 %v1777, 127
        %v1799 = vpop.permute.xlu0 %1798
        %1800 = vrot.lane.b32.xlu0 %v1778, 127
        %v1801 = vpop.permute.xlu0 %1800
        %1802 = vrot.lane.b32.xlu0 %v1779, 127
        %v1803 = vpop.permute.xlu0 %1802
        %v1812 = vadd.f32 %v1762, %v1789
        %v1813 = vadd.f32 %v1763, %v1791
        %v1814 = vadd.f32 %v1764, %v1793
        %v1815 = vadd.f32 %v1765, %v1795
        %v1816 = vadd.f32 %v1766, %v1797
        %v1817 = vadd.f32 %v1767, %v1799
        %v1818 = vadd.f32 %v1768, %v1801
        %v1819 = vadd.f32 %v1769, %v1803
        %v1820 = vsel %vm1752, %v1812, 0.0
        %v1821 = vsel %vm1753, %v1813, 0.0
        %v1822 = vsel %vm1754, %v1814, 0.0
        %v1823 = vsel %vm1755, %v1815, 0.0
        %v1824 = vsel %vm1756, %v1816, 0.0
        %v1825 = vsel %vm1757, %v1817, 0.0
        %v1826 = vsel %vm1758, %v1818, 0.0
        %v1827 = vsel %vm1759, %v1819, 0.0
        %v1828 = vadd.f32 %v1736, %v1820
        %v1829 = vadd.f32 %v1737, %v1821
        %v1830 = vadd.f32 %v1738, %v1822
        %v1831 = vadd.f32 %v1739, %v1823
        %v1832 = vadd.f32 %v1740, %v1824
        %v1833 = vadd.f32 %v1741, %v1825
        %v1834 = vadd.f32 %v1742, %v1826
        %v1835 = vadd.f32 %v1743, %v1827
        %vm1836 = vmand %vm1552, %vm803
        %vm1837 = vmand %vm1553, %vm804
        %vm1838 = vmand %vm1554, %vm805
        %vm1839 = vmand %vm1555, %vm806
        %vm1840 = vmand %vm1556, %vm807
        %vm1841 = vmand %vm1557, %vm808
        %vm1842 = vmand %vm1558, %vm809
        %vm1843 = vmand %vm1559, %vm810
        %vm1844 = vmand %vm1836, %vm819
        %vm1845 = vmand %vm1837, %vm820
        %vm1846 = vmand %vm1838, %vm821
        %vm1847 = vmand %vm1839, %vm822
        %vm1848 = vmand %vm1840, %vm823
        %vm1849 = vmand %vm1841, %vm824
        %vm1850 = vmand %vm1842, %vm825
        %vm1851 = vmand %vm1843, %vm826
        %s1852 = sld [smem:[#allocation2 + $0xd]]
        %v1853 = vstv %s1852
        %v1854 = vmul.f32 %v793, %v1853
        %v1855 = vmul.f32 %v792, %v1853
        %v1856 = vmul.f32 %v791, %v1853
        %v1857 = vmul.f32 %v790, %v1853
        %v1858 = vmul.f32 %v789, %v1853
        %v1859 = vmul.f32 %v788, %v1853
        %v1860 = vmul.f32 %v787, %v1853
        %v1861 = vmul.f32 %v794, %v1853
        %s1862 = sld [smem:[#allocation2 + $0x26]]
        %v1863 = vstv %s1862
        %v1864 = vmul.f32 %v793, %v1863
        %v1865 = vmul.f32 %v792, %v1863
        %v1866 = vmul.f32 %v791, %v1863
        %v1867 = vmul.f32 %v790, %v1863
        %v1868 = vmul.f32 %v789, %v1863
        %v1869 = vmul.f32 %v788, %v1863
        %v1870 = vmul.f32 %v787, %v1863
        %v1871 = vmul.f32 %v794, %v1863
        %1880 = vrot.lane.b32.xlu0 %v1864, 127
        %v1881 = vpop.permute.xlu0 %1880
        %1882 = vrot.lane.b32.xlu0 %v1865, 127
        %v1883 = vpop.permute.xlu0 %1882
        %1884 = vrot.lane.b32.xlu0 %v1866, 127
        %v1885 = vpop.permute.xlu0 %1884
        %1886 = vrot.lane.b32.xlu0 %v1867, 127
        %v1887 = vpop.permute.xlu0 %1886
        %1888 = vrot.lane.b32.xlu0 %v1868, 127
        %v1889 = vpop.permute.xlu0 %1888
        %1890 = vrot.lane.b32.xlu0 %v1869, 127
        %v1891 = vpop.permute.xlu0 %1890
        %1892 = vrot.lane.b32.xlu0 %v1870, 127
        %v1893 = vpop.permute.xlu0 %1892
        %1894 = vrot.lane.b32.xlu0 %v1871, 127
        %v1895 = vpop.permute.xlu0 %1894
        %v1904 = vadd.f32 %v1854, %v1881
        %v1905 = vadd.f32 %v1855, %v1883
        %v1906 = vadd.f32 %v1856, %v1885
        %v1907 = vadd.f32 %v1857, %v1887
        %v1908 = vadd.f32 %v1858, %v1889
        %v1909 = vadd.f32 %v1859, %v1891
        %v1910 = vadd.f32 %v1860, %v1893
        %v1911 = vadd.f32 %v1861, %v1895
        %v1912 = vsel %vm1844, %v1904, 0.0
        %v1913 = vsel %vm1845, %v1905, 0.0
        %v1914 = vsel %vm1846, %v1906, 0.0
        %v1915 = vsel %vm1847, %v1907, 0.0
        %v1916 = vsel %vm1848, %v1908, 0.0
        %v1917 = vsel %vm1849, %v1909, 0.0
        %v1918 = vsel %vm1850, %v1910, 0.0
        %v1919 = vsel %vm1851, %v1911, 0.0
        %v1920 = vadd.f32 %v1828, %v1912
        %v1921 = vadd.f32 %v1829, %v1913
        %v1922 = vadd.f32 %v1830, %v1914
        %v1923 = vadd.f32 %v1831, %v1915
        %v1924 = vadd.f32 %v1832, %v1916
        %v1925 = vadd.f32 %v1833, %v1917
        %v1926 = vadd.f32 %v1834, %v1918
        %v1927 = vadd.f32 %v1835, %v1919
        %vm1928 = vmand %vm1552, %vm936
        %vm1929 = vmand %vm1553, %vm937
        %vm1930 = vmand %vm1554, %vm938
        %vm1931 = vmand %vm1555, %vm939
        %vm1932 = vmand %vm1556, %vm940
        %vm1933 = vmand %vm1557, %vm941
        %vm1934 = vmand %vm1558, %vm942
        %vm1935 = vmand %vm1559, %vm943
        %vm1936 = vmand %vm1928, %vm952
        %vm1937 = vmand %vm1929, %vm953
        %vm1938 = vmand %vm1930, %vm954
        %vm1939 = vmand %vm1931, %vm955
        %vm1940 = vmand %vm1932, %vm956
        %vm1941 = vmand %vm1933, %vm957
        %vm1942 = vmand %vm1934, %vm958
        %vm1943 = vmand %vm1935, %vm959
        %s1944 = sld [smem:[#allocation2 + $0xe]]
        %v1945 = vstv %s1944
        %v1946 = vmul.f32 %v926, %v1945
        %v1947 = vmul.f32 %v925, %v1945
        %v1948 = vmul.f32 %v924, %v1945
        %v1949 = vmul.f32 %v923, %v1945
        %v1950 = vmul.f32 %v922, %v1945
        %v1951 = vmul.f32 %v921, %v1945
        %v1952 = vmul.f32 %v920, %v1945
        %v1953 = vmul.f32 %v927, %v1945
        %s1954 = sld [smem:[#allocation2 + $0x27]]
        %v1955 = vstv %s1954
        %v1956 = vmul.f32 %v926, %v1955
        %v1957 = vmul.f32 %v925, %v1955
        %v1958 = vmul.f32 %v924, %v1955
        %v1959 = vmul.f32 %v923, %v1955
        %v1960 = vmul.f32 %v922, %v1955
        %v1961 = vmul.f32 %v921, %v1955
        %v1962 = vmul.f32 %v920, %v1955
        %v1963 = vmul.f32 %v927, %v1955
        %1972 = vrot.lane.b32.xlu0 %v1956, 127
        %v1973 = vpop.permute.xlu0 %1972
        %1974 = vrot.lane.b32.xlu0 %v1957, 127
        %v1975 = vpop.permute.xlu0 %1974
        %1976 = vrot.lane.b32.xlu0 %v1958, 127
        %v1977 = vpop.permute.xlu0 %1976
        %1978 = vrot.lane.b32.xlu0 %v1959, 127
        %v1979 = vpop.permute.xlu0 %1978
        %1980 = vrot.lane.b32.xlu0 %v1960, 127
        %v1981 = vpop.permute.xlu0 %1980
        %1982 = vrot.lane.b32.xlu0 %v1961, 127
        %v1983 = vpop.permute.xlu0 %1982
        %1984 = vrot.lane.b32.xlu0 %v1962, 127
        %v1985 = vpop.permute.xlu0 %1984
        %1986 = vrot.lane.b32.xlu0 %v1963, 127
        %v1987 = vpop.permute.xlu0 %1986
        %v1996 = vadd.f32 %v1946, %v1973
        %v1997 = vadd.f32 %v1947, %v1975
        %v1998 = vadd.f32 %v1948, %v1977
        %v1999 = vadd.f32 %v1949, %v1979
        %v2000 = vadd.f32 %v1950, %v1981
        %v2001 = vadd.f32 %v1951, %v1983
        %v2002 = vadd.f32 %v1952, %v1985
        %v2003 = vadd.f32 %v1953, %v1987
        %v2004 = vsel %vm1936, %v1996, 0.0
        %v2005 = vsel %vm1937, %v1997, 0.0
        %v2006 = vsel %vm1938, %v1998, 0.0
        %v2007 = vsel %vm1939, %v1999, 0.0
        %v2008 = vsel %vm1940, %v2000, 0.0
        %v2009 = vsel %vm1941, %v2001, 0.0
        %v2010 = vsel %vm1942, %v2002, 0.0
        %v2011 = vsel %vm1943, %v2003, 0.0
        %v2012 = vadd.f32 %v1920, %v2004
        %v2013 = vadd.f32 %v1921, %v2005
        %v2014 = vadd.f32 %v1922, %v2006
        %v2015 = vadd.f32 %v1923, %v2007
        %v2016 = vadd.f32 %v1924, %v2008
        %v2017 = vadd.f32 %v1925, %v2009
        %v2018 = vadd.f32 %v1926, %v2010
        %v2019 = vadd.f32 %v1927, %v2011
        %v2020 = vadd.s32 %v354, 1
        %v2021 = vadd.s32 %v355, 1
        %v2022 = vadd.s32 %v356, 1
        %v2023 = vadd.s32 %v357, 1
        %v2024 = vadd.s32 %v358, 1
        %v2025 = vadd.s32 %v359, 1
        %v2026 = vadd.s32 %v360, 1
        %v2027 = vadd.s32 %v361, 1
        %vm2028 = vcmp.ge.s32.totalorder %v2020, 0
        %vm2029 = vcmp.ge.s32.totalorder %v2021, 0
        %vm2030 = vcmp.ge.s32.totalorder %v2022, 0
        %vm2031 = vcmp.ge.s32.totalorder %v2023, 0
        %vm2032 = vcmp.ge.s32.totalorder %v2024, 0
        %vm2033 = vcmp.ge.s32.totalorder %v2025, 0
        %vm2034 = vcmp.ge.s32.totalorder %v2026, 0
        %vm2035 = vcmp.ge.s32.totalorder %v2027, 0
        %vm2036 = vcmp.lt.s32.totalorder %v2020, 8
        %vm2037 = vcmp.lt.s32.totalorder %v2021, 8
        %vm2038 = vcmp.lt.s32.totalorder %v2022, 8
        %vm2039 = vcmp.lt.s32.totalorder %v2023, 8
        %vm2040 = vcmp.lt.s32.totalorder %v2024, 8
        %vm2041 = vcmp.lt.s32.totalorder %v2025, 8
        %vm2042 = vcmp.lt.s32.totalorder %v2026, 8
        %vm2043 = vcmp.lt.s32.totalorder %v2027, 8
        %vm2044 = vmand %vm2028, %vm2036
        %vm2045 = vmand %vm2029, %vm2037
        %vm2046 = vmand %vm2030, %vm2038
        %vm2047 = vmand %vm2031, %vm2039
        %vm2048 = vmand %vm2032, %vm2040
        %vm2049 = vmand %vm2033, %vm2041
        %vm2050 = vmand %vm2034, %vm2042
        %vm2051 = vmand %vm2035, %vm2043
        %vm2052 = vmand %vm2044, %vm429
        %vm2053 = vmand %vm2045, %vm430
        %vm2054 = vmand %vm2046, %vm431
        %vm2055 = vmand %vm2047, %vm432
        %vm2056 = vmand %vm2048, %vm433
        %vm2057 = vmand %vm2049, %vm434
        %vm2058 = vmand %vm2050, %vm435
        %vm2059 = vmand %vm2051, %vm436
        %vm2060 = vmand %vm2052, %vm445
        %vm2061 = vmand %vm2053, %vm446
        %vm2062 = vmand %vm2054, %vm447
        %vm2063 = vmand %vm2055, %vm448
        %vm2064 = vmand %vm2056, %vm449
        %vm2065 = vmand %vm2057, %vm450
        %vm2066 = vmand %vm2058, %vm451
        %vm2067 = vmand %vm2059, %vm452
        %s2068 = sld [smem:[#allocation2 + $0xf]]
        %v2069 = vstv %s2068
        %v2070 = vmul.f32 %v387, %v2069
        %v2071 = vmul.f32 %v386, %v2069
        %v2072 = vmul.f32 %v385, %v2069
        %v2073 = vmul.f32 %v384, %v2069
        %v2074 = vmul.f32 %v383, %v2069
        %v2075 = vmul.f32 %v382, %v2069
        %v2076 = vmul.f32 %v381, %v2069
        %v2077 = vmul.f32 %v388, %v2069
        %s2078 = sld [smem:[#allocation2 + $0x28]]
        %v2079 = vstv %s2078
        %v2080 = vmul.f32 %v387, %v2079
        %v2081 = vmul.f32 %v386, %v2079
        %v2082 = vmul.f32 %v385, %v2079
        %v2083 = vmul.f32 %v384, %v2079
        %v2084 = vmul.f32 %v383, %v2079
        %v2085 = vmul.f32 %v382, %v2079
        %v2086 = vmul.f32 %v381, %v2079
        %v2087 = vmul.f32 %v388, %v2079
        %2096 = vrot.lane.b32.xlu0 %v2080, 127
        %v2097 = vpop.permute.xlu0 %2096
        %2098 = vrot.lane.b32.xlu0 %v2081, 127
        %v2099 = vpop.permute.xlu0 %2098
        %2100 = vrot.lane.b32.xlu0 %v2082, 127
        %v2101 = vpop.permute.xlu0 %2100
        %2102 = vrot.lane.b32.xlu0 %v2083, 127
        %v2103 = vpop.permute.xlu0 %2102
        %2104 = vrot.lane.b32.xlu0 %v2084, 127
        %v2105 = vpop.permute.xlu0 %2104
        %2106 = vrot.lane.b32.xlu0 %v2085, 127
        %v2107 = vpop.permute.xlu0 %2106
        %2108 = vrot.lane.b32.xlu0 %v2086, 127
        %v2109 = vpop.permute.xlu0 %2108
        %2110 = vrot.lane.b32.xlu0 %v2087, 127
        %v2111 = vpop.permute.xlu0 %2110
        %v2120 = vadd.f32 %v2070, %v2097
        %v2121 = vadd.f32 %v2071, %v2099
        %v2122 = vadd.f32 %v2072, %v2101
        %v2123 = vadd.f32 %v2073, %v2103
        %v2124 = vadd.f32 %v2074, %v2105
        %v2125 = vadd.f32 %v2075, %v2107
        %v2126 = vadd.f32 %v2076, %v2109
        %v2127 = vadd.f32 %v2077, %v2111
        %v2128 = vsel %vm2060, %v2120, 0.0
        %v2129 = vsel %vm2061, %v2121, 0.0
        %v2130 = vsel %vm2062, %v2122, 0.0
        %v2131 = vsel %vm2063, %v2123, 0.0
        %v2132 = vsel %vm2064, %v2124, 0.0
        %v2133 = vsel %vm2065, %v2125, 0.0
        %v2134 = vsel %vm2066, %v2126, 0.0
        %v2135 = vsel %vm2067, %v2127, 0.0
        %v2136 = vadd.f32 %v2012, %v2128
        %v2137 = vadd.f32 %v2013, %v2129
        %v2138 = vadd.f32 %v2014, %v2130
        %v2139 = vadd.f32 %v2015, %v2131
        %v2140 = vadd.f32 %v2016, %v2132
        %v2141 = vadd.f32 %v2017, %v2133
        %v2142 = vadd.f32 %v2018, %v2134
        %v2143 = vadd.f32 %v2019, %v2135
        %vm2144 = vmand %vm2044, %vm562
        %vm2145 = vmand %vm2045, %vm563
        %vm2146 = vmand %vm2046, %vm564
        %vm2147 = vmand %vm2047, %vm565
        %vm2148 = vmand %vm2048, %vm566
        %vm2149 = vmand %vm2049, %vm567
        %vm2150 = vmand %vm2050, %vm568
        %vm2151 = vmand %vm2051, %vm569
        %vm2152 = vmand %vm2144, %vm578
        %vm2153 = vmand %vm2145, %vm579
        %vm2154 = vmand %vm2146, %vm580
        %vm2155 = vmand %vm2147, %vm581
        %vm2156 = vmand %vm2148, %vm582
        %vm2157 = vmand %vm2149, %vm583
        %vm2158 = vmand %vm2150, %vm584
        %vm2159 = vmand %vm2151, %vm585
        %s2160 = sld [smem:[#allocation2 + $0x10]]
        %v2161 = vstv %s2160
        %v2162 = vmul.f32 %v552, %v2161
        %v2163 = vmul.f32 %v551, %v2161
        %v2164 = vmul.f32 %v550, %v2161
        %v2165 = vmul.f32 %v549, %v2161
        %v2166 = vmul.f32 %v548, %v2161
        %v2167 = vmul.f32 %v547, %v2161
        %v2168 = vmul.f32 %v546, %v2161
        %v2169 = vmul.f32 %v553, %v2161
        %s2170 = sld [smem:[#allocation2 + $0x29]]
        %v2171 = vstv %s2170
        %v2172 = vmul.f32 %v552, %v2171
        %v2173 = vmul.f32 %v551, %v2171
        %v2174 = vmul.f32 %v550, %v2171
        %v2175 = vmul.f32 %v549, %v2171
        %v2176 = vmul.f32 %v548, %v2171
        %v2177 = vmul.f32 %v547, %v2171
        %v2178 = vmul.f32 %v546, %v2171
        %v2179 = vmul.f32 %v553, %v2171
        %2188 = vrot.lane.b32.xlu0 %v2172, 127
        %v2189 = vpop.permute.xlu0 %2188
        %2190 = vrot.lane.b32.xlu0 %v2173, 127
        %v2191 = vpop.permute.xlu0 %2190
        %2192 = vrot.lane.b32.xlu0 %v2174, 127
        %v2193 = vpop.permute.xlu0 %2192
        %2194 = vrot.lane.b32.xlu0 %v2175, 127
        %v2195 = vpop.permute.xlu0 %2194
        %2196 = vrot.lane.b32.xlu0 %v2176, 127
        %v2197 = vpop.permute.xlu0 %2196
        %2198 = vrot.lane.b32.xlu0 %v2177, 127
        %v2199 = vpop.permute.xlu0 %2198
        %2200 = vrot.lane.b32.xlu0 %v2178, 127
        %v2201 = vpop.permute.xlu0 %2200
        %2202 = vrot.lane.b32.xlu0 %v2179, 127
        %v2203 = vpop.permute.xlu0 %2202
        %v2212 = vadd.f32 %v2162, %v2189
        %v2213 = vadd.f32 %v2163, %v2191
        %v2214 = vadd.f32 %v2164, %v2193
        %v2215 = vadd.f32 %v2165, %v2195
        %v2216 = vadd.f32 %v2166, %v2197
        %v2217 = vadd.f32 %v2167, %v2199
        %v2218 = vadd.f32 %v2168, %v2201
        %v2219 = vadd.f32 %v2169, %v2203
        %v2220 = vsel %vm2152, %v2212, 0.0
        %v2221 = vsel %vm2153, %v2213, 0.0
        %v2222 = vsel %vm2154, %v2214, 0.0
        %v2223 = vsel %vm2155, %v2215, 0.0
        %v2224 = vsel %vm2156, %v2216, 0.0
        %v2225 = vsel %vm2157, %v2217, 0.0
        %v2226 = vsel %vm2158, %v2218, 0.0
        %v2227 = vsel %vm2159, %v2219, 0.0
        %v2228 = vadd.f32 %v2136, %v2220
        %v2229 = vadd.f32 %v2137, %v2221
        %v2230 = vadd.f32 %v2138, %v2222
        %v2231 = vadd.f32 %v2139, %v2223
        %v2232 = vadd.f32 %v2140, %v2224
        %v2233 = vadd.f32 %v2141, %v2225
        %v2234 = vadd.f32 %v2142, %v2226
        %v2235 = vadd.f32 %v2143, %v2227
        %vm2236 = vmand %vm2044, %vm670
        %vm2237 = vmand %vm2045, %vm671
        %vm2238 = vmand %vm2046, %vm672
        %vm2239 = vmand %vm2047, %vm673
        %vm2240 = vmand %vm2048, %vm674
        %vm2241 = vmand %vm2049, %vm675
        %vm2242 = vmand %vm2050, %vm676
        %vm2243 = vmand %vm2051, %vm677
        %vm2244 = vmand %vm2236, %vm686
        %vm2245 = vmand %vm2237, %vm687
        %vm2246 = vmand %vm2238, %vm688
        %vm2247 = vmand %vm2239, %vm689
        %vm2248 = vmand %vm2240, %vm690
        %vm2249 = vmand %vm2241, %vm691
        %vm2250 = vmand %vm2242, %vm692
        %vm2251 = vmand %vm2243, %vm693
        %s2252 = sld [smem:[#allocation2 + $0x11]]
        %v2253 = vstv %s2252
        %v2254 = vmul.f32 %v339, %v2253
        %v2255 = vmul.f32 %v340, %v2253
        %v2256 = vmul.f32 %v341, %v2253
        %v2257 = vmul.f32 %v342, %v2253
        %v2258 = vmul.f32 %v343, %v2253
        %v2259 = vmul.f32 %v344, %v2253
        %v2260 = vmul.f32 %v345, %v2253
        %v2261 = vmul.f32 %v338, %v2253
        %s2262 = sld [smem:[#allocation2 + $0x2a]]
        %v2263 = vstv %s2262
        %v2264 = vmul.f32 %v339, %v2263
        %v2265 = vmul.f32 %v340, %v2263
        %v2266 = vmul.f32 %v341, %v2263
        %v2267 = vmul.f32 %v342, %v2263
        %v2268 = vmul.f32 %v343, %v2263
        %v2269 = vmul.f32 %v344, %v2263
        %v2270 = vmul.f32 %v345, %v2263
        %v2271 = vmul.f32 %v338, %v2263
        %2280 = vrot.lane.b32.xlu0 %v2264, 127
        %v2281 = vpop.permute.xlu0 %2280
        %2282 = vrot.lane.b32.xlu0 %v2265, 127
        %v2283 = vpop.permute.xlu0 %2282
        %2284 = vrot.lane.b32.xlu0 %v2266, 127
        %v2285 = vpop.permute.xlu0 %2284
        %2286 = vrot.lane.b32.xlu0 %v2267, 127
        %v2287 = vpop.permute.xlu0 %2286
        %2288 = vrot.lane.b32.xlu0 %v2268, 127
        %v2289 = vpop.permute.xlu0 %2288
        %2290 = vrot.lane.b32.xlu0 %v2269, 127
        %v2291 = vpop.permute.xlu0 %2290
        %2292 = vrot.lane.b32.xlu0 %v2270, 127
        %v2293 = vpop.permute.xlu0 %2292
        %2294 = vrot.lane.b32.xlu0 %v2271, 127
        %v2295 = vpop.permute.xlu0 %2294
        %v2304 = vadd.f32 %v2254, %v2281
        %v2305 = vadd.f32 %v2255, %v2283
        %v2306 = vadd.f32 %v2256, %v2285
        %v2307 = vadd.f32 %v2257, %v2287
        %v2308 = vadd.f32 %v2258, %v2289
        %v2309 = vadd.f32 %v2259, %v2291
        %v2310 = vadd.f32 %v2260, %v2293
        %v2311 = vadd.f32 %v2261, %v2295
        %v2312 = vsel %vm2244, %v2304, 0.0
        %v2313 = vsel %vm2245, %v2305, 0.0
        %v2314 = vsel %vm2246, %v2306, 0.0
        %v2315 = vsel %vm2247, %v2307, 0.0
        %v2316 = vsel %vm2248, %v2308, 0.0
        %v2317 = vsel %vm2249, %v2309, 0.0
        %v2318 = vsel %vm2250, %v2310, 0.0
        %v2319 = vsel %vm2251, %v2311, 0.0
        %v2320 = vadd.f32 %v2228, %v2312
        %v2321 = vadd.f32 %v2229, %v2313
        %v2322 = vadd.f32 %v2230, %v2314
        %v2323 = vadd.f32 %v2231, %v2315
        %v2324 = vadd.f32 %v2232, %v2316
        %v2325 = vadd.f32 %v2233, %v2317
        %v2326 = vadd.f32 %v2234, %v2318
        %v2327 = vadd.f32 %v2235, %v2319
        %vm2328 = vmand %vm2044, %vm803
        %vm2329 = vmand %vm2045, %vm804
        %vm2330 = vmand %vm2046, %vm805
        %vm2331 = vmand %vm2047, %vm806
        %vm2332 = vmand %vm2048, %vm807
        %vm2333 = vmand %vm2049, %vm808
        %vm2334 = vmand %vm2050, %vm809
        %vm2335 = vmand %vm2051, %vm810
        %vm2336 = vmand %vm2328, %vm819
        %vm2337 = vmand %vm2329, %vm820
        %vm2338 = vmand %vm2330, %vm821
        %vm2339 = vmand %vm2331, %vm822
        %vm2340 = vmand %vm2332, %vm823
        %vm2341 = vmand %vm2333, %vm824
        %vm2342 = vmand %vm2334, %vm825
        %vm2343 = vmand %vm2335, %vm826
        %s2344 = sld [smem:[#allocation2 + $0x12]]
        %v2345 = vstv %s2344
        %v2346 = vmul.f32 %v792, %v2345
        %v2347 = vmul.f32 %v791, %v2345
        %v2348 = vmul.f32 %v790, %v2345
        %v2349 = vmul.f32 %v789, %v2345
        %v2350 = vmul.f32 %v788, %v2345
        %v2351 = vmul.f32 %v787, %v2345
        %v2352 = vmul.f32 %v794, %v2345
        %v2353 = vmul.f32 %v793, %v2345
        %s2354 = sld [smem:[#allocation2 + $0x2b]]
        %v2355 = vstv %s2354
        %v2356 = vmul.f32 %v792, %v2355
        %v2357 = vmul.f32 %v791, %v2355
        %v2358 = vmul.f32 %v790, %v2355
        %v2359 = vmul.f32 %v789, %v2355
        %v2360 = vmul.f32 %v788, %v2355
        %v2361 = vmul.f32 %v787, %v2355
        %v2362 = vmul.f32 %v794, %v2355
        %v2363 = vmul.f32 %v793, %v2355
        %2372 = vrot.lane.b32.xlu0 %v2356, 127
        %v2373 = vpop.permute.xlu0 %2372
        %2374 = vrot.lane.b32.xlu0 %v2357, 127
        %v2375 = vpop.permute.xlu0 %2374
        %2376 = vrot.lane.b32.xlu0 %v2358, 127
        %v2377 = vpop.permute.xlu0 %2376
        %2378 = vrot.lane.b32.xlu0 %v2359, 127
        %v2379 = vpop.permute.xlu0 %2378
        %2380 = vrot.lane.b32.xlu0 %v2360, 127
        %v2381 = vpop.permute.xlu0 %2380
        %2382 = vrot.lane.b32.xlu0 %v2361, 127
        %v2383 = vpop.permute.xlu0 %2382
        %2384 = vrot.lane.b32.xlu0 %v2362, 127
        %v2385 = vpop.permute.xlu0 %2384
        %2386 = vrot.lane.b32.xlu0 %v2363, 127
        %v2387 = vpop.permute.xlu0 %2386
        %v2396 = vadd.f32 %v2346, %v2373
        %v2397 = vadd.f32 %v2347, %v2375
        %v2398 = vadd.f32 %v2348, %v2377
        %v2399 = vadd.f32 %v2349, %v2379
        %v2400 = vadd.f32 %v2350, %v2381
        %v2401 = vadd.f32 %v2351, %v2383
        %v2402 = vadd.f32 %v2352, %v2385
        %v2403 = vadd.f32 %v2353, %v2387
        %v2404 = vsel %vm2336, %v2396, 0.0
        %v2405 = vsel %vm2337, %v2397, 0.0
        %v2406 = vsel %vm2338, %v2398, 0.0
        %v2407 = vsel %vm2339, %v2399, 0.0
        %v2408 = vsel %vm2340, %v2400, 0.0
        %v2409 = vsel %vm2341, %v2401, 0.0
        %v2410 = vsel %vm2342, %v2402, 0.0
        %v2411 = vsel %vm2343, %v2403, 0.0
        %v2412 = vadd.f32 %v2320, %v2404
        %v2413 = vadd.f32 %v2321, %v2405
        %v2414 = vadd.f32 %v2322, %v2406
        %v2415 = vadd.f32 %v2323, %v2407
        %v2416 = vadd.f32 %v2324, %v2408
        %v2417 = vadd.f32 %v2325, %v2409
        %v2418 = vadd.f32 %v2326, %v2410
        %v2419 = vadd.f32 %v2327, %v2411
        %vm2420 = vmand %vm2044, %vm936
        %vm2421 = vmand %vm2045, %vm937
        %vm2422 = vmand %vm2046, %vm938
        %vm2423 = vmand %vm2047, %vm939
        %vm2424 = vmand %vm2048, %vm940
        %vm2425 = vmand %vm2049, %vm941
        %vm2426 = vmand %vm2050, %vm942
        %vm2427 = vmand %vm2051, %vm943
        %vm2428 = vmand %vm2420, %vm952
        %vm2429 = vmand %vm2421, %vm953
        %vm2430 = vmand %vm2422, %vm954
        %vm2431 = vmand %vm2423, %vm955
        %vm2432 = vmand %vm2424, %vm956
        %vm2433 = vmand %vm2425, %vm957
        %vm2434 = vmand %vm2426, %vm958
        %vm2435 = vmand %vm2427, %vm959
        %s2436 = sld [smem:[#allocation2 + $0x13]]
        %v2437 = vstv %s2436
        %v2438 = vmul.f32 %v925, %v2437
        %v2439 = vmul.f32 %v924, %v2437
        %v2440 = vmul.f32 %v923, %v2437
        %v2441 = vmul.f32 %v922, %v2437
        %v2442 = vmul.f32 %v921, %v2437
        %v2443 = vmul.f32 %v920, %v2437
        %v2444 = vmul.f32 %v927, %v2437
        %v2445 = vmul.f32 %v926, %v2437
        %s2446 = sld [smem:[#allocation2 + $0x2c]]
        %v2447 = vstv %s2446
        %v2448 = vmul.f32 %v925, %v2447
        %v2449 = vmul.f32 %v924, %v2447
        %v2450 = vmul.f32 %v923, %v2447
        %v2451 = vmul.f32 %v922, %v2447
        %v2452 = vmul.f32 %v921, %v2447
        %v2453 = vmul.f32 %v920, %v2447
        %v2454 = vmul.f32 %v927, %v2447
        %v2455 = vmul.f32 %v926, %v2447
        %2464 = vrot.lane.b32.xlu0 %v2448, 127
        %v2465 = vpop.permute.xlu0 %2464
        %2466 = vrot.lane.b32.xlu0 %v2449, 127
        %v2467 = vpop.permute.xlu0 %2466
        %2468 = vrot.lane.b32.xlu0 %v2450, 127
        %v2469 = vpop.permute.xlu0 %2468
        %2470 = vrot.lane.b32.xlu0 %v2451, 127
        %v2471 = vpop.permute.xlu0 %2470
        %2472 = vrot.lane.b32.xlu0 %v2452, 127
        %v2473 = vpop.permute.xlu0 %2472
        %2474 = vrot.lane.b32.xlu0 %v2453, 127
        %v2475 = vpop.permute.xlu0 %2474
        %2476 = vrot.lane.b32.xlu0 %v2454, 127
        %v2477 = vpop.permute.xlu0 %2476
        %2478 = vrot.lane.b32.xlu0 %v2455, 127
        %v2479 = vpop.permute.xlu0 %2478
        %v2488 = vadd.f32 %v2438, %v2465
        %v2489 = vadd.f32 %v2439, %v2467
        %v2490 = vadd.f32 %v2440, %v2469
        %v2491 = vadd.f32 %v2441, %v2471
        %v2492 = vadd.f32 %v2442, %v2473
        %v2493 = vadd.f32 %v2443, %v2475
        %v2494 = vadd.f32 %v2444, %v2477
        %v2495 = vadd.f32 %v2445, %v2479
        %v2496 = vsel %vm2428, %v2488, 0.0
        %v2497 = vsel %vm2429, %v2489, 0.0
        %v2498 = vsel %vm2430, %v2490, 0.0
        %v2499 = vsel %vm2431, %v2491, 0.0
        %v2500 = vsel %vm2432, %v2492, 0.0
        %v2501 = vsel %vm2433, %v2493, 0.0
        %v2502 = vsel %vm2434, %v2494, 0.0
        %v2503 = vsel %vm2435, %v2495, 0.0
        %v2504 = vadd.f32 %v2412, %v2496
        %v2505 = vadd.f32 %v2413, %v2497
        %v2506 = vadd.f32 %v2414, %v2498
        %v2507 = vadd.f32 %v2415, %v2499
        %v2508 = vadd.f32 %v2416, %v2500
        %v2509 = vadd.f32 %v2417, %v2501
        %v2510 = vadd.f32 %v2418, %v2502
        %v2511 = vadd.f32 %v2419, %v2503
        %v2512 = vadd.s32 %v354, 2
        %v2513 = vadd.s32 %v355, 2
        %v2514 = vadd.s32 %v356, 2
        %v2515 = vadd.s32 %v357, 2
        %v2516 = vadd.s32 %v358, 2
        %v2517 = vadd.s32 %v359, 2
        %v2518 = vadd.s32 %v360, 2
        %v2519 = vadd.s32 %v361, 2
        %vm2520 = vcmp.ge.s32.totalorder %v2512, 0
        %vm2521 = vcmp.ge.s32.totalorder %v2513, 0
        %vm2522 = vcmp.ge.s32.totalorder %v2514, 0
        %vm2523 = vcmp.ge.s32.totalorder %v2515, 0
        %vm2524 = vcmp.ge.s32.totalorder %v2516, 0
        %vm2525 = vcmp.ge.s32.totalorder %v2517, 0
        %vm2526 = vcmp.ge.s32.totalorder %v2518, 0
        %vm2527 = vcmp.ge.s32.totalorder %v2519, 0
        %vm2528 = vcmp.lt.s32.totalorder %v2512, 8
        %vm2529 = vcmp.lt.s32.totalorder %v2513, 8
        %vm2530 = vcmp.lt.s32.totalorder %v2514, 8
        %vm2531 = vcmp.lt.s32.totalorder %v2515, 8
        %vm2532 = vcmp.lt.s32.totalorder %v2516, 8
        %vm2533 = vcmp.lt.s32.totalorder %v2517, 8
        %vm2534 = vcmp.lt.s32.totalorder %v2518, 8
        %vm2535 = vcmp.lt.s32.totalorder %v2519, 8
        %vm2536 = vmand %vm2520, %vm2528
        %vm2537 = vmand %vm2521, %vm2529
        %vm2538 = vmand %vm2522, %vm2530
        %vm2539 = vmand %vm2523, %vm2531
        %vm2540 = vmand %vm2524, %vm2532
        %vm2541 = vmand %vm2525, %vm2533
        %vm2542 = vmand %vm2526, %vm2534
        %vm2543 = vmand %vm2527, %vm2535
        %vm2544 = vmand %vm2536, %vm429
        %vm2545 = vmand %vm2537, %vm430
        %vm2546 = vmand %vm2538, %vm431
        %vm2547 = vmand %vm2539, %vm432
        %vm2548 = vmand %vm2540, %vm433
        %vm2549 = vmand %vm2541, %vm434
        %vm2550 = vmand %vm2542, %vm435
        %vm2551 = vmand %vm2543, %vm436
        %vm2552 = vmand %vm2544, %vm445
        %vm2553 = vmand %vm2545, %vm446
        %vm2554 = vmand %vm2546, %vm447
        %vm2555 = vmand %vm2547, %vm448
        %vm2556 = vmand %vm2548, %vm449
        %vm2557 = vmand %vm2549, %vm450
        %vm2558 = vmand %vm2550, %vm451
        %vm2559 = vmand %vm2551, %vm452
        %s2560 = sld [smem:[#allocation2 + $0x14]]
        %v2561 = vstv %s2560
        %v2562 = vmul.f32 %v386, %v2561
        %v2563 = vmul.f32 %v385, %v2561
        %v2564 = vmul.f32 %v384, %v2561
        %v2565 = vmul.f32 %v383, %v2561
        %v2566 = vmul.f32 %v382, %v2561
        %v2567 = vmul.f32 %v381, %v2561
        %v2568 = vmul.f32 %v388, %v2561
        %v2569 = vmul.f32 %v387, %v2561
        %s2570 = sld [smem:[#allocation2 + $0x2d]]
        %v2571 = vstv %s2570
        %v2572 = vmul.f32 %v386, %v2571
        %v2573 = vmul.f32 %v385, %v2571
        %v2574 = vmul.f32 %v384, %v2571
        %v2575 = vmul.f32 %v383, %v2571
        %v2576 = vmul.f32 %v382, %v2571
        %v2577 = vmul.f32 %v381, %v2571
        %v2578 = vmul.f32 %v388, %v2571
        %v2579 = vmul.f32 %v387, %v2571
        %2588 = vrot.lane.b32.xlu0 %v2572, 127
        %v2589 = vpop.permute.xlu0 %2588
        %2590 = vrot.lane.b32.xlu0 %v2573, 127
        %v2591 = vpop.permute.xlu0 %2590
        %2592 = vrot.lane.b32.xlu0 %v2574, 127
        %v2593 = vpop.permute.xlu0 %2592
        %2594 = vrot.lane.b32.xlu0 %v2575, 127
        %v2595 = vpop.permute.xlu0 %2594
        %2596 = vrot.lane.b32.xlu0 %v2576, 127
        %v2597 = vpop.permute.xlu0 %2596
        %2598 = vrot.lane.b32.xlu0 %v2577, 127
        %v2599 = vpop.permute.xlu0 %2598
        %2600 = vrot.lane.b32.xlu0 %v2578, 127
        %v2601 = vpop.permute.xlu0 %2600
        %2602 = vrot.lane.b32.xlu0 %v2579, 127
        %v2603 = vpop.permute.xlu0 %2602
        %v2612 = vadd.f32 %v2562, %v2589
        %v2613 = vadd.f32 %v2563, %v2591
        %v2614 = vadd.f32 %v2564, %v2593
        %v2615 = vadd.f32 %v2565, %v2595
        %v2616 = vadd.f32 %v2566, %v2597
        %v2617 = vadd.f32 %v2567, %v2599
        %v2618 = vadd.f32 %v2568, %v2601
        %v2619 = vadd.f32 %v2569, %v2603
        %v2620 = vsel %vm2552, %v2612, 0.0
        %v2621 = vsel %vm2553, %v2613, 0.0
        %v2622 = vsel %vm2554, %v2614, 0.0
        %v2623 = vsel %vm2555, %v2615, 0.0
        %v2624 = vsel %vm2556, %v2616, 0.0
        %v2625 = vsel %vm2557, %v2617, 0.0
        %v2626 = vsel %vm2558, %v2618, 0.0
        %v2627 = vsel %vm2559, %v2619, 0.0
        %v2628 = vadd.f32 %v2504, %v2620
        %v2629 = vadd.f32 %v2505, %v2621
        %v2630 = vadd.f32 %v2506, %v2622
        %v2631 = vadd.f32 %v2507, %v2623
        %v2632 = vadd.f32 %v2508, %v2624
        %v2633 = vadd.f32 %v2509, %v2625
        %v2634 = vadd.f32 %v2510, %v2626
        %v2635 = vadd.f32 %v2511, %v2627
        %vm2636 = vmand %vm2536, %vm562
        %vm2637 = vmand %vm2537, %vm563
        %vm2638 = vmand %vm2538, %vm564
        %vm2639 = vmand %vm2539, %vm565
        %vm2640 = vmand %vm2540, %vm566
        %vm2641 = vmand %vm2541, %vm567
        %vm2642 = vmand %vm2542, %vm568
        %vm2643 = vmand %vm2543, %vm569
        %vm2644 = vmand %vm2636, %vm578
        %vm2645 = vmand %vm2637, %vm579
        %vm2646 = vmand %vm2638, %vm580
        %vm2647 = vmand %vm2639, %vm581
        %vm2648 = vmand %vm2640, %vm582
        %vm2649 = vmand %vm2641, %vm583
        %vm2650 = vmand %vm2642, %vm584
        %vm2651 = vmand %vm2643, %vm585
        %s2652 = sld [smem:[#allocation2 + $0x15]]
        %v2653 = vstv %s2652
        %v2654 = vmul.f32 %v551, %v2653
        %v2655 = vmul.f32 %v550, %v2653
        %v2656 = vmul.f32 %v549, %v2653
        %v2657 = vmul.f32 %v548, %v2653
        %v2658 = vmul.f32 %v547, %v2653
        %v2659 = vmul.f32 %v546, %v2653
        %v2660 = vmul.f32 %v553, %v2653
        %v2661 = vmul.f32 %v552, %v2653
        %s2662 = sld [smem:[#allocation2 + $0x2e]]
        %v2663 = vstv %s2662
        %v2664 = vmul.f32 %v551, %v2663
        %v2665 = vmul.f32 %v550, %v2663
        %v2666 = vmul.f32 %v549, %v2663
        %v2667 = vmul.f32 %v548, %v2663
        %v2668 = vmul.f32 %v547, %v2663
        %v2669 = vmul.f32 %v546, %v2663
        %v2670 = vmul.f32 %v553, %v2663
        %v2671 = vmul.f32 %v552, %v2663
        %2680 = vrot.lane.b32.xlu0 %v2664, 127
        %v2681 = vpop.permute.xlu0 %2680
        %2682 = vrot.lane.b32.xlu0 %v2665, 127
        %v2683 = vpop.permute.xlu0 %2682
        %2684 = vrot.lane.b32.xlu0 %v2666, 127
        %v2685 = vpop.permute.xlu0 %2684
        %2686 = vrot.lane.b32.xlu0 %v2667, 127
        %v2687 = vpop.permute.xlu0 %2686
        %2688 = vrot.lane.b32.xlu0 %v2668, 127
        %v2689 = vpop.permute.xlu0 %2688
        %2690 = vrot.lane.b32.xlu0 %v2669, 127
        %v2691 = vpop.permute.xlu0 %2690
        %2692 = vrot.lane.b32.xlu0 %v2670, 127
        %v2693 = vpop.permute.xlu0 %2692
        %2694 = vrot.lane.b32.xlu0 %v2671, 127
        %v2695 = vpop.permute.xlu0 %2694
        %v2704 = vadd.f32 %v2654, %v2681
        %v2705 = vadd.f32 %v2655, %v2683
        %v2706 = vadd.f32 %v2656, %v2685
        %v2707 = vadd.f32 %v2657, %v2687
        %v2708 = vadd.f32 %v2658, %v2689
        %v2709 = vadd.f32 %v2659, %v2691
        %v2710 = vadd.f32 %v2660, %v2693
        %v2711 = vadd.f32 %v2661, %v2695
        %v2712 = vsel %vm2644, %v2704, 0.0
        %v2713 = vsel %vm2645, %v2705, 0.0
        %v2714 = vsel %vm2646, %v2706, 0.0
        %v2715 = vsel %vm2647, %v2707, 0.0
        %v2716 = vsel %vm2648, %v2708, 0.0
        %v2717 = vsel %vm2649, %v2709, 0.0
        %v2718 = vsel %vm2650, %v2710, 0.0
        %v2719 = vsel %vm2651, %v2711, 0.0
        %v2720 = vadd.f32 %v2628, %v2712
        %v2721 = vadd.f32 %v2629, %v2713
        %v2722 = vadd.f32 %v2630, %v2714
        %v2723 = vadd.f32 %v2631, %v2715
        %v2724 = vadd.f32 %v2632, %v2716
        %v2725 = vadd.f32 %v2633, %v2717
        %v2726 = vadd.f32 %v2634, %v2718
        %v2727 = vadd.f32 %v2635, %v2719
        %vm2728 = vmand %vm2536, %vm670
        %vm2729 = vmand %vm2537, %vm671
        %vm2730 = vmand %vm2538, %vm672
        %vm2731 = vmand %vm2539, %vm673
        %vm2732 = vmand %vm2540, %vm674
        %vm2733 = vmand %vm2541, %vm675
        %vm2734 = vmand %vm2542, %vm676
        %vm2735 = vmand %vm2543, %vm677
        %vm2736 = vmand %vm2728, %vm686
        %vm2737 = vmand %vm2729, %vm687
        %vm2738 = vmand %vm2730, %vm688
        %vm2739 = vmand %vm2731, %vm689
        %vm2740 = vmand %vm2732, %vm690
        %vm2741 = vmand %vm2733, %vm691
        %vm2742 = vmand %vm2734, %vm692
        %vm2743 = vmand %vm2735, %vm693
        %s2744 = sld [smem:[#allocation2 + $0x16]]
        %v2745 = vstv %s2744
        %v2746 = vmul.f32 %v340, %v2745
        %v2747 = vmul.f32 %v341, %v2745
        %v2748 = vmul.f32 %v342, %v2745
        %v2749 = vmul.f32 %v343, %v2745
        %v2750 = vmul.f32 %v344, %v2745
        %v2751 = vmul.f32 %v345, %v2745
        %v2752 = vmul.f32 %v338, %v2745
        %v2753 = vmul.f32 %v339, %v2745
        %s2754 = sld [smem:[#allocation2 + $0x2f]]
        %v2755 = vstv %s2754
        %v2756 = vmul.f32 %v340, %v2755
        %v2757 = vmul.f32 %v341, %v2755
        %v2758 = vmul.f32 %v342, %v2755
        %v2759 = vmul.f32 %v343, %v2755
        %v2760 = vmul.f32 %v344, %v2755
        %v2761 = vmul.f32 %v345, %v2755
        %v2762 = vmul.f32 %v338, %v2755
        %v2763 = vmul.f32 %v339, %v2755
        %2772 = vrot.lane.b32.xlu0 %v2756, 127
        %v2773 = vpop.permute.xlu0 %2772
        %2774 = vrot.lane.b32.xlu0 %v2757, 127
        %v2775 = vpop.permute.xlu0 %2774
        %2776 = vrot.lane.b32.xlu0 %v2758, 127
        %v2777 = vpop.permute.xlu0 %2776
        %2778 = vrot.lane.b32.xlu0 %v2759, 127
        %v2779 = vpop.permute.xlu0 %2778
        %2780 = vrot.lane.b32.xlu0 %v2760, 127
        %v2781 = vpop.permute.xlu0 %2780
        %2782 = vrot.lane.b32.xlu0 %v2761, 127
        %v2783 = vpop.permute.xlu0 %2782
        %2784 = vrot.lane.b32.xlu0 %v2762, 127
        %v2785 = vpop.permute.xlu0 %2784
        %2786 = vrot.lane.b32.xlu0 %v2763, 127
        %v2787 = vpop.permute.xlu0 %2786
        %v2796 = vadd.f32 %v2746, %v2773
        %v2797 = vadd.f32 %v2747, %v2775
        %v2798 = vadd.f32 %v2748, %v2777
        %v2799 = vadd.f32 %v2749, %v2779
        %v2800 = vadd.f32 %v2750, %v2781
        %v2801 = vadd.f32 %v2751, %v2783
        %v2802 = vadd.f32 %v2752, %v2785
        %v2803 = vadd.f32 %v2753, %v2787
        %v2804 = vsel %vm2736, %v2796, 0.0
        %v2805 = vsel %vm2737, %v2797, 0.0
        %v2806 = vsel %vm2738, %v2798, 0.0
        %v2807 = vsel %vm2739, %v2799, 0.0
        %v2808 = vsel %vm2740, %v2800, 0.0
        %v2809 = vsel %vm2741, %v2801, 0.0
        %v2810 = vsel %vm2742, %v2802, 0.0
        %v2811 = vsel %vm2743, %v2803, 0.0
        %v2812 = vadd.f32 %v2720, %v2804
        %v2813 = vadd.f32 %v2721, %v2805
        %v2814 = vadd.f32 %v2722, %v2806
        %v2815 = vadd.f32 %v2723, %v2807
        %v2816 = vadd.f32 %v2724, %v2808
        %v2817 = vadd.f32 %v2725, %v2809
        %v2818 = vadd.f32 %v2726, %v2810
        %v2819 = vadd.f32 %v2727, %v2811
        %vm2820 = vmand %vm2536, %vm803
        %vm2821 = vmand %vm2537, %vm804
        %vm2822 = vmand %vm2538, %vm805
        %vm2823 = vmand %vm2539, %vm806
        %vm2824 = vmand %vm2540, %vm807
        %vm2825 = vmand %vm2541, %vm808
        %vm2826 = vmand %vm2542, %vm809
        %vm2827 = vmand %vm2543, %vm810
        %vm2828 = vmand %vm2820, %vm819
        %vm2829 = vmand %vm2821, %vm820
        %vm2830 = vmand %vm2822, %vm821
        %vm2831 = vmand %vm2823, %vm822
        %vm2832 = vmand %vm2824, %vm823
        %vm2833 = vmand %vm2825, %vm824
        %vm2834 = vmand %vm2826, %vm825
        %vm2835 = vmand %vm2827, %vm826
        %s2836 = sld [smem:[#allocation2 + $0x17]]
        %v2837 = vstv %s2836
        %v2838 = vmul.f32 %v791, %v2837
        %v2839 = vmul.f32 %v790, %v2837
        %v2840 = vmul.f32 %v789, %v2837
        %v2841 = vmul.f32 %v788, %v2837
        %v2842 = vmul.f32 %v787, %v2837
        %v2843 = vmul.f32 %v794, %v2837
        %v2844 = vmul.f32 %v793, %v2837
        %v2845 = vmul.f32 %v792, %v2837
        %s2846 = sld [smem:[#allocation2 + $0x30]]
        %v2847 = vstv %s2846
        %v2848 = vmul.f32 %v791, %v2847
        %v2849 = vmul.f32 %v790, %v2847
        %v2850 = vmul.f32 %v789, %v2847
        %v2851 = vmul.f32 %v788, %v2847
        %v2852 = vmul.f32 %v787, %v2847
        %v2853 = vmul.f32 %v794, %v2847
        %v2854 = vmul.f32 %v793, %v2847
        %v2855 = vmul.f32 %v792, %v2847
        %2864 = vrot.lane.b32.xlu0 %v2848, 127
        %v2865 = vpop.permute.xlu0 %2864
        %2866 = vrot.lane.b32.xlu0 %v2849, 127
        %v2867 = vpop.permute.xlu0 %2866
        %2868 = vrot.lane.b32.xlu0 %v2850, 127
        %v2869 = vpop.permute.xlu0 %2868
        %2870 = vrot.lane.b32.xlu0 %v2851, 127
        %v2871 = vpop.permute.xlu0 %2870
        %2872 = vrot.lane.b32.xlu0 %v2852, 127
        %v2873 = vpop.permute.xlu0 %2872
        %2874 = vrot.lane.b32.xlu0 %v2853, 127
        %v2875 = vpop.permute.xlu0 %2874
        %2876 = vrot.lane.b32.xlu0 %v2854, 127
        %v2877 = vpop.permute.xlu0 %2876
        %2878 = vrot.lane.b32.xlu0 %v2855, 127
        %v2879 = vpop.permute.xlu0 %2878
        %v2888 = vadd.f32 %v2838, %v2865
        %v2889 = vadd.f32 %v2839, %v2867
        %v2890 = vadd.f32 %v2840, %v2869
        %v2891 = vadd.f32 %v2841, %v2871
        %v2892 = vadd.f32 %v2842, %v2873
        %v2893 = vadd.f32 %v2843, %v2875
        %v2894 = vadd.f32 %v2844, %v2877
        %v2895 = vadd.f32 %v2845, %v2879
        %v2896 = vsel %vm2828, %v2888, 0.0
        %v2897 = vsel %vm2829, %v2889, 0.0
        %v2898 = vsel %vm2830, %v2890, 0.0
        %v2899 = vsel %vm2831, %v2891, 0.0
        %v2900 = vsel %vm2832, %v2892, 0.0
        %v2901 = vsel %vm2833, %v2893, 0.0
        %v2902 = vsel %vm2834, %v2894, 0.0
        %v2903 = vsel %vm2835, %v2895, 0.0
        %v2904 = vadd.f32 %v2812, %v2896
        %v2905 = vadd.f32 %v2813, %v2897
        %v2906 = vadd.f32 %v2814, %v2898
        %v2907 = vadd.f32 %v2815, %v2899
        %v2908 = vadd.f32 %v2816, %v2900
        %v2909 = vadd.f32 %v2817, %v2901
        %v2910 = vadd.f32 %v2818, %v2902
        %v2911 = vadd.f32 %v2819, %v2903
        %vm2912 = vmand %vm2536, %vm936
        %vm2913 = vmand %vm2537, %vm937
        %vm2914 = vmand %vm2538, %vm938
        %vm2915 = vmand %vm2539, %vm939
        %vm2916 = vmand %vm2540, %vm940
        %vm2917 = vmand %vm2541, %vm941
        %vm2918 = vmand %vm2542, %vm942
        %vm2919 = vmand %vm2543, %vm943
        %vm2920 = vmand %vm2912, %vm952
        %vm2921 = vmand %vm2913, %vm953
        %vm2922 = vmand %vm2914, %vm954
        %vm2923 = vmand %vm2915, %vm955
        %vm2924 = vmand %vm2916, %vm956
        %vm2925 = vmand %vm2917, %vm957
        %vm2926 = vmand %vm2918, %vm958
        %vm2927 = vmand %vm2919, %vm959
        %s2928 = sld [smem:[#allocation2 + $0x18]]
        %v2929 = vstv %s2928
        %v2930 = vmul.f32 %v924, %v2929
        %v2931 = vmul.f32 %v923, %v2929
        %v2932 = vmul.f32 %v922, %v2929
        %v2933 = vmul.f32 %v921, %v2929
        %v2934 = vmul.f32 %v920, %v2929
        %v2935 = vmul.f32 %v927, %v2929
        %v2936 = vmul.f32 %v926, %v2929
        %v2937 = vmul.f32 %v925, %v2929
        %s2938 = sld [smem:[#allocation2 + $0x31]]
        %v2939 = vstv %s2938
        %v2940 = vmul.f32 %v924, %v2939
        %v2941 = vmul.f32 %v923, %v2939
        %v2942 = vmul.f32 %v922, %v2939
        %v2943 = vmul.f32 %v921, %v2939
        %v2944 = vmul.f32 %v920, %v2939
        %v2945 = vmul.f32 %v927, %v2939
        %v2946 = vmul.f32 %v926, %v2939
        %v2947 = vmul.f32 %v925, %v2939
        %2956 = vrot.lane.b32.xlu0 %v2940, 127
        %v2957 = vpop.permute.xlu0 %2956
        %2958 = vrot.lane.b32.xlu0 %v2941, 127
        %v2959 = vpop.permute.xlu0 %2958
        %2960 = vrot.lane.b32.xlu0 %v2942, 127
        %v2961 = vpop.permute.xlu0 %2960
        %2962 = vrot.lane.b32.xlu0 %v2943, 127
        %v2963 = vpop.permute.xlu0 %2962
        %2964 = vrot.lane.b32.xlu0 %v2944, 127
        %v2965 = vpop.permute.xlu0 %2964
        %2966 = vrot.lane.b32.xlu0 %v2945, 127
        %v2967 = vpop.permute.xlu0 %2966
        %2968 = vrot.lane.b32.xlu0 %v2946, 127
        %v2969 = vpop.permute.xlu0 %2968
        %2970 = vrot.lane.b32.xlu0 %v2947, 127
        %v2971 = vpop.permute.xlu0 %2970
        %v2980 = vadd.f32 %v2930, %v2957
        %v2981 = vadd.f32 %v2931, %v2959
        %v2982 = vadd.f32 %v2932, %v2961
        %v2983 = vadd.f32 %v2933, %v2963
        %v2984 = vadd.f32 %v2934, %v2965
        %v2985 = vadd.f32 %v2935, %v2967
        %v2986 = vadd.f32 %v2936, %v2969
        %v2987 = vadd.f32 %v2937, %v2971
        %v2988 = vsel %vm2920, %v2980, 0.0
        %v2989 = vsel %vm2921, %v2981, 0.0
        %v2990 = vsel %vm2922, %v2982, 0.0
        %v2991 = vsel %vm2923, %v2983, 0.0
        %v2992 = vsel %vm2924, %v2984, 0.0
        %v2993 = vsel %vm2925, %v2985, 0.0
        %v2994 = vsel %vm2926, %v2986, 0.0
        %v2995 = vsel %vm2927, %v2987, 0.0
        %v2996 = vadd.f32 %v2904, %v2988
        %v2997 = vadd.f32 %v2905, %v2989
        %v2998 = vadd.f32 %v2906, %v2990
        %v2999 = vadd.f32 %v2907, %v2991
        %v3000 = vadd.f32 %v2908, %v2992
        %v3001 = vadd.f32 %v2909, %v2993
        %v3002 = vadd.f32 %v2910, %v2994
        %v3003 = vadd.f32 %v2911, %v2995
        %v3004 = vxor.u32 %v2996, 2147483648
        %v3005 = vxor.u32 %v2997, 2147483648
        %v3006 = vxor.u32 %v2998, 2147483648
        %v3007 = vxor.u32 %v2999, 2147483648
        %v3008 = vxor.u32 %v3000, 2147483648
        %v3009 = vxor.u32 %v3001, 2147483648
        %v3010 = vxor.u32 %v3002, 2147483648
        %v3011 = vxor.u32 %v3003, 2147483648
        %v3012 = vmul.f32 %v3004, 1.442695
        %v3013 = vpow.pop %v3012
        %v3014 = vmul.f32 %v3005, 1.442695
        %v3015 = vpow.pop %v3014
        %v3016 = vmul.f32 %v3006, 1.442695
        %v3017 = vpow.pop %v3016
        %v3018 = vmul.f32 %v3007, 1.442695
        %v3019 = vpow.pop %v3018
        %v3020 = vmul.f32 %v3008, 1.442695
        %v3021 = vpow.pop %v3020
        %v3022 = vmul.f32 %v3009, 1.442695
        %v3023 = vpow.pop %v3022
        %v3024 = vmul.f32 %v3010, 1.442695
        %v3025 = vpow.pop %v3024
        %v3026 = vmul.f32 %v3011, 1.442695
        %v3027 = vpow.pop %v3026
        %v3028 = vadd.f32 %v3013, 1.0
        %v3029 = vadd.f32 %v3015, 1.0
        %v3030 = vadd.f32 %v3017, 1.0
        %v3031 = vadd.f32 %v3019, 1.0
        %v3032 = vadd.f32 %v3021, 1.0
        %v3033 = vadd.f32 %v3023, 1.0
        %v3034 = vadd.f32 %v3025, 1.0
        %v3035 = vadd.f32 %v3027, 1.0
        %v3036 = vrcp.pop %v3028
        %v3037 = vmul.f32 1.0, %v3036
        %v3038 = vrcp.pop %v3029
        %v3039 = vmul.f32 1.0, %v3038
        %v3040 = vrcp.pop %v3030
        %v3041 = vmul.f32 1.0, %v3040
        %v3042 = vrcp.pop %v3031
        %v3043 = vmul.f32 1.0, %v3042
        %v3044 = vrcp.pop %v3032
        %v3045 = vmul.f32 1.0, %v3044
        %v3046 = vrcp.pop %v3033
        %v3047 = vmul.f32 1.0, %v3046
        %v3048 = vrcp.pop %v3034
        %v3049 = vmul.f32 1.0, %v3048
        %v3050 = vrcp.pop %v3035
        %v3051 = vmul.f32 1.0, %v3050
        %v3052 = vadd.f32 %v3037, 1.0
        %v3053 = vadd.f32 %v3039, 1.0
        %v3054 = vadd.f32 %v3041, 1.0
        %v3055 = vadd.f32 %v3043, 1.0
        %v3056 = vadd.f32 %v3045, 1.0
        %v3057 = vadd.f32 %v3047, 1.0
        %v3058 = vadd.f32 %v3049, 1.0
        %v3059 = vadd.f32 %v3051, 1.0
        %3061 = vset.pattern.permute.xlu0 0
        %3062 = vperm.xlu0 %3061, %v3052
        %v3063 = vpop.permute.xlu0 %3062
        %3066 = vset.pattern.permute.xlu0 0
        %3067 = vperm.xlu0 %3066, %v3053
        %v3068 = vpop.permute.xlu0 %3067
        %3071 = vset.pattern.permute.xlu0 0
        %3072 = vperm.xlu0 %3071, %v3054
        %v3073 = vpop.permute.xlu0 %3072
        %3076 = vset.pattern.permute.xlu0 0
        %3077 = vperm.xlu0 %3076, %v3055
        %v3078 = vpop.permute.xlu0 %3077
        %3081 = vset.pattern.permute.xlu0 0
        %3082 = vperm.xlu0 %3081, %v3056
        %v3083 = vpop.permute.xlu0 %3082
        %3086 = vset.pattern.permute.xlu0 0
        %3087 = vperm.xlu0 %3086, %v3057
        %v3088 = vpop.permute.xlu0 %3087
        %3091 = vset.pattern.permute.xlu0 0
        %3092 = vperm.xlu0 %3091, %v3058
        %v3093 = vpop.permute.xlu0 %3092
        %3096 = vset.pattern.permute.xlu0 0
        %3097 = vperm.xlu0 %3096, %v3059
        %v3098 = vpop.permute.xlu0 %3097
        %v3100 = vmul.f32 %v346, %v3063
        %v3101 = vmul.f32 %v347, %v3068
        %v3102 = vmul.f32 %v348, %v3073
        %v3103 = vmul.f32 %v349, %v3078
        %v3104 = vmul.f32 %v350, %v3083
        %v3105 = vmul.f32 %v351, %v3088
        %v3106 = vmul.f32 %v352, %v3093
        %v3107 = vmul.f32 %v353, %v3098
        %v3108 = vld [vmem:[%s5] sm:$0x1]
        %v3110 = vlaneseq
        %v3111 = vshrl.u32 %v3110, 7
        %v3112 = vsub.s32 0, %v3111
        %v3113 = vrot.slane %v3108, %v3112
        %v3115 = vmul.f32 %v3100, %v3113
        %v3116 = vmul.f32 %v3101, %v3113
        %v3117 = vmul.f32 %v3102, %v3113
        %v3118 = vmul.f32 %v3103, %v3113
        %v3119 = vmul.f32 %v3104, %v3113
        %v3120 = vmul.f32 %v3105, %v3113
        %v3121 = vmul.f32 %v3106, %v3113
        %v3122 = vmul.f32 %v3107, %v3113
        %v3123 = vld [vmem:[%s6] sm:$0x1]
        %v3125 = vlaneseq
        %v3126 = vshrl.u32 %v3125, 7
        %v3127 = vsub.s32 0, %v3126
        %v3128 = vrot.slane %v3123, %v3127
        %v3130 = vadd.f32 %v3115, %v3128
        %v3131 = vadd.f32 %v3116, %v3128
        %v3132 = vadd.f32 %v3117, %v3128
        %v3133 = vadd.f32 %v3118, %v3128
        %v3134 = vadd.f32 %v3119, %v3128
        %v3135 = vadd.f32 %v3120, %v3128
        %v3136 = vadd.f32 %v3121, %v3128
        %v3137 = vadd.f32 %v3122, %v3128
        %v3138 = vmax.f32 %v3130, 0.0
        %v3139 = vmax.f32 %v3131, 0.0
        %v3140 = vmax.f32 %v3132, 0.0
        %v3141 = vmax.f32 %v3133, 0.0
        %v3142 = vmax.f32 %v3134, 0.0
        %v3143 = vmax.f32 %v3135, 0.0
        %v3144 = vmax.f32 %v3136, 0.0
        %v3145 = vmax.f32 %v3137, 0.0
        %v3146 = vld [vmem:[%s7] sm:$0xff]
        %v3147 = vld [vmem:[%s7 + $0x8] sm:$0xff]
        %v3148 = vld [vmem:[%s7 + $0x10] sm:$0xff]
        %v3149 = vld [vmem:[%s7 + $0x18] sm:$0xff]
        %v3150 = vld [vmem:[%s7 + $0x20] sm:$0xff]
        %v3151 = vld [vmem:[%s7 + $0x28] sm:$0xff]
        %v3152 = vld [vmem:[%s7 + $0x30] sm:$0xff]
        %v3153 = vld [vmem:[%s7 + $0x38] sm:$0xff]
        %v3154 = vld [vmem:[%s7 + $0x40] sm:$0xff]
        %v3155 = vld [vmem:[%s7 + $0x48] sm:$0xff]
        %v3156 = vld [vmem:[%s7 + $0x50] sm:$0xff]
        %v3157 = vld [vmem:[%s7 + $0x58] sm:$0xff]
        %v3158 = vld [vmem:[%s7 + $0x60] sm:$0xff]
        %v3159 = vld [vmem:[%s7 + $0x68] sm:$0xff]
        %v3160 = vld [vmem:[%s7 + $0x70] sm:$0xff]
        %v3161 = vld [vmem:[%s7 + $0x78] sm:$0xff]
        %3162 = vmatprep.subr.mxu0 0.0
        %3163 = vmatpush1.msra.mxu0 %v3146
        %3164 = vmatprep.subr.mxu0 0.0
        %3165 = vmatpush1.msra.mxu0 %v3147
        %3166 = vmatprep.subr.mxu0 0.0
        %3167 = vmatpush1.msra.mxu0 %v3148
        %3168 = vmatprep.subr.mxu0 0.0
        %3169 = vmatpush1.msra.mxu0 %v3149
        %3170 = vmatprep.subr.mxu0 0.0
        %3171 = vmatpush1.msra.mxu0 %v3150
        %3172 = vmatprep.subr.mxu0 0.0
        %3173 = vmatpush1.msra.mxu0 %v3151
        %3174 = vmatprep.subr.mxu0 0.0
        %3175 = vmatpush1.msra.mxu0 %v3152
        %3176 = vmatprep.subr.mxu0 0.0
        %3177 = vmatpush1.msra.mxu0 %v3153
        %3178 = vmatprep.subr.mxu0 0.0
        %3179 = vmatpush1.msra.mxu0 %v3154
        %3180 = vmatprep.subr.mxu0 0.0
        %3181 = vmatpush1.msra.mxu0 %v3155
        %3182 = vmatprep.subr.mxu0 0.0
        %3183 = vmatpush1.msra.mxu0 %v3156
        %3184 = vmatprep.subr.mxu0 0.0
        %3185 = vmatpush1.msra.mxu0 %v3157
        %3186 = vmatprep.subr.mxu0 0.0
        %3187 = vmatpush1.msra.mxu0 %v3158
        %3188 = vmatprep.subr.mxu0 0.0
        %3189 = vmatpush1.msra.mxu0 %v3159
        %3190 = vmatprep.subr.mxu0 0.0
        %3191 = vmatpush1.msra.mxu0 %v3160
        %3192 = vmatprep.subr.mxu0 0.0
        %3193 = vmatpush1.msra.mxu0 %v3161
        %3194 = vmatprep.subr.mxu0 0.0
        %3195 = vmatpush1.msra.mxu0 0.0
        %3196 = vmatprep.subr.mxu0 0.0
        %3197 = vmatpush1.msra.mxu0 0.0
        %3198 = vmatprep.subr.mxu0 0.0
        %3199 = vmatpush1.msra.mxu0 0.0
        %3200 = vmatprep.subr.mxu0 0.0
        %3201 = vmatpush1.msra.mxu0 0.0
        %3202 = vmatprep.subr.mxu0 0.0
        %3203 = vmatpush1.msra.mxu0 0.0
        %3204 = vmatprep.subr.mxu0 0.0
        %3205 = vmatpush1.msra.mxu0 0.0
        %3206 = vmatprep.subr.mxu0 0.0
        %3207 = vmatpush1.msra.mxu0 0.0
        %3208 = vmatprep.subr.mxu0 0.0
        %3209 = vmatpush1.msra.mxu0 0.0
        %3210 = vmatprep.subr.mxu0 0.0
        %3211 = vmatpush1.msra.mxu0 0.0
        %3212 = vmatprep.subr.mxu0 0.0
        %3213 = vmatpush1.msra.mxu0 0.0
        %3214 = vmatprep.subr.mxu0 0.0
        %3215 = vmatpush1.msra.mxu0 0.0
        %3216 = vmatprep.subr.mxu0 0.0
        %3217 = vmatpush1.msra.mxu0 0.0
        %3218 = vmatprep.subr.mxu0 0.0
        %3219 = vmatpush1.msra.mxu0 0.0
        %3220 = vmatprep.subr.mxu0 0.0
        %3221 = vmatpush1.msra.mxu0 0.0
        %3222 = vmatprep.subr.mxu0 0.0
        %3223 = vmatpush1.msra.mxu0 0.0
        %3224 = vmatprep.subr.mxu0 0.0
        %3225 = vmatpush1.msra.mxu0 0.0
        %3226 = vmatprep.mubr.f32.mxu0 0.0
        %3227 = vmatmul.mubr.f32.gmra.mrb[0].mxu0 %v3138
        %v3228 = vpop.f32.mrb[0].mxu0
        %v3229 = vadd.f32 0.0, %v3228
        %v3230 = vpop.f32.mrb[0].mxu0
        %3231 = vmatprep.mubr.f32.mxu0 0.0
        %3232 = vmatmul.mubr.f32.gmra.mrb[0].mxu0 %v3139
        %v3233 = vpop.f32.mrb[0].mxu0
        %v3234 = vadd.f32 0.0, %v3233
        %v3235 = vpop.f32.mrb[0].mxu0
        %3236 = vmatprep.mubr.f32.mxu0 0.0
        %3237 = vmatmul.mubr.f32.gmra.mrb[0].mxu0 %v3140
        %v3238 = vpop.f32.mrb[0].mxu0
        %v3239 = vadd.f32 0.0, %v3238
        %v3240 = vpop.f32.mrb[0].mxu0
        %3241 = vmatprep.mubr.f32.mxu0 0.0
        %3242 = vmatmul.mubr.f32.gmra.mrb[0].mxu0 %v3141
        %v3243 = vpop.f32.mrb[0].mxu0
        %v3244 = vadd.f32 0.0, %v3243
        %v3245 = vpop.f32.mrb[0].mxu0
        %3246 = vmatprep.mubr.f32.mxu0 0.0
        %3247 = vmatmul.mubr.f32.gmra.mrb[0].mxu0 %v3142
        %v3248 = vpop.f32.mrb[0].mxu0
        %v3249 = vadd.f32 0.0, %v3248
        %v3250 = vpop.f32.mrb[0].mxu0
        %3251 = vmatprep.mubr.f32.mxu0 0.0
        %3252 = vmatmul.mubr.f32.gmra.mrb[0].mxu0 %v3143
        %v3253 = vpop.f32.mrb[0].mxu0
        %v3254 = vadd.f32 0.0, %v3253
        %v3255 = vpop.f32.mrb[0].mxu0
        %3256 = vmatprep.mubr.f32.mxu0 0.0
        %3257 = vmatmul.mubr.f32.gmra.mrb[0].mxu0 %v3144
        %v3258 = vpop.f32.mrb[0].mxu0
        %v3259 = vadd.f32 0.0, %v3258
        %v3260 = vpop.f32.mrb[0].mxu0
        %3261 = vmatprep.mubr.f32.mxu0 0.0
        %3262 = vmatmul.mubr.f32.gmra.mrb[0].mxu0 %v3145
        %v3263 = vpop.f32.mrb[0].mxu0
        %v3264 = vadd.f32 0.0, %v3263
        %v3265 = vpop.f32.mrb[0].mxu0
        %3266 = vdwg.mxu0
        %v3267 = vrot.slane %v3229, 7
        %v3268 = vrot.slane %v3234, 7
        %v3269 = vrot.slane %v3239, 7
        %v3270 = vrot.slane %v3244, 7
        %v3271 = vrot.slane %v3249, 7
        %v3272 = vrot.slane %v3254, 7
        %v3273 = vrot.slane %v3259, 7
        %v3274 = vrot.slane %v3264, 7
        %v3275 = vsel %vm545, %v3273, %v3274
        %v3276 = vsel %vm545, %v3272, %v3273
        %v3277 = vsel %vm545, %v3271, %v3272
        %v3278 = vsel %vm545, %v3270, %v3271
        %v3279 = vsel %vm545, %v3269, %v3270
        %v3280 = vsel %vm545, %v3268, %v3269
        %v3281 = vsel %vm545, %v3267, %v3268
        %v3282 = vsel %vm545, %v3274, %v3267
        %v3283 = vsel %vm1176, 1, 0
        %v3284 = vsel %vm1177, 1, 0
        %v3285 = vsel %vm1178, 1, 0
        %v3286 = vsel %vm1179, 1, 0
        %v3287 = vsel %vm1180, 1, 0
        %v3288 = vsel %vm1181, 1, 0
        %v3289 = vsel %vm1182, 1, 0
        %v3290 = vsel %vm1183, 1, 0
        %3291 = vset.pattern.permute.xlu0 0
        %3292 = vperm.xlu0 %3291, %v3283
        %v3293 = vpop.permute.xlu0 %3292
        %3294 = vset.pattern.permute.xlu0 0
        %3295 = vperm.xlu0 %3294, %v3284
        %v3296 = vpop.permute.xlu0 %3295
        %3297 = vset.pattern.permute.xlu0 0
        %3298 = vperm.xlu0 %3297, %v3285
        %v3299 = vpop.permute.xlu0 %3298
        %3300 = vset.pattern.permute.xlu0 0
        %3301 = vperm.xlu0 %3300, %v3286
        %v3302 = vpop.permute.xlu0 %3301
        %3303 = vset.pattern.permute.xlu0 0
        %3304 = vperm.xlu0 %3303, %v3287
        %v3305 = vpop.permute.xlu0 %3304
        %3306 = vset.pattern.permute.xlu0 0
        %3307 = vperm.xlu0 %3306, %v3288
        %v3308 = vpop.permute.xlu0 %3307
        %3309 = vset.pattern.permute.xlu0 0
        %3310 = vperm.xlu0 %3309, %v3289
        %v3311 = vpop.permute.xlu0 %3310
        %3312 = vset.pattern.permute.xlu0 0
        %3313 = vperm.xlu0 %3312, %v3290
        %v3314 = vpop.permute.xlu0 %3313
        %vm3315 = vcmp.eq.s32.totalorder %v3293, 1
        %vm3316 = vcmp.eq.s32.totalorder %v3296, 1
        %vm3317 = vcmp.eq.s32.totalorder %v3299, 1
        %vm3318 = vcmp.eq.s32.totalorder %v3302, 1
        %vm3319 = vcmp.eq.s32.totalorder %v3305, 1
        %vm3320 = vcmp.eq.s32.totalorder %v3308, 1
        %vm3321 = vcmp.eq.s32.totalorder %v3311, 1
        %vm3322 = vcmp.eq.s32.totalorder %v3314, 1
        %v3323 = vsel %vm3315, %v3275, 0.0
        %v3324 = vsel %vm3316, %v3282, 0.0
        %v3325 = vsel %vm3317, %v3281, 0.0
        %v3326 = vsel %vm3318, %v3280, 0.0
        %v3327 = vsel %vm3319, %v3279, 0.0
        %v3328 = vsel %vm3320, %v3278, 0.0
        %v3329 = vsel %vm3321, %v3277, 0.0
        %v3330 = vsel %vm3322, %v3276, 0.0
        %v3331 = vadd.f32 %v3323, 0.0
        %v3332 = vadd.f32 %v3324, 0.0
        %v3333 = vadd.f32 %v3325, 0.0
        %v3334 = vadd.f32 %v3326, 0.0
        %v3335 = vadd.f32 %v3327, 0.0
        %v3336 = vadd.f32 %v3328, 0.0
        %v3337 = vadd.f32 %v3329, 0.0
        %v3338 = vadd.f32 %v3330, 0.0
        %s3339 = scalar_lea.vmem %s7, 128
        %v3340 = vld [vmem:[%s3339] sm:$0xff]
        %v3341 = vld [vmem:[%s3339 + $0x8] sm:$0xff]
        %v3342 = vld [vmem:[%s3339 + $0x10] sm:$0xff]
        %v3343 = vld [vmem:[%s3339 + $0x18] sm:$0xff]
        %v3344 = vld [vmem:[%s3339 + $0x20] sm:$0xff]
        %v3345 = vld [vmem:[%s3339 + $0x28] sm:$0xff]
        %v3346 = vld [vmem:[%s3339 + $0x30] sm:$0xff]
        %v3347 = vld [vmem:[%s3339 + $0x38] sm:$0xff]
        %v3348 = vld [vmem:[%s3339 + $0x40] sm:$0xff]
        %v3349 = vld [vmem:[%s3339 + $0x48] sm:$0xff]
        %v3350 = vld [vmem:[%s3339 + $0x50] sm:$0xff]
        %v3351 = vld [vmem:[%s3339 + $0x58] sm:$0xff]
        %v3352 = vld [vmem:[%s3339 + $0x60] sm:$0xff]
        %v3353 = vld [vmem:[%s3339 + $0x68] sm:$0xff]
        %v3354 = vld [vmem:[%s3339 + $0x70] sm:$0xff]
        %v3355 = vld [vmem:[%s3339 + $0x78] sm:$0xff]
        %3356 = vmatprep.subr.mxu0 0.0
        %3357 = vmatpush1.msra.mxu0 %v3340
        %3358 = vmatprep.subr.mxu0 0.0
        %3359 = vmatpush1.msra.mxu0 %v3341
        %3360 = vmatprep.subr.mxu0 0.0
        %3361 = vmatpush1.msra.mxu0 %v3342
        %3362 = vmatprep.subr.mxu0 0.0
        %3363 = vmatpush1.msra.mxu0 %v3343
        %3364 = vmatprep.subr.mxu0 0.0
        %3365 = vmatpush1.msra.mxu0 %v3344
        %3366 = vmatprep.subr.mxu0 0.0
        %3367 = vmatpush1.msra.mxu0 %v3345
        %3368 = vmatprep.subr.mxu0 0.0
        %3369 = vmatpush1.msra.mxu0 %v3346
        %3370 = vmatprep.subr.mxu0 0.0
        %3371 = vmatpush1.msra.mxu0 %v3347
        %3372 = vmatprep.subr.mxu0 0.0
        %3373 = vmatpush1.msra.mxu0 %v3348
        %3374 = vmatprep.subr.mxu0 0.0
        %3375 = vmatpush1.msra.mxu0 %v3349
        %3376 = vmatprep.subr.mxu0 0.0
        %3377 = vmatpush1.msra.mxu0 %v3350
        %3378 = vmatprep.subr.mxu0 0.0
        %3379 = vmatpush1.msra.mxu0 %v3351
        %3380 = vmatprep.subr.mxu0 0.0
        %3381 = vmatpush1.msra.mxu0 %v3352
        %3382 = vmatprep.subr.mxu0 0.0
        %3383 = vmatpush1.msra.mxu0 %v3353
        %3384 = vmatprep.subr.mxu0 0.0
        %3385 = vmatpush1.msra.mxu0 %v3354
        %3386 = vmatprep.subr.mxu0 0.0
        %3387 = vmatpush1.msra.mxu0 %v3355
        %3388 = vmatprep.subr.mxu0 0.0
        %3389 = vmatpush1.msra.mxu0 0.0
        %3390 = vmatprep.subr.mxu0 0.0
        %3391 = vmatpush1.msra.mxu0 0.0
        %3392 = vmatprep.subr.mxu0 0.0
        %3393 = vmatpush1.msra.mxu0 0.0
        %3394 = vmatprep.subr.mxu0 0.0
        %3395 = vmatpush1.msra.mxu0 0.0
        %3396 = vmatprep.subr.mxu0 0.0
        %3397 = vmatpush1.msra.mxu0 0.0
        %3398 = vmatprep.subr.mxu0 0.0
        %3399 = vmatpush1.msra.mxu0 0.0
        %3400 = vmatprep.subr.mxu0 0.0
        %3401 = vmatpush1.msra.mxu0 0.0
        %3402 = vmatprep.subr.mxu0 0.0
        %3403 = vmatpush1.msra.mxu0 0.0
        %3404 = vmatprep.subr.mxu0 0.0
        %3405 = vmatpush1.msra.mxu0 0.0
        %3406 = vmatprep.subr.mxu0 0.0
        %3407 = vmatpush1.msra.mxu0 0.0
        %3408 = vmatprep.subr.mxu0 0.0
        %3409 = vmatpush1.msra.mxu0 0.0
        %3410 = vmatprep.subr.mxu0 0.0
        %3411 = vmatpush1.msra.mxu0 0.0
        %3412 = vmatprep.subr.mxu0 0.0
        %3413 = vmatpush1.msra.mxu0 0.0
        %3414 = vmatprep.subr.mxu0 0.0
        %3415 = vmatpush1.msra.mxu0 0.0
        %3416 = vmatprep.subr.mxu0 0.0
        %3417 = vmatpush1.msra.mxu0 0.0
        %3418 = vmatprep.subr.mxu0 0.0
        %3419 = vmatpush1.msra.mxu0 0.0
        %3420 = vmatprep.mubr.f32.mxu0 0.0
        %3421 = vmatmul.mubr.f32.gmra.mrb[0].mxu0 %v3138
        %v3422 = vpop.f32.mrb[0].mxu0
        %v3423 = vadd.f32 0.0, %v3422
        %v3424 = vpop.f32.mrb[0].mxu0
        %3425 = vmatprep.mubr.f32.mxu0 0.0
        %3426 = vmatmul.mubr.f32.gmra.mrb[0].mxu0 %v3139
        %v3427 = vpop.f32.mrb[0].mxu0
        %v3428 = vadd.f32 0.0, %v3427
        %v3429 = vpop.f32.mrb[0].mxu0
        %3430 = vmatprep.mubr.f32.mxu0 0.0
        %3431 = vmatmul.mubr.f32.gmra.mrb[0].mxu0 %v3140
        %v3432 = vpop.f32.mrb[0].mxu0
        %v3433 = vadd.f32 0.0, %v3432
        %v3434 = vpop.f32.mrb[0].mxu0
        %3435 = vmatprep.mubr.f32.mxu0 0.0
        %3436 = vmatmul.mubr.f32.gmra.mrb[0].mxu0 %v3141
        %v3437 = vpop.f32.mrb[0].mxu0
        %v3438 = vadd.f32 0.0, %v3437
        %v3439 = vpop.f32.mrb[0].mxu0
        %3440 = vmatprep.mubr.f32.mxu0 0.0
        %3441 = vmatmul.mubr.f32.gmra.mrb[0].mxu0 %v3142
        %v3442 = vpop.f32.mrb[0].mxu0
        %v3443 = vadd.f32 0.0, %v3442
        %v3444 = vpop.f32.mrb[0].mxu0
        %3445 = vmatprep.mubr.f32.mxu0 0.0
        %3446 = vmatmul.mubr.f32.gmra.mrb[0].mxu0 %v3143
        %v3447 = vpop.f32.mrb[0].mxu0
        %v3448 = vadd.f32 0.0, %v3447
        %v3449 = vpop.f32.mrb[0].mxu0
        %3450 = vmatprep.mubr.f32.mxu0 0.0
        %3451 = vmatmul.mubr.f32.gmra.mrb[0].mxu0 %v3144
        %v3452 = vpop.f32.mrb[0].mxu0
        %v3453 = vadd.f32 0.0, %v3452
        %v3454 = vpop.f32.mrb[0].mxu0
        %3455 = vmatprep.mubr.f32.mxu0 0.0
        %3456 = vmatmul.mubr.f32.gmra.mrb[0].mxu0 %v3145
        %v3457 = vpop.f32.mrb[0].mxu0
        %v3458 = vadd.f32 0.0, %v3457
        %v3459 = vpop.f32.mrb[0].mxu0
        %3460 = vdwg.mxu0
        %v3461 = vsel %vm1268, 1, 0
        %v3462 = vsel %vm1269, 1, 0
        %v3463 = vsel %vm1270, 1, 0
        %v3464 = vsel %vm1271, 1, 0
        %v3465 = vsel %vm1272, 1, 0
        %v3466 = vsel %vm1273, 1, 0
        %v3467 = vsel %vm1274, 1, 0
        %v3468 = vsel %vm1275, 1, 0
        %3469 = vset.pattern.permute.xlu0 0
        %3470 = vperm.xlu0 %3469, %v3461
        %v3471 = vpop.permute.xlu0 %3470
        %3472 = vset.pattern.permute.xlu0 0
        %3473 = vperm.xlu0 %3472, %v3462
        %v3474 = vpop.permute.xlu0 %3473
        %3475 = vset.pattern.permute.xlu0 0
        %3476 = vperm.xlu0 %3475, %v3463
        %v3477 = vpop.permute.xlu0 %3476
        %3478 = vset.pattern.permute.xlu0 0
        %3479 = vperm.xlu0 %3478, %v3464
        %v3480 = vpop.permute.xlu0 %3479
        %3481 = vset.pattern.permute.xlu0 0
        %3482 = vperm.xlu0 %3481, %v3465
        %v3483 = vpop.permute.xlu0 %3482
        %3484 = vset.pattern.permute.xlu0 0
        %3485 = vperm.xlu0 %3484, %v3466
        %v3486 = vpop.permute.xlu0 %3485
        %3487 = vset.pattern.permute.xlu0 0
        %3488 = vperm.xlu0 %3487, %v3467
        %v3489 = vpop.permute.xlu0 %3488
        %3490 = vset.pattern.permute.xlu0 0
        %3491 = vperm.xlu0 %3490, %v3468
        %v3492 = vpop.permute.xlu0 %3491
        %vm3493 = vcmp.eq.s32.totalorder %v3471, 1
        %vm3494 = vcmp.eq.s32.totalorder %v3474, 1
        %vm3495 = vcmp.eq.s32.totalorder %v3477, 1
        %vm3496 = vcmp.eq.s32.totalorder %v3480, 1
        %vm3497 = vcmp.eq.s32.totalorder %v3483, 1
        %vm3498 = vcmp.eq.s32.totalorder %v3486, 1
        %vm3499 = vcmp.eq.s32.totalorder %v3489, 1
        %vm3500 = vcmp.eq.s32.totalorder %v3492, 1
        %v3501 = vsel %vm3493, %v3458, 0.0
        %v3502 = vsel %vm3494, %v3423, 0.0
        %v3503 = vsel %vm3495, %v3428, 0.0
        %v3504 = vsel %vm3496, %v3433, 0.0
        %v3505 = vsel %vm3497, %v3438, 0.0
        %v3506 = vsel %vm3498, %v3443, 0.0
        %v3507 = vsel %vm3499, %v3448, 0.0
        %v3508 = vsel %vm3500, %v3453, 0.0
        %v3509 = vadd.f32 %v3331, %v3501
        %v3510 = vadd.f32 %v3332, %v3502
        %v3511 = vadd.f32 %v3333, %v3503
        %v3512 = vadd.f32 %v3334, %v3504
        %v3513 = vadd.f32 %v3335, %v3505
        %v3514 = vadd.f32 %v3336, %v3506
        %v3515 = vadd.f32 %v3337, %v3507
        %v3516 = vadd.f32 %v3338, %v3508
        %s3517 = scalar_lea.vmem %s7, 256
        %v3518 = vld [vmem:[%s3517] sm:$0xff]
        %v3519 = vld [vmem:[%s3517 + $0x8] sm:$0xff]
        %v3520 = vld [vmem:[%s3517 + $0x10] sm:$0xff]
        %v3521 = vld [vmem:[%s3517 + $0x18] sm:$0xff]
        %v3522 = vld [vmem:[%s3517 + $0x20] sm:$0xff]
        %v3523 = vld [vmem:[%s3517 + $0x28] sm:$0xff]
        %v3524 = vld [vmem:[%s3517 + $0x30] sm:$0xff]
        %v3525 = vld [vmem:[%s3517 + $0x38] sm:$0xff]
        %v3526 = vld [vmem:[%s3517 + $0x40] sm:$0xff]
        %v3527 = vld [vmem:[%s3517 + $0x48] sm:$0xff]
        %v3528 = vld [vmem:[%s3517 + $0x50] sm:$0xff]
        %v3529 = vld [vmem:[%s3517 + $0x58] sm:$0xff]
        %v3530 = vld [vmem:[%s3517 + $0x60] sm:$0xff]
        %v3531 = vld [vmem:[%s3517 + $0x68] sm:$0xff]
        %v3532 = vld [vmem:[%s3517 + $0x70] sm:$0xff]
        %v3533 = vld [vmem:[%s3517 + $0x78] sm:$0xff]
        %3534 = vmatprep.subr.mxu0 0.0
        %3535 = vmatpush1.msra.mxu0 %v3518
        %3536 = vmatprep.subr.mxu0 0.0
        %3537 = vmatpush1.msra.mxu0 %v3519
        %3538 = vmatprep.subr.mxu0 0.0
        %3539 = vmatpush1.msra.mxu0 %v3520
        %3540 = vmatprep.subr.mxu0 0.0
        %3541 = vmatpush1.msra.mxu0 %v3521
        %3542 = vmatprep.subr.mxu0 0.0
        %3543 = vmatpush1.msra.mxu0 %v3522
        %3544 = vmatprep.subr.mxu0 0.0
        %3545 = vmatpush1.msra.mxu0 %v3523
        %3546 = vmatprep.subr.mxu0 0.0
        %3547 = vmatpush1.msra.mxu0 %v3524
        %3548 = vmatprep.subr.mxu0 0.0
        %3549 = vmatpush1.msra.mxu0 %v3525
        %3550 = vmatprep.subr.mxu0 0.0
        %3551 = vmatpush1.msra.mxu0 %v3526
        %3552 = vmatprep.subr.mxu0 0.0
        %3553 = vmatpush1.msra.mxu0 %v3527
        %3554 = vmatprep.subr.mxu0 0.0
        %3555 = vmatpush1.msra.mxu0 %v3528
        %3556 = vmatprep.subr.mxu0 0.0
        %3557 = vmatpush1.msra.mxu0 %v3529
        %3558 = vmatprep.subr.mxu0 0.0
        %3559 = vmatpush1.msra.mxu0 %v3530
        %3560 = vmatprep.subr.mxu0 0.0
        %3561 = vmatpush1.msra.mxu0 %v3531
        %3562 = vmatprep.subr.mxu0 0.0
        %3563 = vmatpush1.msra.mxu0 %v3532
        %3564 = vmatprep.subr.mxu0 0.0
        %3565 = vmatpush1.msra.mxu0 %v3533
        %3566 = vmatprep.subr.mxu0 0.0
        %3567 = vmatpush1.msra.mxu0 0.0
        %3568 = vmatprep.subr.mxu0 0.0
        %3569 = vmatpush1.msra.mxu0 0.0
        %3570 = vmatprep.subr.mxu0 0.0
        %3571 = vmatpush1.msra.mxu0 0.0
        %3572 = vmatprep.subr.mxu0 0.0
        %3573 = vmatpush1.msra.mxu0 0.0
        %3574 = vmatprep.subr.mxu0 0.0
        %3575 = vmatpush1.msra.mxu0 0.0
        %3576 = vmatprep.subr.mxu0 0.0
        %3577 = vmatpush1.msra.mxu0 0.0
        %3578 = vmatprep.subr.mxu0 0.0
        %3579 = vmatpush1.msra.mxu0 0.0
        %3580 = vmatprep.subr.mxu0 0.0
        %3581 = vmatpush1.msra.mxu0 0.0
        %3582 = vmatprep.subr.mxu0 0.0
        %3583 = vmatpush1.msra.mxu0 0.0
        %3584 = vmatprep.subr.mxu0 0.0
        %3585 = vmatpush1.msra.mxu0 0.0
        %3586 = vmatprep.subr.mxu0 0.0
        %3587 = vmatpush1.msra.mxu0 0.0
        %3588 = vmatprep.subr.mxu0 0.0
        %3589 = vmatpush1.msra.mxu0 0.0
        %3590 = vmatprep.subr.mxu0 0.0
        %3591 = vmatpush1.msra.mxu0 0.0
        %3592 = vmatprep.subr.mxu0 0.0
        %3593 = vmatpush1.msra.mxu0 0.0
        %3594 = vmatprep.subr.mxu0 0.0
        %3595 = vmatpush1.msra.mxu0 0.0
        %3596 = vmatprep.subr.mxu0 0.0
        %3597 = vmatpush1.msra.mxu0 0.0
        %3598 = vmatprep.mubr.f32.mxu0 0.0
        %3599 = vmatmul.mubr.f32.gmra.mrb[0].mxu0 %v3138
        %v3600 = vpop.f32.mrb[0].mxu0
        %v3601 = vadd.f32 0.0, %v3600
        %v3602 = vpop.f32.mrb[0].mxu0
        %3603 = vmatprep.mubr.f32.mxu0 0.0
        %3604 = vmatmul.mubr.f32.gmra.mrb[0].mxu0 %v3139
        %v3605 = vpop.f32.mrb[0].mxu0
        %v3606 = vadd.f32 0.0, %v3605
        %v3607 = vpop.f32.mrb[0].mxu0
        %3608 = vmatprep.mubr.f32.mxu0 0.0
        %3609 = vmatmul.mubr.f32.gmra.mrb[0].mxu0 %v3140
        %v3610 = vpop.f32.mrb[0].mxu0
        %v3611 = vadd.f32 0.0, %v3610
        %v3612 = vpop.f32.mrb[0].mxu0
        %3613 = vmatprep.mubr.f32.mxu0 0.0
        %3614 = vmatmul.mubr.f32.gmra.mrb[0].mxu0 %v3141
        %v3615 = vpop.f32.mrb[0].mxu0
        %v3616 = vadd.f32 0.0, %v3615
        %v3617 = vpop.f32.mrb[0].mxu0
        %3618 = vmatprep.mubr.f32.mxu0 0.0
        %3619 = vmatmul.mubr.f32.gmra.mrb[0].mxu0 %v3142
        %v3620 = vpop.f32.mrb[0].mxu0
        %v3621 = vadd.f32 0.0, %v3620
        %v3622 = vpop.f32.mrb[0].mxu0
        %3623 = vmatprep.mubr.f32.mxu0 0.0
        %3624 = vmatmul.mubr.f32.gmra.mrb[0].mxu0 %v3143
        %v3625 = vpop.f32.mrb[0].mxu0
        %v3626 = vadd.f32 0.0, %v3625
        %v3627 = vpop.f32.mrb[0].mxu0
        %3628 = vmatprep.mubr.f32.mxu0 0.0
        %3629 = vmatmul.mubr.f32.gmra.mrb[0].mxu0 %v3144
        %v3630 = vpop.f32.mrb[0].mxu0
        %v3631 = vadd.f32 0.0, %v3630
        %v3632 = vpop.f32.mrb[0].mxu0
        %3633 = vmatprep.mubr.f32.mxu0 0.0
        %3634 = vmatmul.mubr.f32.gmra.mrb[0].mxu0 %v3145
        %v3635 = vpop.f32.mrb[0].mxu0
        %v3636 = vadd.f32 0.0, %v3635
        %v3637 = vpop.f32.mrb[0].mxu0
        %3638 = vdwg.mxu0
        %v3639 = vrot.slane %v3601, 1
        %v3640 = vrot.slane %v3606, 1
        %v3641 = vrot.slane %v3611, 1
        %v3642 = vrot.slane %v3616, 1
        %v3643 = vrot.slane %v3621, 1
        %v3644 = vrot.slane %v3626, 1
        %v3645 = vrot.slane %v3631, 1
        %v3646 = vrot.slane %v3636, 1
        %v3647 = vsel %vm786, %v3645, %v3646
        %v3648 = vsel %vm786, %v3644, %v3645
        %v3649 = vsel %vm786, %v3643, %v3644
        %v3650 = vsel %vm786, %v3642, %v3643
        %v3651 = vsel %vm786, %v3641, %v3642
        %v3652 = vsel %vm786, %v3640, %v3641
        %v3653 = vsel %vm786, %v3639, %v3640
        %v3654 = vsel %vm786, %v3646, %v3639
        %v3655 = vsel %vm1360, 1, 0
        %v3656 = vsel %vm1361, 1, 0
        %v3657 = vsel %vm1362, 1, 0
        %v3658 = vsel %vm1363, 1, 0
        %v3659 = vsel %vm1364, 1, 0
        %v3660 = vsel %vm1365, 1, 0
        %v3661 = vsel %vm1366, 1, 0
        %v3662 = vsel %vm1367, 1, 0
        %3663 = vset.pattern.permute.xlu0 0
        %3664 = vperm.xlu0 %3663, %v3655
        %v3665 = vpop.permute.xlu0 %3664
        %3666 = vset.pattern.permute.xlu0 0
        %3667 = vperm.xlu0 %3666, %v3656
        %v3668 = vpop.permute.xlu0 %3667
        %3669 = vset.pattern.permute.xlu0 0
        %3670 = vperm.xlu0 %3669, %v3657
        %v3671 = vpop.permute.xlu0 %3670
        %3672 = vset.pattern.permute.xlu0 0
        %3673 = vperm.xlu0 %3672, %v3658
        %v3674 = vpop.permute.xlu0 %3673
        %3675 = vset.pattern.permute.xlu0 0
        %3676 = vperm.xlu0 %3675, %v3659
        %v3677 = vpop.permute.xlu0 %3676
        %3678 = vset.pattern.permute.xlu0 0
        %3679 = vperm.xlu0 %3678, %v3660
        %v3680 = vpop.permute.xlu0 %3679
        %3681 = vset.pattern.permute.xlu0 0
        %3682 = vperm.xlu0 %3681, %v3661
        %v3683 = vpop.permute.xlu0 %3682
        %3684 = vset.pattern.permute.xlu0 0
        %3685 = vperm.xlu0 %3684, %v3662
        %v3686 = vpop.permute.xlu0 %3685
        %vm3687 = vcmp.eq.s32.totalorder %v3665, 1
        %vm3688 = vcmp.eq.s32.totalorder %v3668, 1
        %vm3689 = vcmp.eq.s32.totalorder %v3671, 1
        %vm3690 = vcmp.eq.s32.totalorder %v3674, 1
        %vm3691 = vcmp.eq.s32.totalorder %v3677, 1
        %vm3692 = vcmp.eq.s32.totalorder %v3680, 1
        %vm3693 = vcmp.eq.s32.totalorder %v3683, 1
        %vm3694 = vcmp.eq.s32.totalorder %v3686, 1
        %v3695 = vsel %vm3687, %v3654, 0.0
        %v3696 = vsel %vm3688, %v3653, 0.0
        %v3697 = vsel %vm3689, %v3652, 0.0
        %v3698 = vsel %vm3690, %v3651, 0.0
        %v3699 = vsel %vm3691, %v3650, 0.0
        %v3700 = vsel %vm3692, %v3649, 0.0
        %v3701 = vsel %vm3693, %v3648, 0.0
        %v3702 = vsel %vm3694, %v3647, 0.0
        %v3703 = vadd.f32 %v3509, %v3695
        %v3704 = vadd.f32 %v3510, %v3696
        %v3705 = vadd.f32 %v3511, %v3697
        %v3706 = vadd.f32 %v3512, %v3698
        %v3707 = vadd.f32 %v3513, %v3699
        %v3708 = vadd.f32 %v3514, %v3700
        %v3709 = vadd.f32 %v3515, %v3701
        %v3710 = vadd.f32 %v3516, %v3702
        %s3711 = scalar_lea.vmem %s7, 384
        %v3712 = vld [vmem:[%s3711] sm:$0xff]
        %v3713 = vld [vmem:[%s3711 + $0x8] sm:$0xff]
        %v3714 = vld [vmem:[%s3711 + $0x10] sm:$0xff]
        %v3715 = vld [vmem:[%s3711 + $0x18] sm:$0xff]
        %v3716 = vld [vmem:[%s3711 + $0x20] sm:$0xff]
        %v3717 = vld [vmem:[%s3711 + $0x28] sm:$0xff]
        %v3718 = vld [vmem:[%s3711 + $0x30] sm:$0xff]
        %v3719 = vld [vmem:[%s3711 + $0x38] sm:$0xff]
        %v3720 = vld [vmem:[%s3711 + $0x40] sm:$0xff]
        %v3721 = vld [vmem:[%s3711 + $0x48] sm:$0xff]
        %v3722 = vld [vmem:[%s3711 + $0x50] sm:$0xff]
        %v3723 = vld [vmem:[%s3711 + $0x58] sm:$0xff]
        %v3724 = vld [vmem:[%s3711 + $0x60] sm:$0xff]
        %v3725 = vld [vmem:[%s3711 + $0x68] sm:$0xff]
        %v3726 = vld [vmem:[%s3711 + $0x70] sm:$0xff]
        %v3727 = vld [vmem:[%s3711 + $0x78] sm:$0xff]
        %3728 = vmatprep.subr.mxu0 0.0
        %3729 = vmatpush1.msra.mxu0 %v3712
        %3730 = vmatprep.subr.mxu0 0.0
        %3731 = vmatpush1.msra.mxu0 %v3713
        %3732 = vmatprep.subr.mxu0 0.0
        %3733 = vmatpush1.msra.mxu0 %v3714
        %3734 = vmatprep.subr.mxu0 0.0
        %3735 = vmatpush1.msra.mxu0 %v3715
        %3736 = vmatprep.subr.mxu0 0.0
        %3737 = vmatpush1.msra.mxu0 %v3716
        %3738 = vmatprep.subr.mxu0 0.0
        %3739 = vmatpush1.msra.mxu0 %v3717
        %3740 = vmatprep.subr.mxu0 0.0
        %3741 = vmatpush1.msra.mxu0 %v3718
        %3742 = vmatprep.subr.mxu0 0.0
        %3743 = vmatpush1.msra.mxu0 %v3719
        %3744 = vmatprep.subr.mxu0 0.0
        %3745 = vmatpush1.msra.mxu0 %v3720
        %3746 = vmatprep.subr.mxu0 0.0
        %3747 = vmatpush1.msra.mxu0 %v3721
        %3748 = vmatprep.subr.mxu0 0.0
        %3749 = vmatpush1.msra.mxu0 %v3722
        %3750 = vmatprep.subr.mxu0 0.0
        %3751 = vmatpush1.msra.mxu0 %v3723
        %3752 = vmatprep.subr.mxu0 0.0
        %3753 = vmatpush1.msra.mxu0 %v3724
        %3754 = vmatprep.subr.mxu0 0.0
        %3755 = vmatpush1.msra.mxu0 %v3725
        %3756 = vmatprep.subr.mxu0 0.0
        %3757 = vmatpush1.msra.mxu0 %v3726
        %3758 = vmatprep.subr.mxu0 0.0
        %3759 = vmatpush1.msra.mxu0 %v3727
        %3760 = vmatprep.subr.mxu0 0.0
        %3761 = vmatpush1.msra.mxu0 0.0
        %3762 = vmatprep.subr.mxu0 0.0
        %3763 = vmatpush1.msra.mxu0 0.0
        %3764 = vmatprep.subr.mxu0 0.0
        %3765 = vmatpush1.msra.mxu0 0.0
        %3766 = vmatprep.subr.mxu0 0.0
        %3767 = vmatpush1.msra.mxu0 0.0
        %3768 = vmatprep.subr.mxu0 0.0
        %3769 = vmatpush1.msra.mxu0 0.0
        %3770 = vmatprep.subr.mxu0 0.0
        %3771 = vmatpush1.msra.mxu0 0.0
        %3772 = vmatprep.subr.mxu0 0.0
        %3773 = vmatpush1.msra.mxu0 0.0
        %3774 = vmatprep.subr.mxu0 0.0
        %3775 = vmatpush1.msra.mxu0 0.0
        %3776 = vmatprep.subr.mxu0 0.0
        %3777 = vmatpush1.msra.mxu0 0.0
        %3778 = vmatprep.subr.mxu0 0.0
        %3779 = vmatpush1.msra.mxu0 0.0
        %3780 = vmatprep.subr.mxu0 0.0
        %3781 = vmatpush1.msra.mxu0 0.0
        %3782 = vmatprep.subr.mxu0 0.0
        %3783 = vmatpush1.msra.mxu0 0.0
        %3784 = vmatprep.subr.mxu0 0.0
        %3785 = vmatpush1.msra.mxu0 0.0
        %3786 = vmatprep.subr.mxu0 0.0
        %3787 = vmatpush1.msra.mxu0 0.0
        %3788 = vmatprep.subr.mxu0 0.0
        %3789 = vmatpush1.msra.mxu0 0.0
        %3790 = vmatprep.subr.mxu0 0.0
        %3791 = vmatpush1.msra.mxu0 0.0
        %3792 = vmatprep.mubr.f32.mxu0 0.0
        %3793 = vmatmul.mubr.f32.gmra.mrb[0].mxu0 %v3138
        %v3794 = vpop.f32.mrb[0].mxu0
        %v3795 = vadd.f32 0.0, %v3794
        %v3796 = vpop.f32.mrb[0].mxu0
        %3797 = vmatprep.mubr.f32.mxu0 0.0
        %3798 = vmatmul.mubr.f32.gmra.mrb[0].mxu0 %v3139
        %v3799 = vpop.f32.mrb[0].mxu0
        %v3800 = vadd.f32 0.0, %v3799
        %v3801 = vpop.f32.mrb[0].mxu0
        %3802 = vmatprep.mubr.f32.mxu0 0.0
        %3803 = vmatmul.mubr.f32.gmra.mrb[0].mxu0 %v3140
        %v3804 = vpop.f32.mrb[0].mxu0
        %v3805 = vadd.f32 0.0, %v3804
        %v3806 = vpop.f32.mrb[0].mxu0
        %3807 = vmatprep.mubr.f32.mxu0 0.0
        %3808 = vmatmul.mubr.f32.gmra.mrb[0].mxu0 %v3141
        %v3809 = vpop.f32.mrb[0].mxu0
        %v3810 = vadd.f32 0.0, %v3809
        %v3811 = vpop.f32.mrb[0].mxu0
        %3812 = vmatprep.mubr.f32.mxu0 0.0
        %3813 = vmatmul.mubr.f32.gmra.mrb[0].mxu0 %v3142
        %v3814 = vpop.f32.mrb[0].mxu0
        %v3815 = vadd.f32 0.0, %v3814
        %v3816 = vpop.f32.mrb[0].mxu0
        %3817 = vmatprep.mubr.f32.mxu0 0.0
        %3818 = vmatmul.mubr.f32.gmra.mrb[0].mxu0 %v3143
        %v3819 = vpop.f32.mrb[0].mxu0
        %v3820 = vadd.f32 0.0, %v3819
        %v3821 = vpop.f32.mrb[0].mxu0
        %3822 = vmatprep.mubr.f32.mxu0 0.0
        %3823 = vmatmul.mubr.f32.gmra.mrb[0].mxu0 %v3144
        %v3824 = vpop.f32.mrb[0].mxu0
        %v3825 = vadd.f32 0.0, %v3824
        %v3826 = vpop.f32.mrb[0].mxu0
        %3827 = vmatprep.mubr.f32.mxu0 0.0
        %3828 = vmatmul.mubr.f32.gmra.mrb[0].mxu0 %v3145
        %v3829 = vpop.f32.mrb[0].mxu0
        %v3830 = vadd.f32 0.0, %v3829
        %v3831 = vpop.f32.mrb[0].mxu0
        %3832 = vdwg.mxu0
        %v3833 = vrot.slane %v3795, 7
        %v3834 = vrot.slane %v3800, 7
        %v3835 = vrot.slane %v3805, 7
        %v3836 = vrot.slane %v3810, 7
        %v3837 = vrot.slane %v3815, 7
        %v3838 = vrot.slane %v3820, 7
        %v3839 = vrot.slane %v3825, 7
        %v3840 = vrot.slane %v3830, 7
        %v3841 = vsel %vm545, %v3839, %v3840
        %v3842 = vsel %vm545, %v3838, %v3839
        %v3843 = vsel %vm545, %v3837, %v3838
        %v3844 = vsel %vm545, %v3836, %v3837
        %v3845 = vsel %vm545, %v3835, %v3836
        %v3846 = vsel %vm545, %v3834, %v3835
        %v3847 = vsel %vm545, %v3833, %v3834
        %v3848 = vsel %vm545, %v3840, %v3833
        %v3849 = vsel %vm1660, 1, 0
        %v3850 = vsel %vm1661, 1, 0
        %v3851 = vsel %vm1662, 1, 0
        %v3852 = vsel %vm1663, 1, 0
        %v3853 = vsel %vm1664, 1, 0
        %v3854 = vsel %vm1665, 1, 0
        %v3855 = vsel %vm1666, 1, 0
        %v3856 = vsel %vm1667, 1, 0
        %3857 = vset.pattern.permute.xlu0 0
        %3858 = vperm.xlu0 %3857, %v3849
        %v3859 = vpop.permute.xlu0 %3858
        %3860 = vset.pattern.permute.xlu0 0
        %3861 = vperm.xlu0 %3860, %v3850
        %v3862 = vpop.permute.xlu0 %3861
        %3863 = vset.pattern.permute.xlu0 0
        %3864 = vperm.xlu0 %3863, %v3851
        %v3865 = vpop.permute.xlu0 %3864
        %3866 = vset.pattern.permute.xlu0 0
        %3867 = vperm.xlu0 %3866, %v3852
        %v3868 = vpop.permute.xlu0 %3867
        %3869 = vset.pattern.permute.xlu0 0
        %3870 = vperm.xlu0 %3869, %v3853
        %v3871 = vpop.permute.xlu0 %3870
        %3872 = vset.pattern.permute.xlu0 0
        %3873 = vperm.xlu0 %3872, %v3854
        %v3874 = vpop.permute.xlu0 %3873
        %3875 = vset.pattern.permute.xlu0 0
        %3876 = vperm.xlu0 %3875, %v3855
        %v3877 = vpop.permute.xlu0 %3876
        %3878 = vset.pattern.permute.xlu0 0
        %3879 = vperm.xlu0 %3878, %v3856
        %v3880 = vpop.permute.xlu0 %3879
        %vm3881 = vcmp.eq.s32.totalorder %v3859, 1
        %vm3882 = vcmp.eq.s32.totalorder %v3862, 1
        %vm3883 = vcmp.eq.s32.totalorder %v3865, 1
        %vm3884 = vcmp.eq.s32.totalorder %v3868, 1
        %vm3885 = vcmp.eq.s32.totalorder %v3871, 1
        %vm3886 = vcmp.eq.s32.totalorder %v3874, 1
        %vm3887 = vcmp.eq.s32.totalorder %v3877, 1
        %vm3888 = vcmp.eq.s32.totalorder %v3880, 1
        %v3889 = vsel %vm3881, %v3848, 0.0
        %v3890 = vsel %vm3882, %v3847, 0.0
        %v3891 = vsel %vm3883, %v3846, 0.0
        %v3892 = vsel %vm3884, %v3845, 0.0
        %v3893 = vsel %vm3885, %v3844, 0.0
        %v3894 = vsel %vm3886, %v3843, 0.0
        %v3895 = vsel %vm3887, %v3842, 0.0
        %v3896 = vsel %vm3888, %v3841, 0.0
        %v3897 = vadd.f32 %v3703, %v3889
        %v3898 = vadd.f32 %v3704, %v3890
        %v3899 = vadd.f32 %v3705, %v3891
        %v3900 = vadd.f32 %v3706, %v3892
        %v3901 = vadd.f32 %v3707, %v3893
        %v3902 = vadd.f32 %v3708, %v3894
        %v3903 = vadd.f32 %v3709, %v3895
        %v3904 = vadd.f32 %v3710, %v3896
        %s3905 = scalar_lea.vmem %s7, 512
        %v3906 = vld [vmem:[%s3905] sm:$0xff]
        %v3907 = vld [vmem:[%s3905 + $0x8] sm:$0xff]
        %v3908 = vld [vmem:[%s3905 + $0x10] sm:$0xff]
        %v3909 = vld [vmem:[%s3905 + $0x18] sm:$0xff]
        %v3910 = vld [vmem:[%s3905 + $0x20] sm:$0xff]
        %v3911 = vld [vmem:[%s3905 + $0x28] sm:$0xff]
        %v3912 = vld [vmem:[%s3905 + $0x30] sm:$0xff]
        %v3913 = vld [vmem:[%s3905 + $0x38] sm:$0xff]
        %v3914 = vld [vmem:[%s3905 + $0x40] sm:$0xff]
        %v3915 = vld [vmem:[%s3905 + $0x48] sm:$0xff]
        %v3916 = vld [vmem:[%s3905 + $0x50] sm:$0xff]
        %v3917 = vld [vmem:[%s3905 + $0x58] sm:$0xff]
        %v3918 = vld [vmem:[%s3905 + $0x60] sm:$0xff]
        %v3919 = vld [vmem:[%s3905 + $0x68] sm:$0xff]
        %v3920 = vld [vmem:[%s3905 + $0x70] sm:$0xff]
        %v3921 = vld [vmem:[%s3905 + $0x78] sm:$0xff]
        %3922 = vmatprep.subr.mxu0 0.0
        %3923 = vmatpush1.msra.mxu0 %v3906
        %3924 = vmatprep.subr.mxu0 0.0
        %3925 = vmatpush1.msra.mxu0 %v3907
        %3926 = vmatprep.subr.mxu0 0.0
        %3927 = vmatpush1.msra.mxu0 %v3908
        %3928 = vmatprep.subr.mxu0 0.0
        %3929 = vmatpush1.msra.mxu0 %v3909
        %3930 = vmatprep.subr.mxu0 0.0
        %3931 = vmatpush1.msra.mxu0 %v3910
        %3932 = vmatprep.subr.mxu0 0.0
        %3933 = vmatpush1.msra.mxu0 %v3911
        %3934 = vmatprep.subr.mxu0 0.0
        %3935 = vmatpush1.msra.mxu0 %v3912
        %3936 = vmatprep.subr.mxu0 0.0
        %3937 = vmatpush1.msra.mxu0 %v3913
        %3938 = vmatprep.subr.mxu0 0.0
        %3939 = vmatpush1.msra.mxu0 %v3914
        %3940 = vmatprep.subr.mxu0 0.0
        %3941 = vmatpush1.msra.mxu0 %v3915
        %3942 = vmatprep.subr.mxu0 0.0
        %3943 = vmatpush1.msra.mxu0 %v3916
        %3944 = vmatprep.subr.mxu0 0.0
        %3945 = vmatpush1.msra.mxu0 %v3917
        %3946 = vmatprep.subr.mxu0 0.0
        %3947 = vmatpush1.msra.mxu0 %v3918
        %3948 = vmatprep.subr.mxu0 0.0
        %3949 = vmatpush1.msra.mxu0 %v3919
        %3950 = vmatprep.subr.mxu0 0.0
        %3951 = vmatpush1.msra.mxu0 %v3920
        %3952 = vmatprep.subr.mxu0 0.0
        %3953 = vmatpush1.msra.mxu0 %v3921
        %3954 = vmatprep.subr.mxu0 0.0
        %3955 = vmatpush1.msra.mxu0 0.0
        %3956 = vmatprep.subr.mxu0 0.0
        %3957 = vmatpush1.msra.mxu0 0.0
        %3958 = vmatprep.subr.mxu0 0.0
        %3959 = vmatpush1.msra.mxu0 0.0
        %3960 = vmatprep.subr.mxu0 0.0
        %3961 = vmatpush1.msra.mxu0 0.0
        %3962 = vmatprep.subr.mxu0 0.0
        %3963 = vmatpush1.msra.mxu0 0.0
        %3964 = vmatprep.subr.mxu0 0.0
        %3965 = vmatpush1.msra.mxu0 0.0
        %3966 = vmatprep.subr.mxu0 0.0
        %3967 = vmatpush1.msra.mxu0 0.0
        %3968 = vmatprep.subr.mxu0 0.0
        %3969 = vmatpush1.msra.mxu0 0.0
        %3970 = vmatprep.subr.mxu0 0.0
        %3971 = vmatpush1.msra.mxu0 0.0
        %3972 = vmatprep.subr.mxu0 0.0
        %3973 = vmatpush1.msra.mxu0 0.0
        %3974 = vmatprep.subr.mxu0 0.0
        %3975 = vmatpush1.msra.mxu0 0.0
        %3976 = vmatprep.subr.mxu0 0.0
        %3977 = vmatpush1.msra.mxu0 0.0
        %3978 = vmatprep.subr.mxu0 0.0
        %3979 = vmatpush1.msra.mxu0 0.0
        %3980 = vmatprep.subr.mxu0 0.0
        %3981 = vmatpush1.msra.mxu0 0.0
        %3982 = vmatprep.subr.mxu0 0.0
        %3983 = vmatpush1.msra.mxu0 0.0
        %3984 = vmatprep.subr.mxu0 0.0
        %3985 = vmatpush1.msra.mxu0 0.0
        %3986 = vmatprep.mubr.f32.mxu0 0.0
        %3987 = vmatmul.mubr.f32.gmra.mrb[0].mxu0 %v3138
        %v3988 = vpop.f32.mrb[0].mxu0
        %v3989 = vadd.f32 0.0, %v3988
        %v3990 = vpop.f32.mrb[0].mxu0
        %3991 = vmatprep.mubr.f32.mxu0 0.0
        %3992 = vmatmul.mubr.f32.gmra.mrb[0].mxu0 %v3139
        %v3993 = vpop.f32.mrb[0].mxu0
        %v3994 = vadd.f32 0.0, %v3993
        %v3995 = vpop.f32.mrb[0].mxu0
        %3996 = vmatprep.mubr.f32.mxu0 0.0
        %3997 = vmatmul.mubr.f32.gmra.mrb[0].mxu0 %v3140
        %v3998 = vpop.f32.mrb[0].mxu0
        %v3999 = vadd.f32 0.0, %v3998
        %v4000 = vpop.f32.mrb[0].mxu0
        %4001 = vmatprep.mubr.f32.mxu0 0.0
        %4002 = vmatmul.mubr.f32.gmra.mrb[0].mxu0 %v3141
        %v4003 = vpop.f32.mrb[0].mxu0
        %v4004 = vadd.f32 0.0, %v4003
        %v4005 = vpop.f32.mrb[0].mxu0
        %4006 = vmatprep.mubr.f32.mxu0 0.0
        %4007 = vmatmul.mubr.f32.gmra.mrb[0].mxu0 %v3142
        %v4008 = vpop.f32.mrb[0].mxu0
        %v4009 = vadd.f32 0.0, %v4008
        %v4010 = vpop.f32.mrb[0].mxu0
        %4011 = vmatprep.mubr.f32.mxu0 0.0
        %4012 = vmatmul.mubr.f32.gmra.mrb[0].mxu0 %v3143
        %v4013 = vpop.f32.mrb[0].mxu0
        %v4014 = vadd.f32 0.0, %v4013
        %v4015 = vpop.f32.mrb[0].mxu0
        %4016 = vmatprep.mubr.f32.mxu0 0.0
        %4017 = vmatmul.mubr.f32.gmra.mrb[0].mxu0 %v3144
        %v4018 = vpop.f32.mrb[0].mxu0
        %v4019 = vadd.f32 0.0, %v4018
        %v4020 = vpop.f32.mrb[0].mxu0
        %4021 = vmatprep.mubr.f32.mxu0 0.0
        %4022 = vmatmul.mubr.f32.gmra.mrb[0].mxu0 %v3145
        %v4023 = vpop.f32.mrb[0].mxu0
        %v4024 = vadd.f32 0.0, %v4023
        %v4025 = vpop.f32.mrb[0].mxu0
        %4026 = vdwg.mxu0
        %v4027 = vsel %vm1752, 1, 0
        %v4028 = vsel %vm1753, 1, 0
        %v4029 = vsel %vm1754, 1, 0
        %v4030 = vsel %vm1755, 1, 0
        %v4031 = vsel %vm1756, 1, 0
        %v4032 = vsel %vm1757, 1, 0
        %v4033 = vsel %vm1758, 1, 0
        %v4034 = vsel %vm1759, 1, 0
        %4035 = vset.pattern.permute.xlu0 0
        %4036 = vperm.xlu0 %4035, %v4027
        %v4037 = vpop.permute.xlu0 %4036
        %4038 = vset.pattern.permute.xlu0 0
        %4039 = vperm.xlu0 %4038, %v4028
        %v4040 = vpop.permute.xlu0 %4039
        %4041 = vset.pattern.permute.xlu0 0
        %4042 = vperm.xlu0 %4041, %v4029
        %v4043 = vpop.permute.xlu0 %4042
        %4044 = vset.pattern.permute.xlu0 0
        %4045 = vperm.xlu0 %4044, %v4030
        %v4046 = vpop.permute.xlu0 %4045
        %4047 = vset.pattern.permute.xlu0 0
        %4048 = vperm.xlu0 %4047, %v4031
        %v4049 = vpop.permute.xlu0 %4048
        %4050 = vset.pattern.permute.xlu0 0
        %4051 = vperm.xlu0 %4050, %v4032
        %v4052 = vpop.permute.xlu0 %4051
        %4053 = vset.pattern.permute.xlu0 0
        %4054 = vperm.xlu0 %4053, %v4033
        %v4055 = vpop.permute.xlu0 %4054
        %4056 = vset.pattern.permute.xlu0 0
        %4057 = vperm.xlu0 %4056, %v4034
        %v4058 = vpop.permute.xlu0 %4057
        %vm4059 = vcmp.eq.s32.totalorder %v4037, 1
        %vm4060 = vcmp.eq.s32.totalorder %v4040, 1
        %vm4061 = vcmp.eq.s32.totalorder %v4043, 1
        %vm4062 = vcmp.eq.s32.totalorder %v4046, 1
        %vm4063 = vcmp.eq.s32.totalorder %v4049, 1
        %vm4064 = vcmp.eq.s32.totalorder %v4052, 1
        %vm4065 = vcmp.eq.s32.totalorder %v4055, 1
        %vm4066 = vcmp.eq.s32.totalorder %v4058, 1
        %v4067 = vsel %vm4059, %v3989, 0.0
        %v4068 = vsel %vm4060, %v3994, 0.0
        %v4069 = vsel %vm4061, %v3999, 0.0
        %v4070 = vsel %vm4062, %v4004, 0.0
        %v4071 = vsel %vm4063, %v4009, 0.0
        %v4072 = vsel %vm4064, %v4014, 0.0
        %v4073 = vsel %vm4065, %v4019, 0.0
        %v4074 = vsel %vm4066, %v4024, 0.0
        %v4075 = vadd.f32 %v3897, %v4067
        %v4076 = vadd.f32 %v3898, %v4068
        %v4077 = vadd.f32 %v3899, %v4069
        %v4078 = vadd.f32 %v3900, %v4070
        %v4079 = vadd.f32 %v3901, %v4071
        %v4080 = vadd.f32 %v3902, %v4072
        %v4081 = vadd.f32 %v3903, %v4073
        %v4082 = vadd.f32 %v3904, %v4074
        %s4083 = scalar_lea.vmem %s7, 640
        %v4084 = vld [vmem:[%s4083] sm:$0xff]
        %v4085 = vld [vmem:[%s4083 + $0x8] sm:$0xff]
        %v4086 = vld [vmem:[%s4083 + $0x10] sm:$0xff]
        %v4087 = vld [vmem:[%s4083 + $0x18] sm:$0xff]
        %v4088 = vld [vmem:[%s4083 + $0x20] sm:$0xff]
        %v4089 = vld [vmem:[%s4083 + $0x28] sm:$0xff]
        %v4090 = vld [vmem:[%s4083 + $0x30] sm:$0xff]
        %v4091 = vld [vmem:[%s4083 + $0x38] sm:$0xff]
        %v4092 = vld [vmem:[%s4083 + $0x40] sm:$0xff]
        %v4093 = vld [vmem:[%s4083 + $0x48] sm:$0xff]
        %v4094 = vld [vmem:[%s4083 + $0x50] sm:$0xff]
        %v4095 = vld [vmem:[%s4083 + $0x58] sm:$0xff]
        %v4096 = vld [vmem:[%s4083 + $0x60] sm:$0xff]
        %v4097 = vld [vmem:[%s4083 + $0x68] sm:$0xff]
        %v4098 = vld [vmem:[%s4083 + $0x70] sm:$0xff]
        %v4099 = vld [vmem:[%s4083 + $0x78] sm:$0xff]
        %4100 = vmatprep.subr.mxu0 0.0
        %4101 = vmatpush1.msra.mxu0 %v4084
        %4102 = vmatprep.subr.mxu0 0.0
        %4103 = vmatpush1.msra.mxu0 %v4085
        %4104 = vmatprep.subr.mxu0 0.0
        %4105 = vmatpush1.msra.mxu0 %v4086
        %4106 = vmatprep.subr.mxu0 0.0
        %4107 = vmatpush1.msra.mxu0 %v4087
        %4108 = vmatprep.subr.mxu0 0.0
        %4109 = vmatpush1.msra.mxu0 %v4088
        %4110 = vmatprep.subr.mxu0 0.0
        %4111 = vmatpush1.msra.mxu0 %v4089
        %4112 = vmatprep.subr.mxu0 0.0
        %4113 = vmatpush1.msra.mxu0 %v4090
        %4114 = vmatprep.subr.mxu0 0.0
        %4115 = vmatpush1.msra.mxu0 %v4091
        %4116 = vmatprep.subr.mxu0 0.0
        %4117 = vmatpush1.msra.mxu0 %v4092
        %4118 = vmatprep.subr.mxu0 0.0
        %4119 = vmatpush1.msra.mxu0 %v4093
        %4120 = vmatprep.subr.mxu0 0.0
        %4121 = vmatpush1.msra.mxu0 %v4094
        %4122 = vmatprep.subr.mxu0 0.0
        %4123 = vmatpush1.msra.mxu0 %v4095
        %4124 = vmatprep.subr.mxu0 0.0
        %4125 = vmatpush1.msra.mxu0 %v4096
        %4126 = vmatprep.subr.mxu0 0.0
        %4127 = vmatpush1.msra.mxu0 %v4097
        %4128 = vmatprep.subr.mxu0 0.0
        %4129 = vmatpush1.msra.mxu0 %v4098
        %4130 = vmatprep.subr.mxu0 0.0
        %4131 = vmatpush1.msra.mxu0 %v4099
        %4132 = vmatprep.subr.mxu0 0.0
        %4133 = vmatpush1.msra.mxu0 0.0
        %4134 = vmatprep.subr.mxu0 0.0
        %4135 = vmatpush1.msra.mxu0 0.0
        %4136 = vmatprep.subr.mxu0 0.0
        %4137 = vmatpush1.msra.mxu0 0.0
        %4138 = vmatprep.subr.mxu0 0.0
        %4139 = vmatpush1.msra.mxu0 0.0
        %4140 = vmatprep.subr.mxu0 0.0
        %4141 = vmatpush1.msra.mxu0 0.0
        %4142 = vmatprep.subr.mxu0 0.0
        %4143 = vmatpush1.msra.mxu0 0.0
        %4144 = vmatprep.subr.mxu0 0.0
        %4145 = vmatpush1.msra.mxu0 0.0
        %4146 = vmatprep.subr.mxu0 0.0
        %4147 = vmatpush1.msra.mxu0 0.0
        %4148 = vmatprep.subr.mxu0 0.0
        %4149 = vmatpush1.msra.mxu0 0.0
        %4150 = vmatprep.subr.mxu0 0.0
        %4151 = vmatpush1.msra.mxu0 0.0
        %4152 = vmatprep.subr.mxu0 0.0
        %4153 = vmatpush1.msra.mxu0 0.0
        %4154 = vmatprep.subr.mxu0 0.0
        %4155 = vmatpush1.msra.mxu0 0.0
        %4156 = vmatprep.subr.mxu0 0.0
        %4157 = vmatpush1.msra.mxu0 0.0
        %4158 = vmatprep.subr.mxu0 0.0
        %4159 = vmatpush1.msra.mxu0 0.0
        %4160 = vmatprep.subr.mxu0 0.0
        %4161 = vmatpush1.msra.mxu0 0.0
        %4162 = vmatprep.subr.mxu0 0.0
        %4163 = vmatpush1.msra.mxu0 0.0
        %4164 = vmatprep.mubr.f32.mxu0 0.0
        %4165 = vmatmul.mubr.f32.gmra.mrb[0].mxu0 %v3138
        %v4166 = vpop.f32.mrb[0].mxu0
        %v4167 = vadd.f32 0.0, %v4166
        %v4168 = vpop.f32.mrb[0].mxu0
        %4169 = vmatprep.mubr.f32.mxu0 0.0
        %4170 = vmatmul.mubr.f32.gmra.mrb[0].mxu0 %v3139
        %v4171 = vpop.f32.mrb[0].mxu0
        %v4172 = vadd.f32 0.0, %v4171
        %v4173 = vpop.f32.mrb[0].mxu0
        %4174 = vmatprep.mubr.f32.mxu0 0.0
        %4175 = vmatmul.mubr.f32.gmra.mrb[0].mxu0 %v3140
        %v4176 = vpop.f32.mrb[0].mxu0
        %v4177 = vadd.f32 0.0, %v4176
        %v4178 = vpop.f32.mrb[0].mxu0
        %4179 = vmatprep.mubr.f32.mxu0 0.0
        %4180 = vmatmul.mubr.f32.gmra.mrb[0].mxu0 %v3141
        %v4181 = vpop.f32.mrb[0].mxu0
        %v4182 = vadd.f32 0.0, %v4181
        %v4183 = vpop.f32.mrb[0].mxu0
        %4184 = vmatprep.mubr.f32.mxu0 0.0
        %4185 = vmatmul.mubr.f32.gmra.mrb[0].mxu0 %v3142
        %v4186 = vpop.f32.mrb[0].mxu0
        %v4187 = vadd.f32 0.0, %v4186
        %v4188 = vpop.f32.mrb[0].mxu0
        %4189 = vmatprep.mubr.f32.mxu0 0.0
        %4190 = vmatmul.mubr.f32.gmra.mrb[0].mxu0 %v3143
        %v4191 = vpop.f32.mrb[0].mxu0
        %v4192 = vadd.f32 0.0, %v4191
        %v4193 = vpop.f32.mrb[0].mxu0
        %4194 = vmatprep.mubr.f32.mxu0 0.0
        %4195 = vmatmul.mubr.f32.gmra.mrb[0].mxu0 %v3144
        %v4196 = vpop.f32.mrb[0].mxu0
        %v4197 = vadd.f32 0.0, %v4196
        %v4198 = vpop.f32.mrb[0].mxu0
        %4199 = vmatprep.mubr.f32.mxu0 0.0
        %4200 = vmatmul.mubr.f32.gmra.mrb[0].mxu0 %v3145
        %v4201 = vpop.f32.mrb[0].mxu0
        %v4202 = vadd.f32 0.0, %v4201
        %v4203 = vpop.f32.mrb[0].mxu0
        %4204 = vdwg.mxu0
        %v4205 = vrot.slane %v4167, 1
        %v4206 = vrot.slane %v4172, 1
        %v4207 = vrot.slane %v4177, 1
        %v4208 = vrot.slane %v4182, 1
        %v4209 = vrot.slane %v4187, 1
        %v4210 = vrot.slane %v4192, 1
        %v4211 = vrot.slane %v4197, 1
        %v4212 = vrot.slane %v4202, 1
        %v4213 = vsel %vm786, %v4211, %v4212
        %v4214 = vsel %vm786, %v4210, %v4211
        %v4215 = vsel %vm786, %v4209, %v4210
        %v4216 = vsel %vm786, %v4208, %v4209
        %v4217 = vsel %vm786, %v4207, %v4208
        %v4218 = vsel %vm786, %v4206, %v4207
        %v4219 = vsel %vm786, %v4205, %v4206
        %v4220 = vsel %vm786, %v4212, %v4205
        %v4221 = vsel %vm1844, 1, 0
        %v4222 = vsel %vm1845, 1, 0
        %v4223 = vsel %vm1846, 1, 0
        %v4224 = vsel %vm1847, 1, 0
        %v4225 = vsel %vm1848, 1, 0
        %v4226 = vsel %vm1849, 1, 0
        %v4227 = vsel %vm1850, 1, 0
        %v4228 = vsel %vm1851, 1, 0
        %4229 = vset.pattern.permute.xlu0 0
        %4230 = vperm.xlu0 %4229, %v4221
        %v4231 = vpop.permute.xlu0 %4230
        %4232 = vset.pattern.permute.xlu0 0
        %4233 = vperm.xlu0 %4232, %v4222
        %v4234 = vpop.permute.xlu0 %4233
        %4235 = vset.pattern.permute.xlu0 0
        %4236 = vperm.xlu0 %4235, %v4223
        %v4237 = vpop.permute.xlu0 %4236
        %4238 = vset.pattern.permute.xlu0 0
        %4239 = vperm.xlu0 %4238, %v4224
        %v4240 = vpop.permute.xlu0 %4239
        %4241 = vset.pattern.permute.xlu0 0
        %4242 = vperm.xlu0 %4241, %v4225
        %v4243 = vpop.permute.xlu0 %4242
        %4244 = vset.pattern.permute.xlu0 0
        %4245 = vperm.xlu0 %4244, %v4226
        %v4246 = vpop.permute.xlu0 %4245
        %4247 = vset.pattern.permute.xlu0 0
        %4248 = vperm.xlu0 %4247, %v4227
        %v4249 = vpop.permute.xlu0 %4248
        %4250 = vset.pattern.permute.xlu0 0
        %4251 = vperm.xlu0 %4250, %v4228
        %v4252 = vpop.permute.xlu0 %4251
        %vm4253 = vcmp.eq.s32.totalorder %v4231, 1
        %vm4254 = vcmp.eq.s32.totalorder %v4234, 1
        %vm4255 = vcmp.eq.s32.totalorder %v4237, 1
        %vm4256 = vcmp.eq.s32.totalorder %v4240, 1
        %vm4257 = vcmp.eq.s32.totalorder %v4243, 1
        %vm4258 = vcmp.eq.s32.totalorder %v4246, 1
        %vm4259 = vcmp.eq.s32.totalorder %v4249, 1
        %vm4260 = vcmp.eq.s32.totalorder %v4252, 1
        %v4261 = vsel %vm4253, %v4219, 0.0
        %v4262 = vsel %vm4254, %v4218, 0.0
        %v4263 = vsel %vm4255, %v4217, 0.0
        %v4264 = vsel %vm4256, %v4216, 0.0
        %v4265 = vsel %vm4257, %v4215, 0.0
        %v4266 = vsel %vm4258, %v4214, 0.0
        %v4267 = vsel %vm4259, %v4213, 0.0
        %v4268 = vsel %vm4260, %v4220, 0.0
        %v4269 = vadd.f32 %v4075, %v4261
        %v4270 = vadd.f32 %v4076, %v4262
        %v4271 = vadd.f32 %v4077, %v4263
        %v4272 = vadd.f32 %v4078, %v4264
        %v4273 = vadd.f32 %v4079, %v4265
        %v4274 = vadd.f32 %v4080, %v4266
        %v4275 = vadd.f32 %v4081, %v4267
        %v4276 = vadd.f32 %v4082, %v4268
        %s4277 = scalar_lea.vmem %s7, 768
        %v4278 = vld [vmem:[%s4277] sm:$0xff]
        %v4279 = vld [vmem:[%s4277 + $0x8] sm:$0xff]
        %v4280 = vld [vmem:[%s4277 + $0x10] sm:$0xff]
        %v4281 = vld [vmem:[%s4277 + $0x18] sm:$0xff]
        %v4282 = vld [vmem:[%s4277 + $0x20] sm:$0xff]
        %v4283 = vld [vmem:[%s4277 + $0x28] sm:$0xff]
        %v4284 = vld [vmem:[%s4277 + $0x30] sm:$0xff]
        %v4285 = vld [vmem:[%s4277 + $0x38] sm:$0xff]
        %v4286 = vld [vmem:[%s4277 + $0x40] sm:$0xff]
        %v4287 = vld [vmem:[%s4277 + $0x48] sm:$0xff]
        %v4288 = vld [vmem:[%s4277 + $0x50] sm:$0xff]
        %v4289 = vld [vmem:[%s4277 + $0x58] sm:$0xff]
        %v4290 = vld [vmem:[%s4277 + $0x60] sm:$0xff]
        %v4291 = vld [vmem:[%s4277 + $0x68] sm:$0xff]
        %v4292 = vld [vmem:[%s4277 + $0x70] sm:$0xff]
        %v4293 = vld [vmem:[%s4277 + $0x78] sm:$0xff]
        %4294 = vmatprep.subr.mxu0 0.0
        %4295 = vmatpush1.msra.mxu0 %v4278
        %4296 = vmatprep.subr.mxu0 0.0
        %4297 = vmatpush1.msra.mxu0 %v4279
        %4298 = vmatprep.subr.mxu0 0.0
        %4299 = vmatpush1.msra.mxu0 %v4280
        %4300 = vmatprep.subr.mxu0 0.0
        %4301 = vmatpush1.msra.mxu0 %v4281
        %4302 = vmatprep.subr.mxu0 0.0
        %4303 = vmatpush1.msra.mxu0 %v4282
        %4304 = vmatprep.subr.mxu0 0.0
        %4305 = vmatpush1.msra.mxu0 %v4283
        %4306 = vmatprep.subr.mxu0 0.0
        %4307 = vmatpush1.msra.mxu0 %v4284
        %4308 = vmatprep.subr.mxu0 0.0
        %4309 = vmatpush1.msra.mxu0 %v4285
        %4310 = vmatprep.subr.mxu0 0.0
        %4311 = vmatpush1.msra.mxu0 %v4286
        %4312 = vmatprep.subr.mxu0 0.0
        %4313 = vmatpush1.msra.mxu0 %v4287
        %4314 = vmatprep.subr.mxu0 0.0
        %4315 = vmatpush1.msra.mxu0 %v4288
        %4316 = vmatprep.subr.mxu0 0.0
        %4317 = vmatpush1.msra.mxu0 %v4289
        %4318 = vmatprep.subr.mxu0 0.0
        %4319 = vmatpush1.msra.mxu0 %v4290
        %4320 = vmatprep.subr.mxu0 0.0
        %4321 = vmatpush1.msra.mxu0 %v4291
        %4322 = vmatprep.subr.mxu0 0.0
        %4323 = vmatpush1.msra.mxu0 %v4292
        %4324 = vmatprep.subr.mxu0 0.0
        %4325 = vmatpush1.msra.mxu0 %v4293
        %4326 = vmatprep.subr.mxu0 0.0
        %4327 = vmatpush1.msra.mxu0 0.0
        %4328 = vmatprep.subr.mxu0 0.0
        %4329 = vmatpush1.msra.mxu0 0.0
        %4330 = vmatprep.subr.mxu0 0.0
        %4331 = vmatpush1.msra.mxu0 0.0
        %4332 = vmatprep.subr.mxu0 0.0
        %4333 = vmatpush1.msra.mxu0 0.0
        %4334 = vmatprep.subr.mxu0 0.0
        %4335 = vmatpush1.msra.mxu0 0.0
        %4336 = vmatprep.subr.mxu0 0.0
        %4337 = vmatpush1.msra.mxu0 0.0
        %4338 = vmatprep.subr.mxu0 0.0
        %4339 = vmatpush1.msra.mxu0 0.0
        %4340 = vmatprep.subr.mxu0 0.0
        %4341 = vmatpush1.msra.mxu0 0.0
        %4342 = vmatprep.subr.mxu0 0.0
        %4343 = vmatpush1.msra.mxu0 0.0
        %4344 = vmatprep.subr.mxu0 0.0
        %4345 = vmatpush1.msra.mxu0 0.0
        %4346 = vmatprep.subr.mxu0 0.0
        %4347 = vmatpush1.msra.mxu0 0.0
        %4348 = vmatprep.subr.mxu0 0.0
        %4349 = vmatpush1.msra.mxu0 0.0
        %4350 = vmatprep.subr.mxu0 0.0
        %4351 = vmatpush1.msra.mxu0 0.0
        %4352 = vmatprep.subr.mxu0 0.0
        %4353 = vmatpush1.msra.mxu0 0.0
        %4354 = vmatprep.subr.mxu0 0.0
        %4355 = vmatpush1.msra.mxu0 0.0
        %4356 = vmatprep.subr.mxu0 0.0
        %4357 = vmatpush1.msra.mxu0 0.0
        %4358 = vmatprep.mubr.f32.mxu0 0.0
        %4359 = vmatmul.mubr.f32.gmra.mrb[0].mxu0 %v3138
        %v4360 = vpop.f32.mrb[0].mxu0
        %v4361 = vadd.f32 0.0, %v4360
        %v4362 = vpop.f32.mrb[0].mxu0
        %4363 = vmatprep.mubr.f32.mxu0 0.0
        %4364 = vmatmul.mubr.f32.gmra.mrb[0].mxu0 %v3139
        %v4365 = vpop.f32.mrb[0].mxu0
        %v4366 = vadd.f32 0.0, %v4365
        %v4367 = vpop.f32.mrb[0].mxu0
        %4368 = vmatprep.mubr.f32.mxu0 0.0
        %4369 = vmatmul.mubr.f32.gmra.mrb[0].mxu0 %v3140
        %v4370 = vpop.f32.mrb[0].mxu0
        %v4371 = vadd.f32 0.0, %v4370
        %v4372 = vpop.f32.mrb[0].mxu0
        %4373 = vmatprep.mubr.f32.mxu0 0.0
        %4374 = vmatmul.mubr.f32.gmra.mrb[0].mxu0 %v3141
        %v4375 = vpop.f32.mrb[0].mxu0
        %v4376 = vadd.f32 0.0, %v4375
        %v4377 = vpop.f32.mrb[0].mxu0
        %4378 = vmatprep.mubr.f32.mxu0 0.0
        %4379 = vmatmul.mubr.f32.gmra.mrb[0].mxu0 %v3142
        %v4380 = vpop.f32.mrb[0].mxu0
        %v4381 = vadd.f32 0.0, %v4380
        %v4382 = vpop.f32.mrb[0].mxu0
        %4383 = vmatprep.mubr.f32.mxu0 0.0
        %4384 = vmatmul.mubr.f32.gmra.mrb[0].mxu0 %v3143
        %v4385 = vpop.f32.mrb[0].mxu0
        %v4386 = vadd.f32 0.0, %v4385
        %v4387 = vpop.f32.mrb[0].mxu0
        %4388 = vmatprep.mubr.f32.mxu0 0.0
        %4389 = vmatmul.mubr.f32.gmra.mrb[0].mxu0 %v3144
        %v4390 = vpop.f32.mrb[0].mxu0
        %v4391 = vadd.f32 0.0, %v4390
        %v4392 = vpop.f32.mrb[0].mxu0
        %4393 = vmatprep.mubr.f32.mxu0 0.0
        %4394 = vmatmul.mubr.f32.gmra.mrb[0].mxu0 %v3145
        %v4395 = vpop.f32.mrb[0].mxu0
        %v4396 = vadd.f32 0.0, %v4395
        %v4397 = vpop.f32.mrb[0].mxu0
        %4398 = vdwg.mxu0
        %v4399 = vrot.slane %v4361, 7
        %v4400 = vrot.slane %v4366, 7
        %v4401 = vrot.slane %v4371, 7
        %v4402 = vrot.slane %v4376, 7
        %v4403 = vrot.slane %v4381, 7
        %v4404 = vrot.slane %v4386, 7
        %v4405 = vrot.slane %v4391, 7
        %v4406 = vrot.slane %v4396, 7
        %v4407 = vsel %vm545, %v4405, %v4406
        %v4408 = vsel %vm545, %v4404, %v4405
        %v4409 = vsel %vm545, %v4403, %v4404
        %v4410 = vsel %vm545, %v4402, %v4403
        %v4411 = vsel %vm545, %v4401, %v4402
        %v4412 = vsel %vm545, %v4400, %v4401
        %v4413 = vsel %vm545, %v4399, %v4400
        %v4414 = vsel %vm545, %v4406, %v4399
        %v4415 = vsel %vm2152, 1, 0
        %v4416 = vsel %vm2153, 1, 0
        %v4417 = vsel %vm2154, 1, 0
        %v4418 = vsel %vm2155, 1, 0
        %v4419 = vsel %vm2156, 1, 0
        %v4420 = vsel %vm2157, 1, 0
        %v4421 = vsel %vm2158, 1, 0
        %v4422 = vsel %vm2159, 1, 0
        %4423 = vset.pattern.permute.xlu0 0
        %4424 = vperm.xlu0 %4423, %v4415
        %v4425 = vpop.permute.xlu0 %4424
        %4426 = vset.pattern.permute.xlu0 0
        %4427 = vperm.xlu0 %4426, %v4416
        %v4428 = vpop.permute.xlu0 %4427
        %4429 = vset.pattern.permute.xlu0 0
        %4430 = vperm.xlu0 %4429, %v4417
        %v4431 = vpop.permute.xlu0 %4430
        %4432 = vset.pattern.permute.xlu0 0
        %4433 = vperm.xlu0 %4432, %v4418
        %v4434 = vpop.permute.xlu0 %4433
        %4435 = vset.pattern.permute.xlu0 0
        %4436 = vperm.xlu0 %4435, %v4419
        %v4437 = vpop.permute.xlu0 %4436
        %4438 = vset.pattern.permute.xlu0 0
        %4439 = vperm.xlu0 %4438, %v4420
        %v4440 = vpop.permute.xlu0 %4439
        %4441 = vset.pattern.permute.xlu0 0
        %4442 = vperm.xlu0 %4441, %v4421
        %v4443 = vpop.permute.xlu0 %4442
        %4444 = vset.pattern.permute.xlu0 0
        %4445 = vperm.xlu0 %4444, %v4422
        %v4446 = vpop.permute.xlu0 %4445
        %vm4447 = vcmp.eq.s32.totalorder %v4425, 1
        %vm4448 = vcmp.eq.s32.totalorder %v4428, 1
        %vm4449 = vcmp.eq.s32.totalorder %v4431, 1
        %vm4450 = vcmp.eq.s32.totalorder %v4434, 1
        %vm4451 = vcmp.eq.s32.totalorder %v4437, 1
        %vm4452 = vcmp.eq.s32.totalorder %v4440, 1
        %vm4453 = vcmp.eq.s32.totalorder %v4443, 1
        %vm4454 = vcmp.eq.s32.totalorder %v4446, 1
        %v4455 = vsel %vm4447, %v4413, 0.0
        %v4456 = vsel %vm4448, %v4412, 0.0
        %v4457 = vsel %vm4449, %v4411, 0.0
        %v4458 = vsel %vm4450, %v4410, 0.0
        %v4459 = vsel %vm4451, %v4409, 0.0
        %v4460 = vsel %vm4452, %v4408, 0.0
        %v4461 = vsel %vm4453, %v4407, 0.0
        %v4462 = vsel %vm4454, %v4414, 0.0
        %v4463 = vadd.f32 %v4269, %v4455
        %v4464 = vadd.f32 %v4270, %v4456
        %v4465 = vadd.f32 %v4271, %v4457
        %v4466 = vadd.f32 %v4272, %v4458
        %v4467 = vadd.f32 %v4273, %v4459
        %v4468 = vadd.f32 %v4274, %v4460
        %v4469 = vadd.f32 %v4275, %v4461
        %v4470 = vadd.f32 %v4276, %v4462
        %s4471 = scalar_lea.vmem %s7, 896
        %v4472 = vld [vmem:[%s4471] sm:$0xff]
        %v4473 = vld [vmem:[%s4471 + $0x8] sm:$0xff]
        %v4474 = vld [vmem:[%s4471 + $0x10] sm:$0xff]
        %v4475 = vld [vmem:[%s4471 + $0x18] sm:$0xff]
        %v4476 = vld [vmem:[%s4471 + $0x20] sm:$0xff]
        %v4477 = vld [vmem:[%s4471 + $0x28] sm:$0xff]
        %v4478 = vld [vmem:[%s4471 + $0x30] sm:$0xff]
        %v4479 = vld [vmem:[%s4471 + $0x38] sm:$0xff]
        %v4480 = vld [vmem:[%s4471 + $0x40] sm:$0xff]
        %v4481 = vld [vmem:[%s4471 + $0x48] sm:$0xff]
        %v4482 = vld [vmem:[%s4471 + $0x50] sm:$0xff]
        %v4483 = vld [vmem:[%s4471 + $0x58] sm:$0xff]
        %v4484 = vld [vmem:[%s4471 + $0x60] sm:$0xff]
        %v4485 = vld [vmem:[%s4471 + $0x68] sm:$0xff]
        %v4486 = vld [vmem:[%s4471 + $0x70] sm:$0xff]
        %v4487 = vld [vmem:[%s4471 + $0x78] sm:$0xff]
        %4488 = vmatprep.subr.mxu0 0.0
        %4489 = vmatpush1.msra.mxu0 %v4472
        %4490 = vmatprep.subr.mxu0 0.0
        %4491 = vmatpush1.msra.mxu0 %v4473
        %4492 = vmatprep.subr.mxu0 0.0
        %4493 = vmatpush1.msra.mxu0 %v4474
        %4494 = vmatprep.subr.mxu0 0.0
        %4495 = vmatpush1.msra.mxu0 %v4475
        %4496 = vmatprep.subr.mxu0 0.0
        %4497 = vmatpush1.msra.mxu0 %v4476
        %4498 = vmatprep.subr.mxu0 0.0
        %4499 = vmatpush1.msra.mxu0 %v4477
        %4500 = vmatprep.subr.mxu0 0.0
        %4501 = vmatpush1.msra.mxu0 %v4478
        %4502 = vmatprep.subr.mxu0 0.0
        %4503 = vmatpush1.msra.mxu0 %v4479
        %4504 = vmatprep.subr.mxu0 0.0
        %4505 = vmatpush1.msra.mxu0 %v4480
        %4506 = vmatprep.subr.mxu0 0.0
        %4507 = vmatpush1.msra.mxu0 %v4481
        %4508 = vmatprep.subr.mxu0 0.0
        %4509 = vmatpush1.msra.mxu0 %v4482
        %4510 = vmatprep.subr.mxu0 0.0
        %4511 = vmatpush1.msra.mxu0 %v4483
        %4512 = vmatprep.subr.mxu0 0.0
        %4513 = vmatpush1.msra.mxu0 %v4484
        %4514 = vmatprep.subr.mxu0 0.0
        %4515 = vmatpush1.msra.mxu0 %v4485
        %4516 = vmatprep.subr.mxu0 0.0
        %4517 = vmatpush1.msra.mxu0 %v4486
        %4518 = vmatprep.subr.mxu0 0.0
        %4519 = vmatpush1.msra.mxu0 %v4487
        %4520 = vmatprep.subr.mxu0 0.0
        %4521 = vmatpush1.msra.mxu0 0.0
        %4522 = vmatprep.subr.mxu0 0.0
        %4523 = vmatpush1.msra.mxu0 0.0
        %4524 = vmatprep.subr.mxu0 0.0
        %4525 = vmatpush1.msra.mxu0 0.0
        %4526 = vmatprep.subr.mxu0 0.0
        %4527 = vmatpush1.msra.mxu0 0.0
        %4528 = vmatprep.subr.mxu0 0.0
        %4529 = vmatpush1.msra.mxu0 0.0
        %4530 = vmatprep.subr.mxu0 0.0
        %4531 = vmatpush1.msra.mxu0 0.0
        %4532 = vmatprep.subr.mxu0 0.0
        %4533 = vmatpush1.msra.mxu0 0.0
        %4534 = vmatprep.subr.mxu0 0.0
        %4535 = vmatpush1.msra.mxu0 0.0
        %4536 = vmatprep.subr.mxu0 0.0
        %4537 = vmatpush1.msra.mxu0 0.0
        %4538 = vmatprep.subr.mxu0 0.0
        %4539 = vmatpush1.msra.mxu0 0.0
        %4540 = vmatprep.subr.mxu0 0.0
        %4541 = vmatpush1.msra.mxu0 0.0
        %4542 = vmatprep.subr.mxu0 0.0
        %4543 = vmatpush1.msra.mxu0 0.0
        %4544 = vmatprep.subr.mxu0 0.0
        %4545 = vmatpush1.msra.mxu0 0.0
        %4546 = vmatprep.subr.mxu0 0.0
        %4547 = vmatpush1.msra.mxu0 0.0
        %4548 = vmatprep.subr.mxu0 0.0
        %4549 = vmatpush1.msra.mxu0 0.0
        %4550 = vmatprep.subr.mxu0 0.0
        %4551 = vmatpush1.msra.mxu0 0.0
        %4552 = vmatprep.mubr.f32.mxu0 0.0
        %4553 = vmatmul.mubr.f32.gmra.mrb[0].mxu0 %v3138
        %v4554 = vpop.f32.mrb[0].mxu0
        %v4555 = vadd.f32 0.0, %v4554
        %v4556 = vpop.f32.mrb[0].mxu0
        %4557 = vmatprep.mubr.f32.mxu0 0.0
        %4558 = vmatmul.mubr.f32.gmra.mrb[0].mxu0 %v3139
        %v4559 = vpop.f32.mrb[0].mxu0
        %v4560 = vadd.f32 0.0, %v4559
        %v4561 = vpop.f32.mrb[0].mxu0
        %4562 = vmatprep.mubr.f32.mxu0 0.0
        %4563 = vmatmul.mubr.f32.gmra.mrb[0].mxu0 %v3140
        %v4564 = vpop.f32.mrb[0].mxu0
        %v4565 = vadd.f32 0.0, %v4564
        %v4566 = vpop.f32.mrb[0].mxu0
        %4567 = vmatprep.mubr.f32.mxu0 0.0
        %4568 = vmatmul.mubr.f32.gmra.mrb[0].mxu0 %v3141
        %v4569 = vpop.f32.mrb[0].mxu0
        %v4570 = vadd.f32 0.0, %v4569
        %v4571 = vpop.f32.mrb[0].mxu0
        %4572 = vmatprep.mubr.f32.mxu0 0.0
        %4573 = vmatmul.mubr.f32.gmra.mrb[0].mxu0 %v3142
        %v4574 = vpop.f32.mrb[0].mxu0
        %v4575 = vadd.f32 0.0, %v4574
        %v4576 = vpop.f32.mrb[0].mxu0
        %4577 = vmatprep.mubr.f32.mxu0 0.0
        %4578 = vmatmul.mubr.f32.gmra.mrb[0].mxu0 %v3143
        %v4579 = vpop.f32.mrb[0].mxu0
        %v4580 = vadd.f32 0.0, %v4579
        %v4581 = vpop.f32.mrb[0].mxu0
        %4582 = vmatprep.mubr.f32.mxu0 0.0
        %4583 = vmatmul.mubr.f32.gmra.mrb[0].mxu0 %v3144
        %v4584 = vpop.f32.mrb[0].mxu0
        %v4585 = vadd.f32 0.0, %v4584
        %v4586 = vpop.f32.mrb[0].mxu0
        %4587 = vmatprep.mubr.f32.mxu0 0.0
        %4588 = vmatmul.mubr.f32.gmra.mrb[0].mxu0 %v3145
        %v4589 = vpop.f32.mrb[0].mxu0
        %v4590 = vadd.f32 0.0, %v4589
        %v4591 = vpop.f32.mrb[0].mxu0
        %4592 = vdwg.mxu0
        %v4593 = vsel %vm2244, 1, 0
        %v4594 = vsel %vm2245, 1, 0
        %v4595 = vsel %vm2246, 1, 0
        %v4596 = vsel %vm2247, 1, 0
        %v4597 = vsel %vm2248, 1, 0
        %v4598 = vsel %vm2249, 1, 0
        %v4599 = vsel %vm2250, 1, 0
        %v4600 = vsel %vm2251, 1, 0
        %4601 = vset.pattern.permute.xlu0 0
        %4602 = vperm.xlu0 %4601, %v4593
        %v4603 = vpop.permute.xlu0 %4602
        %4604 = vset.pattern.permute.xlu0 0
        %4605 = vperm.xlu0 %4604, %v4594
        %v4606 = vpop.permute.xlu0 %4605
        %4607 = vset.pattern.permute.xlu0 0
        %4608 = vperm.xlu0 %4607, %v4595
        %v4609 = vpop.permute.xlu0 %4608
        %4610 = vset.pattern.permute.xlu0 0
        %4611 = vperm.xlu0 %4610, %v4596
        %v4612 = vpop.permute.xlu0 %4611
        %4613 = vset.pattern.permute.xlu0 0
        %4614 = vperm.xlu0 %4613, %v4597
        %v4615 = vpop.permute.xlu0 %4614
        %4616 = vset.pattern.permute.xlu0 0
        %4617 = vperm.xlu0 %4616, %v4598
        %v4618 = vpop.permute.xlu0 %4617
        %4619 = vset.pattern.permute.xlu0 0
        %4620 = vperm.xlu0 %4619, %v4599
        %v4621 = vpop.permute.xlu0 %4620
        %4622 = vset.pattern.permute.xlu0 0
        %4623 = vperm.xlu0 %4622, %v4600
        %v4624 = vpop.permute.xlu0 %4623
        %vm4625 = vcmp.eq.s32.totalorder %v4603, 1
        %vm4626 = vcmp.eq.s32.totalorder %v4606, 1
        %vm4627 = vcmp.eq.s32.totalorder %v4609, 1
        %vm4628 = vcmp.eq.s32.totalorder %v4612, 1
        %vm4629 = vcmp.eq.s32.totalorder %v4615, 1
        %vm4630 = vcmp.eq.s32.totalorder %v4618, 1
        %vm4631 = vcmp.eq.s32.totalorder %v4621, 1
        %vm4632 = vcmp.eq.s32.totalorder %v4624, 1
        %v4633 = vsel %vm4625, %v4560, 0.0
        %v4634 = vsel %vm4626, %v4565, 0.0
        %v4635 = vsel %vm4627, %v4570, 0.0
        %v4636 = vsel %vm4628, %v4575, 0.0
        %v4637 = vsel %vm4629, %v4580, 0.0
        %v4638 = vsel %vm4630, %v4585, 0.0
        %v4639 = vsel %vm4631, %v4590, 0.0
        %v4640 = vsel %vm4632, %v4555, 0.0
        %v4641 = vadd.f32 %v4463, %v4633
        %v4642 = vadd.f32 %v4464, %v4634
        %v4643 = vadd.f32 %v4465, %v4635
        %v4644 = vadd.f32 %v4466, %v4636
        %v4645 = vadd.f32 %v4467, %v4637
        %v4646 = vadd.f32 %v4468, %v4638
        %v4647 = vadd.f32 %v4469, %v4639
        %v4648 = vadd.f32 %v4470, %v4640
        %s4649 = scalar_lea.vmem %s7, 1024
        %v4650 = vld [vmem:[%s4649] sm:$0xff]
        %v4651 = vld [vmem:[%s4649 + $0x8] sm:$0xff]
        %v4652 = vld [vmem:[%s4649 + $0x10] sm:$0xff]
        %v4653 = vld [vmem:[%s4649 + $0x18] sm:$0xff]
        %v4654 = vld [vmem:[%s4649 + $0x20] sm:$0xff]
        %v4655 = vld [vmem:[%s4649 + $0x28] sm:$0xff]
        %v4656 = vld [vmem:[%s4649 + $0x30] sm:$0xff]
        %v4657 = vld [vmem:[%s4649 + $0x38] sm:$0xff]
        %v4658 = vld [vmem:[%s4649 + $0x40] sm:$0xff]
        %v4659 = vld [vmem:[%s4649 + $0x48] sm:$0xff]
        %v4660 = vld [vmem:[%s4649 + $0x50] sm:$0xff]
        %v4661 = vld [vmem:[%s4649 + $0x58] sm:$0xff]
        %v4662 = vld [vmem:[%s4649 + $0x60] sm:$0xff]
        %v4663 = vld [vmem:[%s4649 + $0x68] sm:$0xff]
        %v4664 = vld [vmem:[%s4649 + $0x70] sm:$0xff]
        %v4665 = vld [vmem:[%s4649 + $0x78] sm:$0xff]
        %4666 = vmatprep.subr.mxu0 0.0
        %4667 = vmatpush1.msra.mxu0 %v4650
        %4668 = vmatprep.subr.mxu0 0.0
        %4669 = vmatpush1.msra.mxu0 %v4651
        %4670 = vmatprep.subr.mxu0 0.0
        %4671 = vmatpush1.msra.mxu0 %v4652
        %4672 = vmatprep.subr.mxu0 0.0
        %4673 = vmatpush1.msra.mxu0 %v4653
        %4674 = vmatprep.subr.mxu0 0.0
        %4675 = vmatpush1.msra.mxu0 %v4654
        %4676 = vmatprep.subr.mxu0 0.0
        %4677 = vmatpush1.msra.mxu0 %v4655
        %4678 = vmatprep.subr.mxu0 0.0
        %4679 = vmatpush1.msra.mxu0 %v4656
        %4680 = vmatprep.subr.mxu0 0.0
        %4681 = vmatpush1.msra.mxu0 %v4657
        %4682 = vmatprep.subr.mxu0 0.0
        %4683 = vmatpush1.msra.mxu0 %v4658
        %4684 = vmatprep.subr.mxu0 0.0
        %4685 = vmatpush1.msra.mxu0 %v4659
        %4686 = vmatprep.subr.mxu0 0.0
        %4687 = vmatpush1.msra.mxu0 %v4660
        %4688 = vmatprep.subr.mxu0 0.0
        %4689 = vmatpush1.msra.mxu0 %v4661
        %4690 = vmatprep.subr.mxu0 0.0
        %4691 = vmatpush1.msra.mxu0 %v4662
        %4692 = vmatprep.subr.mxu0 0.0
        %4693 = vmatpush1.msra.mxu0 %v4663
        %4694 = vmatprep.subr.mxu0 0.0
        %4695 = vmatpush1.msra.mxu0 %v4664
        %4696 = vmatprep.subr.mxu0 0.0
        %4697 = vmatpush1.msra.mxu0 %v4665
        %4698 = vmatprep.subr.mxu0 0.0
        %4699 = vmatpush1.msra.mxu0 0.0
        %4700 = vmatprep.subr.mxu0 0.0
        %4701 = vmatpush1.msra.mxu0 0.0
        %4702 = vmatprep.subr.mxu0 0.0
        %4703 = vmatpush1.msra.mxu0 0.0
        %4704 = vmatprep.subr.mxu0 0.0
        %4705 = vmatpush1.msra.mxu0 0.0
        %4706 = vmatprep.subr.mxu0 0.0
        %4707 = vmatpush1.msra.mxu0 0.0
        %4708 = vmatprep.subr.mxu0 0.0
        %4709 = vmatpush1.msra.mxu0 0.0
        %4710 = vmatprep.subr.mxu0 0.0
        %4711 = vmatpush1.msra.mxu0 0.0
        %4712 = vmatprep.subr.mxu0 0.0
        %4713 = vmatpush1.msra.mxu0 0.0
        %4714 = vmatprep.subr.mxu0 0.0
        %4715 = vmatpush1.msra.mxu0 0.0
        %4716 = vmatprep.subr.mxu0 0.0
        %4717 = vmatpush1.msra.mxu0 0.0
        %4718 = vmatprep.subr.mxu0 0.0
        %4719 = vmatpush1.msra.mxu0 0.0
        %4720 = vmatprep.subr.mxu0 0.0
        %4721 = vmatpush1.msra.mxu0 0.0
        %4722 = vmatprep.subr.mxu0 0.0
        %4723 = vmatpush1.msra.mxu0 0.0
        %4724 = vmatprep.subr.mxu0 0.0
        %4725 = vmatpush1.msra.mxu0 0.0
        %4726 = vmatprep.subr.mxu0 0.0
        %4727 = vmatpush1.msra.mxu0 0.0
        %4728 = vmatprep.subr.mxu0 0.0
        %4729 = vmatpush1.msra.mxu0 0.0
        %4730 = vmatprep.mubr.f32.mxu0 0.0
        %4731 = vmatmul.mubr.f32.gmra.mrb[0].mxu0 %v3138
        %v4732 = vpop.f32.mrb[0].mxu0
        %v4733 = vadd.f32 0.0, %v4732
        %v4734 = vpop.f32.mrb[0].mxu0
        %4735 = vmatprep.mubr.f32.mxu0 0.0
        %4736 = vmatmul.mubr.f32.gmra.mrb[0].mxu0 %v3139
        %v4737 = vpop.f32.mrb[0].mxu0
        %v4738 = vadd.f32 0.0, %v4737
        %v4739 = vpop.f32.mrb[0].mxu0
        %4740 = vmatprep.mubr.f32.mxu0 0.0
        %4741 = vmatmul.mubr.f32.gmra.mrb[0].mxu0 %v3140
        %v4742 = vpop.f32.mrb[0].mxu0
        %v4743 = vadd.f32 0.0, %v4742
        %v4744 = vpop.f32.mrb[0].mxu0
        %4745 = vmatprep.mubr.f32.mxu0 0.0
        %4746 = vmatmul.mubr.f32.gmra.mrb[0].mxu0 %v3141
        %v4747 = vpop.f32.mrb[0].mxu0
        %v4748 = vadd.f32 0.0, %v4747
        %v4749 = vpop.f32.mrb[0].mxu0
        %4750 = vmatprep.mubr.f32.mxu0 0.0
        %4751 = vmatmul.mubr.f32.gmra.mrb[0].mxu0 %v3142
        %v4752 = vpop.f32.mrb[0].mxu0
        %v4753 = vadd.f32 0.0, %v4752
        %v4754 = vpop.f32.mrb[0].mxu0
        %4755 = vmatprep.mubr.f32.mxu0 0.0
        %4756 = vmatmul.mubr.f32.gmra.mrb[0].mxu0 %v3143
        %v4757 = vpop.f32.mrb[0].mxu0
        %v4758 = vadd.f32 0.0, %v4757
        %v4759 = vpop.f32.mrb[0].mxu0
        %4760 = vmatprep.mubr.f32.mxu0 0.0
        %4761 = vmatmul.mubr.f32.gmra.mrb[0].mxu0 %v3144
        %v4762 = vpop.f32.mrb[0].mxu0
        %v4763 = vadd.f32 0.0, %v4762
        %v4764 = vpop.f32.mrb[0].mxu0
        %4765 = vmatprep.mubr.f32.mxu0 0.0
        %4766 = vmatmul.mubr.f32.gmra.mrb[0].mxu0 %v3145
        %v4767 = vpop.f32.mrb[0].mxu0
        %v4768 = vadd.f32 0.0, %v4767
        %v4769 = vpop.f32.mrb[0].mxu0
        %4770 = vdwg.mxu0
        %v4771 = vrot.slane %v4733, 1
        %v4772 = vrot.slane %v4738, 1
        %v4773 = vrot.slane %v4743, 1
        %v4774 = vrot.slane %v4748, 1
        %v4775 = vrot.slane %v4753, 1
        %v4776 = vrot.slane %v4758, 1
        %v4777 = vrot.slane %v4763, 1
        %v4778 = vrot.slane %v4768, 1
        %v4779 = vsel %vm786, %v4777, %v4778
        %v4780 = vsel %vm786, %v4776, %v4777
        %v4781 = vsel %vm786, %v4775, %v4776
        %v4782 = vsel %vm786, %v4774, %v4775
        %v4783 = vsel %vm786, %v4773, %v4774
        %v4784 = vsel %vm786, %v4772, %v4773
        %v4785 = vsel %vm786, %v4771, %v4772
        %v4786 = vsel %vm786, %v4778, %v4771
        %v4787 = vsel %vm2336, 1, 0
        %v4788 = vsel %vm2337, 1, 0
        %v4789 = vsel %vm2338, 1, 0
        %v4790 = vsel %vm2339, 1, 0
        %v4791 = vsel %vm2340, 1, 0
        %v4792 = vsel %vm2341, 1, 0
        %v4793 = vsel %vm2342, 1, 0
        %v4794 = vsel %vm2343, 1, 0
        %4795 = vset.pattern.permute.xlu0 0
        %4796 = vperm.xlu0 %4795, %v4787
        %v4797 = vpop.permute.xlu0 %4796
        %4798 = vset.pattern.permute.xlu0 0
        %4799 = vperm.xlu0 %4798, %v4788
        %v4800 = vpop.permute.xlu0 %4799
        %4801 = vset.pattern.permute.xlu0 0
        %4802 = vperm.xlu0 %4801, %v4789
        %v4803 = vpop.permute.xlu0 %4802
        %4804 = vset.pattern.permute.xlu0 0
        %4805 = vperm.xlu0 %4804, %v4790
        %v4806 = vpop.permute.xlu0 %4805
        %4807 = vset.pattern.permute.xlu0 0
        %4808 = vperm.xlu0 %4807, %v4791
        %v4809 = vpop.permute.xlu0 %4808
        %4810 = vset.pattern.permute.xlu0 0
        %4811 = vperm.xlu0 %4810, %v4792
        %v4812 = vpop.permute.xlu0 %4811
        %4813 = vset.pattern.permute.xlu0 0
        %4814 = vperm.xlu0 %4813, %v4793
        %v4815 = vpop.permute.xlu0 %4814
        %4816 = vset.pattern.permute.xlu0 0
        %4817 = vperm.xlu0 %4816, %v4794
        %v4818 = vpop.permute.xlu0 %4817
        %vm4819 = vcmp.eq.s32.totalorder %v4797, 1
        %vm4820 = vcmp.eq.s32.totalorder %v4800, 1
        %vm4821 = vcmp.eq.s32.totalorder %v4803, 1
        %vm4822 = vcmp.eq.s32.totalorder %v4806, 1
        %vm4823 = vcmp.eq.s32.totalorder %v4809, 1
        %vm4824 = vcmp.eq.s32.totalorder %v4812, 1
        %vm4825 = vcmp.eq.s32.totalorder %v4815, 1
        %vm4826 = vcmp.eq.s32.totalorder %v4818, 1
        %v4827 = vsel %vm4819, %v4784, 0.0
        %v4828 = vsel %vm4820, %v4783, 0.0
        %v4829 = vsel %vm4821, %v4782, 0.0
        %v4830 = vsel %vm4822, %v4781, 0.0
        %v4831 = vsel %vm4823, %v4780, 0.0
        %v4832 = vsel %vm4824, %v4779, 0.0
        %v4833 = vsel %vm4825, %v4786, 0.0
        %v4834 = vsel %vm4826, %v4785, 0.0
        %v4835 = vadd.f32 %v4641, %v4827
        %v4836 = vadd.f32 %v4642, %v4828
        %v4837 = vadd.f32 %v4643, %v4829
        %v4838 = vadd.f32 %v4644, %v4830
        %v4839 = vadd.f32 %v4645, %v4831
        %v4840 = vadd.f32 %v4646, %v4832
        %v4841 = vadd.f32 %v4647, %v4833
        %v4842 = vadd.f32 %v4648, %v4834
        %4843 = vst [vmem:[%s327] sm:$0xff] %v4835
        %4844 = vst [vmem:[%s327 + $0x8] sm:$0xff] %v4836
        %4845 = vst [vmem:[%s327 + $0x10] sm:$0xff] %v4837
        %4846 = vst [vmem:[%s327 + $0x18] sm:$0xff] %v4838
        %4847 = vst [vmem:[%s327 + $0x20] sm:$0xff] %v4839
        %4848 = vst [vmem:[%s327 + $0x28] sm:$0xff] %v4840
        %4849 = vst [vmem:[%s327 + $0x30] sm:$0xff] %v4841
        %4850 = vst [vmem:[%s327 + $0x38] sm:$0xff] %v4842
        %s4851 = sand.u32 %s209, 1
        %s4852 = scalar_lea.sflag [#allocation3], %s4851
        %s4853 = sand.u32 %s209, 1
        %s4854 = smul.addr %s4853, 64
        %s4855 = scalar_lea.vmem [#allocation5], %s4854
        // Predicated region
        $region57: #{upsample_8_forward.3} parent=51 // pred_check
          %p4856 = pneg %p219
        $region58: #{upsample_8_forward.3} parent=51 // pred_check_branch
          %4858 = sbr.rel (%p4856) target = $region60
        $region59: #{upsample_8_forward.3} parent=51 // pred_region
          %s4860 = ssub.s32 1024, 1024
          %4861 = vsyncadd %s4852, %s4860
          %s4862 = smul.addr %s23, 8
          %s4863 = smul.addr %s4862, 128
          %s4864 = scalar_lea.hbm %s8, %s4863
          %s4865 = sshll.u32 %s4855, 4
          %s4866 = int_to_ptr.vmem [resolvable:$true] %s4865
          %4871 = dma.vmem_to_hbm [thread:$0]  %s4866, 1024, %s4864, %s4852, 128, 128, 8
        $region60: #{upsample_8_forward.3} parent=51 // pred_fallthru
          _
      $region52: #{upsample_8_forward.3} parent=5 // pred_fallthru
        _
      %p4872 = scmp.le.s32.totalorder 2, %s18
      // Predicated region
      $region61: #{upsample_8_forward.3} parent=5 // pred_check
        %p4873 = pneg %p4872
      $region62: #{upsample_8_forward.3} parent=5 // pred_check_branch
        %4875 = sbr.rel (%p4873) target = $region64
      $region63: #{upsample_8_forward.3} parent=5 // pred_region
        %s4876 = ssub.s32 %s18, 2
        // Predicated region
        $region65: #{upsample_8_forward.3} parent=63 // pred_check
          %p4877 = pneg %p225
        $region66: #{upsample_8_forward.3} parent=63 // pred_check_branch
          %4879 = sbr.rel (%p4877) target = $region68
        $region67: #{upsample_8_forward.3} parent=63 // pred_region
          %s4880 = sand.u32 %s210, 1
          %s4881 = scalar_lea.sflag [#allocation3], %s4880
          %s4882 = sand.u32 %s210, 1
          %s4883 = smul.addr %s4882, 64
          %s4884 = scalar_lea.vmem [#allocation5], %s4883
          %4885 = dma.done %s4881, 1024
        $region68: #{upsample_8_forward.3} parent=63 // pred_fallthru
          _
      $region64: #{upsample_8_forward.3} parent=5 // pred_fallthru
        _
    $region6: #{upsample_8_forward.3} parent=1 // loop_footer
      %s22 = sadd.s32 1, %s18
    $region7: #{upsample_8_forward.3} parent=1 // loop_footer_branch
      %17 = sbr.rel target = $region3
    $region8: #{upsample_8_forward.3} parent=1 // loop_exit
      _
    %4886 = vsyncpa [#allocation3], 1
    %s4887 = scalar_lea.sflag [#allocation3], 1
    %4888 = vsyncpa %s4887, 1
    %4889 = vsyncpa [#allocation4], 1
    %s4890 = scalar_lea.sflag [#allocation4], 1
    %4891 = vsyncpa %s4890, 1

</llo_original>
